<compile_context>
chip_gen: v7x
topology: tpu7x:2x2x1
jax: 0.10.0
libtpu: 0.0.40
codegen_flags: <defaults>
</compile_context>

<pallas_src>
import functools

import jax
import jax.numpy as jnp
from jax.experimental import pallas as pl
from jax.experimental.pallas import tpu as pltpu

EPS = 1e-5                      # PyTorch BatchNorm1d default eps
MATMUL_DTYPE = jnp.bfloat16     # MXU-native operand dtype (accumulation stays f32)


# --------------------------------------------------------------------------------------
# streaming conv-stack kernels (grid = (B, num_row_tiles))
# --------------------------------------------------------------------------------------
def _row_mask(j, n_valid, tile_n):
    """Boolean (tile_n, 1) mask of valid (non-padded) rows for row-tile j."""
    rows = jax.lax.broadcasted_iota(jnp.int32, (tile_n, 1), 0)
    return rows < (n_valid - j * tile_n)


def _bn_relu_cast(h, sc_ref, sh_ref):
    """Fused BN(train) + ReLU as one FMA, cast to the matmul dtype for the next layer."""
    return jnp.maximum(h * sc_ref[...] + sh_ref[...], 0.0).astype(MATMUL_DTYPE)


def conv1_stats_kernel(x_ref, w1p_ref, sum_ref, ssq_ref):
    """Pass 1: conv1 partial BN stats.  w1 is zero-padded to 128 output channels so the
    resident accumulators are lane-dense (unmasked 128-lane stores).  Padded point rows
    are all-zero and there is no conv bias, so they contribute exactly 0 to both sums ->
    no row masking needed in this pass."""
    @pl.when(pl.program_id(1) == 0)
    def _init():
        sum_ref[...] = jnp.zeros_like(sum_ref)
        ssq_ref[...] = jnp.zeros_like(ssq_ref)

    h1 = jnp.dot(x_ref[0], w1p_ref[...], preferred_element_type=jnp.float32)  # (t, 128)
    sum_ref[...] += jnp.sum(h1, axis=0, keepdims=True)[None]
    ssq_ref[...] += jnp.sum(h1 * h1, axis=0, keepdims=True)[None]


def conv2_stats_kernel(x_ref, w1_ref, sc1_ref, sh1_ref, w2_ref, sum_ref, ssq_ref,
                       *, n_valid, tile_n):
    """Pass 2: (recompute conv1) -> bn1+relu -> conv2 -> bn2 partial stats."""
    j = pl.program_id(1)

    @pl.when(j == 0)
    def _init():
        sum_ref[...] = jnp.zeros_like(sum_ref)
        ssq_ref[...] = jnp.zeros_like(ssq_ref)

    h1 = jnp.dot(x_ref[0], w1_ref[...], preferred_element_type=jnp.float32)
    a1 = _bn_relu_cast(h1, sc1_ref, sh1_ref)

    def accum(a1_t):
        h2 = jnp.dot(a1_t, w2_ref[...], preferred_element_type=jnp.float32)
        sum_ref[...] += jnp.sum(h2, axis=0, keepdims=True)[None]
        ssq_ref[...] += jnp.sum(h2 * h2, axis=0, keepdims=True)[None]

    if n_valid % tile_n == 0:           # compile-time: no padding anywhere
        accum(a1)
    else:                               # mask work gated to the last row tile only
        last = pl.num_programs(1) - 1

        @pl.when(j != last)
        def _full():
            accum(a1)

        @pl.when(j == last)
        def _masked():
            valid = _row_mask(j, n_valid, tile_n)
            # zeroing the (t,64) a1 rows makes the padded h2 rows exactly 0
            accum(a1 * valid.astype(a1.dtype))


def conv3_stats_kernel(x_ref, w1_ref, sc1_ref, sh1_ref, w2_ref, sc2_ref, sh2_ref,
                       w3s_ref, sa2_ref, ssq_ref, ext_ref, *, n_valid, tile_n):
    """Pass 3: full conv stack -> bn3 partial stats + per-batch signed extreme of conv3."""
    j = pl.program_id(1)

    @pl.when(j == 0)
    def _init():
        sa2_ref[...] = jnp.zeros_like(sa2_ref)
        ssq_ref[...] = jnp.zeros_like(ssq_ref)
        ext_ref[...] = jnp.full(ext_ref.shape, -jnp.inf, ext_ref.dtype)

    h1 = jnp.dot(x_ref[0], w1_ref[...], preferred_element_type=jnp.float32)
    a1 = _bn_relu_cast(h1, sc1_ref, sh1_ref)
    h2 = jnp.dot(a1, w2_ref[...], preferred_element_type=jnp.float32)
    a2 = _bn_relu_cast(h2, sc2_ref, sh2_ref)

    def accum(a2_t, ext_mask):
        # w3s = w3 * sign(gamma3) (host-side): one running column-max of h3s is the exact
        # per-channel extreme needed to recover max(relu(bn3(conv3))) -- no min tracker,
        # no per-tile where/select on full tiles.
        h3s = jnp.dot(a2_t, w3s_ref[...], preferred_element_type=jnp.float32)  # (t,1024)
        # bn3 mean via matmul linearity: accumulate colsum(a2) (128 lanes, 8x cheaper than
        # a 1024-lane reduce); host reconstructs sum(conv3) = colsum(a2) @ w3.
        sa2_ref[...] += jnp.sum(a2_t.astype(jnp.float32), axis=0, keepdims=True)[None]
        ssq_ref[...] += jnp.sum(h3s * h3s, axis=0, keepdims=True)[None]   # sign-invariant
        hm = h3s if ext_mask is None else jnp.where(ext_mask, h3s, -jnp.inf)
        ext_ref[...] = jnp.maximum(ext_ref[...],
                                   jnp.max(hm, axis=0, keepdims=True)[None])

    if n_valid % tile_n == 0:           # compile-time: no padding anywhere
        accum(a2, None)
    else:                               # mask work gated to the last row tile only
        last = pl.num_programs(1) - 1

        @pl.when(j != last)
        def _full():
            accum(a2, None)

        @pl.when(j == last)
        def _masked():
            valid = _row_mask(j, n_valid, tile_n)
            # zero padded a2 rows -> padded h3s rows are 0 -> sums need no 1024-wide mask
            accum(a2 * valid.astype(a2.dtype), valid)


# --------------------------------------------------------------------------------------
# FC head kernel (single block, everything VMEM-resident; bf16 matmuls, f32 BN math)
# --------------------------------------------------------------------------------------
def fc_head_kernel(ext_ref, asc3_ref, sh3_ref, w4_ref, g4_ref, t4_ref,
                   w5_ref, g5_ref, t5_ref, w6_ref, b6_ref, out_ref):
    # exact pooled = max_points relu(bn3(conv3)): |sc3| * ext == sc3 * (argmax-side value)
    pooled = jnp.maximum(ext_ref[...] * asc3_ref[...] + sh3_ref[...], 0.0)   # (B,1024) f32

    def bn_relu(h, g, t):
        mu = jnp.mean(h, axis=0, keepdims=True)
        var = jnp.mean(jnp.square(h - mu), axis=0, keepdims=True)   # biased, training mode
        scale = g * jax.lax.rsqrt(var + EPS)
        return jnp.maximum(h * scale + (t - mu * scale), 0.0)       # fc bias folded by BN

    h4 = bn_relu(jnp.dot(pooled.astype(MATMUL_DTYPE), w4_ref[...],
                         preferred_element_type=jnp.float32), g4_ref[...], t4_ref[...])
    h5 = bn_relu(jnp.dot(h4.astype(MATMUL_DTYPE), w5_ref[...],
                         preferred_element_type=jnp.float32), g5_ref[...], t5_ref[...])
    out_ref[...] = (jnp.dot(h5.astype(MATMUL_DTYPE), w6_ref[...],
                            preferred_element_type=jnp.float32)
                    + b6_ref[...])                                   # b6 already has identity


# --------------------------------------------------------------------------------------
# host-side orchestration
# --------------------------------------------------------------------------------------
def _finalize_bn(total_sum, total_ssq, gamma, beta, count):
    """(1,C) global sums -> per-channel BN scale/shift (training-mode, biased variance)."""
    mean = total_sum / count
    var = jnp.maximum(total_ssq / count - mean * mean, 0.0)
    scale = gamma * jax.lax.rsqrt(var + EPS)
    return scale, beta - mean * scale


def stnkd_forward(x, params, k, *, tile_n12=2048, tile_n3=512):
    """x: (B, k, N) float32 (PyTorch NCW layout).  Returns (B, k, k).

    tile_n12: row tile for the cheap stats passes 1-2 (overhead-bound -> big tiles).
    tile_n3 : row tile for the conv3 pass (<=512 keeps v7x's 64 MiB VMEM / 32 MiB scoped
              default safe without raising vmem_limit_bytes).
    """
    (w1, b1, g1, t1, w2, b2, g2, t2, w3, b3, g3, t3,
     w4, b4, g4, t4, w5, b5, g5, t5, w6, b6) = params
    # b1..b5 are intentionally unused: training-mode BN absorbs them exactly.
    del b1, b2, b3, b4, b5

    B, K, N = x.shape
    assert K == k
    rows = B * N                                       # rows that count for conv BN stats

    def pick_tile(want):
        want = max(8, (want // 8) * 8)                 # (8,128) sublane rule: multiple of 8
        return min(want, pl.cdiv(N, 8) * 8)            # never tile past (8-padded) N

    t12, tt3 = pick_tile(tile_n12), pick_tile(tile_n3)

    x_cl = jnp.transpose(x, (0, 2, 1)).astype(jnp.float32)          # (B, N, k)

    def padded_input(tile):
        nt = pl.cdiv(N, tile)
        npad = nt * tile
        xp = x_cl if npad == N else jnp.pad(x_cl, ((0, 0), (0, npad - N), (0, 0)))
        return xp.astype(MATMUL_DTYPE), nt

    w1c = w1.astype(MATMUL_DTYPE)                                   # (k, 64)
    w1p = jnp.pad(w1, ((0, 0), (0, 64))).astype(MATMUL_DTYPE)       # (k, 128) for pass 1
    w2c = w2.astype(MATMUL_DTYPE)                                   # (64, 128)
    sign3 = jnp.where(g3 >= 0.0, 1.0, -1.0).astype(jnp.float32)     # sign(sc3)==sign(g3)
    w3s = (w3 * sign3).astype(MATMUL_DTYPE)                         # (128, 1024) signed

    cp = pltpu.CompilerParams(dimension_semantics=("parallel", "arbitrary"))
    # TODO(synk): on v7x with small/odd B, also split the row-tile axis into a leading
    # "parallel" half-axis (two partial accumulator sets summed on the host) so both
    # TensorCores of the chip get work.

    def x_spec(tile):
        return pl.BlockSpec((1, tile, k), lambda b, j: (b, j, 0))

    def rep_spec(a):     # whole-array operand, same block at every grid step
        return pl.BlockSpec(a.shape, lambda b, j, _nd=a.ndim: (0,) * _nd)

    def acc_spec(c):     # per-batch accumulator block, resident across the row-tile axis
        return pl.BlockSpec((1, 1, c), lambda b, j: (b, 0, 0))

    def stat_shape(c):
        return jax.ShapeDtypeStruct((B, 1, c), jnp.float32)

    def cost(flops, *ops, out_elems):
        byts = sum(int(o.size) * o.dtype.itemsize for o in ops) + 4 * out_elems
        return pl.CostEstimate(flops=int(flops), transcendentals=0, bytes_accessed=int(byts))

    # ---- pass 1: conv1 -> bn1 partial stats (big tiles; no row masking needed) --------
    x12, nt12 = padded_input(t12)
    rp12 = B * nt12 * t12
    s1, q1 = pl.pallas_call(
        conv1_stats_kernel,
        grid=(B, nt12),
        in_specs=[x_spec(t12), rep_spec(w1p)],
        out_specs=(acc_spec(128), acc_spec(128)),
        out_shape=(stat_shape(128), stat_shape(128)),
        compiler_params=cp,
        cost_estimate=cost(2 * rp12 * k * 128, x12, w1p, out_elems=2 * B * 128),
    )(x12, w1p)
    sc1, sh1 = _finalize_bn(jnp.sum(s1[..., :64], axis=0),
                            jnp.sum(q1[..., :64], axis=0), g1, t1, rows)

    # ---- pass 2: (recompute conv1) -> bn1+relu -> conv2 -> bn2 partial stats ----------
    s2, q2 = pl.pallas_call(
        functools.partial(conv2_stats_kernel, n_valid=N, tile_n=t12),
        grid=(B, nt12),
        in_specs=[x_spec(t12), rep_spec(w1c), rep_spec(sc1), rep_spec(sh1), rep_spec(w2c)],
        out_specs=(acc_spec(128), acc_spec(128)),
        out_shape=(stat_shape(128), stat_shape(128)),
        compiler_params=cp,
        cost_estimate=cost(2 * rp12 * (k * 64 + 64 * 128), x12, w1c, w2c, sc1, sh1,
                           out_elems=2 * B * 128),
    )(x12, w1c, sc1, sh1, w2c)
    sc2, sh2 = _finalize_bn(jnp.sum(s2, axis=0), jnp.sum(q2, axis=0), g2, t2, rows)

    # ---- pass 3: conv stack -> bn3 partials + per-batch signed extreme of conv3 -------
    x3, nt3 = padded_input(tt3)
    rp3 = B * nt3 * tt3
    sa2, q3, ext = pl.pallas_call(
        functools.partial(conv3_stats_kernel, n_valid=N, tile_n=tt3),
        grid=(B, nt3),
        in_specs=[x_spec(tt3), rep_spec(w1c), rep_spec(sc1), rep_spec(sh1),
                  rep_spec(w2c), rep_spec(sc2), rep_spec(sh2), rep_spec(w3s)],
        out_specs=(acc_spec(128), acc_spec(1024), acc_spec(1024)),
        out_shape=(stat_shape(128), stat_shape(1024), stat_shape(1024)),
        compiler_params=cp,
        cost_estimate=cost(2 * rp3 * (k * 64 + 64 * 128 + 128 * 1024),
                           x3, w1c, w2c, w3s, sc1, sh1, sc2, sh2,
                           out_elems=3 * B * 1024),
    )(x3, w1c, sc1, sh1, w2c, sc2, sh2, w3s)

    # bn3 stats: sum(conv3) = colsum(a2) @ w3 (matmul linearity, exact up to f32 order);
    # ssq is sign-invariant so it comes straight from the kernel accumulator.
    w3_eff = w3.astype(MATMUL_DTYPE).astype(jnp.float32)     # exactly the kernel's weights
    sum3 = jnp.dot(jnp.sum(sa2, axis=0), w3_eff)             # (1, 1024)
    sc3, sh3 = _finalize_bn(sum3, jnp.sum(q3, axis=0), g3, t3, rows)
    asc3 = jnp.abs(sc3)                                      # |sc3| pairs with signed ext

    # ---- FC head: pooled -> fc1/bn4 -> fc2/bn5 -> fc3 (+identity folded into bias) ----
    b6_eff = b6 + jnp.eye(k, dtype=jnp.float32).reshape(1, k * k)
    vmem = pl.BlockSpec(memory_space=pltpu.MemorySpace.VMEM)
    out = pl.pallas_call(
        fc_head_kernel,
        out_shape=jax.ShapeDtypeStruct((B, k * k), jnp.float32),
        in_specs=[vmem] * 11,
        out_specs=vmem,
    )(ext.reshape(B, 1024), asc3, sh3,
      w4.astype(MATMUL_DTYPE), g4, t4, w5.astype(MATMUL_DTYPE), g5, t5,
      w6.astype(MATMUL_DTYPE), b6_eff)
    return out.reshape(B, k, k)


# --------------------------------------------------------------------------------------
# parameters + pure-JAX reference (naive, faithful to the PyTorch module)
# --------------------------------------------------------------------------------------
def make_params(key, k):
    """Weights stored transposed for right-multiplication: conv/fc weights (in, out);
    per-channel vectors (bias / bn gamma / bn beta) stored as (1, C)."""
    dims = [(k, 64), (64, 128), (128, 1024), (1024, 512), (512, 256), (256, k * k)]
    keys = iter(jax.random.split(key, 4 * len(dims)))
    params = []
    for li, (cin, cout) in enumerate(dims):
        w = 0.05 * jax.random.normal(next(keys), (cin, cout), jnp.float32)
        b = 0.05 * jax.random.normal(next(keys), (1, cout), jnp.float32)
        params.extend([w, b])
        if li < 5:  # layers with BatchNorm (conv1..3, fc1, fc2); some gammas negative
            g = 1.0 + 0.75 * jax.random.normal(next(keys), (1, cout), jnp.float32)
            t = 0.1 * jax.random.normal(next(keys), (1, cout), jnp.float32)
            params.extend([g, t])
    return params


def reference_forward(x, params, k):
    """Naive dense reference: includes the b1..b5 biases, two-pass BN stats, and the
    max-pool AFTER bn+relu.  The only deliberate precision match with the kernel is the
    bf16 cast of matmul operands (f32 accumulation) on every layer."""
    (w1, b1, g1, t1, w2, b2, g2, t2, w3, b3, g3, t3,
     w4, b4, g4, t4, w5, b5, g5, t5, w6, b6) = params
    B, _, N = x.shape

    def bn_train(h, g, t):
        mu = jnp.mean(h, axis=0, keepdims=True)
        var = jnp.mean(jnp.square(h - mu), axis=0, keepdims=True)
        return (h - mu) * jax.lax.rsqrt(var + EPS) * g + t

    def mm(a, w):
        return jnp.dot(a.astype(MATMUL_DTYPE), w.astype(MATMUL_DTYPE),
                       preferred_element_type=jnp.float32)

    def block(h, w, b, g, t):
        return jnp.maximum(bn_train(mm(h, w) + b, g, t), 0.0)

    h = jnp.transpose(x, (0, 2, 1)).reshape(B * N, k)
    h = block(h, w1, b1, g1, t1)
    h = block(h, w2, b2, g2, t2)
    h = block(h, w3, b3, g3, t3)
    pooled = jnp.max(h.reshape(B, N, 1024), axis=1)

    f = block(pooled, w4, b4, g4, t4)
    f = block(f, w5, b5, g5, t5)
    out = mm(f, w6) + b6 + jnp.eye(k, dtype=jnp.float32).reshape(1, k * k)
    return out.reshape(B, k, k)


if __name__ == "__main__":
    k = 16       # STNkd "k" (k*k = 256 keeps the final output lane-dense)
    B = 4        # batch
    N = 300      # points; NOT a multiple of the tiles -> exercises the last-tile mask path

    key = jax.random.PRNGKey(0)
    kx, kp = jax.random.split(key)
    x = jax.random.normal(kx, (B, k, N), jnp.float32)   # PyTorch NCW layout (B, k, N)
    params = make_params(kp, k)

    # Small tiles here so the test hits multiple row tiles + the masked last-tile branch.
    fwd = jax.jit(functools.partial(stnkd_forward, k=k, tile_n12=256, tile_n3=128))
    out = jax.block_until_ready(fwd(x, params))

    ref = jax.block_until_ready(jax.jit(functools.partial(reference_forward, k=k))(x, params))

    assert out.shape == (B, k, k)
    assert bool(jnp.all(jnp.isfinite(out)))
    # bf16 matmul operands (both paths) + streamed stat accumulation -> small numeric drift
    assert jnp.allclose(out, ref, atol=5e-3, rtol=5e-3), \
        f"mismatch vs JAX reference, max abs diff = {float(jnp.max(jnp.abs(out - ref)))}"
    print("KERNEL_OK")
</pallas_src>

<mosaic_0001>
module attributes {stable_mosaic.version = 11 : i64} {
  func.func @conv1_stats_kernel(%arg0: i32, %arg1: i32, %arg2: memref<1x256x16xbf16, #tpu.memory_space<vmem>>, %arg3: memref<16x128xbf16, #tpu.memory_space<vmem>>, %arg4: memref<1x1x128xf32, #tpu.memory_space<vmem>>, %arg5: memref<1x1x128xf32, #tpu.memory_space<vmem>>) attributes {dimension_semantics = [#tpu.dimension_semantics<parallel>, #tpu.dimension_semantics<arbitrary>], iteration_bounds = array<i64: 4, 2>, scalar_prefetch = 0 : i64, scratch_operands = 0 : i64, tpu.core_type = #tpu.core_type<tc>, window_params = [{transform_indices = @transform_0, window_bounds = array<i64: 1, 256, 16>}, {pipeline_mode = #tpu.pipeline_mode<synchronous>, transform_indices = @transform_1, window_bounds = array<i64: 16, 128>}, {transform_indices = @transform_2, window_bounds = array<i64: 1, 1, 128>}, {transform_indices = @transform_3, window_bounds = array<i64: 1, 1, 128>}]} {
    %c0_i32 = arith.constant 0 : i32
    %0 = arith.cmpi eq, %arg1, %c0_i32 : i32
    %1 = arith.extui %0 : i1 to i32
    %c0_i32_0 = arith.constant 0 : i32
    %2 = arith.cmpi ne, %1, %c0_i32_0 : i32
    scf.if %2 {
      %cst_19 = arith.constant 0.000000e+00 : f32
      %20 = vector.broadcast %cst_19 : f32 to vector<1x1x128xf32>
      %c0_20 = arith.constant 0 : index
      %c0_21 = arith.constant 0 : index
      %c0_22 = arith.constant 0 : index
      %21 = vector.load %arg4[%c0_20, %c0_21, %c0_22] : memref<1x1x128xf32, #tpu.memory_space<vmem>>, vector<1x1x128xf32>
      tpu.vector_store %arg4[%c0_20, %c0_21, %c0_22], %20 {strides = array<i32>} : memref<1x1x128xf32, #tpu.memory_space<vmem>>, vector<1x1x128xf32>,
      %cst_23 = arith.constant 0.000000e+00 : f32
      %22 = vector.broadcast %cst_23 : f32 to vector<1x1x128xf32>
      %c0_24 = arith.constant 0 : index
      %c0_25 = arith.constant 0 : index
      %c0_26 = arith.constant 0 : index
      %23 = vector.load %arg5[%c0_24, %c0_25, %c0_26] : memref<1x1x128xf32, #tpu.memory_space<vmem>>, vector<1x1x128xf32>
      tpu.vector_store %arg5[%c0_24, %c0_25, %c0_26], %22 {strides = array<i32>} : memref<1x1x128xf32, #tpu.memory_space<vmem>>, vector<1x1x128xf32>,
    } else {
    }
    %c0 = arith.constant 0 : index
    %c0_1 = arith.constant 0 : index
    %c0_2 = arith.constant 0 : index
    %3 = vector.load %arg2[%c0, %c0_1, %c0_2] : memref<1x256x16xbf16, #tpu.memory_space<vmem>>, vector<1x256x16xbf16>
    %4 = vector.shape_cast %3 : vector<1x256x16xbf16> to vector<256x16xbf16>
    %c0_3 = arith.constant 0 : index
    %c0_4 = arith.constant 0 : index
    %5 = vector.load %arg3[%c0_3, %c0_4] : memref<16x128xbf16, #tpu.memory_space<vmem>>, vector<16x128xbf16>
    %cst = arith.constant dense<0.000000e+00> : vector<256x128xf32>
    %6 = tpu.matmul %4, %5, %cst {dimension_numbers = #tpu.dot_dimension_numbers<[1], [0], [0], [1], [0, 0, 1, 1], [], []>} : vector<256x16xbf16>, vector<16x128xbf16>, vector<256x128xf32> -> vector<256x128xf32>
    %c0_5 = arith.constant 0 : index
    %c0_6 = arith.constant 0 : index
    %c0_7 = arith.constant 0 : index
    %7 = vector.load %arg4[%c0_5, %c0_6, %c0_7] : memref<1x1x128xf32, #tpu.memory_space<vmem>>, vector<1x1x128xf32>
    %cst_8 = arith.constant dense<0.000000e+00> : vector<128xf32>
    %8 = vector.multi_reduction <add>, %6, %cst_8 [0] : vector<256x128xf32> to vector<128xf32>
    %9 = vector.shape_cast %8 : vector<128xf32> to vector<1x128xf32>
    %10 = vector.shape_cast %9 : vector<1x128xf32> to vector<1x1x128xf32>
    %11 = arith.addf %7, %10 : vector<1x1x128xf32>
    %c0_9 = arith.constant 0 : index
    %c0_10 = arith.constant 0 : index
    %c0_11 = arith.constant 0 : index
    %12 = vector.load %arg4[%c0_9, %c0_10, %c0_11] : memref<1x1x128xf32, #tpu.memory_space<vmem>>, vector<1x1x128xf32>
    tpu.vector_store %arg4[%c0_9, %c0_10, %c0_11], %11 {strides = array<i32>} : memref<1x1x128xf32, #tpu.memory_space<vmem>>, vector<1x1x128xf32>,
    %c0_12 = arith.constant 0 : index
    %c0_13 = arith.constant 0 : index
    %c0_14 = arith.constant 0 : index
    %13 = vector.load %arg5[%c0_12, %c0_13, %c0_14] : memref<1x1x128xf32, #tpu.memory_space<vmem>>, vector<1x1x128xf32>
    %14 = arith.mulf %6, %6 : vector<256x128xf32>
    %cst_15 = arith.constant dense<0.000000e+00> : vector<128xf32>
    %15 = vector.multi_reduction <add>, %14, %cst_15 [0] : vector<256x128xf32> to vector<128xf32>
    %16 = vector.shape_cast %15 : vector<128xf32> to vector<1x128xf32>
    %17 = vector.shape_cast %16 : vector<1x128xf32> to vector<1x1x128xf32>
    %18 = arith.addf %13, %17 : vector<1x1x128xf32>
    %c0_16 = arith.constant 0 : index
    %c0_17 = arith.constant 0 : index
    %c0_18 = arith.constant 0 : index
    %19 = vector.load %arg5[%c0_16, %c0_17, %c0_18] : memref<1x1x128xf32, #tpu.memory_space<vmem>>, vector<1x1x128xf32>
    tpu.vector_store %arg5[%c0_16, %c0_17, %c0_18], %18 {strides = array<i32>} : memref<1x1x128xf32, #tpu.memory_space<vmem>>, vector<1x1x128xf32>,
    return
  }
  func.func @transform_0(%arg0: i32, %arg1: i32) -> (i32, i32, i32) {
    %c0_i32 = arith.constant 0 : i32
    %c0_i32_0 = arith.constant 0 : i32
    return %arg0, %arg1, %c0_i32 : i32, i32, i32
  }
  func.func @transform_1(%arg0: i32, %arg1: i32) -> (i32, i32) {
    %c0_i32 = arith.constant 0 : i32
    %c0_i32_0 = arith.constant 0 : i32
    %c0_i32_1 = arith.constant 0 : i32
    return %c0_i32, %c0_i32_0 : i32, i32
  }
  func.func @transform_2(%arg0: i32, %arg1: i32) -> (i32, i32, i32) {
    %c0_i32 = arith.constant 0 : i32
    %c0_i32_0 = arith.constant 0 : i32
    %c0_i32_1 = arith.constant 0 : i32
    return %arg0, %c0_i32, %c0_i32_0 : i32, i32, i32
  }
  func.func @transform_3(%arg0: i32, %arg1: i32) -> (i32, i32, i32) {
    %c0_i32 = arith.constant 0 : i32
    %c0_i32_0 = arith.constant 0 : i32
    %c0_i32_1 = arith.constant 0 : i32
    return %arg0, %c0_i32, %c0_i32_0 : i32, i32, i32
  }
}

module attributes {stable_mosaic.version = 11 : i64} {
  func.func @conv2_stats_kernel(%arg0: i32, %arg1: i32, %arg2: memref<1x256x16xbf16, #tpu.memory_space<vmem>>, %arg3: memref<16x64xbf16, #tpu.memory_space<vmem>>, %arg4: memref<1x64xf32, #tpu.memory_space<vmem>>, %arg5: memref<1x64xf32, #tpu.memory_space<vmem>>, %arg6: memref<64x128xbf16, #tpu.memory_space<vmem>>, %arg7: memref<1x1x128xf32, #tpu.memory_space<vmem>>, %arg8: memref<1x1x128xf32, #tpu.memory_space<vmem>>) attributes {dimension_semantics = [#tpu.dimension_semantics<parallel>, #tpu.dimension_semantics<arbitrary>], iteration_bounds = array<i64: 4, 2>, scalar_prefetch = 0 : i64, scratch_operands = 0 : i64, tpu.core_type = #tpu.core_type<tc>, window_params = [{transform_indices = @transform_0, window_bounds = array<i64: 1, 256, 16>}, {pipeline_mode = #tpu.pipeline_mode<synchronous>, transform_indices = @transform_1, window_bounds = array<i64: 16, 64>}, {pipeline_mode = #tpu.pipeline_mode<synchronous>, transform_indices = @transform_2, window_bounds = array<i64: 1, 64>}, {pipeline_mode = #tpu.pipeline_mode<synchronous>, transform_indices = @transform_3, window_bounds = array<i64: 1, 64>}, {pipeline_mode = #tpu.pipeline_mode<synchronous>, transform_indices = @transform_4, window_bounds = array<i64: 64, 128>}, {transform_indices = @transform_5, window_bounds = array<i64: 1, 1, 128>}, {transform_indices = @transform_6, window_bounds = array<i64: 1, 1, 128>}]} {
    %c0_i32 = arith.constant 0 : i32
    %0 = arith.cmpi eq, %arg1, %c0_i32 : i32
    %1 = arith.extui %0 : i1 to i32
    %c0_i32_0 = arith.constant 0 : i32
    %2 = arith.cmpi ne, %1, %c0_i32_0 : i32
    scf.if %2 {
      %cst_13 = arith.constant 0.000000e+00 : f32
      %22 = vector.broadcast %cst_13 : f32 to vector<1x1x128xf32>
      %c0_14 = arith.constant 0 : index
      %c0_15 = arith.constant 0 : index
      %c0_16 = arith.constant 0 : index
      %23 = vector.load %arg7[%c0_14, %c0_15, %c0_16] : memref<1x1x128xf32, #tpu.memory_space<vmem>>, vector<1x1x128xf32>
      tpu.vector_store %arg7[%c0_14, %c0_15, %c0_16], %22 {strides = array<i32>} : memref<1x1x128xf32, #tpu.memory_space<vmem>>, vector<1x1x128xf32>,
      %cst_17 = arith.constant 0.000000e+00 : f32
      %24 = vector.broadcast %cst_17 : f32 to vector<1x1x128xf32>
      %c0_18 = arith.constant 0 : index
      %c0_19 = arith.constant 0 : index
      %c0_20 = arith.constant 0 : index
      %25 = vector.load %arg8[%c0_18, %c0_19, %c0_20] : memref<1x1x128xf32, #tpu.memory_space<vmem>>, vector<1x1x128xf32>
      tpu.vector_store %arg8[%c0_18, %c0_19, %c0_20], %24 {strides = array<i32>} : memref<1x1x128xf32, #tpu.memory_space<vmem>>, vector<1x1x128xf32>,
    } else {
    }
    %c0 = arith.constant 0 : index
    %c0_1 = arith.constant 0 : index
    %c0_2 = arith.constant 0 : index
    %3 = vector.load %arg2[%c0, %c0_1, %c0_2] : memref<1x256x16xbf16, #tpu.memory_space<vmem>>, vector<1x256x16xbf16>
    %4 = vector.shape_cast %3 : vector<1x256x16xbf16> to vector<256x16xbf16>
    %c0_3 = arith.constant 0 : index
    %c0_4 = arith.constant 0 : index
    %5 = vector.load %arg3[%c0_3, %c0_4] : memref<16x64xbf16, #tpu.memory_space<vmem>>, vector<16x64xbf16>
    %cst = arith.constant dense<0.000000e+00> : vector<256x64xf32>
    %6 = tpu.matmul %4, %5, %cst {dimension_numbers = #tpu.dot_dimension_numbers<[1], [0], [0], [1], [0, 0, 1, 1], [], []>} : vector<256x16xbf16>, vector<16x64xbf16>, vector<256x64xf32> -> vector<256x64xf32>
    %c0_5 = arith.constant 0 : index
    %c0_6 = arith.constant 0 : index
    %7 = vector.load %arg4[%c0_5, %c0_6] : memref<1x64xf32, #tpu.memory_space<vmem>>, vector<1x64xf32>
    %8 = vector.broadcast %7 : vector<1x64xf32> to vector<256x64xf32>
    %9 = arith.mulf %6, %8 : vector<256x64xf32>
    %c0_7 = arith.constant 0 : index
    %c0_8 = arith.constant 0 : index
    %10 = vector.load %arg5[%c0_7, %c0_8] : memref<1x64xf32, #tpu.memory_space<vmem>>, vector<1x64xf32>
    %11 = vector.broadcast %10 : vector<1x64xf32> to vector<256x64xf32>
    %12 = arith.addf %9, %11 : vector<256x64xf32>
    %cst_9 = arith.constant 0.000000e+00 : f32
    %13 = vector.broadcast %cst_9 : f32 to vector<256x64xf32>
    %14 = arith.maximumf %12, %13 : vector<256x64xf32>
    %15 = arith.truncf %14 : vector<256x64xf32> to vector<256x64xbf16>
    %c1_i32 = arith.constant 1 : i32
    %16 = arith.cmpi ne, %arg1, %c1_i32 : i32
    %17 = arith.extui %16 : i1 to i32
    %c0_i32_10 = arith.constant 0 : i32
    %18 = arith.cmpi ne, %17, %c0_i32_10 : i32
    scf.if %18 {
      %c0_13 = arith.constant 0 : index
      %c0_14 = arith.constant 0 : index
      %22 = vector.load %arg6[%c0_13, %c0_14] : memref<64x128xbf16, #tpu.memory_space<vmem>>, vector<64x128xbf16>
      %cst_15 = arith.constant dense<0.000000e+00> : vector<256x128xf32>
      %23 = tpu.matmul %15, %22, %cst_15 {dimension_numbers = #tpu.dot_dimension_numbers<[1], [0], [0], [1], [0, 0, 1, 1], [], []>} : vector<256x64xbf16>, vector<64x128xbf16>, vector<256x128xf32> -> vector<256x128xf32>
      %c0_16 = arith.constant 0 : index
      %c0_17 = arith.constant 0 : index
      %c0_18 = arith.constant 0 : index
      %24 = vector.load %arg7[%c0_16, %c0_17, %c0_18] : memref<1x1x128xf32, #tpu.memory_space<vmem>>, vector<1x1x128xf32>
      %cst_19 = arith.constant dense<0.000000e+00> : vector<128xf32>
      %25 = vector.multi_reduction <add>, %23, %cst_19 [0] : vector<256x128xf32> to vector<128xf32>
      %26 = vector.shape_cast %25 : vector<128xf32> to vector<1x128xf32>
      %27 = vector.shape_cast %26 : vector<1x128xf32> to vector<1x1x128xf32>
      %28 = arith.addf %24, %27 : vector<1x1x128xf32>
      %c0_20 = arith.constant 0 : index
      %c0_21 = arith.constant 0 : index
      %c0_22 = arith.constant 0 : index
      %29 = vector.load %arg7[%c0_20, %c0_21, %c0_22] : memref<1x1x128xf32, #tpu.memory_space<vmem>>, vector<1x1x128xf32>
      tpu.vector_store %arg7[%c0_20, %c0_21, %c0_22], %28 {strides = array<i32>} : memref<1x1x128xf32, #tpu.memory_space<vmem>>, vector<1x1x128xf32>,
      %c0_23 = arith.constant 0 : index
      %c0_24 = arith.constant 0 : index
      %c0_25 = arith.constant 0 : index
      %30 = vector.load %arg8[%c0_23, %c0_24, %c0_25] : memref<1x1x128xf32, #tpu.memory_space<vmem>>, vector<1x1x128xf32>
      %31 = arith.mulf %23, %23 : vector<256x128xf32>
      %cst_26 = arith.constant dense<0.000000e+00> : vector<128xf32>
      %32 = vector.multi_reduction <add>, %31, %cst_26 [0] : vector<256x128xf32> to vector<128xf32>
      %33 = vector.shape_cast %32 : vector<128xf32> to vector<1x128xf32>
      %34 = vector.shape_cast %33 : vector<1x128xf32> to vector<1x1x128xf32>
      %35 = arith.addf %30, %34 : vector<1x1x128xf32>
      %c0_27 = arith.constant 0 : index
      %c0_28 = arith.constant 0 : index
      %c0_29 = arith.constant 0 : index
      %36 = vector.load %arg8[%c0_27, %c0_28, %c0_29] : memref<1x1x128xf32, #tpu.memory_space<vmem>>, vector<1x1x128xf32>
      tpu.vector_store %arg8[%c0_27, %c0_28, %c0_29], %35 {strides = array<i32>} : memref<1x1x128xf32, #tpu.memory_space<vmem>>, vector<1x1x128xf32>,
    } else {
    }
    %c1_i32_11 = arith.constant 1 : i32
    %19 = arith.cmpi eq, %arg1, %c1_i32_11 : i32
    %20 = arith.extui %19 : i1 to i32
    %c0_i32_12 = arith.constant 0 : i32
    %21 = arith.cmpi ne, %20, %c0_i32_12 : i32
    scf.if %21 {
      %22 = tpu.iota {dimensions = array<i32: 0>} : vector<256x1xi32>
      %c256_i32 = arith.constant 256 : i32
      %23 = arith.muli %arg1, %c256_i32 : i32
      %c300_i32 = arith.constant 300 : i32
      %24 = arith.subi %c300_i32, %23 : i32
      %25 = vector.broadcast %24 : i32 to vector<256x1xi32>
      %26 = arith.cmpi slt, %22, %25 : vector<256x1xi32>
      %27 = arith.extui %26 : vector<256x1xi1> to vector<256x1xi32>
      %28 = arith.sitofp %27 : vector<256x1xi32> to vector<256x1xf32>
      %29 = arith.truncf %28 : vector<256x1xf32> to vector<256x1xbf16>
      %30 = vector.broadcast %29 : vector<256x1xbf16> to vector<256x64xbf16>
      %31 = arith.mulf %15, %30 : vector<256x64xbf16>
      %c0_13 = arith.constant 0 : index
      %c0_14 = arith.constant 0 : index
      %32 = vector.load %arg6[%c0_13, %c0_14] : memref<64x128xbf16, #tpu.memory_space<vmem>>, vector<64x128xbf16>
      %cst_15 = arith.constant dense<0.000000e+00> : vector<256x128xf32>
      %33 = tpu.matmul %31, %32, %cst_15 {dimension_numbers = #tpu.dot_dimension_numbers<[1], [0], [0], [1], [0, 0, 1, 1], [], []>} : vector<256x64xbf16>, vector<64x128xbf16>, vector<256x128xf32> -> vector<256x128xf32>
      %c0_16 = arith.constant 0 : index
      %c0_17 = arith.constant 0 : index
      %c0_18 = arith.constant 0 : index
      %34 = vector.load %arg7[%c0_16, %c0_17, %c0_18] : memref<1x1x128xf32, #tpu.memory_space<vmem>>, vector<1x1x128xf32>
      %cst_19 = arith.constant dense<0.000000e+00> : vector<128xf32>
      %35 = vector.multi_reduction <add>, %33, %cst_19 [0] : vector<256x128xf32> to vector<128xf32>
      %36 = vector.shape_cast %35 : vector<128xf32> to vector<1x128xf32>
      %37 = vector.shape_cast %36 : vector<1x128xf32> to vector<1x1x128xf32>
      %38 = arith.addf %34, %37 : vector<1x1x128xf32>
      %c0_20 = arith.constant 0 : index
      %c0_21 = arith.constant 0 : index
      %c0_22 = arith.constant 0 : index
      %39 = vector.load %arg7[%c0_20, %c0_21, %c0_22] : memref<1x1x128xf32, #tpu.memory_space<vmem>>, vector<1x1x128xf32>
      tpu.vector_store %arg7[%c0_20, %c0_21, %c0_22], %38 {strides = array<i32>} : memref<1x1x128xf32, #tpu.memory_space<vmem>>, vector<1x1x128xf32>,
      %c0_23 = arith.constant 0 : index
      %c0_24 = arith.constant 0 : index
      %c0_25 = arith.constant 0 : index
      %40 = vector.load %arg8[%c0_23, %c0_24, %c0_25] : memref<1x1x128xf32, #tpu.memory_space<vmem>>, vector<1x1x128xf32>
      %41 = arith.mulf %33, %33 : vector<256x128xf32>
      %cst_26 = arith.constant dense<0.000000e+00> : vector<128xf32>
      %42 = vector.multi_reduction <add>, %41, %cst_26 [0] : vector<256x128xf32> to vector<128xf32>
      %43 = vector.shape_cast %42 : vector<128xf32> to vector<1x128xf32>
      %44 = vector.shape_cast %43 : vector<1x128xf32> to vector<1x1x128xf32>
      %45 = arith.addf %40, %44 : vector<1x1x128xf32>
      %c0_27 = arith.constant 0 : index
      %c0_28 = arith.constant 0 : index
      %c0_29 = arith.constant 0 : index
      %46 = vector.load %arg8[%c0_27, %c0_28, %c0_29] : memref<1x1x128xf32, #tpu.memory_space<vmem>>, vector<1x1x128xf32>
      tpu.vector_store %arg8[%c0_27, %c0_28, %c0_29], %45 {strides = array<i32>} : memref<1x1x128xf32, #tpu.memory_space<vmem>>, vector<1x1x128xf32>,
    } else {
    }
    return
  }
  func.func @transform_0(%arg0: i32, %arg1: i32) -> (i32, i32, i32) {
    %c0_i32 = arith.constant 0 : i32
    %c0_i32_0 = arith.constant 0 : i32
    return %arg0, %arg1, %c0_i32 : i32, i32, i32
  }
  func.func @transform_1(%arg0: i32, %arg1: i32) -> (i32, i32) {
    %c0_i32 = arith.constant 0 : i32
    %c0_i32_0 = arith.constant 0 : i32
    %c0_i32_1 = arith.constant 0 : i32
    return %c0_i32, %c0_i32_0 : i32, i32
  }
  func.func @transform_2(%arg0: i32, %arg1: i32) -> (i32, i32) {
    %c0_i32 = arith.constant 0 : i32
    %c0_i32_0 = arith.constant 0 : i32
    %c0_i32_1 = arith.constant 0 : i32
    return %c0_i32, %c0_i32_0 : i32, i32
  }
  func.func @transform_3(%arg0: i32, %arg1: i32) -> (i32, i32) {
    %c0_i32 = arith.constant 0 : i32
    %c0_i32_0 = arith.constant 0 : i32
    %c0_i32_1 = arith.constant 0 : i32
    return %c0_i32, %c0_i32_0 : i32, i32
  }
  func.func @transform_4(%arg0: i32, %arg1: i32) -> (i32, i32) {
    %c0_i32 = arith.constant 0 : i32
    %c0_i32_0 = arith.constant 0 : i32
    %c0_i32_1 = arith.constant 0 : i32
    return %c0_i32, %c0_i32_0 : i32, i32
  }
  func.func @transform_5(%arg0: i32, %arg1: i32) -> (i32, i32, i32) {
    %c0_i32 = arith.constant 0 : i32
    %c0_i32_0 = arith.constant 0 : i32
    %c0_i32_1 = arith.constant 0 : i32
    return %arg0, %c0_i32, %c0_i32_0 : i32, i32, i32
  }
  func.func @transform_6(%arg0: i32, %arg1: i32) -> (i32, i32, i32) {
    %c0_i32 = arith.constant 0 : i32
    %c0_i32_0 = arith.constant 0 : i32
    %c0_i32_1 = arith.constant 0 : i32
    return %arg0, %c0_i32, %c0_i32_0 : i32, i32, i32
  }
}

module attributes {stable_mosaic.version = 11 : i64} {
  func.func @conv3_stats_kernel(%arg0: i32, %arg1: i32, %arg2: memref<1x128x16xbf16, #tpu.memory_space<vmem>>, %arg3: memref<16x64xbf16, #tpu.memory_space<vmem>>, %arg4: memref<1x64xf32, #tpu.memory_space<vmem>>, %arg5: memref<1x64xf32, #tpu.memory_space<vmem>>, %arg6: memref<64x128xbf16, #tpu.memory_space<vmem>>, %arg7: memref<1x128xf32, #tpu.memory_space<vmem>>, %arg8: memref<1x128xf32, #tpu.memory_space<vmem>>, %arg9: memref<128x1024xbf16, #tpu.memory_space<vmem>>, %arg10: memref<1x1x128xf32, #tpu.memory_space<vmem>>, %arg11: memref<1x1x1024xf32, #tpu.memory_space<vmem>>, %arg12: memref<1x1x1024xf32, #tpu.memory_space<vmem>>) attributes {dimension_semantics = [#tpu.dimension_semantics<parallel>, #tpu.dimension_semantics<arbitrary>], iteration_bounds = array<i64: 4, 3>, scalar_prefetch = 0 : i64, scratch_operands = 0 : i64, tpu.core_type = #tpu.core_type<tc>, window_params = [{transform_indices = @transform_0, window_bounds = array<i64: 1, 128, 16>}, {pipeline_mode = #tpu.pipeline_mode<synchronous>, transform_indices = @transform_1, window_bounds = array<i64: 16, 64>}, {pipeline_mode = #tpu.pipeline_mode<synchronous>, transform_indices = @transform_2, window_bounds = array<i64: 1, 64>}, {pipeline_mode = #tpu.pipeline_mode<synchronous>, transform_indices = @transform_3, window_bounds = array<i64: 1, 64>}, {pipeline_mode = #tpu.pipeline_mode<synchronous>, transform_indices = @transform_4, window_bounds = array<i64: 64, 128>}, {pipeline_mode = #tpu.pipeline_mode<synchronous>, transform_indices = @transform_5, window_bounds = array<i64: 1, 128>}, {pipeline_mode = #tpu.pipeline_mode<synchronous>, transform_indices = @transform_6, window_bounds = array<i64: 1, 128>}, {pipeline_mode = #tpu.pipeline_mode<synchronous>, transform_indices = @transform_7, window_bounds = array<i64: 128, 1024>}, {transform_indices = @transform_8, window_bounds = array<i64: 1, 1, 128>}, {transform_indices = @transform_9, window_bounds = array<i64: 1, 1, 1024>}, {transform_indices = @transform_10, window_bounds = array<i64: 1, 1, 1024>}]} {
    %c0_i32 = arith.constant 0 : i32
    %0 = arith.cmpi eq, %arg1, %c0_i32 : i32
    %1 = arith.extui %0 : i1 to i32
    %c0_i32_0 = arith.constant 0 : i32
    %2 = arith.cmpi ne, %1, %c0_i32_0 : i32
    scf.if %2 {
      %cst_21 = arith.constant 0.000000e+00 : f32
      %33 = vector.broadcast %cst_21 : f32 to vector<1x1x128xf32>
      %c0_22 = arith.constant 0 : index
      %c0_23 = arith.constant 0 : index
      %c0_24 = arith.constant 0 : index
      %34 = vector.load %arg10[%c0_22, %c0_23, %c0_24] : memref<1x1x128xf32, #tpu.memory_space<vmem>>, vector<1x1x128xf32>
      tpu.vector_store %arg10[%c0_22, %c0_23, %c0_24], %33 {strides = array<i32>} : memref<1x1x128xf32, #tpu.memory_space<vmem>>, vector<1x1x128xf32>,
      %cst_25 = arith.constant 0.000000e+00 : f32
      %35 = vector.broadcast %cst_25 : f32 to vector<1x1x1024xf32>
      %c0_26 = arith.constant 0 : index
      %c0_27 = arith.constant 0 : index
      %c0_28 = arith.constant 0 : index
      %36 = vector.load %arg11[%c0_26, %c0_27, %c0_28] : memref<1x1x1024xf32, #tpu.memory_space<vmem>>, vector<1x1x1024xf32>
      tpu.vector_store %arg11[%c0_26, %c0_27, %c0_28], %35 {strides = array<i32>} : memref<1x1x1024xf32, #tpu.memory_space<vmem>>, vector<1x1x1024xf32>,
      %cst_29 = arith.constant 0xFF800000 : f32
      %37 = vector.broadcast %cst_29 : f32 to vector<1x1x1024xf32>
      %c0_30 = arith.constant 0 : index
      %c0_31 = arith.constant 0 : index
      %c0_32 = arith.constant 0 : index
      %38 = vector.load %arg12[%c0_30, %c0_31, %c0_32] : memref<1x1x1024xf32, #tpu.memory_space<vmem>>, vector<1x1x1024xf32>
      tpu.vector_store %arg12[%c0_30, %c0_31, %c0_32], %37 {strides = array<i32>} : memref<1x1x1024xf32, #tpu.memory_space<vmem>>, vector<1x1x1024xf32>,
    } else {
    }
    %c0 = arith.constant 0 : index
    %c0_1 = arith.constant 0 : index
    %c0_2 = arith.constant 0 : index
    %3 = vector.load %arg2[%c0, %c0_1, %c0_2] : memref<1x128x16xbf16, #tpu.memory_space<vmem>>, vector<1x128x16xbf16>
    %4 = vector.shape_cast %3 : vector<1x128x16xbf16> to vector<128x16xbf16>
    %c0_3 = arith.constant 0 : index
    %c0_4 = arith.constant 0 : index
    %5 = vector.load %arg3[%c0_3, %c0_4] : memref<16x64xbf16, #tpu.memory_space<vmem>>, vector<16x64xbf16>
    %cst = arith.constant dense<0.000000e+00> : vector<128x64xf32>
    %6 = tpu.matmul %4, %5, %cst {dimension_numbers = #tpu.dot_dimension_numbers<[1], [0], [0], [1], [0, 0, 1, 1], [], []>} : vector<128x16xbf16>, vector<16x64xbf16>, vector<128x64xf32> -> vector<128x64xf32>
    %c0_5 = arith.constant 0 : index
    %c0_6 = arith.constant 0 : index
    %7 = vector.load %arg4[%c0_5, %c0_6] : memref<1x64xf32, #tpu.memory_space<vmem>>, vector<1x64xf32>
    %8 = vector.broadcast %7 : vector<1x64xf32> to vector<128x64xf32>
    %9 = arith.mulf %6, %8 : vector<128x64xf32>
    %c0_7 = arith.constant 0 : index
    %c0_8 = arith.constant 0 : index
    %10 = vector.load %arg5[%c0_7, %c0_8] : memref<1x64xf32, #tpu.memory_space<vmem>>, vector<1x64xf32>
    %11 = vector.broadcast %10 : vector<1x64xf32> to vector<128x64xf32>
    %12 = arith.addf %9, %11 : vector<128x64xf32>
    %cst_9 = arith.constant 0.000000e+00 : f32
    %13 = vector.broadcast %cst_9 : f32 to vector<128x64xf32>
    %14 = arith.maximumf %12, %13 : vector<128x64xf32>
    %15 = arith.truncf %14 : vector<128x64xf32> to vector<128x64xbf16>
    %c0_10 = arith.constant 0 : index
    %c0_11 = arith.constant 0 : index
    %16 = vector.load %arg6[%c0_10, %c0_11] : memref<64x128xbf16, #tpu.memory_space<vmem>>, vector<64x128xbf16>
    %cst_12 = arith.constant dense<0.000000e+00> : vector<128x128xf32>
    %17 = tpu.matmul %15, %16, %cst_12 {dimension_numbers = #tpu.dot_dimension_numbers<[1], [0], [0], [1], [0, 0, 1, 1], [], []>} : vector<128x64xbf16>, vector<64x128xbf16>, vector<128x128xf32> -> vector<128x128xf32>
    %c0_13 = arith.constant 0 : index
    %c0_14 = arith.constant 0 : index
    %18 = vector.load %arg7[%c0_13, %c0_14] : memref<1x128xf32, #tpu.memory_space<vmem>>, vector<1x128xf32>
    %19 = vector.broadcast %18 : vector<1x128xf32> to vector<128x128xf32>
    %20 = arith.mulf %17, %19 : vector<128x128xf32>
    %c0_15 = arith.constant 0 : index
    %c0_16 = arith.constant 0 : index
    %21 = vector.load %arg8[%c0_15, %c0_16] : memref<1x128xf32, #tpu.memory_space<vmem>>, vector<1x128xf32>
    %22 = vector.broadcast %21 : vector<1x128xf32> to vector<128x128xf32>
    %23 = arith.addf %20, %22 : vector<128x128xf32>
    %cst_17 = arith.constant 0.000000e+00 : f32
    %24 = vector.broadcast %cst_17 : f32 to vector<128x128xf32>
    %25 = arith.maximumf %23, %24 : vector<128x128xf32>
    %26 = arith.truncf %25 : vector<128x128xf32> to vector<128x128xbf16>
    %c2_i32 = arith.constant 2 : i32
    %27 = arith.cmpi ne, %arg1, %c2_i32 : i32
    %28 = arith.extui %27 : i1 to i32
    %c0_i32_18 = arith.constant 0 : i32
    %29 = arith.cmpi ne, %28, %c0_i32_18 : i32
    scf.if %29 {
      %c0_21 = arith.constant 0 : index
      %c0_22 = arith.constant 0 : index
      %33 = vector.load %arg9[%c0_21, %c0_22] : memref<128x1024xbf16, #tpu.memory_space<vmem>>, vector<128x1024xbf16>
      %cst_23 = arith.constant dense<0.000000e+00> : vector<128x1024xf32>
      %34 = tpu.matmul %26, %33, %cst_23 {dimension_numbers = #tpu.dot_dimension_numbers<[1], [0], [0], [1], [0, 0, 1, 1], [], []>} : vector<128x128xbf16>, vector<128x1024xbf16>, vector<128x1024xf32> -> vector<128x1024xf32>
      %c0_24 = arith.constant 0 : index
      %c0_25 = arith.constant 0 : index
      %c0_26 = arith.constant 0 : index
      %35 = vector.load %arg10[%c0_24, %c0_25, %c0_26] : memref<1x1x128xf32, #tpu.memory_space<vmem>>, vector<1x1x128xf32>
      %36 = arith.extf %26 : vector<128x128xbf16> to vector<128x128xf32>
      %cst_27 = arith.constant dense<0.000000e+00> : vector<128xf32>
      %37 = vector.multi_reduction <add>, %36, %cst_27 [0] : vector<128x128xf32> to vector<128xf32>
      %38 = vector.shape_cast %37 : vector<128xf32> to vector<1x128xf32>
      %39 = vector.shape_cast %38 : vector<1x128xf32> to vector<1x1x128xf32>
      %40 = arith.addf %35, %39 : vector<1x1x128xf32>
      %c0_28 = arith.constant 0 : index
      %c0_29 = arith.constant 0 : index
      %c0_30 = arith.constant 0 : index
      %41 = vector.load %arg10[%c0_28, %c0_29, %c0_30] : memref<1x1x128xf32, #tpu.memory_space<vmem>>, vector<1x1x128xf32>
      tpu.vector_store %arg10[%c0_28, %c0_29, %c0_30], %40 {strides = array<i32>} : memref<1x1x128xf32, #tpu.memory_space<vmem>>, vector<1x1x128xf32>,
      %c0_31 = arith.constant 0 : index
      %c0_32 = arith.constant 0 : index
      %c0_33 = arith.constant 0 : index
      %42 = vector.load %arg11[%c0_31, %c0_32, %c0_33] : memref<1x1x1024xf32, #tpu.memory_space<vmem>>, vector<1x1x1024xf32>
      %43 = arith.mulf %34, %34 : vector<128x1024xf32>
      %cst_34 = arith.constant dense<0.000000e+00> : vector<1024xf32>
      %44 = vector.multi_reduction <add>, %43, %cst_34 [0] : vector<128x1024xf32> to vector<1024xf32>
      %45 = vector.shape_cast %44 : vector<1024xf32> to vector<1x1024xf32>
      %46 = vector.shape_cast %45 : vector<1x1024xf32> to vector<1x1x1024xf32>
      %47 = arith.addf %42, %46 : vector<1x1x1024xf32>
      %c0_35 = arith.constant 0 : index
      %c0_36 = arith.constant 0 : index
      %c0_37 = arith.constant 0 : index
      %48 = vector.load %arg11[%c0_35, %c0_36, %c0_37] : memref<1x1x1024xf32, #tpu.memory_space<vmem>>, vector<1x1x1024xf32>
      tpu.vector_store %arg11[%c0_35, %c0_36, %c0_37], %47 {strides = array<i32>} : memref<1x1x1024xf32, #tpu.memory_space<vmem>>, vector<1x1x1024xf32>,
      %c0_38 = arith.constant 0 : index
      %c0_39 = arith.constant 0 : index
      %c0_40 = arith.constant 0 : index
      %49 = vector.load %arg12[%c0_38, %c0_39, %c0_40] : memref<1x1x1024xf32, #tpu.memory_space<vmem>>, vector<1x1x1024xf32>
      %cst_41 = arith.constant dense<0xFF800000> : vector<1024xf32>
      %50 = vector.multi_reduction <maximumf>, %34, %cst_41 [0] : vector<128x1024xf32> to vector<1024xf32>
      %51 = vector.shape_cast %50 : vector<1024xf32> to vector<1x1024xf32>
      %52 = vector.shape_cast %51 : vector<1x1024xf32> to vector<1x1x1024xf32>
      %53 = arith.maximumf %49, %52 : vector<1x1x1024xf32>
      %c0_42 = arith.constant 0 : index
      %c0_43 = arith.constant 0 : index
      %c0_44 = arith.constant 0 : index
      %54 = vector.load %arg12[%c0_42, %c0_43, %c0_44] : memref<1x1x1024xf32, #tpu.memory_space<vmem>>, vector<1x1x1024xf32>
      tpu.vector_store %arg12[%c0_42, %c0_43, %c0_44], %53 {strides = array<i32>} : memref<1x1x1024xf32, #tpu.memory_space<vmem>>, vector<1x1x1024xf32>,
    } else {
    }
    %c2_i32_19 = arith.constant 2 : i32
    %30 = arith.cmpi eq, %arg1, %c2_i32_19 : i32
    %31 = arith.extui %30 : i1 to i32
    %c0_i32_20 = arith.constant 0 : i32
    %32 = arith.cmpi ne, %31, %c0_i32_20 : i32
    scf.if %32 {
      %33 = tpu.iota {dimensions = array<i32: 0>} : vector<128x1xi32>
      %c128_i32 = arith.constant 128 : i32
      %34 = arith.muli %arg1, %c128_i32 : i32
      %c300_i32 = arith.constant 300 : i32
      %35 = arith.subi %c300_i32, %34 : i32
      %36 = vector.broadcast %35 : i32 to vector<128x1xi32>
      %37 = arith.cmpi slt, %33, %36 : vector<128x1xi32>
      %38 = arith.extui %37 : vector<128x1xi1> to vector<128x1xi32>
      %39 = arith.sitofp %38 : vector<128x1xi32> to vector<128x1xf32>
      %40 = arith.truncf %39 : vector<128x1xf32> to vector<128x1xbf16>
      %41 = vector.broadcast %40 : vector<128x1xbf16> to vector<128x128xbf16>
      %42 = arith.mulf %26, %41 : vector<128x128xbf16>
      %c0_21 = arith.constant 0 : index
      %c0_22 = arith.constant 0 : index
      %43 = vector.load %arg9[%c0_21, %c0_22] : memref<128x1024xbf16, #tpu.memory_space<vmem>>, vector<128x1024xbf16>
      %cst_23 = arith.constant dense<0.000000e+00> : vector<128x1024xf32>
      %44 = tpu.matmul %42, %43, %cst_23 {dimension_numbers = #tpu.dot_dimension_numbers<[1], [0], [0], [1], [0, 0, 1, 1], [], []>} : vector<128x128xbf16>, vector<128x1024xbf16>, vector<128x1024xf32> -> vector<128x1024xf32>
      %c0_24 = arith.constant 0 : index
      %c0_25 = arith.constant 0 : index
      %c0_26 = arith.constant 0 : index
      %45 = vector.load %arg10[%c0_24, %c0_25, %c0_26] : memref<1x1x128xf32, #tpu.memory_space<vmem>>, vector<1x1x128xf32>
      %46 = arith.extf %42 : vector<128x128xbf16> to vector<128x128xf32>
      %cst_27 = arith.constant dense<0.000000e+00> : vector<128xf32>
      %47 = vector.multi_reduction <add>, %46, %cst_27 [0] : vector<128x128xf32> to vector<128xf32>
      %48 = vector.shape_cast %47 : vector<128xf32> to vector<1x128xf32>
      %49 = vector.shape_cast %48 : vector<1x128xf32> to vector<1x1x128xf32>
      %50 = arith.addf %45, %49 : vector<1x1x128xf32>
      %c0_28 = arith.constant 0 : index
      %c0_29 = arith.constant 0 : index
      %c0_30 = arith.constant 0 : index
      %51 = vector.load %arg10[%c0_28, %c0_29, %c0_30] : memref<1x1x128xf32, #tpu.memory_space<vmem>>, vector<1x1x128xf32>
      tpu.vector_store %arg10[%c0_28, %c0_29, %c0_30], %50 {strides = array<i32>} : memref<1x1x128xf32, #tpu.memory_space<vmem>>, vector<1x1x128xf32>,
      %c0_31 = arith.constant 0 : index
      %c0_32 = arith.constant 0 : index
      %c0_33 = arith.constant 0 : index
      %52 = vector.load %arg11[%c0_31, %c0_32, %c0_33] : memref<1x1x1024xf32, #tpu.memory_space<vmem>>, vector<1x1x1024xf32>
      %53 = arith.mulf %44, %44 : vector<128x1024xf32>
      %cst_34 = arith.constant dense<0.000000e+00> : vector<1024xf32>
      %54 = vector.multi_reduction <add>, %53, %cst_34 [0] : vector<128x1024xf32> to vector<1024xf32>
      %55 = vector.shape_cast %54 : vector<1024xf32> to vector<1x1024xf32>
      %56 = vector.shape_cast %55 : vector<1x1024xf32> to vector<1x1x1024xf32>
      %57 = arith.addf %52, %56 : vector<1x1x1024xf32>
      %c0_35 = arith.constant 0 : index
      %c0_36 = arith.constant 0 : index
      %c0_37 = arith.constant 0 : index
      %58 = vector.load %arg11[%c0_35, %c0_36, %c0_37] : memref<1x1x1024xf32, #tpu.memory_space<vmem>>, vector<1x1x1024xf32>
      tpu.vector_store %arg11[%c0_35, %c0_36, %c0_37], %57 {strides = array<i32>} : memref<1x1x1024xf32, #tpu.memory_space<vmem>>, vector<1x1x1024xf32>,
      %cst_38 = arith.constant 0xFF800000 : f32
      %59 = vector.shape_cast %37 : vector<128x1xi1> to vector<128x1xi1>
      %60 = vector.broadcast %59 : vector<128x1xi1> to vector<128x1024xi1>
      %61 = vector.broadcast %cst_38 : f32 to vector<128x1024xf32>
      %62 = arith.select %60, %44, %61 : vector<128x1024xi1>, vector<128x1024xf32>
      %c0_39 = arith.constant 0 : index
      %c0_40 = arith.constant 0 : index
      %c0_41 = arith.constant 0 : index
      %63 = vector.load %arg12[%c0_39, %c0_40, %c0_41] : memref<1x1x1024xf32, #tpu.memory_space<vmem>>, vector<1x1x1024xf32>
      %cst_42 = arith.constant dense<0xFF800000> : vector<1024xf32>
      %64 = vector.multi_reduction <maximumf>, %62, %cst_42 [0] : vector<128x1024xf32> to vector<1024xf32>
      %65 = vector.shape_cast %64 : vector<1024xf32> to vector<1x1024xf32>
      %66 = vector.shape_cast %65 : vector<1x1024xf32> to vector<1x1x1024xf32>
      %67 = arith.maximumf %63, %66 : vector<1x1x1024xf32>
      %c0_43 = arith.constant 0 : index
      %c0_44 = arith.constant 0 : index
      %c0_45 = arith.constant 0 : index
      %68 = vector.load %arg12[%c0_43, %c0_44, %c0_45] : memref<1x1x1024xf32, #tpu.memory_space<vmem>>, vector<1x1x1024xf32>
      tpu.vector_store %arg12[%c0_43, %c0_44, %c0_45], %67 {strides = array<i32>} : memref<1x1x1024xf32, #tpu.memory_space<vmem>>, vector<1x1x1024xf32>,
    } else {
    }
    return
  }
  func.func @transform_0(%arg0: i32, %arg1: i32) -> (i32, i32, i32) {
    %c0_i32 = arith.constant 0 : i32
    %c0_i32_0 = arith.constant 0 : i32
    return %arg0, %arg1, %c0_i32 : i32, i32, i32
  }
  func.func @transform_1(%arg0: i32, %arg1: i32) -> (i32, i32) {
    %c0_i32 = arith.constant 0 : i32
    %c0_i32_0 = arith.constant 0 : i32
    %c0_i32_1 = arith.constant 0 : i32
    return %c0_i32, %c0_i32_0 : i32, i32
  }
  func.func @transform_2(%arg0: i32, %arg1: i32) -> (i32, i32) {
    %c0_i32 = arith.constant 0 : i32
    %c0_i32_0 = arith.constant 0 : i32
    %c0_i32_1 = arith.constant 0 : i32
    return %c0_i32, %c0_i32_0 : i32, i32
  }
  func.func @transform_3(%arg0: i32, %arg1: i32) -> (i32, i32) {
    %c0_i32 = arith.constant 0 : i32
    %c0_i32_0 = arith.constant 0 : i32
    %c0_i32_1 = arith.constant 0 : i32
    return %c0_i32, %c0_i32_0 : i32, i32
  }
  func.func @transform_4(%arg0: i32, %arg1: i32) -> (i32, i32) {
    %c0_i32 = arith.constant 0 : i32
    %c0_i32_0 = arith.constant 0 : i32
    %c0_i32_1 = arith.constant 0 : i32
    return %c0_i32, %c0_i32_0 : i32, i32
  }
  func.func @transform_5(%arg0: i32, %arg1: i32) -> (i32, i32) {
    %c0_i32 = arith.constant 0 : i32
    %c0_i32_0 = arith.constant 0 : i32
    %c0_i32_1 = arith.constant 0 : i32
    return %c0_i32, %c0_i32_0 : i32, i32
  }
  func.func @transform_6(%arg0: i32, %arg1: i32) -> (i32, i32) {
    %c0_i32 = arith.constant 0 : i32
    %c0_i32_0 = arith.constant 0 : i32
    %c0_i32_1 = arith.constant 0 : i32
    return %c0_i32, %c0_i32_0 : i32, i32
  }
  func.func @transform_7(%arg0: i32, %arg1: i32) -> (i32, i32) {
    %c0_i32 = arith.constant 0 : i32
    %c0_i32_0 = arith.constant 0 : i32
    %c0_i32_1 = arith.constant 0 : i32
    return %c0_i32, %c0_i32_0 : i32, i32
  }
  func.func @transform_8(%arg0: i32, %arg1: i32) -> (i32, i32, i32) {
    %c0_i32 = arith.constant 0 : i32
    %c0_i32_0 = arith.constant 0 : i32
    %c0_i32_1 = arith.constant 0 : i32
    return %arg0, %c0_i32, %c0_i32_0 : i32, i32, i32
  }
  func.func @transform_9(%arg0: i32, %arg1: i32) -> (i32, i32, i32) {
    %c0_i32 = arith.constant 0 : i32
    %c0_i32_0 = arith.constant 0 : i32
    %c0_i32_1 = arith.constant 0 : i32
    return %arg0, %c0_i32, %c0_i32_0 : i32, i32, i32
  }
  func.func @transform_10(%arg0: i32, %arg1: i32) -> (i32, i32, i32) {
    %c0_i32 = arith.constant 0 : i32
    %c0_i32_0 = arith.constant 0 : i32
    %c0_i32_1 = arith.constant 0 : i32
    return %arg0, %c0_i32, %c0_i32_0 : i32, i32, i32
  }
}

module attributes {stable_mosaic.version = 11 : i64} {
  func.func @fc_head_kernel(%arg0: memref<4x1024xf32, #tpu.memory_space<vmem>>, %arg1: memref<1x1024xf32, #tpu.memory_space<vmem>>, %arg2: memref<1x1024xf32, #tpu.memory_space<vmem>>, %arg3: memref<1024x512xbf16, #tpu.memory_space<vmem>>, %arg4: memref<1x512xf32, #tpu.memory_space<vmem>>, %arg5: memref<1x512xf32, #tpu.memory_space<vmem>>, %arg6: memref<512x256xbf16, #tpu.memory_space<vmem>>, %arg7: memref<1x256xf32, #tpu.memory_space<vmem>>, %arg8: memref<1x256xf32, #tpu.memory_space<vmem>>, %arg9: memref<256x256xbf16, #tpu.memory_space<vmem>>, %arg10: memref<1x256xf32, #tpu.memory_space<vmem>>, %arg11: memref<4x256xf32, #tpu.memory_space<vmem>>) attributes {dimension_semantics = [], scalar_prefetch = 0 : i64, scratch_operands = 0 : i64, tpu.core_type = #tpu.core_type<tc>} {
    %c0 = arith.constant 0 : index
    %c0_0 = arith.constant 0 : index
    %0 = vector.load %arg0[%c0, %c0_0] : memref<4x1024xf32, #tpu.memory_space<vmem>>, vector<4x1024xf32>
    %c0_1 = arith.constant 0 : index
    %c0_2 = arith.constant 0 : index
    %1 = vector.load %arg1[%c0_1, %c0_2] : memref<1x1024xf32, #tpu.memory_space<vmem>>, vector<1x1024xf32>
    %2 = vector.broadcast %1 : vector<1x1024xf32> to vector<4x1024xf32>
    %3 = arith.mulf %0, %2 : vector<4x1024xf32>
    %c0_3 = arith.constant 0 : index
    %c0_4 = arith.constant 0 : index
    %4 = vector.load %arg2[%c0_3, %c0_4] : memref<1x1024xf32, #tpu.memory_space<vmem>>, vector<1x1024xf32>
    %5 = vector.broadcast %4 : vector<1x1024xf32> to vector<4x1024xf32>
    %6 = arith.addf %3, %5 : vector<4x1024xf32>
    %cst = arith.constant 0.000000e+00 : f32
    %7 = vector.broadcast %cst : f32 to vector<4x1024xf32>
    %8 = arith.maximumf %6, %7 : vector<4x1024xf32>
    %9 = arith.truncf %8 : vector<4x1024xf32> to vector<4x1024xbf16>
    %c0_5 = arith.constant 0 : index
    %c0_6 = arith.constant 0 : index
    %10 = vector.load %arg3[%c0_5, %c0_6] : memref<1024x512xbf16, #tpu.memory_space<vmem>>, vector<1024x512xbf16>
    %cst_7 = arith.constant dense<0.000000e+00> : vector<4x512xf32>
    %11 = tpu.matmul %9, %10, %cst_7 {dimension_numbers = #tpu.dot_dimension_numbers<[1], [0], [0], [1], [0, 0, 1, 1], [], []>} : vector<4x1024xbf16>, vector<1024x512xbf16>, vector<4x512xf32> -> vector<4x512xf32>
    %c0_8 = arith.constant 0 : index
    %c0_9 = arith.constant 0 : index
    %12 = vector.load %arg4[%c0_8, %c0_9] : memref<1x512xf32, #tpu.memory_space<vmem>>, vector<1x512xf32>
    %c0_10 = arith.constant 0 : index
    %c0_11 = arith.constant 0 : index
    %13 = vector.load %arg5[%c0_10, %c0_11] : memref<1x512xf32, #tpu.memory_space<vmem>>, vector<1x512xf32>
    %cst_12 = arith.constant dense<0.000000e+00> : vector<512xf32>
    %14 = vector.multi_reduction <add>, %11, %cst_12 [0] : vector<4x512xf32> to vector<512xf32>
    %15 = vector.shape_cast %14 : vector<512xf32> to vector<1x512xf32>
    %cst_13 = arith.constant 4.000000e+00 : f32
    %16 = vector.broadcast %cst_13 : f32 to vector<1x512xf32>
    %17 = arith.divf %15, %16 : vector<1x512xf32>
    %18 = vector.broadcast %17 : vector<1x512xf32> to vector<4x512xf32>
    %19 = arith.subf %11, %18 : vector<4x512xf32>
    %20 = arith.mulf %19, %19 : vector<4x512xf32>
    %cst_14 = arith.constant dense<0.000000e+00> : vector<512xf32>
    %21 = vector.multi_reduction <add>, %20, %cst_14 [0] : vector<4x512xf32> to vector<512xf32>
    %22 = vector.shape_cast %21 : vector<512xf32> to vector<1x512xf32>
    %cst_15 = arith.constant 4.000000e+00 : f32
    %23 = vector.broadcast %cst_15 : f32 to vector<1x512xf32>
    %24 = arith.divf %22, %23 : vector<1x512xf32>
    %cst_16 = arith.constant 9.99999974E-6 : f32
    %25 = vector.broadcast %cst_16 : f32 to vector<1x512xf32>
    %26 = arith.addf %24, %25 : vector<1x512xf32>
    %27 = math.rsqrt %26 : vector<1x512xf32>
    %28 = arith.mulf %12, %27 : vector<1x512xf32>
    %29 = vector.broadcast %28 : vector<1x512xf32> to vector<4x512xf32>
    %30 = arith.mulf %11, %29 : vector<4x512xf32>
    %31 = arith.mulf %17, %28 : vector<1x512xf32>
    %32 = arith.subf %13, %31 : vector<1x512xf32>
    %33 = vector.broadcast %32 : vector<1x512xf32> to vector<4x512xf32>
    %34 = arith.addf %30, %33 : vector<4x512xf32>
    %cst_17 = arith.constant 0.000000e+00 : f32
    %35 = vector.broadcast %cst_17 : f32 to vector<4x512xf32>
    %36 = arith.maximumf %34, %35 : vector<4x512xf32>
    %37 = arith.truncf %36 : vector<4x512xf32> to vector<4x512xbf16>
    %c0_18 = arith.constant 0 : index
    %c0_19 = arith.constant 0 : index
    %38 = vector.load %arg6[%c0_18, %c0_19] : memref<512x256xbf16, #tpu.memory_space<vmem>>, vector<512x256xbf16>
    %cst_20 = arith.constant dense<0.000000e+00> : vector<4x256xf32>
    %39 = tpu.matmul %37, %38, %cst_20 {dimension_numbers = #tpu.dot_dimension_numbers<[1], [0], [0], [1], [0, 0, 1, 1], [], []>} : vector<4x512xbf16>, vector<512x256xbf16>, vector<4x256xf32> -> vector<4x256xf32>
    %c0_21 = arith.constant 0 : index
    %c0_22 = arith.constant 0 : index
    %40 = vector.load %arg7[%c0_21, %c0_22] : memref<1x256xf32, #tpu.memory_space<vmem>>, vector<1x256xf32>
    %c0_23 = arith.constant 0 : index
    %c0_24 = arith.constant 0 : index
    %41 = vector.load %arg8[%c0_23, %c0_24] : memref<1x256xf32, #tpu.memory_space<vmem>>, vector<1x256xf32>
    %cst_25 = arith.constant dense<0.000000e+00> : vector<256xf32>
    %42 = vector.multi_reduction <add>, %39, %cst_25 [0] : vector<4x256xf32> to vector<256xf32>
    %43 = vector.shape_cast %42 : vector<256xf32> to vector<1x256xf32>
    %cst_26 = arith.constant 4.000000e+00 : f32
    %44 = vector.broadcast %cst_26 : f32 to vector<1x256xf32>
    %45 = arith.divf %43, %44 : vector<1x256xf32>
    %46 = vector.broadcast %45 : vector<1x256xf32> to vector<4x256xf32>
    %47 = arith.subf %39, %46 : vector<4x256xf32>
    %48 = arith.mulf %47, %47 : vector<4x256xf32>
    %cst_27 = arith.constant dense<0.000000e+00> : vector<256xf32>
    %49 = vector.multi_reduction <add>, %48, %cst_27 [0] : vector<4x256xf32> to vector<256xf32>
    %50 = vector.shape_cast %49 : vector<256xf32> to vector<1x256xf32>
    %cst_28 = arith.constant 4.000000e+00 : f32
    %51 = vector.broadcast %cst_28 : f32 to vector<1x256xf32>
    %52 = arith.divf %50, %51 : vector<1x256xf32>
    %cst_29 = arith.constant 9.99999974E-6 : f32
    %53 = vector.broadcast %cst_29 : f32 to vector<1x256xf32>
    %54 = arith.addf %52, %53 : vector<1x256xf32>
    %55 = math.rsqrt %54 : vector<1x256xf32>
    %56 = arith.mulf %40, %55 : vector<1x256xf32>
    %57 = vector.broadcast %56 : vector<1x256xf32> to vector<4x256xf32>
    %58 = arith.mulf %39, %57 : vector<4x256xf32>
    %59 = arith.mulf %45, %56 : vector<1x256xf32>
    %60 = arith.subf %41, %59 : vector<1x256xf32>
    %61 = vector.broadcast %60 : vector<1x256xf32> to vector<4x256xf32>
    %62 = arith.addf %58, %61 : vector<4x256xf32>
    %cst_30 = arith.constant 0.000000e+00 : f32
    %63 = vector.broadcast %cst_30 : f32 to vector<4x256xf32>
    %64 = arith.maximumf %62, %63 : vector<4x256xf32>
    %65 = arith.truncf %64 : vector<4x256xf32> to vector<4x256xbf16>
    %c0_31 = arith.constant 0 : index
    %c0_32 = arith.constant 0 : index
    %66 = vector.load %arg9[%c0_31, %c0_32] : memref<256x256xbf16, #tpu.memory_space<vmem>>, vector<256x256xbf16>
    %cst_33 = arith.constant dense<0.000000e+00> : vector<4x256xf32>
    %67 = tpu.matmul %65, %66, %cst_33 {dimension_numbers = #tpu.dot_dimension_numbers<[1], [0], [0], [1], [0, 0, 1, 1], [], []>} : vector<4x256xbf16>, vector<256x256xbf16>, vector<4x256xf32> -> vector<4x256xf32>
    %c0_34 = arith.constant 0 : index
    %c0_35 = arith.constant 0 : index
    %68 = vector.load %arg10[%c0_34, %c0_35] : memref<1x256xf32, #tpu.memory_space<vmem>>, vector<1x256xf32>
    %69 = vector.broadcast %68 : vector<1x256xf32> to vector<4x256xf32>
    %70 = arith.addf %67, %69 : vector<4x256xf32>
    %c0_36 = arith.constant 0 : index
    %c0_37 = arith.constant 0 : index
    %71 = vector.load %arg11[%c0_36, %c0_37] : memref<4x256xf32, #tpu.memory_space<vmem>>, vector<4x256xf32>
    tpu.vector_store %arg11[%c0_36, %c0_37], %70 {strides = array<i32>} : memref<4x256xf32, #tpu.memory_space<vmem>>, vector<4x256xf32>,
    return
  }
}

</mosaic_0001>

<llo_original>
// kernel: stnkd_forward.4
$region0: #{stnkd_forward.4}
  #allocation0 [shape = 'u32[]', space=smem, size = 0x4, offset = 0x4, fixed_abs, tag = 'smem constant byte address 0x4 - core index']
  #allocation1 [shape = 'u32[144,128]{1,0:T(1,128)}', space=vmem, size = 0x12000, scoped, tag = 'internal scratch']
  %s0 = inlined_call_operand.vmem [shape: bf16[4,512,16], index: 0, kind: input, shape index: {}]
  %s1 = inlined_call_operand.vmem [shape: bf16[16,128], index: 1, kind: input, shape index: {}]
  %s2 = inlined_call_operand.vmem [shape: f32[4,1,128], index: 2, kind: output, shape index: {0}]
  %s3 = inlined_call_operand.vmem [shape: f32[4,1,128], index: 3, kind: output, shape index: {1}]
  %4 = xla_tuple %s2, %s3
  %s5 = sld [smem:[#allocation0]]
  $region53: #{stnkd_forward.4} parent=0
    _
  %s7 = ssub.s32 1, %s5
  %s8 = scalar_select 0, %s7, %s5
  loop: start=0, step=1, limit=10
  $region2: #{stnkd_forward.4} parent=0 // loop_pre_header
    _
  $region3: #{stnkd_forward.4} parent=0 // loop_header
    %s10 = sphi 0, %s14
    %p11 = scmp.ge.s32.totalorder %s10, 10
    %s17 = sphi 0, %s29
    %s18 = sphi 0, %s25
    %s19 = sphi 0, %s17
    %s20 = sphi 0, %s18
    %s21 = sphi 0, %s19
    %s22 = sphi 0, %s20
    %s34 = sphi 0, %s36
    %s37 = sphi 0, %s34
    %s38 = sphi 0, %s37
    %s54 = sphi 0, %s38
    %s58 = sphi 0, %s58
    %s60 = sphi 0, %s58
    %s61 = sphi 0, %s60
    %s75 = sphi 0, %s61
    %s81 = sphi 0, %s83
    %s84 = sphi 0, %s81
    %s85 = sphi 0, %s84
    %s101 = sphi 0, %s85
    %s107 = sphi 0, %s109
    %s110 = sphi 0, %s107
    %s111 = sphi 0, %s110
    %s127 = sphi 0, %s111
  $region4: #{stnkd_forward.4} parent=0 // loop_header_branch
    %13 = sbr.rel (%p11) target = $region8
  $region5: #{stnkd_forward.4} parent=0 // loop_body
    %s15 = ssub.s32 %s10, 1
    %s16 = ssub.s32 %s10, 2
    %s23 = sadd.s32 1, %s18
    %p24 = scmp.ge.s32.totalorder %s23, 2
    %s25 = scalar_select %p24, 0, %s23
    %s26 = sadd.s32 1, %s17
    %s27 = scalar_select %p24, %s26, %s17
    %p28 = scmp.ge.s32.totalorder %s27, 4
    %s29 = scalar_select %p28, 0, %s27
    %s30 = ssub.s32 %s17, %s29
    %s31 = ssub.s32 %s18, %s25
    %s32 = sor.u32 %s30, %s31
    %p33 = scmp.eq.s32.totalorder %s32, 0
    %s35 = sadd.s32 %s34, 1
    %s36 = scalar_select %p33, %s34, %s35
    %p39 = pneg %p33
    %p40 = scmp.eq.s32.totalorder %s10, 7
    %p41 = por %p39, %p40
    %p42 = scmp.ne.s32.totalorder %s34, %s37
    %p43 = scmp.eq.s32.totalorder %s10, 0
    %p44 = por %p42, %p43
    %p45 = scmp.ne.s32.totalorder %s34, %s37
    %p46 = scmp.eq.s32.totalorder %s15, 7
    %p47 = por %p45, %p46
    %p48 = scmp.ne.s32.totalorder %s37, %s38
    %p49 = scmp.eq.s32.totalorder %s15, 0
    %p50 = por %p48, %p49
    %p51 = scmp.ne.s32.totalorder %s37, %s38
    %p52 = scmp.eq.s32.totalorder %s16, 7
    %p53 = por %p51, %p52
    %p55 = scmp.ne.s32.totalorder %s38, %s54
    %p56 = scmp.eq.s32.totalorder %s16, 0
    %p57 = por %p55, %p56
    %s59 = sadd.s32 %s58, 1
    %p62 = scmp.eq.s32.totalorder %s10, 7
    %p63 = scmp.ne.s32.totalorder %s58, %s60
    %p64 = scmp.eq.s32.totalorder %s10, 0
    %p65 = por %p63, %p64
    %p66 = scmp.ne.s32.totalorder %s58, %s60
    %p67 = scmp.eq.s32.totalorder %s15, 7
    %p68 = por %p66, %p67
    %p69 = scmp.ne.s32.totalorder %s60, %s61
    %p70 = scmp.eq.s32.totalorder %s15, 0
    %p71 = por %p69, %p70
    %p72 = scmp.ne.s32.totalorder %s60, %s61
    %p73 = scmp.eq.s32.totalorder %s16, 7
    %p74 = por %p72, %p73
    %p76 = scmp.ne.s32.totalorder %s61, %s75
    %p77 = scmp.eq.s32.totalorder %s16, 0
    %p78 = por %p76, %p77
    %s79 = ssub.s32 %s17, %s29
    %p80 = scmp.eq.s32.totalorder %s79, 0
    %s82 = sadd.s32 %s81, 1
    %s83 = scalar_select %p80, %s81, %s82
    %p86 = pneg %p80
    %p87 = scmp.eq.s32.totalorder %s10, 7
    %p88 = por %p86, %p87
    %p89 = scmp.ne.s32.totalorder %s81, %s84
    %p90 = scmp.eq.s32.totalorder %s10, 0
    %p91 = por %p89, %p90
    %p92 = scmp.ne.s32.totalorder %s81, %s84
    %p93 = scmp.eq.s32.totalorder %s15, 7
    %p94 = por %p92, %p93
    %p95 = scmp.ne.s32.totalorder %s84, %s85
    %p96 = scmp.eq.s32.totalorder %s15, 0
    %p97 = por %p95, %p96
    %p98 = scmp.ne.s32.totalorder %s84, %s85
    %p99 = scmp.eq.s32.totalorder %s16, 7
    %p100 = por %p98, %p99
    %p102 = scmp.ne.s32.totalorder %s85, %s101
    %p103 = scmp.eq.s32.totalorder %s16, 0
    %p104 = por %p102, %p103
    %s105 = ssub.s32 %s17, %s29
    %p106 = scmp.eq.s32.totalorder %s105, 0
    %s108 = sadd.s32 %s107, 1
    %s109 = scalar_select %p106, %s107, %s108
    %p112 = pneg %p106
    %p113 = scmp.eq.s32.totalorder %s10, 7
    %p114 = por %p112, %p113
    %p115 = scmp.ne.s32.totalorder %s107, %s110
    %p116 = scmp.eq.s32.totalorder %s10, 0
    %p117 = por %p115, %p116
    %p118 = scmp.ne.s32.totalorder %s107, %s110
    %p119 = scmp.eq.s32.totalorder %s15, 7
    %p120 = por %p118, %p119
    %p121 = scmp.ne.s32.totalorder %s110, %s111
    %p122 = scmp.eq.s32.totalorder %s15, 0
    %p123 = por %p121, %p122
    %p124 = scmp.ne.s32.totalorder %s110, %s111
    %p125 = scmp.eq.s32.totalorder %s16, 7
    %p126 = por %p124, %p125
    %p128 = scmp.ne.s32.totalorder %s111, %s127
    %p129 = scmp.eq.s32.totalorder %s16, 0
    %p130 = por %p128, %p129
    %p131 = scmp.le.s32.totalorder 1, %s10
    %p132 = scmp.lt.s32.totalorder %s10, 9
    %p133 = pnand %p131, %p132
    %p134 = pneg %p133
    // Predicated region
    $region9: #{stnkd_forward.4} parent=5 // pred_check
      _
    $region10: #{stnkd_forward.4} parent=5 // pred_check_branch
      %136 = sbr.rel (%p133) target = $region12
    $region11: #{stnkd_forward.4} parent=5 // pred_region
      %s137 = ssub.s32 %s10, 1
      // Predicated region
      $region13: #{stnkd_forward.4} parent=11 // pred_check
        %p138 = pneg %p71
      $region14: #{stnkd_forward.4} parent=11 // pred_check_branch
        %140 = sbr.rel (%p138) target = $region16
      $region15: #{stnkd_forward.4} parent=11 // pred_region
        _
      $region16: #{stnkd_forward.4} parent=11 // pred_fallthru
        _
    $region12: #{stnkd_forward.4} parent=5 // pred_fallthru
      _
    %p141 = scmp.lt.s32.totalorder %s10, 8
    // Predicated region
    $region17: #{stnkd_forward.4} parent=5 // pred_check
      %p142 = pneg %p141
    $region18: #{stnkd_forward.4} parent=5 // pred_check_branch
      %144 = sbr.rel (%p142) target = $region20
    $region19: #{stnkd_forward.4} parent=5 // pred_region
      // Predicated region
      $region21: #{stnkd_forward.4} parent=19 // pred_check
        %p145 = pneg %p44
      $region22: #{stnkd_forward.4} parent=19 // pred_check_branch
        %147 = sbr.rel (%p145) target = $region24
      $region23: #{stnkd_forward.4} parent=19 // pred_region
        %s148 = smul.u32 32, %s18
        %p149 = scmp.lt.s32.totalorder %s17, 3
        %s150 = scalar_select %p149, %s17, 3
        %p151 = scmp.lt.s32.totalorder %s148, 63
        %s152 = scalar_select %p151, %s148, 63
        %s153 = smul.addr %s150, 64
        %s154 = sadd.s32 %s152, %s153
        %s155 = smul.addr %s154, 4
        %s156 = scalar_lea.vmem %s0, %s155
        %s157 = smul.u32 32, %s18
      $region24: #{stnkd_forward.4} parent=19 // pred_fallthru
        _
    $region20: #{stnkd_forward.4} parent=5 // pred_fallthru
      _
    %p158 = scmp.le.s32.totalorder 1, %s10
    %p159 = scmp.lt.s32.totalorder %s10, 9
    %p160 = pnand %p158, %p159
    %p161 = pneg %p160
    // Predicated region
    $region25: #{stnkd_forward.4} parent=5 // pred_check
      _
    $region26: #{stnkd_forward.4} parent=5 // pred_check_branch
      %163 = sbr.rel (%p160) target = $region28
    $region27: #{stnkd_forward.4} parent=5 // pred_region
      %s164 = ssub.s32 %s10, 1
      %s165 = smul.u32 32, %s20
      %p166 = scmp.lt.s32.totalorder %s19, 3
      %s167 = scalar_select %p166, %s19, 3
      %p168 = scmp.lt.s32.totalorder %s165, 63
      %s169 = scalar_select %p168, %s165, 63
      %s170 = smul.addr %s167, 64
      %s171 = sadd.s32 %s169, %s170
      %s172 = smul.addr %s171, 4
      %s173 = scalar_lea.vmem %s0, %s172
      %p174 = pneg %p50
      %p175 = pneg %p47
      %p176 = pneg %p71
      %p177 = pneg %p68
      %p178 = pneg %p97
      %p179 = pneg %p94
      %p180 = scmp.lt.s32.totalorder %s19, 3
      %s181 = scalar_select %p180, %s19, 3
      %s182 = scalar_lea.vmem %s2, %s181
      %p183 = pneg %p123
      %p184 = pneg %p120
      %p185 = scmp.lt.s32.totalorder %s19, 3
      %s186 = scalar_select %p185, %s19, 3
      %s187 = scalar_lea.vmem %s3, %s186
      %s188 = smul.u32 32, %s20
      %p189 = scmp.lt.s32.totalorder %s19, 3
      %s190 = scalar_select %p189, %s19, 3
      %p191 = scmp.lt.s32.totalorder %s188, 63
      %s192 = scalar_select %p191, %s188, 63
      %s193 = smul.addr %s190, 64
      %s194 = sadd.s32 %s192, %s193
      %s195 = smul.addr %s194, 4
      %s196 = scalar_lea.vmem %s0, %s195
      %s197 = smul.u32 32, %s20
      %p198 = scmp.lt.s32.totalorder %s19, 3
      %s199 = scalar_select %p198, %s19, 3
      %s200 = scalar_lea.vmem %s2, %s199
      %p201 = scmp.lt.s32.totalorder %s19, 3
      %s202 = scalar_select %p201, %s19, 3
      %s203 = scalar_lea.vmem %s3, %s202
      %p205 = scmp.eq.s32.totalorder %s20, 0
      // Predicated region
      $region29: #{stnkd_forward.4} parent=27 // pred_check
        %p206 = pneg %p205
      $region30: #{stnkd_forward.4} parent=27 // pred_check_branch
        %208 = sbr.rel (%p206) target = $region32
      $region31: #{stnkd_forward.4} parent=27 // pred_region
        %209 = vst [vmem:[%s200] sm:$0x1] 0.0
        %210 = vst [vmem:[%s203] sm:$0x1] 0.0
      $region32: #{stnkd_forward.4} parent=27 // pred_fallthru
        _
      %v211 = vld [vmem:[%s196] sm:$0xf]
      %v212 = vld [vmem:[%s196 + $0x4] sm:$0xf]
      %v213 = vld [vmem:[%s196 + $0x8] sm:$0xf]
      %v214 = vld [vmem:[%s196 + $0xc] sm:$0xf]
      %v215 = vld [vmem:[%s196 + $0x10] sm:$0xf]
      %v216 = vld [vmem:[%s196 + $0x14] sm:$0xf]
      %v217 = vld [vmem:[%s196 + $0x18] sm:$0xf]
      %v218 = vld [vmem:[%s196 + $0x1c] sm:$0xf]
      %v219 = vld [vmem:[%s196 + $0x20] sm:$0xf]
      %v220 = vld [vmem:[%s196 + $0x24] sm:$0xf]
      %v221 = vld [vmem:[%s196 + $0x28] sm:$0xf]
      %v222 = vld [vmem:[%s196 + $0x2c] sm:$0xf]
      %v223 = vld [vmem:[%s196 + $0x30] sm:$0xf]
      %v224 = vld [vmem:[%s196 + $0x34] sm:$0xf]
      %v225 = vld [vmem:[%s196 + $0x38] sm:$0xf]
      %v226 = vld [vmem:[%s196 + $0x3c] sm:$0xf]
      %v227 = vld [vmem:[%s196 + $0x40] sm:$0xf]
      %v228 = vld [vmem:[%s196 + $0x44] sm:$0xf]
      %v229 = vld [vmem:[%s196 + $0x48] sm:$0xf]
      %v230 = vld [vmem:[%s196 + $0x4c] sm:$0xf]
      %v231 = vld [vmem:[%s196 + $0x50] sm:$0xf]
      %v232 = vld [vmem:[%s196 + $0x54] sm:$0xf]
      %v233 = vld [vmem:[%s196 + $0x58] sm:$0xf]
      %v234 = vld [vmem:[%s196 + $0x5c] sm:$0xf]
      %v235 = vld [vmem:[%s196 + $0x60] sm:$0xf]
      %v236 = vld [vmem:[%s196 + $0x64] sm:$0xf]
      %v237 = vld [vmem:[%s196 + $0x68] sm:$0xf]
      %v238 = vld [vmem:[%s196 + $0x6c] sm:$0xf]
      %v239 = vld [vmem:[%s196 + $0x70] sm:$0xf]
      %v240 = vld [vmem:[%s196 + $0x74] sm:$0xf]
      %v241 = vld [vmem:[%s196 + $0x78] sm:$0xf]
      %v242 = vld [vmem:[%s196 + $0x7c] sm:$0xf]
      %v243 = vld [vmem:[%s1] sm:$0xf]
      %v244 = vld [vmem:[%s1 + $0x4] sm:$0xf]
      %v277 = vunpack.c.l.b16 %v211
      %v278 = vunpack.c.l.b16 %v212
      %v279 = vunpack.c.l.b16 %v213
      %v280 = vunpack.c.l.b16 %v214
      %v281 = vunpack.c.l.b16 %v215
      %v282 = vunpack.c.l.b16 %v216
      %v283 = vunpack.c.l.b16 %v217
      %v284 = vunpack.c.l.b16 %v218
      %v285 = vunpack.c.l.b16 %v219
      %v286 = vunpack.c.l.b16 %v220
      %v287 = vunpack.c.l.b16 %v221
      %v288 = vunpack.c.l.b16 %v222
      %v289 = vunpack.c.l.b16 %v223
      %v290 = vunpack.c.l.b16 %v224
      %v291 = vunpack.c.l.b16 %v225
      %v292 = vunpack.c.l.b16 %v226
      %v293 = vunpack.c.l.b16 %v227
      %v294 = vunpack.c.l.b16 %v228
      %v295 = vunpack.c.l.b16 %v229
      %v296 = vunpack.c.l.b16 %v230
      %v297 = vunpack.c.l.b16 %v231
      %v298 = vunpack.c.l.b16 %v232
      %v299 = vunpack.c.l.b16 %v233
      %v300 = vunpack.c.l.b16 %v234
      %v301 = vunpack.c.l.b16 %v235
      %v302 = vunpack.c.l.b16 %v236
      %v303 = vunpack.c.l.b16 %v237
      %v304 = vunpack.c.l.b16 %v238
      %v305 = vunpack.c.l.b16 %v239
      %v306 = vunpack.c.l.b16 %v240
      %v307 = vunpack.c.l.b16 %v241
      %v308 = vunpack.c.l.b16 %v242
      %v309 = vpack.c.b16 %v278, %v277
      %v310 = vpack.c.b16 %v280, %v279
      %v311 = vpack.c.b16 %v282, %v281
      %v312 = vpack.c.b16 %v284, %v283
      %v313 = vpack.c.b16 %v286, %v285
      %v314 = vpack.c.b16 %v288, %v287
      %v315 = vpack.c.b16 %v290, %v289
      %v316 = vpack.c.b16 %v292, %v291
      %v317 = vpack.c.b16 %v294, %v293
      %v318 = vpack.c.b16 %v296, %v295
      %v319 = vpack.c.b16 %v298, %v297
      %v320 = vpack.c.b16 %v300, %v299
      %v321 = vpack.c.b16 %v302, %v301
      %v322 = vpack.c.b16 %v304, %v303
      %v323 = vpack.c.b16 %v306, %v305
      %v324 = vpack.c.b16 %v308, %v307
      %v327 = vunpack.c.l.b16 %v243
      %v328 = vunpack.c.l.b16 %v244
      %v329 = vpack.c.b16 %v328, %v327
      %vm331 = vcmask 130048
      %v333 = vsel %vm331, %v309, 0
      %v336 = vsel %vm331, %v310, 0
      %v339 = vsel %vm331, %v311, 0
      %v342 = vsel %vm331, %v312, 0
      %v345 = vsel %vm331, %v313, 0
      %v348 = vsel %vm331, %v314, 0
      %v351 = vsel %vm331, %v315, 0
      %v354 = vsel %vm331, %v316, 0
      %v357 = vsel %vm331, %v317, 0
      %v360 = vsel %vm331, %v318, 0
      %v363 = vsel %vm331, %v319, 0
      %v366 = vsel %vm331, %v320, 0
      %v369 = vsel %vm331, %v321, 0
      %v372 = vsel %vm331, %v322, 0
      %v375 = vsel %vm331, %v323, 0
      %v378 = vsel %vm331, %v324, 0
      %380 = vmatprep.subr.bf16.mxu0 0
      %381 = vmatpush1.bf16.msra.mxu0 %v329
      %382 = vmatprep.subr.bf16.mxu0 0
      %383 = vmatpush1.bf16.msra.mxu0 0
      %384 = vmatprep.subr.bf16.mxu0 0
      %385 = vmatpush1.bf16.msra.mxu0 0
      %386 = vmatprep.subr.bf16.mxu0 0
      %387 = vmatpush1.bf16.msra.mxu0 0
      %388 = vmatprep.subr.bf16.mxu0 0
      %389 = vmatpush1.bf16.msra.mxu0 0
      %390 = vmatprep.subr.bf16.mxu0 0
      %391 = vmatpush1.bf16.msra.mxu0 0
      %392 = vmatprep.subr.bf16.mxu0 0
      %393 = vmatpush1.bf16.msra.mxu0 0
      %394 = vmatprep.subr.bf16.mxu0 0
      %395 = vmatpush1.bf16.msra.mxu0 0
      %396 = vmatprep.subr.bf16.mxu0 0
      %397 = vmatpush1.bf16.msra.mxu0 0
      %398 = vmatprep.subr.bf16.mxu0 0
      %399 = vmatpush1.bf16.msra.mxu0 0
      %400 = vmatprep.subr.bf16.mxu0 0
      %401 = vmatpush1.bf16.msra.mxu0 0
      %402 = vmatprep.subr.bf16.mxu0 0
      %403 = vmatpush1.bf16.msra.mxu0 0
      %404 = vmatprep.subr.bf16.mxu0 0
      %405 = vmatpush1.bf16.msra.mxu0 0
      %406 = vmatprep.subr.bf16.mxu0 0
      %407 = vmatpush1.bf16.msra.mxu0 0
      %408 = vmatprep.subr.bf16.mxu0 0
      %409 = vmatpush1.bf16.msra.mxu0 0
      %410 = vmatprep.subr.bf16.mxu0 0
      %411 = vmatpush1.bf16.msra.mxu0 0
      %412 = vmatprep.mubr.bf16.mxu0 0
      %413 = vmatmul.mubr.bf16.gmra.mrb[0].mxu0 %v333
      %v414 = vpop.f32.mrb[0].mxu0
      %v415 = vadd.f32 0.0, %v414
      %v416 = vpop.f32.mrb[0].mxu0
      %v417 = vpop.f32.mrb[0].mxu0
      %v418 = vadd.f32 0.0, %v417
      %v419 = vpop.f32.mrb[0].mxu0
      %420 = vmatprep.mubr.bf16.mxu0 0
      %421 = vmatmul.mubr.bf16.gmra.mrb[0].mxu0 %v336
      %v422 = vpop.f32.mrb[0].mxu0
      %v423 = vadd.f32 0.0, %v422
      %v424 = vpop.f32.mrb[0].mxu0
      %v425 = vpop.f32.mrb[0].mxu0
      %v426 = vadd.f32 0.0, %v425
      %v427 = vpop.f32.mrb[0].mxu0
      %428 = vmatprep.mubr.bf16.mxu0 0
      %429 = vmatmul.mubr.bf16.gmra.mrb[0].mxu0 %v339
      %v430 = vpop.f32.mrb[0].mxu0
      %v431 = vadd.f32 0.0, %v430
      %v432 = vpop.f32.mrb[0].mxu0
      %v433 = vpop.f32.mrb[0].mxu0
      %v434 = vadd.f32 0.0, %v433
      %v435 = vpop.f32.mrb[0].mxu0
      %436 = vmatprep.mubr.bf16.mxu0 0
      %437 = vmatmul.mubr.bf16.gmra.mrb[0].mxu0 %v342
      %v438 = vpop.f32.mrb[0].mxu0
      %v439 = vadd.f32 0.0, %v438
      %v440 = vpop.f32.mrb[0].mxu0
      %v441 = vpop.f32.mrb[0].mxu0
      %v442 = vadd.f32 0.0, %v441
      %v443 = vpop.f32.mrb[0].mxu0
      %444 = vmatprep.mubr.bf16.mxu0 0
      %445 = vmatmul.mubr.bf16.gmra.mrb[0].mxu0 %v345
      %v446 = vpop.f32.mrb[0].mxu0
      %v447 = vadd.f32 0.0, %v446
      %v448 = vpop.f32.mrb[0].mxu0
      %v449 = vpop.f32.mrb[0].mxu0
      %v450 = vadd.f32 0.0, %v449
      %v451 = vpop.f32.mrb[0].mxu0
      %452 = vmatprep.mubr.bf16.mxu0 0
      %453 = vmatmul.mubr.bf16.gmra.mrb[0].mxu0 %v348
      %v454 = vpop.f32.mrb[0].mxu0
      %v455 = vadd.f32 0.0, %v454
      %v456 = vpop.f32.mrb[0].mxu0
      %v457 = vpop.f32.mrb[0].mxu0
      %v458 = vadd.f32 0.0, %v457
      %v459 = vpop.f32.mrb[0].mxu0
      %460 = vmatprep.mubr.bf16.mxu0 0
      %461 = vmatmul.mubr.bf16.gmra.mrb[0].mxu0 %v351
      %v462 = vpop.f32.mrb[0].mxu0
      %v463 = vadd.f32 0.0, %v462
      %v464 = vpop.f32.mrb[0].mxu0
      %v465 = vpop.f32.mrb[0].mxu0
      %v466 = vadd.f32 0.0, %v465
      %v467 = vpop.f32.mrb[0].mxu0
      %468 = vmatprep.mubr.bf16.mxu0 0
      %469 = vmatmul.mubr.bf16.gmra.mrb[0].mxu0 %v354
      %v470 = vpop.f32.mrb[0].mxu0
      %v471 = vadd.f32 0.0, %v470
      %v472 = vpop.f32.mrb[0].mxu0
      %v473 = vpop.f32.mrb[0].mxu0
      %v474 = vadd.f32 0.0, %v473
      %v475 = vpop.f32.mrb[0].mxu0
      %476 = vmatprep.mubr.bf16.mxu0 0
      %477 = vmatmul.mubr.bf16.gmra.mrb[0].mxu0 %v357
      %v478 = vpop.f32.mrb[0].mxu0
      %v479 = vadd.f32 0.0, %v478
      %v480 = vpop.f32.mrb[0].mxu0
      %v481 = vpop.f32.mrb[0].mxu0
      %v482 = vadd.f32 0.0, %v481
      %v483 = vpop.f32.mrb[0].mxu0
      %484 = vmatprep.mubr.bf16.mxu0 0
      %485 = vmatmul.mubr.bf16.gmra.mrb[0].mxu0 %v360
      %v486 = vpop.f32.mrb[0].mxu0
      %v487 = vadd.f32 0.0, %v486
      %v488 = vpop.f32.mrb[0].mxu0
      %v489 = vpop.f32.mrb[0].mxu0
      %v490 = vadd.f32 0.0, %v489
      %v491 = vpop.f32.mrb[0].mxu0
      %492 = vmatprep.mubr.bf16.mxu0 0
      %493 = vmatmul.mubr.bf16.gmra.mrb[0].mxu0 %v363
      %v494 = vpop.f32.mrb[0].mxu0
      %v495 = vadd.f32 0.0, %v494
      %v496 = vpop.f32.mrb[0].mxu0
      %v497 = vpop.f32.mrb[0].mxu0
      %v498 = vadd.f32 0.0, %v497
      %v499 = vpop.f32.mrb[0].mxu0
      %500 = vmatprep.mubr.bf16.mxu0 0
      %501 = vmatmul.mubr.bf16.gmra.mrb[0].mxu0 %v366
      %v502 = vpop.f32.mrb[0].mxu0
      %v503 = vadd.f32 0.0, %v502
      %v504 = vpop.f32.mrb[0].mxu0
      %v505 = vpop.f32.mrb[0].mxu0
      %v506 = vadd.f32 0.0, %v505
      %v507 = vpop.f32.mrb[0].mxu0
      %508 = vmatprep.mubr.bf16.mxu0 0
      %509 = vmatmul.mubr.bf16.gmra.mrb[0].mxu0 %v369
      %v510 = vpop.f32.mrb[0].mxu0
      %v511 = vadd.f32 0.0, %v510
      %v512 = vpop.f32.mrb[0].mxu0
      %v513 = vpop.f32.mrb[0].mxu0
      %v514 = vadd.f32 0.0, %v513
      %v515 = vpop.f32.mrb[0].mxu0
      %516 = vmatprep.mubr.bf16.mxu0 0
      %517 = vmatmul.mubr.bf16.gmra.mrb[0].mxu0 %v372
      %v518 = vpop.f32.mrb[0].mxu0
      %v519 = vadd.f32 0.0, %v518
      %v520 = vpop.f32.mrb[0].mxu0
      %v521 = vpop.f32.mrb[0].mxu0
      %v522 = vadd.f32 0.0, %v521
      %v523 = vpop.f32.mrb[0].mxu0
      %524 = vmatprep.mubr.bf16.mxu0 0
      %525 = vmatmul.mubr.bf16.gmra.mrb[0].mxu0 %v375
      %v526 = vpop.f32.mrb[0].mxu0
      %v527 = vadd.f32 0.0, %v526
      %v528 = vpop.f32.mrb[0].mxu0
      %v529 = vpop.f32.mrb[0].mxu0
      %v530 = vadd.f32 0.0, %v529
      %v531 = vpop.f32.mrb[0].mxu0
      %532 = vmatprep.mubr.bf16.mxu0 0
      %533 = vmatmul.mubr.bf16.gmra.mrb[0].mxu0 %v378
      %v534 = vpop.f32.mrb[0].mxu0
      %v535 = vadd.f32 0.0, %v534
      %v536 = vpop.f32.mrb[0].mxu0
      %v537 = vpop.f32.mrb[0].mxu0
      %v538 = vadd.f32 0.0, %v537
      %v539 = vpop.f32.mrb[0].mxu0
      %540 = vdwg.mxu0
      %v541 = vld [vmem:[%s200] sm:$0x1]
      %v542 = vadd.f32 %v415, %v418
      %v543 = vadd.f32 %v542, %v423
      %v544 = vadd.f32 %v543, %v426
      %v545 = vadd.f32 %v544, %v431
      %v546 = vadd.f32 %v545, %v434
      %v547 = vadd.f32 %v546, %v439
      %v548 = vadd.f32 %v547, %v442
      %v549 = vadd.f32 %v548, %v447
      %v550 = vadd.f32 %v549, %v450
      %v551 = vadd.f32 %v550, %v455
      %v552 = vadd.f32 %v551, %v458
      %v553 = vadd.f32 %v552, %v463
      %v554 = vadd.f32 %v553, %v466
      %v555 = vadd.f32 %v554, %v471
      %v556 = vadd.f32 %v555, %v474
      %v557 = vadd.f32 %v556, %v479
      %v558 = vadd.f32 %v557, %v482
      %v559 = vadd.f32 %v558, %v487
      %v560 = vadd.f32 %v559, %v490
      %v561 = vadd.f32 %v560, %v495
      %v562 = vadd.f32 %v561, %v498
      %v563 = vadd.f32 %v562, %v503
      %v564 = vadd.f32 %v563, %v506
      %v565 = vadd.f32 %v564, %v511
      %v566 = vadd.f32 %v565, %v514
      %v567 = vadd.f32 %v566, %v519
      %v568 = vadd.f32 %v567, %v522
      %v569 = vadd.f32 %v568, %v527
      %v570 = vadd.f32 %v569, %v530
      %v571 = vadd.f32 %v570, %v535
      %v572 = vadd.f32 %v571, %v538
      %v573 = vrot.slane %v572, 4
      %v574 = vadd.f32 %v572, %v573
      %v575 = vrot.slane %v574, 2
      %v576 = vadd.f32 %v574, %v575
      %v577 = vrot.slane %v576, 1
      %v578 = vadd.f32 %v576, %v577
      %v579 = vadd.f32 %v541, %v578
      %580 = vst [vmem:[%s200] sm:$0x1] %v579
      %v581 = vld [vmem:[%s203] sm:$0x1]
      %v582 = vmul.f32 %v415, %v415
      %v583 = vmul.f32 %v418, %v418
      %v584 = vmul.f32 %v423, %v423
      %v585 = vmul.f32 %v426, %v426
      %v586 = vmul.f32 %v431, %v431
      %v587 = vmul.f32 %v434, %v434
      %v588 = vmul.f32 %v439, %v439
      %v589 = vmul.f32 %v442, %v442
      %v590 = vmul.f32 %v447, %v447
      %v591 = vmul.f32 %v450, %v450
      %v592 = vmul.f32 %v455, %v455
      %v593 = vmul.f32 %v458, %v458
      %v594 = vmul.f32 %v463, %v463
      %v595 = vmul.f32 %v466, %v466
      %v596 = vmul.f32 %v471, %v471
      %v597 = vmul.f32 %v474, %v474
      %v598 = vmul.f32 %v479, %v479
      %v599 = vmul.f32 %v482, %v482
      %v600 = vmul.f32 %v487, %v487
      %v601 = vmul.f32 %v490, %v490
      %v602 = vmul.f32 %v495, %v495
      %v603 = vmul.f32 %v498, %v498
      %v604 = vmul.f32 %v503, %v503
      %v605 = vmul.f32 %v506, %v506
      %v606 = vmul.f32 %v511, %v511
      %v607 = vmul.f32 %v514, %v514
      %v608 = vmul.f32 %v519, %v519
      %v609 = vmul.f32 %v522, %v522
      %v610 = vmul.f32 %v527, %v527
      %v611 = vmul.f32 %v530, %v530
      %v612 = vmul.f32 %v535, %v535
      %v613 = vmul.f32 %v538, %v538
      %v614 = vadd.f32 %v582, %v583
      %v615 = vadd.f32 %v614, %v584
      %v616 = vadd.f32 %v615, %v585
      %v617 = vadd.f32 %v616, %v586
      %v618 = vadd.f32 %v617, %v587
      %v619 = vadd.f32 %v618, %v588
      %v620 = vadd.f32 %v619, %v589
      %v621 = vadd.f32 %v620, %v590
      %v622 = vadd.f32 %v621, %v591
      %v623 = vadd.f32 %v622, %v592
      %v624 = vadd.f32 %v623, %v593
      %v625 = vadd.f32 %v624, %v594
      %v626 = vadd.f32 %v625, %v595
      %v627 = vadd.f32 %v626, %v596
      %v628 = vadd.f32 %v627, %v597
      %v629 = vadd.f32 %v628, %v598
      %v630 = vadd.f32 %v629, %v599
      %v631 = vadd.f32 %v630, %v600
      %v632 = vadd.f32 %v631, %v601
      %v633 = vadd.f32 %v632, %v602
      %v634 = vadd.f32 %v633, %v603
      %v635 = vadd.f32 %v634, %v604
      %v636 = vadd.f32 %v635, %v605
      %v637 = vadd.f32 %v636, %v606
      %v638 = vadd.f32 %v637, %v607
      %v639 = vadd.f32 %v638, %v608
      %v640 = vadd.f32 %v639, %v609
      %v641 = vadd.f32 %v640, %v610
      %v642 = vadd.f32 %v641, %v611
      %v643 = vadd.f32 %v642, %v612
      %v644 = vadd.f32 %v643, %v613
      %v645 = vrot.slane %v644, 4
      %v646 = vadd.f32 %v644, %v645
      %v647 = vrot.slane %v646, 2
      %v648 = vadd.f32 %v646, %v647
      %v649 = vrot.slane %v648, 1
      %v650 = vadd.f32 %v648, %v649
      %v651 = vadd.f32 %v581, %v650
      %652 = vst [vmem:[%s203] sm:$0x1] %v651
      %p653 = scmp.lt.s32.totalorder %s19, 3
      %s654 = scalar_select %p653, %s19, 3
      %s655 = scalar_lea.vmem %s2, %s654
      %p656 = scmp.lt.s32.totalorder %s19, 3
      %s657 = scalar_select %p656, %s19, 3
      %s658 = scalar_lea.vmem %s3, %s657
      // Predicated region
      $region33: #{stnkd_forward.4} parent=27 // pred_check
        %p659 = pneg %p94
      $region34: #{stnkd_forward.4} parent=27 // pred_check_branch
        %661 = sbr.rel (%p659) target = $region36
      $region35: #{stnkd_forward.4} parent=27 // pred_region
        _
      $region36: #{stnkd_forward.4} parent=27 // pred_fallthru
        _
      // Predicated region
      $region37: #{stnkd_forward.4} parent=27 // pred_check
        %p662 = pneg %p120
      $region38: #{stnkd_forward.4} parent=27 // pred_check_branch
        %664 = sbr.rel (%p662) target = $region40
      $region39: #{stnkd_forward.4} parent=27 // pred_region
        _
      $region40: #{stnkd_forward.4} parent=27 // pred_fallthru
        _
    $region28: #{stnkd_forward.4} parent=5 // pred_fallthru
      _
    %p665 = scmp.le.s32.totalorder 2, %s10
    // Predicated region
    $region41: #{stnkd_forward.4} parent=5 // pred_check
      %p666 = pneg %p665
    $region42: #{stnkd_forward.4} parent=5 // pred_check_branch
      %668 = sbr.rel (%p666) target = $region44
    $region43: #{stnkd_forward.4} parent=5 // pred_region
      %s669 = ssub.s32 %s10, 2
      // Predicated region
      $region45: #{stnkd_forward.4} parent=43 // pred_check
        %p670 = pneg %p100
      $region46: #{stnkd_forward.4} parent=43 // pred_check_branch
        %672 = sbr.rel (%p670) target = $region48
      $region47: #{stnkd_forward.4} parent=43 // pred_region
        %p673 = scmp.lt.s32.totalorder %s21, 3
        %s674 = scalar_select %p673, %s21, 3
        %s675 = scalar_lea.vmem %s2, %s674
      $region48: #{stnkd_forward.4} parent=43 // pred_fallthru
        _
      // Predicated region
      $region49: #{stnkd_forward.4} parent=43 // pred_check
        %p676 = pneg %p126
      $region50: #{stnkd_forward.4} parent=43 // pred_check_branch
        %678 = sbr.rel (%p676) target = $region52
      $region51: #{stnkd_forward.4} parent=43 // pred_region
        %p679 = scmp.lt.s32.totalorder %s21, 3
        %s680 = scalar_select %p679, %s21, 3
        %s681 = scalar_lea.vmem %s3, %s680
      $region52: #{stnkd_forward.4} parent=43 // pred_fallthru
        _
    $region44: #{stnkd_forward.4} parent=5 // pred_fallthru
      _
  $region6: #{stnkd_forward.4} parent=0 // loop_footer
    %s14 = sadd.s32 1, %s10
  $region7: #{stnkd_forward.4} parent=0 // loop_footer_branch
    %9 = sbr.rel target = $region3
  $region8: #{stnkd_forward.4} parent=0 // loop_exit
    _

// kernel: stnkd_forward.5
$region0: #{stnkd_forward.5}
  #allocation0 [shape = 'u32[]', space=smem, size = 0x4, offset = 0x4, fixed_abs, tag = 'smem constant byte address 0x4 - core index']
  #allocation1 [shape = 'u32[144,128]{1,0:T(1,128)}', space=vmem, size = 0x12000, scoped, tag = 'internal scratch']
  %s0 = inlined_call_operand.vmem [shape: bf16[4,512,16], index: 0, kind: input, shape index: {}]
  %s1 = inlined_call_operand.vmem [shape: bf16[16,64], index: 1, kind: input, shape index: {}]
  %s2 = inlined_call_operand.vmem [shape: f32[1,64], index: 2, kind: input, shape index: {}]
  %s3 = inlined_call_operand.vmem [shape: f32[1,64], index: 3, kind: input, shape index: {}]
  %s4 = inlined_call_operand.vmem [shape: bf16[64,128], index: 4, kind: input, shape index: {}]
  %s5 = inlined_call_operand.vmem [shape: f32[4,1,128], index: 5, kind: output, shape index: {0}]
  %s6 = inlined_call_operand.vmem [shape: f32[4,1,128], index: 6, kind: output, shape index: {1}]
  %7 = xla_tuple %s5, %s6
  %s8 = sld [smem:[#allocation0]]
  $region73: #{stnkd_forward.5} parent=0
    _
  %s10 = ssub.s32 1, %s8
  %s11 = scalar_select 0, %s10, %s8
  loop: start=0, step=1, limit=10
  $region2: #{stnkd_forward.5} parent=0 // loop_pre_header
    _
  $region3: #{stnkd_forward.5} parent=0 // loop_header
    %s13 = sphi 0, %s17
    %p14 = scmp.ge.s32.totalorder %s13, 10
    %s20 = sphi 0, %s32
    %s21 = sphi 0, %s28
    %s22 = sphi 0, %s20
    %s23 = sphi 0, %s21
    %s24 = sphi 0, %s22
    %s25 = sphi 0, %s23
    %s37 = sphi 0, %s39
    %s40 = sphi 0, %s37
    %s41 = sphi 0, %s40
    %s57 = sphi 0, %s41
    %s61 = sphi 0, %s61
    %s63 = sphi 0, %s61
    %s64 = sphi 0, %s63
    %s78 = sphi 0, %s64
    %s82 = sphi 0, %s82
    %s84 = sphi 0, %s82
    %s85 = sphi 0, %s84
    %s99 = sphi 0, %s85
    %s103 = sphi 0, %s103
    %s105 = sphi 0, %s103
    %s106 = sphi 0, %s105
    %s120 = sphi 0, %s106
    %s124 = sphi 0, %s124
    %s126 = sphi 0, %s124
    %s127 = sphi 0, %s126
    %s141 = sphi 0, %s127
    %s147 = sphi 0, %s149
    %s150 = sphi 0, %s147
    %s151 = sphi 0, %s150
    %s167 = sphi 0, %s151
    %s173 = sphi 0, %s175
    %s176 = sphi 0, %s173
    %s177 = sphi 0, %s176
    %s193 = sphi 0, %s177
  $region4: #{stnkd_forward.5} parent=0 // loop_header_branch
    %16 = sbr.rel (%p14) target = $region8
  $region5: #{stnkd_forward.5} parent=0 // loop_body
    %s18 = ssub.s32 %s13, 1
    %s19 = ssub.s32 %s13, 2
    %s26 = sadd.s32 1, %s21
    %p27 = scmp.ge.s32.totalorder %s26, 2
    %s28 = scalar_select %p27, 0, %s26
    %s29 = sadd.s32 1, %s20
    %s30 = scalar_select %p27, %s29, %s20
    %p31 = scmp.ge.s32.totalorder %s30, 4
    %s32 = scalar_select %p31, 0, %s30
    %s33 = ssub.s32 %s20, %s32
    %s34 = ssub.s32 %s21, %s28
    %s35 = sor.u32 %s33, %s34
    %p36 = scmp.eq.s32.totalorder %s35, 0
    %s38 = sadd.s32 %s37, 1
    %s39 = scalar_select %p36, %s37, %s38
    %p42 = pneg %p36
    %p43 = scmp.eq.s32.totalorder %s13, 7
    %p44 = por %p42, %p43
    %p45 = scmp.ne.s32.totalorder %s37, %s40
    %p46 = scmp.eq.s32.totalorder %s13, 0
    %p47 = por %p45, %p46
    %p48 = scmp.ne.s32.totalorder %s37, %s40
    %p49 = scmp.eq.s32.totalorder %s18, 7
    %p50 = por %p48, %p49
    %p51 = scmp.ne.s32.totalorder %s40, %s41
    %p52 = scmp.eq.s32.totalorder %s18, 0
    %p53 = por %p51, %p52
    %p54 = scmp.ne.s32.totalorder %s40, %s41
    %p55 = scmp.eq.s32.totalorder %s19, 7
    %p56 = por %p54, %p55
    %p58 = scmp.ne.s32.totalorder %s41, %s57
    %p59 = scmp.eq.s32.totalorder %s19, 0
    %p60 = por %p58, %p59
    %s62 = sadd.s32 %s61, 1
    %p65 = scmp.eq.s32.totalorder %s13, 7
    %p66 = scmp.ne.s32.totalorder %s61, %s63
    %p67 = scmp.eq.s32.totalorder %s13, 0
    %p68 = por %p66, %p67
    %p69 = scmp.ne.s32.totalorder %s61, %s63
    %p70 = scmp.eq.s32.totalorder %s18, 7
    %p71 = por %p69, %p70
    %p72 = scmp.ne.s32.totalorder %s63, %s64
    %p73 = scmp.eq.s32.totalorder %s18, 0
    %p74 = por %p72, %p73
    %p75 = scmp.ne.s32.totalorder %s63, %s64
    %p76 = scmp.eq.s32.totalorder %s19, 7
    %p77 = por %p75, %p76
    %p79 = scmp.ne.s32.totalorder %s64, %s78
    %p80 = scmp.eq.s32.totalorder %s19, 0
    %p81 = por %p79, %p80
    %s83 = sadd.s32 %s82, 1
    %p86 = scmp.eq.s32.totalorder %s13, 7
    %p87 = scmp.ne.s32.totalorder %s82, %s84
    %p88 = scmp.eq.s32.totalorder %s13, 0
    %p89 = por %p87, %p88
    %p90 = scmp.ne.s32.totalorder %s82, %s84
    %p91 = scmp.eq.s32.totalorder %s18, 7
    %p92 = por %p90, %p91
    %p93 = scmp.ne.s32.totalorder %s84, %s85
    %p94 = scmp.eq.s32.totalorder %s18, 0
    %p95 = por %p93, %p94
    %p96 = scmp.ne.s32.totalorder %s84, %s85
    %p97 = scmp.eq.s32.totalorder %s19, 7
    %p98 = por %p96, %p97
    %p100 = scmp.ne.s32.totalorder %s85, %s99
    %p101 = scmp.eq.s32.totalorder %s19, 0
    %p102 = por %p100, %p101
    %s104 = sadd.s32 %s103, 1
    %p107 = scmp.eq.s32.totalorder %s13, 7
    %p108 = scmp.ne.s32.totalorder %s103, %s105
    %p109 = scmp.eq.s32.totalorder %s13, 0
    %p110 = por %p108, %p109
    %p111 = scmp.ne.s32.totalorder %s103, %s105
    %p112 = scmp.eq.s32.totalorder %s18, 7
    %p113 = por %p111, %p112
    %p114 = scmp.ne.s32.totalorder %s105, %s106
    %p115 = scmp.eq.s32.totalorder %s18, 0
    %p116 = por %p114, %p115
    %p117 = scmp.ne.s32.totalorder %s105, %s106
    %p118 = scmp.eq.s32.totalorder %s19, 7
    %p119 = por %p117, %p118
    %p121 = scmp.ne.s32.totalorder %s106, %s120
    %p122 = scmp.eq.s32.totalorder %s19, 0
    %p123 = por %p121, %p122
    %s125 = sadd.s32 %s124, 1
    %p128 = scmp.eq.s32.totalorder %s13, 7
    %p129 = scmp.ne.s32.totalorder %s124, %s126
    %p130 = scmp.eq.s32.totalorder %s13, 0
    %p131 = por %p129, %p130
    %p132 = scmp.ne.s32.totalorder %s124, %s126
    %p133 = scmp.eq.s32.totalorder %s18, 7
    %p134 = por %p132, %p133
    %p135 = scmp.ne.s32.totalorder %s126, %s127
    %p136 = scmp.eq.s32.totalorder %s18, 0
    %p137 = por %p135, %p136
    %p138 = scmp.ne.s32.totalorder %s126, %s127
    %p139 = scmp.eq.s32.totalorder %s19, 7
    %p140 = por %p138, %p139
    %p142 = scmp.ne.s32.totalorder %s127, %s141
    %p143 = scmp.eq.s32.totalorder %s19, 0
    %p144 = por %p142, %p143
    %s145 = ssub.s32 %s20, %s32
    %p146 = scmp.eq.s32.totalorder %s145, 0
    %s148 = sadd.s32 %s147, 1
    %s149 = scalar_select %p146, %s147, %s148
    %p152 = pneg %p146
    %p153 = scmp.eq.s32.totalorder %s13, 7
    %p154 = por %p152, %p153
    %p155 = scmp.ne.s32.totalorder %s147, %s150
    %p156 = scmp.eq.s32.totalorder %s13, 0
    %p157 = por %p155, %p156
    %p158 = scmp.ne.s32.totalorder %s147, %s150
    %p159 = scmp.eq.s32.totalorder %s18, 7
    %p160 = por %p158, %p159
    %p161 = scmp.ne.s32.totalorder %s150, %s151
    %p162 = scmp.eq.s32.totalorder %s18, 0
    %p163 = por %p161, %p162
    %p164 = scmp.ne.s32.totalorder %s150, %s151
    %p165 = scmp.eq.s32.totalorder %s19, 7
    %p166 = por %p164, %p165
    %p168 = scmp.ne.s32.totalorder %s151, %s167
    %p169 = scmp.eq.s32.totalorder %s19, 0
    %p170 = por %p168, %p169
    %s171 = ssub.s32 %s20, %s32
    %p172 = scmp.eq.s32.totalorder %s171, 0
    %s174 = sadd.s32 %s173, 1
    %s175 = scalar_select %p172, %s173, %s174
    %p178 = pneg %p172
    %p179 = scmp.eq.s32.totalorder %s13, 7
    %p180 = por %p178, %p179
    %p181 = scmp.ne.s32.totalorder %s173, %s176
    %p182 = scmp.eq.s32.totalorder %s13, 0
    %p183 = por %p181, %p182
    %p184 = scmp.ne.s32.totalorder %s173, %s176
    %p185 = scmp.eq.s32.totalorder %s18, 7
    %p186 = por %p184, %p185
    %p187 = scmp.ne.s32.totalorder %s176, %s177
    %p188 = scmp.eq.s32.totalorder %s18, 0
    %p189 = por %p187, %p188
    %p190 = scmp.ne.s32.totalorder %s176, %s177
    %p191 = scmp.eq.s32.totalorder %s19, 7
    %p192 = por %p190, %p191
    %p194 = scmp.ne.s32.totalorder %s177, %s193
    %p195 = scmp.eq.s32.totalorder %s19, 0
    %p196 = por %p194, %p195
    %p197 = scmp.le.s32.totalorder 1, %s13
    %p198 = scmp.lt.s32.totalorder %s13, 9
    %p199 = pnand %p197, %p198
    %p200 = pneg %p199
    // Predicated region
    $region9: #{stnkd_forward.5} parent=5 // pred_check
      _
    $region10: #{stnkd_forward.5} parent=5 // pred_check_branch
      %202 = sbr.rel (%p199) target = $region12
    $region11: #{stnkd_forward.5} parent=5 // pred_region
      %s203 = ssub.s32 %s13, 1
      // Predicated region
      $region13: #{stnkd_forward.5} parent=11 // pred_check
        %p204 = pneg %p74
      $region14: #{stnkd_forward.5} parent=11 // pred_check_branch
        %206 = sbr.rel (%p204) target = $region16
      $region15: #{stnkd_forward.5} parent=11 // pred_region
        _
      $region16: #{stnkd_forward.5} parent=11 // pred_fallthru
        _
      // Predicated region
      $region17: #{stnkd_forward.5} parent=11 // pred_check
        %p207 = pneg %p95
      $region18: #{stnkd_forward.5} parent=11 // pred_check_branch
        %209 = sbr.rel (%p207) target = $region20
      $region19: #{stnkd_forward.5} parent=11 // pred_region
        _
      $region20: #{stnkd_forward.5} parent=11 // pred_fallthru
        _
      // Predicated region
      $region21: #{stnkd_forward.5} parent=11 // pred_check
        %p210 = pneg %p116
      $region22: #{stnkd_forward.5} parent=11 // pred_check_branch
        %212 = sbr.rel (%p210) target = $region24
      $region23: #{stnkd_forward.5} parent=11 // pred_region
        _
      $region24: #{stnkd_forward.5} parent=11 // pred_fallthru
        _
      // Predicated region
      $region25: #{stnkd_forward.5} parent=11 // pred_check
        %p213 = pneg %p137
      $region26: #{stnkd_forward.5} parent=11 // pred_check_branch
        %215 = sbr.rel (%p213) target = $region28
      $region27: #{stnkd_forward.5} parent=11 // pred_region
        _
      $region28: #{stnkd_forward.5} parent=11 // pred_fallthru
        _
    $region12: #{stnkd_forward.5} parent=5 // pred_fallthru
      _
    %p216 = scmp.lt.s32.totalorder %s13, 8
    // Predicated region
    $region29: #{stnkd_forward.5} parent=5 // pred_check
      %p217 = pneg %p216
    $region30: #{stnkd_forward.5} parent=5 // pred_check_branch
      %219 = sbr.rel (%p217) target = $region32
    $region31: #{stnkd_forward.5} parent=5 // pred_region
      // Predicated region
      $region33: #{stnkd_forward.5} parent=31 // pred_check
        %p220 = pneg %p47
      $region34: #{stnkd_forward.5} parent=31 // pred_check_branch
        %222 = sbr.rel (%p220) target = $region36
      $region35: #{stnkd_forward.5} parent=31 // pred_region
        %s223 = smul.u32 32, %s21
        %p224 = scmp.lt.s32.totalorder %s20, 3
        %s225 = scalar_select %p224, %s20, 3
        %p226 = scmp.lt.s32.totalorder %s223, 63
        %s227 = scalar_select %p226, %s223, 63
        %s228 = smul.addr %s225, 64
        %s229 = sadd.s32 %s227, %s228
        %s230 = smul.addr %s229, 4
        %s231 = scalar_lea.vmem %s0, %s230
        %s232 = smul.u32 32, %s21
      $region36: #{stnkd_forward.5} parent=31 // pred_fallthru
        _
    $region32: #{stnkd_forward.5} parent=5 // pred_fallthru
      _
    %p233 = scmp.le.s32.totalorder 1, %s13
    %p234 = scmp.lt.s32.totalorder %s13, 9
    %p235 = pnand %p233, %p234
    %p236 = pneg %p235
    // Predicated region
    $region37: #{stnkd_forward.5} parent=5 // pred_check
      _
    $region38: #{stnkd_forward.5} parent=5 // pred_check_branch
      %238 = sbr.rel (%p235) target = $region40
    $region39: #{stnkd_forward.5} parent=5 // pred_region
      %s239 = ssub.s32 %s13, 1
      %s240 = smul.u32 32, %s23
      %p241 = scmp.lt.s32.totalorder %s22, 3
      %s242 = scalar_select %p241, %s22, 3
      %p243 = scmp.lt.s32.totalorder %s240, 63
      %s244 = scalar_select %p243, %s240, 63
      %s245 = smul.addr %s242, 64
      %s246 = sadd.s32 %s244, %s245
      %s247 = smul.addr %s246, 4
      %s248 = scalar_lea.vmem %s0, %s247
      %p249 = pneg %p53
      %p250 = pneg %p50
      %p251 = pneg %p74
      %p252 = pneg %p71
      %p253 = pneg %p95
      %p254 = pneg %p92
      %p255 = pneg %p116
      %p256 = pneg %p113
      %p257 = pneg %p137
      %p258 = pneg %p134
      %p259 = pneg %p163
      %p260 = pneg %p160
      %p261 = scmp.lt.s32.totalorder %s22, 3
      %s262 = scalar_select %p261, %s22, 3
      %s263 = scalar_lea.vmem %s5, %s262
      %p264 = pneg %p189
      %p265 = pneg %p186
      %p266 = scmp.lt.s32.totalorder %s22, 3
      %s267 = scalar_select %p266, %s22, 3
      %s268 = scalar_lea.vmem %s6, %s267
      %s269 = smul.u32 32, %s23
      %p270 = scmp.lt.s32.totalorder %s22, 3
      %s271 = scalar_select %p270, %s22, 3
      %p272 = scmp.lt.s32.totalorder %s269, 63
      %s273 = scalar_select %p272, %s269, 63
      %s274 = smul.addr %s271, 64
      %s275 = sadd.s32 %s273, %s274
      %s276 = smul.addr %s275, 4
      %s277 = scalar_lea.vmem %s0, %s276
      %s278 = smul.u32 32, %s23
      %p279 = scmp.lt.s32.totalorder %s22, 3
      %s280 = scalar_select %p279, %s22, 3
      %s281 = scalar_lea.vmem %s5, %s280
      %p282 = scmp.lt.s32.totalorder %s22, 3
      %s283 = scalar_select %p282, %s22, 3
      %s284 = scalar_lea.vmem %s6, %s283
      %p286 = scmp.eq.s32.totalorder %s23, 0
      // Predicated region
      $region41: #{stnkd_forward.5} parent=39 // pred_check
        %p287 = pneg %p286
      $region42: #{stnkd_forward.5} parent=39 // pred_check_branch
        %289 = sbr.rel (%p287) target = $region44
      $region43: #{stnkd_forward.5} parent=39 // pred_region
        %290 = vst [vmem:[%s281] sm:$0x1] 0.0
        %291 = vst [vmem:[%s284] sm:$0x1] 0.0
      $region44: #{stnkd_forward.5} parent=39 // pred_fallthru
        _
      %v292 = vld [vmem:[%s277] sm:$0xf]
      %v293 = vld [vmem:[%s277 + $0x4] sm:$0xf]
      %v294 = vld [vmem:[%s277 + $0x8] sm:$0xf]
      %v295 = vld [vmem:[%s277 + $0xc] sm:$0xf]
      %v296 = vld [vmem:[%s277 + $0x10] sm:$0xf]
      %v297 = vld [vmem:[%s277 + $0x14] sm:$0xf]
      %v298 = vld [vmem:[%s277 + $0x18] sm:$0xf]
      %v299 = vld [vmem:[%s277 + $0x1c] sm:$0xf]
      %v300 = vld [vmem:[%s277 + $0x20] sm:$0xf]
      %v301 = vld [vmem:[%s277 + $0x24] sm:$0xf]
      %v302 = vld [vmem:[%s277 + $0x28] sm:$0xf]
      %v303 = vld [vmem:[%s277 + $0x2c] sm:$0xf]
      %v304 = vld [vmem:[%s277 + $0x30] sm:$0xf]
      %v305 = vld [vmem:[%s277 + $0x34] sm:$0xf]
      %v306 = vld [vmem:[%s277 + $0x38] sm:$0xf]
      %v307 = vld [vmem:[%s277 + $0x3c] sm:$0xf]
      %v308 = vld [vmem:[%s277 + $0x40] sm:$0xf]
      %v309 = vld [vmem:[%s277 + $0x44] sm:$0xf]
      %v310 = vld [vmem:[%s277 + $0x48] sm:$0xf]
      %v311 = vld [vmem:[%s277 + $0x4c] sm:$0xf]
      %v312 = vld [vmem:[%s277 + $0x50] sm:$0xf]
      %v313 = vld [vmem:[%s277 + $0x54] sm:$0xf]
      %v314 = vld [vmem:[%s277 + $0x58] sm:$0xf]
      %v315 = vld [vmem:[%s277 + $0x5c] sm:$0xf]
      %v316 = vld [vmem:[%s277 + $0x60] sm:$0xf]
      %v317 = vld [vmem:[%s277 + $0x64] sm:$0xf]
      %v318 = vld [vmem:[%s277 + $0x68] sm:$0xf]
      %v319 = vld [vmem:[%s277 + $0x6c] sm:$0xf]
      %v320 = vld [vmem:[%s277 + $0x70] sm:$0xf]
      %v321 = vld [vmem:[%s277 + $0x74] sm:$0xf]
      %v322 = vld [vmem:[%s277 + $0x78] sm:$0xf]
      %v323 = vld [vmem:[%s277 + $0x7c] sm:$0xf]
      %v324 = vld [vmem:[%s1] sm:$0xf]
      %v325 = vld [vmem:[%s1 + $0x4] sm:$0xf]
      %v358 = vunpack.c.l.b16 %v292
      %v359 = vunpack.c.l.b16 %v293
      %v360 = vunpack.c.l.b16 %v294
      %v361 = vunpack.c.l.b16 %v295
      %v362 = vunpack.c.l.b16 %v296
      %v363 = vunpack.c.l.b16 %v297
      %v364 = vunpack.c.l.b16 %v298
      %v365 = vunpack.c.l.b16 %v299
      %v366 = vunpack.c.l.b16 %v300
      %v367 = vunpack.c.l.b16 %v301
      %v368 = vunpack.c.l.b16 %v302
      %v369 = vunpack.c.l.b16 %v303
      %v370 = vunpack.c.l.b16 %v304
      %v371 = vunpack.c.l.b16 %v305
      %v372 = vunpack.c.l.b16 %v306
      %v373 = vunpack.c.l.b16 %v307
      %v374 = vunpack.c.l.b16 %v308
      %v375 = vunpack.c.l.b16 %v309
      %v376 = vunpack.c.l.b16 %v310
      %v377 = vunpack.c.l.b16 %v311
      %v378 = vunpack.c.l.b16 %v312
      %v379 = vunpack.c.l.b16 %v313
      %v380 = vunpack.c.l.b16 %v314
      %v381 = vunpack.c.l.b16 %v315
      %v382 = vunpack.c.l.b16 %v316
      %v383 = vunpack.c.l.b16 %v317
      %v384 = vunpack.c.l.b16 %v318
      %v385 = vunpack.c.l.b16 %v319
      %v386 = vunpack.c.l.b16 %v320
      %v387 = vunpack.c.l.b16 %v321
      %v388 = vunpack.c.l.b16 %v322
      %v389 = vunpack.c.l.b16 %v323
      %v390 = vpack.c.b16 %v359, %v358
      %v391 = vpack.c.b16 %v361, %v360
      %v392 = vpack.c.b16 %v363, %v362
      %v393 = vpack.c.b16 %v365, %v364
      %v394 = vpack.c.b16 %v367, %v366
      %v395 = vpack.c.b16 %v369, %v368
      %v396 = vpack.c.b16 %v371, %v370
      %v397 = vpack.c.b16 %v373, %v372
      %v398 = vpack.c.b16 %v375, %v374
      %v399 = vpack.c.b16 %v377, %v376
      %v400 = vpack.c.b16 %v379, %v378
      %v401 = vpack.c.b16 %v381, %v380
      %v402 = vpack.c.b16 %v383, %v382
      %v403 = vpack.c.b16 %v385, %v384
      %v404 = vpack.c.b16 %v387, %v386
      %v405 = vpack.c.b16 %v389, %v388
      %v408 = vunpack.c.l.b16 %v324
      %v409 = vunpack.c.l.b16 %v325
      %v410 = vpack.c.b16 %v409, %v408
      %vm412 = vcmask 130048
      %v414 = vsel %vm412, %v390, 0
      %v417 = vsel %vm412, %v391, 0
      %v420 = vsel %vm412, %v392, 0
      %v423 = vsel %vm412, %v393, 0
      %v426 = vsel %vm412, %v394, 0
      %v429 = vsel %vm412, %v395, 0
      %v432 = vsel %vm412, %v396, 0
      %v435 = vsel %vm412, %v397, 0
      %v438 = vsel %vm412, %v398, 0
      %v441 = vsel %vm412, %v399, 0
      %v444 = vsel %vm412, %v400, 0
      %v447 = vsel %vm412, %v401, 0
      %v450 = vsel %vm412, %v402, 0
      %v453 = vsel %vm412, %v403, 0
      %v456 = vsel %vm412, %v404, 0
      %v459 = vsel %vm412, %v405, 0
      %461 = vmatprep.subr.bf16.mxu0 0
      %462 = vmatpush1.bf16.msra.mxu0 %v410
      %463 = vmatprep.subr.bf16.mxu0 0
      %464 = vmatpush1.bf16.msra.mxu0 0
      %465 = vmatprep.subr.bf16.mxu0 0
      %466 = vmatpush1.bf16.msra.mxu0 0
      %467 = vmatprep.subr.bf16.mxu0 0
      %468 = vmatpush1.bf16.msra.mxu0 0
      %469 = vmatprep.subr.bf16.mxu0 0
      %470 = vmatpush1.bf16.msra.mxu0 0
      %471 = vmatprep.subr.bf16.mxu0 0
      %472 = vmatpush1.bf16.msra.mxu0 0
      %473 = vmatprep.subr.bf16.mxu0 0
      %474 = vmatpush1.bf16.msra.mxu0 0
      %475 = vmatprep.subr.bf16.mxu0 0
      %476 = vmatpush1.bf16.msra.mxu0 0
      %477 = vmatprep.subr.bf16.mxu0 0
      %478 = vmatpush1.bf16.msra.mxu0 0
      %479 = vmatprep.subr.bf16.mxu0 0
      %480 = vmatpush1.bf16.msra.mxu0 0
      %481 = vmatprep.subr.bf16.mxu0 0
      %482 = vmatpush1.bf16.msra.mxu0 0
      %483 = vmatprep.subr.bf16.mxu0 0
      %484 = vmatpush1.bf16.msra.mxu0 0
      %485 = vmatprep.subr.bf16.mxu0 0
      %486 = vmatpush1.bf16.msra.mxu0 0
      %487 = vmatprep.subr.bf16.mxu0 0
      %488 = vmatpush1.bf16.msra.mxu0 0
      %489 = vmatprep.subr.bf16.mxu0 0
      %490 = vmatpush1.bf16.msra.mxu0 0
      %491 = vmatprep.subr.bf16.mxu0 0
      %492 = vmatpush1.bf16.msra.mxu0 0
      %493 = vmatprep.mubr.bf16.mxu0 0
      %494 = vmatmul.mubr.bf16.gmra.mrb[0].mxu0 %v414
      %v495 = vpop.f32.mrb[0].mxu0
      %v496 = vadd.f32 0.0, %v495
      %v497 = vpop.f32.mrb[0].mxu0
      %v498 = vpop.f32.mrb[0].mxu0
      %v499 = vadd.f32 0.0, %v498
      %v500 = vpop.f32.mrb[0].mxu0
      %501 = vmatprep.mubr.bf16.mxu0 0
      %502 = vmatmul.mubr.bf16.gmra.mrb[0].mxu0 %v417
      %v503 = vpop.f32.mrb[0].mxu0
      %v504 = vadd.f32 0.0, %v503
      %v505 = vpop.f32.mrb[0].mxu0
      %v506 = vpop.f32.mrb[0].mxu0
      %v507 = vadd.f32 0.0, %v506
      %v508 = vpop.f32.mrb[0].mxu0
      %509 = vmatprep.mubr.bf16.mxu0 0
      %510 = vmatmul.mubr.bf16.gmra.mrb[0].mxu0 %v420
      %v511 = vpop.f32.mrb[0].mxu0
      %v512 = vadd.f32 0.0, %v511
      %v513 = vpop.f32.mrb[0].mxu0
      %v514 = vpop.f32.mrb[0].mxu0
      %v515 = vadd.f32 0.0, %v514
      %v516 = vpop.f32.mrb[0].mxu0
      %517 = vmatprep.mubr.bf16.mxu0 0
      %518 = vmatmul.mubr.bf16.gmra.mrb[0].mxu0 %v423
      %v519 = vpop.f32.mrb[0].mxu0
      %v520 = vadd.f32 0.0, %v519
      %v521 = vpop.f32.mrb[0].mxu0
      %v522 = vpop.f32.mrb[0].mxu0
      %v523 = vadd.f32 0.0, %v522
      %v524 = vpop.f32.mrb[0].mxu0
      %525 = vmatprep.mubr.bf16.mxu0 0
      %526 = vmatmul.mubr.bf16.gmra.mrb[0].mxu0 %v426
      %v527 = vpop.f32.mrb[0].mxu0
      %v528 = vadd.f32 0.0, %v527
      %v529 = vpop.f32.mrb[0].mxu0
      %v530 = vpop.f32.mrb[0].mxu0
      %v531 = vadd.f32 0.0, %v530
      %v532 = vpop.f32.mrb[0].mxu0
      %533 = vmatprep.mubr.bf16.mxu0 0
      %534 = vmatmul.mubr.bf16.gmra.mrb[0].mxu0 %v429
      %v535 = vpop.f32.mrb[0].mxu0
      %v536 = vadd.f32 0.0, %v535
      %v537 = vpop.f32.mrb[0].mxu0
      %v538 = vpop.f32.mrb[0].mxu0
      %v539 = vadd.f32 0.0, %v538
      %v540 = vpop.f32.mrb[0].mxu0
      %541 = vmatprep.mubr.bf16.mxu0 0
      %542 = vmatmul.mubr.bf16.gmra.mrb[0].mxu0 %v432
      %v543 = vpop.f32.mrb[0].mxu0
      %v544 = vadd.f32 0.0, %v543
      %v545 = vpop.f32.mrb[0].mxu0
      %v546 = vpop.f32.mrb[0].mxu0
      %v547 = vadd.f32 0.0, %v546
      %v548 = vpop.f32.mrb[0].mxu0
      %549 = vmatprep.mubr.bf16.mxu0 0
      %550 = vmatmul.mubr.bf16.gmra.mrb[0].mxu0 %v435
      %v551 = vpop.f32.mrb[0].mxu0
      %v552 = vadd.f32 0.0, %v551
      %v553 = vpop.f32.mrb[0].mxu0
      %v554 = vpop.f32.mrb[0].mxu0
      %v555 = vadd.f32 0.0, %v554
      %v556 = vpop.f32.mrb[0].mxu0
      %557 = vmatprep.mubr.bf16.mxu0 0
      %558 = vmatmul.mubr.bf16.gmra.mrb[0].mxu0 %v438
      %v559 = vpop.f32.mrb[0].mxu0
      %v560 = vadd.f32 0.0, %v559
      %v561 = vpop.f32.mrb[0].mxu0
      %v562 = vpop.f32.mrb[0].mxu0
      %v563 = vadd.f32 0.0, %v562
      %v564 = vpop.f32.mrb[0].mxu0
      %565 = vmatprep.mubr.bf16.mxu0 0
      %566 = vmatmul.mubr.bf16.gmra.mrb[0].mxu0 %v441
      %v567 = vpop.f32.mrb[0].mxu0
      %v568 = vadd.f32 0.0, %v567
      %v569 = vpop.f32.mrb[0].mxu0
      %v570 = vpop.f32.mrb[0].mxu0
      %v571 = vadd.f32 0.0, %v570
      %v572 = vpop.f32.mrb[0].mxu0
      %573 = vmatprep.mubr.bf16.mxu0 0
      %574 = vmatmul.mubr.bf16.gmra.mrb[0].mxu0 %v444
      %v575 = vpop.f32.mrb[0].mxu0
      %v576 = vadd.f32 0.0, %v575
      %v577 = vpop.f32.mrb[0].mxu0
      %v578 = vpop.f32.mrb[0].mxu0
      %v579 = vadd.f32 0.0, %v578
      %v580 = vpop.f32.mrb[0].mxu0
      %581 = vmatprep.mubr.bf16.mxu0 0
      %582 = vmatmul.mubr.bf16.gmra.mrb[0].mxu0 %v447
      %v583 = vpop.f32.mrb[0].mxu0
      %v584 = vadd.f32 0.0, %v583
      %v585 = vpop.f32.mrb[0].mxu0
      %v586 = vpop.f32.mrb[0].mxu0
      %v587 = vadd.f32 0.0, %v586
      %v588 = vpop.f32.mrb[0].mxu0
      %589 = vmatprep.mubr.bf16.mxu0 0
      %590 = vmatmul.mubr.bf16.gmra.mrb[0].mxu0 %v450
      %v591 = vpop.f32.mrb[0].mxu0
      %v592 = vadd.f32 0.0, %v591
      %v593 = vpop.f32.mrb[0].mxu0
      %v594 = vpop.f32.mrb[0].mxu0
      %v595 = vadd.f32 0.0, %v594
      %v596 = vpop.f32.mrb[0].mxu0
      %597 = vmatprep.mubr.bf16.mxu0 0
      %598 = vmatmul.mubr.bf16.gmra.mrb[0].mxu0 %v453
      %v599 = vpop.f32.mrb[0].mxu0
      %v600 = vadd.f32 0.0, %v599
      %v601 = vpop.f32.mrb[0].mxu0
      %v602 = vpop.f32.mrb[0].mxu0
      %v603 = vadd.f32 0.0, %v602
      %v604 = vpop.f32.mrb[0].mxu0
      %605 = vmatprep.mubr.bf16.mxu0 0
      %606 = vmatmul.mubr.bf16.gmra.mrb[0].mxu0 %v456
      %v607 = vpop.f32.mrb[0].mxu0
      %v608 = vadd.f32 0.0, %v607
      %v609 = vpop.f32.mrb[0].mxu0
      %v610 = vpop.f32.mrb[0].mxu0
      %v611 = vadd.f32 0.0, %v610
      %v612 = vpop.f32.mrb[0].mxu0
      %613 = vmatprep.mubr.bf16.mxu0 0
      %614 = vmatmul.mubr.bf16.gmra.mrb[0].mxu0 %v459
      %v615 = vpop.f32.mrb[0].mxu0
      %v616 = vadd.f32 0.0, %v615
      %v617 = vpop.f32.mrb[0].mxu0
      %v618 = vpop.f32.mrb[0].mxu0
      %v619 = vadd.f32 0.0, %v618
      %v620 = vpop.f32.mrb[0].mxu0
      %621 = vdwg.mxu0
      %v622 = vld [vmem:[%s2] sm:$0x1]
      %v624 = vlaneseq
      %v625 = vshrl.u32 %v624, 7
      %v626 = vsub.s32 0, %v625
      %v627 = vrot.slane %v622, %v626
      %v629 = vmul.f32 %v496, %v627
      %v630 = vmul.f32 %v499, %v627
      %v631 = vmul.f32 %v504, %v627
      %v632 = vmul.f32 %v507, %v627
      %v633 = vmul.f32 %v512, %v627
      %v634 = vmul.f32 %v515, %v627
      %v635 = vmul.f32 %v520, %v627
      %v636 = vmul.f32 %v523, %v627
      %v637 = vmul.f32 %v528, %v627
      %v638 = vmul.f32 %v531, %v627
      %v639 = vmul.f32 %v536, %v627
      %v640 = vmul.f32 %v539, %v627
      %v641 = vmul.f32 %v544, %v627
      %v642 = vmul.f32 %v547, %v627
      %v643 = vmul.f32 %v552, %v627
      %v644 = vmul.f32 %v555, %v627
      %v645 = vmul.f32 %v560, %v627
      %v646 = vmul.f32 %v563, %v627
      %v647 = vmul.f32 %v568, %v627
      %v648 = vmul.f32 %v571, %v627
      %v649 = vmul.f32 %v576, %v627
      %v650 = vmul.f32 %v579, %v627
      %v651 = vmul.f32 %v584, %v627
      %v652 = vmul.f32 %v587, %v627
      %v653 = vmul.f32 %v592, %v627
      %v654 = vmul.f32 %v595, %v627
      %v655 = vmul.f32 %v600, %v627
      %v656 = vmul.f32 %v603, %v627
      %v657 = vmul.f32 %v608, %v627
      %v658 = vmul.f32 %v611, %v627
      %v659 = vmul.f32 %v616, %v627
      %v660 = vmul.f32 %v619, %v627
      %v661 = vld [vmem:[%s3] sm:$0x1]
      %v663 = vlaneseq
      %v664 = vshrl.u32 %v663, 7
      %v665 = vsub.s32 0, %v664
      %v666 = vrot.slane %v661, %v665
      %v668 = vadd.f32 %v629, %v666
      %v669 = vadd.f32 %v630, %v666
      %v670 = vadd.f32 %v631, %v666
      %v671 = vadd.f32 %v632, %v666
      %v672 = vadd.f32 %v633, %v666
      %v673 = vadd.f32 %v634, %v666
      %v674 = vadd.f32 %v635, %v666
      %v675 = vadd.f32 %v636, %v666
      %v676 = vadd.f32 %v637, %v666
      %v677 = vadd.f32 %v638, %v666
      %v678 = vadd.f32 %v639, %v666
      %v679 = vadd.f32 %v640, %v666
      %v680 = vadd.f32 %v641, %v666
      %v681 = vadd.f32 %v642, %v666
      %v682 = vadd.f32 %v643, %v666
      %v683 = vadd.f32 %v644, %v666
      %v684 = vadd.f32 %v645, %v666
      %v685 = vadd.f32 %v646, %v666
      %v686 = vadd.f32 %v647, %v666
      %v687 = vadd.f32 %v648, %v666
      %v688 = vadd.f32 %v649, %v666
      %v689 = vadd.f32 %v650, %v666
      %v690 = vadd.f32 %v651, %v666
      %v691 = vadd.f32 %v652, %v666
      %v692 = vadd.f32 %v653, %v666
      %v693 = vadd.f32 %v654, %v666
      %v694 = vadd.f32 %v655, %v666
      %v695 = vadd.f32 %v656, %v666
      %v696 = vadd.f32 %v657, %v666
      %v697 = vadd.f32 %v658, %v666
      %v698 = vadd.f32 %v659, %v666
      %v699 = vadd.f32 %v660, %v666
      %v700 = vmax.f32 %v668, 0.0
      %v701 = vmax.f32 %v669, 0.0
      %v702 = vmax.f32 %v670, 0.0
      %v703 = vmax.f32 %v671, 0.0
      %v704 = vmax.f32 %v672, 0.0
      %v705 = vmax.f32 %v673, 0.0
      %v706 = vmax.f32 %v674, 0.0
      %v707 = vmax.f32 %v675, 0.0
      %v708 = vmax.f32 %v676, 0.0
      %v709 = vmax.f32 %v677, 0.0
      %v710 = vmax.f32 %v678, 0.0
      %v711 = vmax.f32 %v679, 0.0
      %v712 = vmax.f32 %v680, 0.0
      %v713 = vmax.f32 %v681, 0.0
      %v714 = vmax.f32 %v682, 0.0
      %v715 = vmax.f32 %v683, 0.0
      %v716 = vmax.f32 %v684, 0.0
      %v717 = vmax.f32 %v685, 0.0
      %v718 = vmax.f32 %v686, 0.0
      %v719 = vmax.f32 %v687, 0.0
      %v720 = vmax.f32 %v688, 0.0
      %v721 = vmax.f32 %v689, 0.0
      %v722 = vmax.f32 %v690, 0.0
      %v723 = vmax.f32 %v691, 0.0
      %v724 = vmax.f32 %v692, 0.0
      %v725 = vmax.f32 %v693, 0.0
      %v726 = vmax.f32 %v694, 0.0
      %v727 = vmax.f32 %v695, 0.0
      %v728 = vmax.f32 %v696, 0.0
      %v729 = vmax.f32 %v697, 0.0
      %v730 = vmax.f32 %v698, 0.0
      %v731 = vmax.f32 %v699, 0.0
      %v732 = vpack.c.bf16 %v701, %v700
      %v733 = vpack.c.bf16 %v703, %v702
      %v734 = vpack.c.bf16 %v705, %v704
      %v735 = vpack.c.bf16 %v707, %v706
      %v736 = vpack.c.bf16 %v709, %v708
      %v737 = vpack.c.bf16 %v711, %v710
      %v738 = vpack.c.bf16 %v713, %v712
      %v739 = vpack.c.bf16 %v715, %v714
      %v740 = vpack.c.bf16 %v717, %v716
      %v741 = vpack.c.bf16 %v719, %v718
      %v742 = vpack.c.bf16 %v721, %v720
      %v743 = vpack.c.bf16 %v723, %v722
      %v744 = vpack.c.bf16 %v725, %v724
      %v745 = vpack.c.bf16 %v727, %v726
      %v746 = vpack.c.bf16 %v729, %v728
      %v747 = vpack.c.bf16 %v731, %v730
      %p748 = scmp.ne.s32.totalorder %s23, 1
      // Predicated region
      $region45: #{stnkd_forward.5} parent=39 // pred_check
        %p749 = pneg %p748
      $region46: #{stnkd_forward.5} parent=39 // pred_check_branch
        %751 = sbr.rel (%p749) target = $region48
      $region47: #{stnkd_forward.5} parent=39 // pred_region
        %v752 = vld [vmem:[%s4] sm:$0xf]
        %v753 = vld [vmem:[%s4 + $0x4] sm:$0xf]
        %v754 = vld [vmem:[%s4 + $0x8] sm:$0xf]
        %v755 = vld [vmem:[%s4 + $0xc] sm:$0xf]
        %v756 = vld [vmem:[%s4 + $0x10] sm:$0xf]
        %v757 = vld [vmem:[%s4 + $0x14] sm:$0xf]
        %v758 = vld [vmem:[%s4 + $0x18] sm:$0xf]
        %v759 = vld [vmem:[%s4 + $0x1c] sm:$0xf]
        %v768 = vunpack.c.l.b16 %v752
        %v769 = vunpack.c.l.b16 %v753
        %v770 = vunpack.c.l.b16 %v754
        %v771 = vunpack.c.l.b16 %v755
        %v772 = vunpack.c.l.b16 %v756
        %v773 = vunpack.c.l.b16 %v757
        %v774 = vunpack.c.l.b16 %v758
        %v775 = vunpack.c.l.b16 %v759
        %v776 = vpack.c.b16 %v769, %v768
        %v777 = vpack.c.b16 %v771, %v770
        %v778 = vpack.c.b16 %v773, %v772
        %v779 = vpack.c.b16 %v775, %v774
        %vm784 = vcmask 523264
        %v786 = vsel %vm784, %v732, 0
        %v789 = vsel %vm784, %v733, 0
        %v792 = vsel %vm784, %v734, 0
        %v795 = vsel %vm784, %v735, 0
        %v798 = vsel %vm784, %v736, 0
        %v801 = vsel %vm784, %v737, 0
        %v804 = vsel %vm784, %v738, 0
        %v807 = vsel %vm784, %v739, 0
        %v810 = vsel %vm784, %v740, 0
        %v813 = vsel %vm784, %v741, 0
        %v816 = vsel %vm784, %v742, 0
        %v819 = vsel %vm784, %v743, 0
        %v822 = vsel %vm784, %v744, 0
        %v825 = vsel %vm784, %v745, 0
        %v828 = vsel %vm784, %v746, 0
        %v831 = vsel %vm784, %v747, 0
        %833 = vmatprep.subr.bf16.mxu0 0
        %834 = vmatpush1.bf16.msra.mxu0 %v776
        %835 = vmatprep.subr.bf16.mxu0 0
        %836 = vmatpush1.bf16.msra.mxu0 %v777
        %837 = vmatprep.subr.bf16.mxu0 0
        %838 = vmatpush1.bf16.msra.mxu0 %v778
        %839 = vmatprep.subr.bf16.mxu0 0
        %840 = vmatpush1.bf16.msra.mxu0 %v779
        %841 = vmatprep.subr.bf16.mxu0 0
        %842 = vmatpush1.bf16.msra.mxu0 0
        %843 = vmatprep.subr.bf16.mxu0 0
        %844 = vmatpush1.bf16.msra.mxu0 0
        %845 = vmatprep.subr.bf16.mxu0 0
        %846 = vmatpush1.bf16.msra.mxu0 0
        %847 = vmatprep.subr.bf16.mxu0 0
        %848 = vmatpush1.bf16.msra.mxu0 0
        %849 = vmatprep.subr.bf16.mxu0 0
        %850 = vmatpush1.bf16.msra.mxu0 0
        %851 = vmatprep.subr.bf16.mxu0 0
        %852 = vmatpush1.bf16.msra.mxu0 0
        %853 = vmatprep.subr.bf16.mxu0 0
        %854 = vmatpush1.bf16.msra.mxu0 0
        %855 = vmatprep.subr.bf16.mxu0 0
        %856 = vmatpush1.bf16.msra.mxu0 0
        %857 = vmatprep.subr.bf16.mxu0 0
        %858 = vmatpush1.bf16.msra.mxu0 0
        %859 = vmatprep.subr.bf16.mxu0 0
        %860 = vmatpush1.bf16.msra.mxu0 0
        %861 = vmatprep.subr.bf16.mxu0 0
        %862 = vmatpush1.bf16.msra.mxu0 0
        %863 = vmatprep.subr.bf16.mxu0 0
        %864 = vmatpush1.bf16.msra.mxu0 0
        %865 = vmatprep.mubr.bf16.mxu0 0
        %866 = vmatmul.mubr.bf16.gmra.mrb[0].mxu0 %v786
        %v867 = vpop.f32.mrb[0].mxu0
        %v868 = vadd.f32 0.0, %v867
        %v869 = vpop.f32.mrb[0].mxu0
        %v870 = vpop.f32.mrb[0].mxu0
        %v871 = vadd.f32 0.0, %v870
        %v872 = vpop.f32.mrb[0].mxu0
        %873 = vmatprep.mubr.bf16.mxu0 0
        %874 = vmatmul.mubr.bf16.gmra.mrb[0].mxu0 %v789
        %v875 = vpop.f32.mrb[0].mxu0
        %v876 = vadd.f32 0.0, %v875
        %v877 = vpop.f32.mrb[0].mxu0
        %v878 = vpop.f32.mrb[0].mxu0
        %v879 = vadd.f32 0.0, %v878
        %v880 = vpop.f32.mrb[0].mxu0
        %881 = vmatprep.mubr.bf16.mxu0 0
        %882 = vmatmul.mubr.bf16.gmra.mrb[0].mxu0 %v792
        %v883 = vpop.f32.mrb[0].mxu0
        %v884 = vadd.f32 0.0, %v883
        %v885 = vpop.f32.mrb[0].mxu0
        %v886 = vpop.f32.mrb[0].mxu0
        %v887 = vadd.f32 0.0, %v886
        %v888 = vpop.f32.mrb[0].mxu0
        %889 = vmatprep.mubr.bf16.mxu0 0
        %890 = vmatmul.mubr.bf16.gmra.mrb[0].mxu0 %v795
        %v891 = vpop.f32.mrb[0].mxu0
        %v892 = vadd.f32 0.0, %v891
        %v893 = vpop.f32.mrb[0].mxu0
        %v894 = vpop.f32.mrb[0].mxu0
        %v895 = vadd.f32 0.0, %v894
        %v896 = vpop.f32.mrb[0].mxu0
        %897 = vmatprep.mubr.bf16.mxu0 0
        %898 = vmatmul.mubr.bf16.gmra.mrb[0].mxu0 %v798
        %v899 = vpop.f32.mrb[0].mxu0
        %v900 = vadd.f32 0.0, %v899
        %v901 = vpop.f32.mrb[0].mxu0
        %v902 = vpop.f32.mrb[0].mxu0
        %v903 = vadd.f32 0.0, %v902
        %v904 = vpop.f32.mrb[0].mxu0
        %905 = vmatprep.mubr.bf16.mxu0 0
        %906 = vmatmul.mubr.bf16.gmra.mrb[0].mxu0 %v801
        %v907 = vpop.f32.mrb[0].mxu0
        %v908 = vadd.f32 0.0, %v907
        %v909 = vpop.f32.mrb[0].mxu0
        %v910 = vpop.f32.mrb[0].mxu0
        %v911 = vadd.f32 0.0, %v910
        %v912 = vpop.f32.mrb[0].mxu0
        %913 = vmatprep.mubr.bf16.mxu0 0
        %914 = vmatmul.mubr.bf16.gmra.mrb[0].mxu0 %v804
        %v915 = vpop.f32.mrb[0].mxu0
        %v916 = vadd.f32 0.0, %v915
        %v917 = vpop.f32.mrb[0].mxu0
        %v918 = vpop.f32.mrb[0].mxu0
        %v919 = vadd.f32 0.0, %v918
        %v920 = vpop.f32.mrb[0].mxu0
        %921 = vmatprep.mubr.bf16.mxu0 0
        %922 = vmatmul.mubr.bf16.gmra.mrb[0].mxu0 %v807
        %v923 = vpop.f32.mrb[0].mxu0
        %v924 = vadd.f32 0.0, %v923
        %v925 = vpop.f32.mrb[0].mxu0
        %v926 = vpop.f32.mrb[0].mxu0
        %v927 = vadd.f32 0.0, %v926
        %v928 = vpop.f32.mrb[0].mxu0
        %929 = vmatprep.mubr.bf16.mxu0 0
        %930 = vmatmul.mubr.bf16.gmra.mrb[0].mxu0 %v810
        %v931 = vpop.f32.mrb[0].mxu0
        %v932 = vadd.f32 0.0, %v931
        %v933 = vpop.f32.mrb[0].mxu0
        %v934 = vpop.f32.mrb[0].mxu0
        %v935 = vadd.f32 0.0, %v934
        %v936 = vpop.f32.mrb[0].mxu0
        %937 = vmatprep.mubr.bf16.mxu0 0
        %938 = vmatmul.mubr.bf16.gmra.mrb[0].mxu0 %v813
        %v939 = vpop.f32.mrb[0].mxu0
        %v940 = vadd.f32 0.0, %v939
        %v941 = vpop.f32.mrb[0].mxu0
        %v942 = vpop.f32.mrb[0].mxu0
        %v943 = vadd.f32 0.0, %v942
        %v944 = vpop.f32.mrb[0].mxu0
        %945 = vmatprep.mubr.bf16.mxu0 0
        %946 = vmatmul.mubr.bf16.gmra.mrb[0].mxu0 %v816
        %v947 = vpop.f32.mrb[0].mxu0
        %v948 = vadd.f32 0.0, %v947
        %v949 = vpop.f32.mrb[0].mxu0
        %v950 = vpop.f32.mrb[0].mxu0
        %v951 = vadd.f32 0.0, %v950
        %v952 = vpop.f32.mrb[0].mxu0
        %953 = vmatprep.mubr.bf16.mxu0 0
        %954 = vmatmul.mubr.bf16.gmra.mrb[0].mxu0 %v819
        %v955 = vpop.f32.mrb[0].mxu0
        %v956 = vadd.f32 0.0, %v955
        %v957 = vpop.f32.mrb[0].mxu0
        %v958 = vpop.f32.mrb[0].mxu0
        %v959 = vadd.f32 0.0, %v958
        %v960 = vpop.f32.mrb[0].mxu0
        %961 = vmatprep.mubr.bf16.mxu0 0
        %962 = vmatmul.mubr.bf16.gmra.mrb[0].mxu0 %v822
        %v963 = vpop.f32.mrb[0].mxu0
        %v964 = vadd.f32 0.0, %v963
        %v965 = vpop.f32.mrb[0].mxu0
        %v966 = vpop.f32.mrb[0].mxu0
        %v967 = vadd.f32 0.0, %v966
        %v968 = vpop.f32.mrb[0].mxu0
        %969 = vmatprep.mubr.bf16.mxu0 0
        %970 = vmatmul.mubr.bf16.gmra.mrb[0].mxu0 %v825
        %v971 = vpop.f32.mrb[0].mxu0
        %v972 = vadd.f32 0.0, %v971
        %v973 = vpop.f32.mrb[0].mxu0
        %v974 = vpop.f32.mrb[0].mxu0
        %v975 = vadd.f32 0.0, %v974
        %v976 = vpop.f32.mrb[0].mxu0
        %977 = vmatprep.mubr.bf16.mxu0 0
        %978 = vmatmul.mubr.bf16.gmra.mrb[0].mxu0 %v828
        %v979 = vpop.f32.mrb[0].mxu0
        %v980 = vadd.f32 0.0, %v979
        %v981 = vpop.f32.mrb[0].mxu0
        %v982 = vpop.f32.mrb[0].mxu0
        %v983 = vadd.f32 0.0, %v982
        %v984 = vpop.f32.mrb[0].mxu0
        %985 = vmatprep.mubr.bf16.mxu0 0
        %986 = vmatmul.mubr.bf16.gmra.mrb[0].mxu0 %v831
        %v987 = vpop.f32.mrb[0].mxu0
        %v988 = vadd.f32 0.0, %v987
        %v989 = vpop.f32.mrb[0].mxu0
        %v990 = vpop.f32.mrb[0].mxu0
        %v991 = vadd.f32 0.0, %v990
        %v992 = vpop.f32.mrb[0].mxu0
        %993 = vdwg.mxu0
        %v994 = vld [vmem:[%s281] sm:$0x1]
        %v995 = vadd.f32 %v868, %v871
        %v996 = vadd.f32 %v995, %v876
        %v997 = vadd.f32 %v996, %v879
        %v998 = vadd.f32 %v997, %v884
        %v999 = vadd.f32 %v998, %v887
        %v1000 = vadd.f32 %v999, %v892
        %v1001 = vadd.f32 %v1000, %v895
        %v1002 = vadd.f32 %v1001, %v900
        %v1003 = vadd.f32 %v1002, %v903
        %v1004 = vadd.f32 %v1003, %v908
        %v1005 = vadd.f32 %v1004, %v911
        %v1006 = vadd.f32 %v1005, %v916
        %v1007 = vadd.f32 %v1006, %v919
        %v1008 = vadd.f32 %v1007, %v924
        %v1009 = vadd.f32 %v1008, %v927
        %v1010 = vadd.f32 %v1009, %v932
        %v1011 = vadd.f32 %v1010, %v935
        %v1012 = vadd.f32 %v1011, %v940
        %v1013 = vadd.f32 %v1012, %v943
        %v1014 = vadd.f32 %v1013, %v948
        %v1015 = vadd.f32 %v1014, %v951
        %v1016 = vadd.f32 %v1015, %v956
        %v1017 = vadd.f32 %v1016, %v959
        %v1018 = vadd.f32 %v1017, %v964
        %v1019 = vadd.f32 %v1018, %v967
        %v1020 = vadd.f32 %v1019, %v972
        %v1021 = vadd.f32 %v1020, %v975
        %v1022 = vadd.f32 %v1021, %v980
        %v1023 = vadd.f32 %v1022, %v983
        %v1024 = vadd.f32 %v1023, %v988
        %v1025 = vadd.f32 %v1024, %v991
        %v1026 = vrot.slane %v1025, 4
        %v1027 = vadd.f32 %v1025, %v1026
        %v1028 = vrot.slane %v1027, 2
        %v1029 = vadd.f32 %v1027, %v1028
        %v1030 = vrot.slane %v1029, 1
        %v1031 = vadd.f32 %v1029, %v1030
        %v1032 = vadd.f32 %v994, %v1031
        %1033 = vst [vmem:[%s281] sm:$0x1] %v1032
        %v1034 = vld [vmem:[%s284] sm:$0x1]
        %v1035 = vmul.f32 %v868, %v868
        %v1036 = vmul.f32 %v871, %v871
        %v1037 = vmul.f32 %v876, %v876
        %v1038 = vmul.f32 %v879, %v879
        %v1039 = vmul.f32 %v884, %v884
        %v1040 = vmul.f32 %v887, %v887
        %v1041 = vmul.f32 %v892, %v892
        %v1042 = vmul.f32 %v895, %v895
        %v1043 = vmul.f32 %v900, %v900
        %v1044 = vmul.f32 %v903, %v903
        %v1045 = vmul.f32 %v908, %v908
        %v1046 = vmul.f32 %v911, %v911
        %v1047 = vmul.f32 %v916, %v916
        %v1048 = vmul.f32 %v919, %v919
        %v1049 = vmul.f32 %v924, %v924
        %v1050 = vmul.f32 %v927, %v927
        %v1051 = vmul.f32 %v932, %v932
        %v1052 = vmul.f32 %v935, %v935
        %v1053 = vmul.f32 %v940, %v940
        %v1054 = vmul.f32 %v943, %v943
        %v1055 = vmul.f32 %v948, %v948
        %v1056 = vmul.f32 %v951, %v951
        %v1057 = vmul.f32 %v956, %v956
        %v1058 = vmul.f32 %v959, %v959
        %v1059 = vmul.f32 %v964, %v964
        %v1060 = vmul.f32 %v967, %v967
        %v1061 = vmul.f32 %v972, %v972
        %v1062 = vmul.f32 %v975, %v975
        %v1063 = vmul.f32 %v980, %v980
        %v1064 = vmul.f32 %v983, %v983
        %v1065 = vmul.f32 %v988, %v988
        %v1066 = vmul.f32 %v991, %v991
        %v1067 = vadd.f32 %v1035, %v1036
        %v1068 = vadd.f32 %v1067, %v1037
        %v1069 = vadd.f32 %v1068, %v1038
        %v1070 = vadd.f32 %v1069, %v1039
        %v1071 = vadd.f32 %v1070, %v1040
        %v1072 = vadd.f32 %v1071, %v1041
        %v1073 = vadd.f32 %v1072, %v1042
        %v1074 = vadd.f32 %v1073, %v1043
        %v1075 = vadd.f32 %v1074, %v1044
        %v1076 = vadd.f32 %v1075, %v1045
        %v1077 = vadd.f32 %v1076, %v1046
        %v1078 = vadd.f32 %v1077, %v1047
        %v1079 = vadd.f32 %v1078, %v1048
        %v1080 = vadd.f32 %v1079, %v1049
        %v1081 = vadd.f32 %v1080, %v1050
        %v1082 = vadd.f32 %v1081, %v1051
        %v1083 = vadd.f32 %v1082, %v1052
        %v1084 = vadd.f32 %v1083, %v1053
        %v1085 = vadd.f32 %v1084, %v1054
        %v1086 = vadd.f32 %v1085, %v1055
        %v1087 = vadd.f32 %v1086, %v1056
        %v1088 = vadd.f32 %v1087, %v1057
        %v1089 = vadd.f32 %v1088, %v1058
        %v1090 = vadd.f32 %v1089, %v1059
        %v1091 = vadd.f32 %v1090, %v1060
        %v1092 = vadd.f32 %v1091, %v1061
        %v1093 = vadd.f32 %v1092, %v1062
        %v1094 = vadd.f32 %v1093, %v1063
        %v1095 = vadd.f32 %v1094, %v1064
        %v1096 = vadd.f32 %v1095, %v1065
        %v1097 = vadd.f32 %v1096, %v1066
        %v1098 = vrot.slane %v1097, 4
        %v1099 = vadd.f32 %v1097, %v1098
        %v1100 = vrot.slane %v1099, 2
        %v1101 = vadd.f32 %v1099, %v1100
        %v1102 = vrot.slane %v1101, 1
        %v1103 = vadd.f32 %v1101, %v1102
        %v1104 = vadd.f32 %v1034, %v1103
        %1105 = vst [vmem:[%s284] sm:$0x1] %v1104
      $region48: #{stnkd_forward.5} parent=39 // pred_fallthru
        _
      %p1106 = scmp.eq.s32.totalorder %s23, 1
      // Predicated region
      $region49: #{stnkd_forward.5} parent=39 // pred_check
        %p1107 = pneg %p1106
      $region50: #{stnkd_forward.5} parent=39 // pred_check_branch
        %1109 = sbr.rel (%p1107) target = $region52
      $region51: #{stnkd_forward.5} parent=39 // pred_region
        %v1110 = vlaneseq
        %v1111 = vshrl.u32 %v1110, 7
        %v1112 = vadd.s32 %v1111, 8
        %v1113 = vadd.s32 %v1111, 16
        %v1114 = vadd.s32 %v1111, 24
        %v1115 = vadd.s32 %v1111, 32
        %v1116 = vadd.s32 %v1111, 40
        %v1117 = vadd.s32 %v1111, 48
        %v1118 = vadd.s32 %v1111, 56
        %v1119 = vadd.s32 %v1111, 64
        %v1120 = vadd.s32 %v1111, 72
        %v1121 = vadd.s32 %v1111, 80
        %v1122 = vadd.s32 %v1111, 88
        %v1123 = vadd.s32 %v1111, 96
        %v1124 = vadd.s32 %v1111, 104
        %v1125 = vadd.s32 %v1111, 112
        %v1126 = vadd.s32 %v1111, 120
        %v1127 = vadd.s32 %v1111, 128
        %v1128 = vadd.s32 %v1111, 136
        %v1129 = vadd.s32 %v1111, 144
        %v1130 = vadd.s32 %v1111, 152
        %v1131 = vadd.s32 %v1111, 160
        %v1132 = vadd.s32 %v1111, 168
        %v1133 = vadd.s32 %v1111, 176
        %v1134 = vadd.s32 %v1111, 184
        %v1135 = vadd.s32 %v1111, 192
        %v1136 = vadd.s32 %v1111, 200
        %v1137 = vadd.s32 %v1111, 208
        %v1138 = vadd.s32 %v1111, 216
        %v1139 = vadd.s32 %v1111, 224
        %v1140 = vadd.s32 %v1111, 232
        %v1141 = vadd.s32 %v1111, 240
        %v1142 = vadd.s32 %v1111, 248
        %s1143 = smul.u32 %s23, 256
        %s1144 = ssub.s32 300, %s1143
        %v1145 = vstv %s1144
        %vm1146 = vcmp.lt.s32.totalorder %v1111, %v1145
        %vm1147 = vcmp.lt.s32.totalorder %v1112, %v1145
        %vm1148 = vcmp.lt.s32.totalorder %v1113, %v1145
        %vm1149 = vcmp.lt.s32.totalorder %v1114, %v1145
        %vm1150 = vcmp.lt.s32.totalorder %v1115, %v1145
        %vm1151 = vcmp.lt.s32.totalorder %v1116, %v1145
        %vm1152 = vcmp.lt.s32.totalorder %v1117, %v1145
        %vm1153 = vcmp.lt.s32.totalorder %v1118, %v1145
        %vm1154 = vcmp.lt.s32.totalorder %v1119, %v1145
        %vm1155 = vcmp.lt.s32.totalorder %v1120, %v1145
        %vm1156 = vcmp.lt.s32.totalorder %v1121, %v1145
        %vm1157 = vcmp.lt.s32.totalorder %v1122, %v1145
        %vm1158 = vcmp.lt.s32.totalorder %v1123, %v1145
        %vm1159 = vcmp.lt.s32.totalorder %v1124, %v1145
        %vm1160 = vcmp.lt.s32.totalorder %v1125, %v1145
        %vm1161 = vcmp.lt.s32.totalorder %v1126, %v1145
        %vm1162 = vcmp.lt.s32.totalorder %v1127, %v1145
        %vm1163 = vcmp.lt.s32.totalorder %v1128, %v1145
        %vm1164 = vcmp.lt.s32.totalorder %v1129, %v1145
        %vm1165 = vcmp.lt.s32.totalorder %v1130, %v1145
        %vm1166 = vcmp.lt.s32.totalorder %v1131, %v1145
        %vm1167 = vcmp.lt.s32.totalorder %v1132, %v1145
        %vm1168 = vcmp.lt.s32.totalorder %v1133, %v1145
        %vm1169 = vcmp.lt.s32.totalorder %v1134, %v1145
        %vm1170 = vcmp.lt.s32.totalorder %v1135, %v1145
        %vm1171 = vcmp.lt.s32.totalorder %v1136, %v1145
        %vm1172 = vcmp.lt.s32.totalorder %v1137, %v1145
        %vm1173 = vcmp.lt.s32.totalorder %v1138, %v1145
        %vm1174 = vcmp.lt.s32.totalorder %v1139, %v1145
        %vm1175 = vcmp.lt.s32.totalorder %v1140, %v1145
        %vm1176 = vcmp.lt.s32.totalorder %v1141, %v1145
        %vm1177 = vcmp.lt.s32.totalorder %v1142, %v1145
        %v1178 = vsel %vm1146, 1, 0
        %v1179 = vsel %vm1147, 1, 0
        %v1180 = vsel %vm1148, 1, 0
        %v1181 = vsel %vm1149, 1, 0
        %v1182 = vsel %vm1150, 1, 0
        %v1183 = vsel %vm1151, 1, 0
        %v1184 = vsel %vm1152, 1, 0
        %v1185 = vsel %vm1153, 1, 0
        %v1186 = vsel %vm1154, 1, 0
        %v1187 = vsel %vm1155, 1, 0
        %v1188 = vsel %vm1156, 1, 0
        %v1189 = vsel %vm1157, 1, 0
        %v1190 = vsel %vm1158, 1, 0
        %v1191 = vsel %vm1159, 1, 0
        %v1192 = vsel %vm1160, 1, 0
        %v1193 = vsel %vm1161, 1, 0
        %v1194 = vsel %vm1162, 1, 0
        %v1195 = vsel %vm1163, 1, 0
        %v1196 = vsel %vm1164, 1, 0
        %v1197 = vsel %vm1165, 1, 0
        %v1198 = vsel %vm1166, 1, 0
        %v1199 = vsel %vm1167, 1, 0
        %v1200 = vsel %vm1168, 1, 0
        %v1201 = vsel %vm1169, 1, 0
        %v1202 = vsel %vm1170, 1, 0
        %v1203 = vsel %vm1171, 1, 0
        %v1204 = vsel %vm1172, 1, 0
        %v1205 = vsel %vm1173, 1, 0
        %v1206 = vsel %vm1174, 1, 0
        %v1207 = vsel %vm1175, 1, 0
        %v1208 = vsel %vm1176, 1, 0
        %v1209 = vsel %vm1177, 1, 0
        %v1210 = vcvt.s32.f32 %v1178
        %v1211 = vcvt.s32.f32 %v1179
        %v1212 = vcvt.s32.f32 %v1180
        %v1213 = vcvt.s32.f32 %v1181
        %v1214 = vcvt.s32.f32 %v1182
        %v1215 = vcvt.s32.f32 %v1183
        %v1216 = vcvt.s32.f32 %v1184
        %v1217 = vcvt.s32.f32 %v1185
        %v1218 = vcvt.s32.f32 %v1186
        %v1219 = vcvt.s32.f32 %v1187
        %v1220 = vcvt.s32.f32 %v1188
        %v1221 = vcvt.s32.f32 %v1189
        %v1222 = vcvt.s32.f32 %v1190
        %v1223 = vcvt.s32.f32 %v1191
        %v1224 = vcvt.s32.f32 %v1192
        %v1225 = vcvt.s32.f32 %v1193
        %v1226 = vcvt.s32.f32 %v1194
        %v1227 = vcvt.s32.f32 %v1195
        %v1228 = vcvt.s32.f32 %v1196
        %v1229 = vcvt.s32.f32 %v1197
        %v1230 = vcvt.s32.f32 %v1198
        %v1231 = vcvt.s32.f32 %v1199
        %v1232 = vcvt.s32.f32 %v1200
        %v1233 = vcvt.s32.f32 %v1201
        %v1234 = vcvt.s32.f32 %v1202
        %v1235 = vcvt.s32.f32 %v1203
        %v1236 = vcvt.s32.f32 %v1204
        %v1237 = vcvt.s32.f32 %v1205
        %v1238 = vcvt.s32.f32 %v1206
        %v1239 = vcvt.s32.f32 %v1207
        %v1240 = vcvt.s32.f32 %v1208
        %v1241 = vcvt.s32.f32 %v1209
        %v1242 = vpack.c.bf16 %v1211, %v1210
        %v1243 = vpack.c.bf16 %v1213, %v1212
        %v1244 = vpack.c.bf16 %v1215, %v1214
        %v1245 = vpack.c.bf16 %v1217, %v1216
        %v1246 = vpack.c.bf16 %v1219, %v1218
        %v1247 = vpack.c.bf16 %v1221, %v1220
        %v1248 = vpack.c.bf16 %v1223, %v1222
        %v1249 = vpack.c.bf16 %v1225, %v1224
        %v1250 = vpack.c.bf16 %v1227, %v1226
        %v1251 = vpack.c.bf16 %v1229, %v1228
        %v1252 = vpack.c.bf16 %v1231, %v1230
        %v1253 = vpack.c.bf16 %v1233, %v1232
        %v1254 = vpack.c.bf16 %v1235, %v1234
        %v1255 = vpack.c.bf16 %v1237, %v1236
        %v1256 = vpack.c.bf16 %v1239, %v1238
        %v1257 = vpack.c.bf16 %v1241, %v1240
        %v1258 = vmul.bf16 %v732, %v1242
        %v1259 = vmul.bf16 %v733, %v1243
        %v1260 = vmul.bf16 %v734, %v1244
        %v1261 = vmul.bf16 %v735, %v1245
        %v1262 = vmul.bf16 %v736, %v1246
        %v1263 = vmul.bf16 %v737, %v1247
        %v1264 = vmul.bf16 %v738, %v1248
        %v1265 = vmul.bf16 %v739, %v1249
        %v1266 = vmul.bf16 %v740, %v1250
        %v1267 = vmul.bf16 %v741, %v1251
        %v1268 = vmul.bf16 %v742, %v1252
        %v1269 = vmul.bf16 %v743, %v1253
        %v1270 = vmul.bf16 %v744, %v1254
        %v1271 = vmul.bf16 %v745, %v1255
        %v1272 = vmul.bf16 %v746, %v1256
        %v1273 = vmul.bf16 %v747, %v1257
        %v1274 = vld [vmem:[%s4] sm:$0xf]
        %v1275 = vld [vmem:[%s4 + $0x4] sm:$0xf]
        %v1276 = vld [vmem:[%s4 + $0x8] sm:$0xf]
        %v1277 = vld [vmem:[%s4 + $0xc] sm:$0xf]
        %v1278 = vld [vmem:[%s4 + $0x10] sm:$0xf]
        %v1279 = vld [vmem:[%s4 + $0x14] sm:$0xf]
        %v1280 = vld [vmem:[%s4 + $0x18] sm:$0xf]
        %v1281 = vld [vmem:[%s4 + $0x1c] sm:$0xf]
        %v1290 = vunpack.c.l.b16 %v1274
        %v1291 = vunpack.c.l.b16 %v1275
        %v1292 = vunpack.c.l.b16 %v1276
        %v1293 = vunpack.c.l.b16 %v1277
        %v1294 = vunpack.c.l.b16 %v1278
        %v1295 = vunpack.c.l.b16 %v1279
        %v1296 = vunpack.c.l.b16 %v1280
        %v1297 = vunpack.c.l.b16 %v1281
        %v1298 = vpack.c.b16 %v1291, %v1290
        %v1299 = vpack.c.b16 %v1293, %v1292
        %v1300 = vpack.c.b16 %v1295, %v1294
        %v1301 = vpack.c.b16 %v1297, %v1296
        %vm1306 = vcmask 523264
        %v1308 = vsel %vm1306, %v1258, 0
        %v1311 = vsel %vm1306, %v1259, 0
        %v1314 = vsel %vm1306, %v1260, 0
        %v1317 = vsel %vm1306, %v1261, 0
        %v1320 = vsel %vm1306, %v1262, 0
        %v1323 = vsel %vm1306, %v1263, 0
        %v1326 = vsel %vm1306, %v1264, 0
        %v1329 = vsel %vm1306, %v1265, 0
        %v1332 = vsel %vm1306, %v1266, 0
        %v1335 = vsel %vm1306, %v1267, 0
        %v1338 = vsel %vm1306, %v1268, 0
        %v1341 = vsel %vm1306, %v1269, 0
        %v1344 = vsel %vm1306, %v1270, 0
        %v1347 = vsel %vm1306, %v1271, 0
        %v1350 = vsel %vm1306, %v1272, 0
        %v1353 = vsel %vm1306, %v1273, 0
        %1355 = vmatprep.subr.bf16.mxu0 0
        %1356 = vmatpush1.bf16.msra.mxu0 %v1298
        %1357 = vmatprep.subr.bf16.mxu0 0
        %1358 = vmatpush1.bf16.msra.mxu0 %v1299
        %1359 = vmatprep.subr.bf16.mxu0 0
        %1360 = vmatpush1.bf16.msra.mxu0 %v1300
        %1361 = vmatprep.subr.bf16.mxu0 0
        %1362 = vmatpush1.bf16.msra.mxu0 %v1301
        %1363 = vmatprep.subr.bf16.mxu0 0
        %1364 = vmatpush1.bf16.msra.mxu0 0
        %1365 = vmatprep.subr.bf16.mxu0 0
        %1366 = vmatpush1.bf16.msra.mxu0 0
        %1367 = vmatprep.subr.bf16.mxu0 0
        %1368 = vmatpush1.bf16.msra.mxu0 0
        %1369 = vmatprep.subr.bf16.mxu0 0
        %1370 = vmatpush1.bf16.msra.mxu0 0
        %1371 = vmatprep.subr.bf16.mxu0 0
        %1372 = vmatpush1.bf16.msra.mxu0 0
        %1373 = vmatprep.subr.bf16.mxu0 0
        %1374 = vmatpush1.bf16.msra.mxu0 0
        %1375 = vmatprep.subr.bf16.mxu0 0
        %1376 = vmatpush1.bf16.msra.mxu0 0
        %1377 = vmatprep.subr.bf16.mxu0 0
        %1378 = vmatpush1.bf16.msra.mxu0 0
        %1379 = vmatprep.subr.bf16.mxu0 0
        %1380 = vmatpush1.bf16.msra.mxu0 0
        %1381 = vmatprep.subr.bf16.mxu0 0
        %1382 = vmatpush1.bf16.msra.mxu0 0
        %1383 = vmatprep.subr.bf16.mxu0 0
        %1384 = vmatpush1.bf16.msra.mxu0 0
        %1385 = vmatprep.subr.bf16.mxu0 0
        %1386 = vmatpush1.bf16.msra.mxu0 0
        %1387 = vmatprep.mubr.bf16.mxu0 0
        %1388 = vmatmul.mubr.bf16.gmra.mrb[0].mxu0 %v1308
        %v1389 = vpop.f32.mrb[0].mxu0
        %v1390 = vadd.f32 0.0, %v1389
        %v1391 = vpop.f32.mrb[0].mxu0
        %v1392 = vpop.f32.mrb[0].mxu0
        %v1393 = vadd.f32 0.0, %v1392
        %v1394 = vpop.f32.mrb[0].mxu0
        %1395 = vmatprep.mubr.bf16.mxu0 0
        %1396 = vmatmul.mubr.bf16.gmra.mrb[0].mxu0 %v1311
        %v1397 = vpop.f32.mrb[0].mxu0
        %v1398 = vadd.f32 0.0, %v1397
        %v1399 = vpop.f32.mrb[0].mxu0
        %v1400 = vpop.f32.mrb[0].mxu0
        %v1401 = vadd.f32 0.0, %v1400
        %v1402 = vpop.f32.mrb[0].mxu0
        %1403 = vmatprep.mubr.bf16.mxu0 0
        %1404 = vmatmul.mubr.bf16.gmra.mrb[0].mxu0 %v1314
        %v1405 = vpop.f32.mrb[0].mxu0
        %v1406 = vadd.f32 0.0, %v1405
        %v1407 = vpop.f32.mrb[0].mxu0
        %v1408 = vpop.f32.mrb[0].mxu0
        %v1409 = vadd.f32 0.0, %v1408
        %v1410 = vpop.f32.mrb[0].mxu0
        %1411 = vmatprep.mubr.bf16.mxu0 0
        %1412 = vmatmul.mubr.bf16.gmra.mrb[0].mxu0 %v1317
        %v1413 = vpop.f32.mrb[0].mxu0
        %v1414 = vadd.f32 0.0, %v1413
        %v1415 = vpop.f32.mrb[0].mxu0
        %v1416 = vpop.f32.mrb[0].mxu0
        %v1417 = vadd.f32 0.0, %v1416
        %v1418 = vpop.f32.mrb[0].mxu0
        %1419 = vmatprep.mubr.bf16.mxu0 0
        %1420 = vmatmul.mubr.bf16.gmra.mrb[0].mxu0 %v1320
        %v1421 = vpop.f32.mrb[0].mxu0
        %v1422 = vadd.f32 0.0, %v1421
        %v1423 = vpop.f32.mrb[0].mxu0
        %v1424 = vpop.f32.mrb[0].mxu0
        %v1425 = vadd.f32 0.0, %v1424
        %v1426 = vpop.f32.mrb[0].mxu0
        %1427 = vmatprep.mubr.bf16.mxu0 0
        %1428 = vmatmul.mubr.bf16.gmra.mrb[0].mxu0 %v1323
        %v1429 = vpop.f32.mrb[0].mxu0
        %v1430 = vadd.f32 0.0, %v1429
        %v1431 = vpop.f32.mrb[0].mxu0
        %v1432 = vpop.f32.mrb[0].mxu0
        %v1433 = vadd.f32 0.0, %v1432
        %v1434 = vpop.f32.mrb[0].mxu0
        %1435 = vmatprep.mubr.bf16.mxu0 0
        %1436 = vmatmul.mubr.bf16.gmra.mrb[0].mxu0 %v1326
        %v1437 = vpop.f32.mrb[0].mxu0
        %v1438 = vadd.f32 0.0, %v1437
        %v1439 = vpop.f32.mrb[0].mxu0
        %v1440 = vpop.f32.mrb[0].mxu0
        %v1441 = vadd.f32 0.0, %v1440
        %v1442 = vpop.f32.mrb[0].mxu0
        %1443 = vmatprep.mubr.bf16.mxu0 0
        %1444 = vmatmul.mubr.bf16.gmra.mrb[0].mxu0 %v1329
        %v1445 = vpop.f32.mrb[0].mxu0
        %v1446 = vadd.f32 0.0, %v1445
        %v1447 = vpop.f32.mrb[0].mxu0
        %v1448 = vpop.f32.mrb[0].mxu0
        %v1449 = vadd.f32 0.0, %v1448
        %v1450 = vpop.f32.mrb[0].mxu0
        %1451 = vmatprep.mubr.bf16.mxu0 0
        %1452 = vmatmul.mubr.bf16.gmra.mrb[0].mxu0 %v1332
        %v1453 = vpop.f32.mrb[0].mxu0
        %v1454 = vadd.f32 0.0, %v1453
        %v1455 = vpop.f32.mrb[0].mxu0
        %v1456 = vpop.f32.mrb[0].mxu0
        %v1457 = vadd.f32 0.0, %v1456
        %v1458 = vpop.f32.mrb[0].mxu0
        %1459 = vmatprep.mubr.bf16.mxu0 0
        %1460 = vmatmul.mubr.bf16.gmra.mrb[0].mxu0 %v1335
        %v1461 = vpop.f32.mrb[0].mxu0
        %v1462 = vadd.f32 0.0, %v1461
        %v1463 = vpop.f32.mrb[0].mxu0
        %v1464 = vpop.f32.mrb[0].mxu0
        %v1465 = vadd.f32 0.0, %v1464
        %v1466 = vpop.f32.mrb[0].mxu0
        %1467 = vmatprep.mubr.bf16.mxu0 0
        %1468 = vmatmul.mubr.bf16.gmra.mrb[0].mxu0 %v1338
        %v1469 = vpop.f32.mrb[0].mxu0
        %v1470 = vadd.f32 0.0, %v1469
        %v1471 = vpop.f32.mrb[0].mxu0
        %v1472 = vpop.f32.mrb[0].mxu0
        %v1473 = vadd.f32 0.0, %v1472
        %v1474 = vpop.f32.mrb[0].mxu0
        %1475 = vmatprep.mubr.bf16.mxu0 0
        %1476 = vmatmul.mubr.bf16.gmra.mrb[0].mxu0 %v1341
        %v1477 = vpop.f32.mrb[0].mxu0
        %v1478 = vadd.f32 0.0, %v1477
        %v1479 = vpop.f32.mrb[0].mxu0
        %v1480 = vpop.f32.mrb[0].mxu0
        %v1481 = vadd.f32 0.0, %v1480
        %v1482 = vpop.f32.mrb[0].mxu0
        %1483 = vmatprep.mubr.bf16.mxu0 0
        %1484 = vmatmul.mubr.bf16.gmra.mrb[0].mxu0 %v1344
        %v1485 = vpop.f32.mrb[0].mxu0
        %v1486 = vadd.f32 0.0, %v1485
        %v1487 = vpop.f32.mrb[0].mxu0
        %v1488 = vpop.f32.mrb[0].mxu0
        %v1489 = vadd.f32 0.0, %v1488
        %v1490 = vpop.f32.mrb[0].mxu0
        %1491 = vmatprep.mubr.bf16.mxu0 0
        %1492 = vmatmul.mubr.bf16.gmra.mrb[0].mxu0 %v1347
        %v1493 = vpop.f32.mrb[0].mxu0
        %v1494 = vadd.f32 0.0, %v1493
        %v1495 = vpop.f32.mrb[0].mxu0
        %v1496 = vpop.f32.mrb[0].mxu0
        %v1497 = vadd.f32 0.0, %v1496
        %v1498 = vpop.f32.mrb[0].mxu0
        %1499 = vmatprep.mubr.bf16.mxu0 0
        %1500 = vmatmul.mubr.bf16.gmra.mrb[0].mxu0 %v1350
        %v1501 = vpop.f32.mrb[0].mxu0
        %v1502 = vadd.f32 0.0, %v1501
        %v1503 = vpop.f32.mrb[0].mxu0
        %v1504 = vpop.f32.mrb[0].mxu0
        %v1505 = vadd.f32 0.0, %v1504
        %v1506 = vpop.f32.mrb[0].mxu0
        %1507 = vmatprep.mubr.bf16.mxu0 0
        %1508 = vmatmul.mubr.bf16.gmra.mrb[0].mxu0 %v1353
        %v1509 = vpop.f32.mrb[0].mxu0
        %v1510 = vadd.f32 0.0, %v1509
        %v1511 = vpop.f32.mrb[0].mxu0
        %v1512 = vpop.f32.mrb[0].mxu0
        %v1513 = vadd.f32 0.0, %v1512
        %v1514 = vpop.f32.mrb[0].mxu0
        %1515 = vdwg.mxu0
        %v1516 = vld [vmem:[%s281] sm:$0x1]
        %v1517 = vadd.f32 %v1390, %v1393
        %v1518 = vadd.f32 %v1517, %v1398
        %v1519 = vadd.f32 %v1518, %v1401
        %v1520 = vadd.f32 %v1519, %v1406
        %v1521 = vadd.f32 %v1520, %v1409
        %v1522 = vadd.f32 %v1521, %v1414
        %v1523 = vadd.f32 %v1522, %v1417
        %v1524 = vadd.f32 %v1523, %v1422
        %v1525 = vadd.f32 %v1524, %v1425
        %v1526 = vadd.f32 %v1525, %v1430
        %v1527 = vadd.f32 %v1526, %v1433
        %v1528 = vadd.f32 %v1527, %v1438
        %v1529 = vadd.f32 %v1528, %v1441
        %v1530 = vadd.f32 %v1529, %v1446
        %v1531 = vadd.f32 %v1530, %v1449
        %v1532 = vadd.f32 %v1531, %v1454
        %v1533 = vadd.f32 %v1532, %v1457
        %v1534 = vadd.f32 %v1533, %v1462
        %v1535 = vadd.f32 %v1534, %v1465
        %v1536 = vadd.f32 %v1535, %v1470
        %v1537 = vadd.f32 %v1536, %v1473
        %v1538 = vadd.f32 %v1537, %v1478
        %v1539 = vadd.f32 %v1538, %v1481
        %v1540 = vadd.f32 %v1539, %v1486
        %v1541 = vadd.f32 %v1540, %v1489
        %v1542 = vadd.f32 %v1541, %v1494
        %v1543 = vadd.f32 %v1542, %v1497
        %v1544 = vadd.f32 %v1543, %v1502
        %v1545 = vadd.f32 %v1544, %v1505
        %v1546 = vadd.f32 %v1545, %v1510
        %v1547 = vadd.f32 %v1546, %v1513
        %v1548 = vrot.slane %v1547, 4
        %v1549 = vadd.f32 %v1547, %v1548
        %v1550 = vrot.slane %v1549, 2
        %v1551 = vadd.f32 %v1549, %v1550
        %v1552 = vrot.slane %v1551, 1
        %v1553 = vadd.f32 %v1551, %v1552
        %v1554 = vadd.f32 %v1516, %v1553
        %1555 = vst [vmem:[%s281] sm:$0x1] %v1554
        %v1556 = vld [vmem:[%s284] sm:$0x1]
        %v1557 = vmul.f32 %v1390, %v1390
        %v1558 = vmul.f32 %v1393, %v1393
        %v1559 = vmul.f32 %v1398, %v1398
        %v1560 = vmul.f32 %v1401, %v1401
        %v1561 = vmul.f32 %v1406, %v1406
        %v1562 = vmul.f32 %v1409, %v1409
        %v1563 = vmul.f32 %v1414, %v1414
        %v1564 = vmul.f32 %v1417, %v1417
        %v1565 = vmul.f32 %v1422, %v1422
        %v1566 = vmul.f32 %v1425, %v1425
        %v1567 = vmul.f32 %v1430, %v1430
        %v1568 = vmul.f32 %v1433, %v1433
        %v1569 = vmul.f32 %v1438, %v1438
        %v1570 = vmul.f32 %v1441, %v1441
        %v1571 = vmul.f32 %v1446, %v1446
        %v1572 = vmul.f32 %v1449, %v1449
        %v1573 = vmul.f32 %v1454, %v1454
        %v1574 = vmul.f32 %v1457, %v1457
        %v1575 = vmul.f32 %v1462, %v1462
        %v1576 = vmul.f32 %v1465, %v1465
        %v1577 = vmul.f32 %v1470, %v1470
        %v1578 = vmul.f32 %v1473, %v1473
        %v1579 = vmul.f32 %v1478, %v1478
        %v1580 = vmul.f32 %v1481, %v1481
        %v1581 = vmul.f32 %v1486, %v1486
        %v1582 = vmul.f32 %v1489, %v1489
        %v1583 = vmul.f32 %v1494, %v1494
        %v1584 = vmul.f32 %v1497, %v1497
        %v1585 = vmul.f32 %v1502, %v1502
        %v1586 = vmul.f32 %v1505, %v1505
        %v1587 = vmul.f32 %v1510, %v1510
        %v1588 = vmul.f32 %v1513, %v1513
        %v1589 = vadd.f32 %v1557, %v1558
        %v1590 = vadd.f32 %v1589, %v1559
        %v1591 = vadd.f32 %v1590, %v1560
        %v1592 = vadd.f32 %v1591, %v1561
        %v1593 = vadd.f32 %v1592, %v1562
        %v1594 = vadd.f32 %v1593, %v1563
        %v1595 = vadd.f32 %v1594, %v1564
        %v1596 = vadd.f32 %v1595, %v1565
        %v1597 = vadd.f32 %v1596, %v1566
        %v1598 = vadd.f32 %v1597, %v1567
        %v1599 = vadd.f32 %v1598, %v1568
        %v1600 = vadd.f32 %v1599, %v1569
        %v1601 = vadd.f32 %v1600, %v1570
        %v1602 = vadd.f32 %v1601, %v1571
        %v1603 = vadd.f32 %v1602, %v1572
        %v1604 = vadd.f32 %v1603, %v1573
        %v1605 = vadd.f32 %v1604, %v1574
        %v1606 = vadd.f32 %v1605, %v1575
        %v1607 = vadd.f32 %v1606, %v1576
        %v1608 = vadd.f32 %v1607, %v1577
        %v1609 = vadd.f32 %v1608, %v1578
        %v1610 = vadd.f32 %v1609, %v1579
        %v1611 = vadd.f32 %v1610, %v1580
        %v1612 = vadd.f32 %v1611, %v1581
        %v1613 = vadd.f32 %v1612, %v1582
        %v1614 = vadd.f32 %v1613, %v1583
        %v1615 = vadd.f32 %v1614, %v1584
        %v1616 = vadd.f32 %v1615, %v1585
        %v1617 = vadd.f32 %v1616, %v1586
        %v1618 = vadd.f32 %v1617, %v1587
        %v1619 = vadd.f32 %v1618, %v1588
        %v1620 = vrot.slane %v1619, 4
        %v1621 = vadd.f32 %v1619, %v1620
        %v1622 = vrot.slane %v1621, 2
        %v1623 = vadd.f32 %v1621, %v1622
        %v1624 = vrot.slane %v1623, 1
        %v1625 = vadd.f32 %v1623, %v1624
        %v1626 = vadd.f32 %v1556, %v1625
        %1627 = vst [vmem:[%s284] sm:$0x1] %v1626
      $region52: #{stnkd_forward.5} parent=39 // pred_fallthru
        _
      %p1628 = scmp.lt.s32.totalorder %s22, 3
      %s1629 = scalar_select %p1628, %s22, 3
      %s1630 = scalar_lea.vmem %s5, %s1629
      %p1631 = scmp.lt.s32.totalorder %s22, 3
      %s1632 = scalar_select %p1631, %s22, 3
      %s1633 = scalar_lea.vmem %s6, %s1632
      // Predicated region
      $region53: #{stnkd_forward.5} parent=39 // pred_check
        %p1634 = pneg %p160
      $region54: #{stnkd_forward.5} parent=39 // pred_check_branch
        %1636 = sbr.rel (%p1634) target = $region56
      $region55: #{stnkd_forward.5} parent=39 // pred_region
        _
      $region56: #{stnkd_forward.5} parent=39 // pred_fallthru
        _
      // Predicated region
      $region57: #{stnkd_forward.5} parent=39 // pred_check
        %p1637 = pneg %p186
      $region58: #{stnkd_forward.5} parent=39 // pred_check_branch
        %1639 = sbr.rel (%p1637) target = $region60
      $region59: #{stnkd_forward.5} parent=39 // pred_region
        _
      $region60: #{stnkd_forward.5} parent=39 // pred_fallthru
        _
    $region40: #{stnkd_forward.5} parent=5 // pred_fallthru
      _
    %p1640 = scmp.le.s32.totalorder 2, %s13
    // Predicated region
    $region61: #{stnkd_forward.5} parent=5 // pred_check
      %p1641 = pneg %p1640
    $region62: #{stnkd_forward.5} parent=5 // pred_check_branch
      %1643 = sbr.rel (%p1641) target = $region64
    $region63: #{stnkd_forward.5} parent=5 // pred_region
      %s1644 = ssub.s32 %s13, 2
      // Predicated region
      $region65: #{stnkd_forward.5} parent=63 // pred_check
        %p1645 = pneg %p166
      $region66: #{stnkd_forward.5} parent=63 // pred_check_branch
        %1647 = sbr.rel (%p1645) target = $region68
      $region67: #{stnkd_forward.5} parent=63 // pred_region
        %p1648 = scmp.lt.s32.totalorder %s24, 3
        %s1649 = scalar_select %p1648, %s24, 3
        %s1650 = scalar_lea.vmem %s5, %s1649
      $region68: #{stnkd_forward.5} parent=63 // pred_fallthru
        _
      // Predicated region
      $region69: #{stnkd_forward.5} parent=63 // pred_check
        %p1651 = pneg %p192
      $region70: #{stnkd_forward.5} parent=63 // pred_check_branch
        %1653 = sbr.rel (%p1651) target = $region72
      $region71: #{stnkd_forward.5} parent=63 // pred_region
        %p1654 = scmp.lt.s32.totalorder %s24, 3
        %s1655 = scalar_select %p1654, %s24, 3
        %s1656 = scalar_lea.vmem %s6, %s1655
      $region72: #{stnkd_forward.5} parent=63 // pred_fallthru
        _
    $region64: #{stnkd_forward.5} parent=5 // pred_fallthru
      _
  $region6: #{stnkd_forward.5} parent=0 // loop_footer
    %s17 = sadd.s32 1, %s13
  $region7: #{stnkd_forward.5} parent=0 // loop_footer_branch
    %12 = sbr.rel target = $region3
  $region8: #{stnkd_forward.5} parent=0 // loop_exit
    _

// kernel: stnkd_forward.6
$region0: #{stnkd_forward.6}
  #allocation0 [shape = 'u32[]', space=smem, size = 0x4, offset = 0x4, fixed_abs, tag = 'smem constant byte address 0x4 - core index']
  #allocation1 [shape = 'u32[144,128]{1,0:T(1,128)}', space=vmem, size = 0x12000, scoped, tag = 'internal scratch']
  %s0 = inlined_call_operand.vmem [shape: bf16[4,384,16], index: 0, kind: input, shape index: {}]
  %s1 = inlined_call_operand.vmem [shape: bf16[16,64], index: 1, kind: input, shape index: {}]
  %s2 = inlined_call_operand.vmem [shape: f32[1,64], index: 2, kind: input, shape index: {}]
  %s3 = inlined_call_operand.vmem [shape: f32[1,64], index: 3, kind: input, shape index: {}]
  %s4 = inlined_call_operand.vmem [shape: bf16[64,128], index: 4, kind: input, shape index: {}]
  %s5 = inlined_call_operand.vmem [shape: f32[1,128], index: 5, kind: input, shape index: {}]
  %s6 = inlined_call_operand.vmem [shape: f32[1,128], index: 6, kind: input, shape index: {}]
  %s7 = inlined_call_operand.vmem [shape: bf16[128,1024], index: 7, kind: input, shape index: {}]
  %s8 = inlined_call_operand.vmem [shape: f32[4,1,128], index: 8, kind: output, shape index: {0}]
  %s9 = inlined_call_operand.vmem [shape: f32[4,1,1024], index: 9, kind: output, shape index: {1}]
  %s10 = inlined_call_operand.vmem [shape: f32[4,1,1024], index: 10, kind: output, shape index: {2}]
  %11 = xla_tuple %s8, %s9, %s10
  %s12 = sld [smem:[#allocation0]]
  $region93: #{stnkd_forward.6} parent=0
    _
  %s14 = ssub.s32 1, %s12
  %s15 = scalar_select 0, %s14, %s12
  loop: start=0, step=1, limit=14
  $region2: #{stnkd_forward.6} parent=0 // loop_pre_header
    _
  $region3: #{stnkd_forward.6} parent=0 // loop_header
    %s17 = sphi 0, %s21
    %p18 = scmp.ge.s32.totalorder %s17, 14
    %s24 = sphi 0, %s36
    %s25 = sphi 0, %s32
    %s26 = sphi 0, %s24
    %s27 = sphi 0, %s25
    %s28 = sphi 0, %s26
    %s29 = sphi 0, %s27
    %s41 = sphi 0, %s43
    %s44 = sphi 0, %s41
    %s45 = sphi 0, %s44
    %s61 = sphi 0, %s45
    %s65 = sphi 0, %s65
    %s67 = sphi 0, %s65
    %s68 = sphi 0, %s67
    %s82 = sphi 0, %s68
    %s86 = sphi 0, %s86
    %s88 = sphi 0, %s86
    %s89 = sphi 0, %s88
    %s103 = sphi 0, %s89
    %s107 = sphi 0, %s107
    %s109 = sphi 0, %s107
    %s110 = sphi 0, %s109
    %s124 = sphi 0, %s110
    %s128 = sphi 0, %s128
    %s130 = sphi 0, %s128
    %s131 = sphi 0, %s130
    %s145 = sphi 0, %s131
    %s149 = sphi 0, %s149
    %s151 = sphi 0, %s149
    %s152 = sphi 0, %s151
    %s166 = sphi 0, %s152
    %s170 = sphi 0, %s170
    %s172 = sphi 0, %s170
    %s173 = sphi 0, %s172
    %s187 = sphi 0, %s173
    %s191 = sphi 0, %s191
    %s193 = sphi 0, %s191
    %s194 = sphi 0, %s193
    %s208 = sphi 0, %s194
    %s214 = sphi 0, %s216
    %s217 = sphi 0, %s214
    %s218 = sphi 0, %s217
    %s234 = sphi 0, %s218
    %s240 = sphi 0, %s242
    %s243 = sphi 0, %s240
    %s244 = sphi 0, %s243
    %s260 = sphi 0, %s244
    %s266 = sphi 0, %s268
    %s269 = sphi 0, %s266
    %s270 = sphi 0, %s269
    %s286 = sphi 0, %s270
  $region4: #{stnkd_forward.6} parent=0 // loop_header_branch
    %20 = sbr.rel (%p18) target = $region8
  $region5: #{stnkd_forward.6} parent=0 // loop_body
    %s22 = ssub.s32 %s17, 1
    %s23 = ssub.s32 %s17, 2
    %s30 = sadd.s32 1, %s25
    %p31 = scmp.ge.s32.totalorder %s30, 3
    %s32 = scalar_select %p31, 0, %s30
    %s33 = sadd.s32 1, %s24
    %s34 = scalar_select %p31, %s33, %s24
    %p35 = scmp.ge.s32.totalorder %s34, 4
    %s36 = scalar_select %p35, 0, %s34
    %s37 = ssub.s32 %s24, %s36
    %s38 = ssub.s32 %s25, %s32
    %s39 = sor.u32 %s37, %s38
    %p40 = scmp.eq.s32.totalorder %s39, 0
    %s42 = sadd.s32 %s41, 1
    %s43 = scalar_select %p40, %s41, %s42
    %p46 = pneg %p40
    %p47 = scmp.eq.s32.totalorder %s17, 11
    %p48 = por %p46, %p47
    %p49 = scmp.ne.s32.totalorder %s41, %s44
    %p50 = scmp.eq.s32.totalorder %s17, 0
    %p51 = por %p49, %p50
    %p52 = scmp.ne.s32.totalorder %s41, %s44
    %p53 = scmp.eq.s32.totalorder %s22, 11
    %p54 = por %p52, %p53
    %p55 = scmp.ne.s32.totalorder %s44, %s45
    %p56 = scmp.eq.s32.totalorder %s22, 0
    %p57 = por %p55, %p56
    %p58 = scmp.ne.s32.totalorder %s44, %s45
    %p59 = scmp.eq.s32.totalorder %s23, 11
    %p60 = por %p58, %p59
    %p62 = scmp.ne.s32.totalorder %s45, %s61
    %p63 = scmp.eq.s32.totalorder %s23, 0
    %p64 = por %p62, %p63
    %s66 = sadd.s32 %s65, 1
    %p69 = scmp.eq.s32.totalorder %s17, 11
    %p70 = scmp.ne.s32.totalorder %s65, %s67
    %p71 = scmp.eq.s32.totalorder %s17, 0
    %p72 = por %p70, %p71
    %p73 = scmp.ne.s32.totalorder %s65, %s67
    %p74 = scmp.eq.s32.totalorder %s22, 11
    %p75 = por %p73, %p74
    %p76 = scmp.ne.s32.totalorder %s67, %s68
    %p77 = scmp.eq.s32.totalorder %s22, 0
    %p78 = por %p76, %p77
    %p79 = scmp.ne.s32.totalorder %s67, %s68
    %p80 = scmp.eq.s32.totalorder %s23, 11
    %p81 = por %p79, %p80
    %p83 = scmp.ne.s32.totalorder %s68, %s82
    %p84 = scmp.eq.s32.totalorder %s23, 0
    %p85 = por %p83, %p84
    %s87 = sadd.s32 %s86, 1
    %p90 = scmp.eq.s32.totalorder %s17, 11
    %p91 = scmp.ne.s32.totalorder %s86, %s88
    %p92 = scmp.eq.s32.totalorder %s17, 0
    %p93 = por %p91, %p92
    %p94 = scmp.ne.s32.totalorder %s86, %s88
    %p95 = scmp.eq.s32.totalorder %s22, 11
    %p96 = por %p94, %p95
    %p97 = scmp.ne.s32.totalorder %s88, %s89
    %p98 = scmp.eq.s32.totalorder %s22, 0
    %p99 = por %p97, %p98
    %p100 = scmp.ne.s32.totalorder %s88, %s89
    %p101 = scmp.eq.s32.totalorder %s23, 11
    %p102 = por %p100, %p101
    %p104 = scmp.ne.s32.totalorder %s89, %s103
    %p105 = scmp.eq.s32.totalorder %s23, 0
    %p106 = por %p104, %p105
    %s108 = sadd.s32 %s107, 1
    %p111 = scmp.eq.s32.totalorder %s17, 11
    %p112 = scmp.ne.s32.totalorder %s107, %s109
    %p113 = scmp.eq.s32.totalorder %s17, 0
    %p114 = por %p112, %p113
    %p115 = scmp.ne.s32.totalorder %s107, %s109
    %p116 = scmp.eq.s32.totalorder %s22, 11
    %p117 = por %p115, %p116
    %p118 = scmp.ne.s32.totalorder %s109, %s110
    %p119 = scmp.eq.s32.totalorder %s22, 0
    %p120 = por %p118, %p119
    %p121 = scmp.ne.s32.totalorder %s109, %s110
    %p122 = scmp.eq.s32.totalorder %s23, 11
    %p123 = por %p121, %p122
    %p125 = scmp.ne.s32.totalorder %s110, %s124
    %p126 = scmp.eq.s32.totalorder %s23, 0
    %p127 = por %p125, %p126
    %s129 = sadd.s32 %s128, 1
    %p132 = scmp.eq.s32.totalorder %s17, 11
    %p133 = scmp.ne.s32.totalorder %s128, %s130
    %p134 = scmp.eq.s32.totalorder %s17, 0
    %p135 = por %p133, %p134
    %p136 = scmp.ne.s32.totalorder %s128, %s130
    %p137 = scmp.eq.s32.totalorder %s22, 11
    %p138 = por %p136, %p137
    %p139 = scmp.ne.s32.totalorder %s130, %s131
    %p140 = scmp.eq.s32.totalorder %s22, 0
    %p141 = por %p139, %p140
    %p142 = scmp.ne.s32.totalorder %s130, %s131
    %p143 = scmp.eq.s32.totalorder %s23, 11
    %p144 = por %p142, %p143
    %p146 = scmp.ne.s32.totalorder %s131, %s145
    %p147 = scmp.eq.s32.totalorder %s23, 0
    %p148 = por %p146, %p147
    %s150 = sadd.s32 %s149, 1
    %p153 = scmp.eq.s32.totalorder %s17, 11
    %p154 = scmp.ne.s32.totalorder %s149, %s151
    %p155 = scmp.eq.s32.totalorder %s17, 0
    %p156 = por %p154, %p155
    %p157 = scmp.ne.s32.totalorder %s149, %s151
    %p158 = scmp.eq.s32.totalorder %s22, 11
    %p159 = por %p157, %p158
    %p160 = scmp.ne.s32.totalorder %s151, %s152
    %p161 = scmp.eq.s32.totalorder %s22, 0
    %p162 = por %p160, %p161
    %p163 = scmp.ne.s32.totalorder %s151, %s152
    %p164 = scmp.eq.s32.totalorder %s23, 11
    %p165 = por %p163, %p164
    %p167 = scmp.ne.s32.totalorder %s152, %s166
    %p168 = scmp.eq.s32.totalorder %s23, 0
    %p169 = por %p167, %p168
    %s171 = sadd.s32 %s170, 1
    %p174 = scmp.eq.s32.totalorder %s17, 11
    %p175 = scmp.ne.s32.totalorder %s170, %s172
    %p176 = scmp.eq.s32.totalorder %s17, 0
    %p177 = por %p175, %p176
    %p178 = scmp.ne.s32.totalorder %s170, %s172
    %p179 = scmp.eq.s32.totalorder %s22, 11
    %p180 = por %p178, %p179
    %p181 = scmp.ne.s32.totalorder %s172, %s173
    %p182 = scmp.eq.s32.totalorder %s22, 0
    %p183 = por %p181, %p182
    %p184 = scmp.ne.s32.totalorder %s172, %s173
    %p185 = scmp.eq.s32.totalorder %s23, 11
    %p186 = por %p184, %p185
    %p188 = scmp.ne.s32.totalorder %s173, %s187
    %p189 = scmp.eq.s32.totalorder %s23, 0
    %p190 = por %p188, %p189
    %s192 = sadd.s32 %s191, 1
    %p195 = scmp.eq.s32.totalorder %s17, 11
    %p196 = scmp.ne.s32.totalorder %s191, %s193
    %p197 = scmp.eq.s32.totalorder %s17, 0
    %p198 = por %p196, %p197
    %p199 = scmp.ne.s32.totalorder %s191, %s193
    %p200 = scmp.eq.s32.totalorder %s22, 11
    %p201 = por %p199, %p200
    %p202 = scmp.ne.s32.totalorder %s193, %s194
    %p203 = scmp.eq.s32.totalorder %s22, 0
    %p204 = por %p202, %p203
    %p205 = scmp.ne.s32.totalorder %s193, %s194
    %p206 = scmp.eq.s32.totalorder %s23, 11
    %p207 = por %p205, %p206
    %p209 = scmp.ne.s32.totalorder %s194, %s208
    %p210 = scmp.eq.s32.totalorder %s23, 0
    %p211 = por %p209, %p210
    %s212 = ssub.s32 %s24, %s36
    %p213 = scmp.eq.s32.totalorder %s212, 0
    %s215 = sadd.s32 %s214, 1
    %s216 = scalar_select %p213, %s214, %s215
    %p219 = pneg %p213
    %p220 = scmp.eq.s32.totalorder %s17, 11
    %p221 = por %p219, %p220
    %p222 = scmp.ne.s32.totalorder %s214, %s217
    %p223 = scmp.eq.s32.totalorder %s17, 0
    %p224 = por %p222, %p223
    %p225 = scmp.ne.s32.totalorder %s214, %s217
    %p226 = scmp.eq.s32.totalorder %s22, 11
    %p227 = por %p225, %p226
    %p228 = scmp.ne.s32.totalorder %s217, %s218
    %p229 = scmp.eq.s32.totalorder %s22, 0
    %p230 = por %p228, %p229
    %p231 = scmp.ne.s32.totalorder %s217, %s218
    %p232 = scmp.eq.s32.totalorder %s23, 11
    %p233 = por %p231, %p232
    %p235 = scmp.ne.s32.totalorder %s218, %s234
    %p236 = scmp.eq.s32.totalorder %s23, 0
    %p237 = por %p235, %p236
    %s238 = ssub.s32 %s24, %s36
    %p239 = scmp.eq.s32.totalorder %s238, 0
    %s241 = sadd.s32 %s240, 1
    %s242 = scalar_select %p239, %s240, %s241
    %p245 = pneg %p239
    %p246 = scmp.eq.s32.totalorder %s17, 11
    %p247 = por %p245, %p246
    %p248 = scmp.ne.s32.totalorder %s240, %s243
    %p249 = scmp.eq.s32.totalorder %s17, 0
    %p250 = por %p248, %p249
    %p251 = scmp.ne.s32.totalorder %s240, %s243
    %p252 = scmp.eq.s32.totalorder %s22, 11
    %p253 = por %p251, %p252
    %p254 = scmp.ne.s32.totalorder %s243, %s244
    %p255 = scmp.eq.s32.totalorder %s22, 0
    %p256 = por %p254, %p255
    %p257 = scmp.ne.s32.totalorder %s243, %s244
    %p258 = scmp.eq.s32.totalorder %s23, 11
    %p259 = por %p257, %p258
    %p261 = scmp.ne.s32.totalorder %s244, %s260
    %p262 = scmp.eq.s32.totalorder %s23, 0
    %p263 = por %p261, %p262
    %s264 = ssub.s32 %s24, %s36
    %p265 = scmp.eq.s32.totalorder %s264, 0
    %s267 = sadd.s32 %s266, 1
    %s268 = scalar_select %p265, %s266, %s267
    %p271 = pneg %p265
    %p272 = scmp.eq.s32.totalorder %s17, 11
    %p273 = por %p271, %p272
    %p274 = scmp.ne.s32.totalorder %s266, %s269
    %p275 = scmp.eq.s32.totalorder %s17, 0
    %p276 = por %p274, %p275
    %p277 = scmp.ne.s32.totalorder %s266, %s269
    %p278 = scmp.eq.s32.totalorder %s22, 11
    %p279 = por %p277, %p278
    %p280 = scmp.ne.s32.totalorder %s269, %s270
    %p281 = scmp.eq.s32.totalorder %s22, 0
    %p282 = por %p280, %p281
    %p283 = scmp.ne.s32.totalorder %s269, %s270
    %p284 = scmp.eq.s32.totalorder %s23, 11
    %p285 = por %p283, %p284
    %p287 = scmp.ne.s32.totalorder %s270, %s286
    %p288 = scmp.eq.s32.totalorder %s23, 0
    %p289 = por %p287, %p288
    %p290 = scmp.le.s32.totalorder 1, %s17
    %p291 = scmp.lt.s32.totalorder %s17, 13
    %p292 = pnand %p290, %p291
    %p293 = pneg %p292
    // Predicated region
    $region9: #{stnkd_forward.6} parent=5 // pred_check
      _
    $region10: #{stnkd_forward.6} parent=5 // pred_check_branch
      %295 = sbr.rel (%p292) target = $region12
    $region11: #{stnkd_forward.6} parent=5 // pred_region
      %s296 = ssub.s32 %s17, 1
      // Predicated region
      $region13: #{stnkd_forward.6} parent=11 // pred_check
        %p297 = pneg %p78
      $region14: #{stnkd_forward.6} parent=11 // pred_check_branch
        %299 = sbr.rel (%p297) target = $region16
      $region15: #{stnkd_forward.6} parent=11 // pred_region
        _
      $region16: #{stnkd_forward.6} parent=11 // pred_fallthru
        _
      // Predicated region
      $region17: #{stnkd_forward.6} parent=11 // pred_check
        %p300 = pneg %p99
      $region18: #{stnkd_forward.6} parent=11 // pred_check_branch
        %302 = sbr.rel (%p300) target = $region20
      $region19: #{stnkd_forward.6} parent=11 // pred_region
        _
      $region20: #{stnkd_forward.6} parent=11 // pred_fallthru
        _
      // Predicated region
      $region21: #{stnkd_forward.6} parent=11 // pred_check
        %p303 = pneg %p120
      $region22: #{stnkd_forward.6} parent=11 // pred_check_branch
        %305 = sbr.rel (%p303) target = $region24
      $region23: #{stnkd_forward.6} parent=11 // pred_region
        _
      $region24: #{stnkd_forward.6} parent=11 // pred_fallthru
        _
      // Predicated region
      $region25: #{stnkd_forward.6} parent=11 // pred_check
        %p306 = pneg %p141
      $region26: #{stnkd_forward.6} parent=11 // pred_check_branch
        %308 = sbr.rel (%p306) target = $region28
      $region27: #{stnkd_forward.6} parent=11 // pred_region
        _
      $region28: #{stnkd_forward.6} parent=11 // pred_fallthru
        _
      // Predicated region
      $region29: #{stnkd_forward.6} parent=11 // pred_check
        %p309 = pneg %p162
      $region30: #{stnkd_forward.6} parent=11 // pred_check_branch
        %311 = sbr.rel (%p309) target = $region32
      $region31: #{stnkd_forward.6} parent=11 // pred_region
        _
      $region32: #{stnkd_forward.6} parent=11 // pred_fallthru
        _
      // Predicated region
      $region33: #{stnkd_forward.6} parent=11 // pred_check
        %p312 = pneg %p183
      $region34: #{stnkd_forward.6} parent=11 // pred_check_branch
        %314 = sbr.rel (%p312) target = $region36
      $region35: #{stnkd_forward.6} parent=11 // pred_region
        _
      $region36: #{stnkd_forward.6} parent=11 // pred_fallthru
        _
      // Predicated region
      $region37: #{stnkd_forward.6} parent=11 // pred_check
        %p315 = pneg %p204
      $region38: #{stnkd_forward.6} parent=11 // pred_check_branch
        %317 = sbr.rel (%p315) target = $region40
      $region39: #{stnkd_forward.6} parent=11 // pred_region
        _
      $region40: #{stnkd_forward.6} parent=11 // pred_fallthru
        _
    $region12: #{stnkd_forward.6} parent=5 // pred_fallthru
      _
    %p318 = scmp.lt.s32.totalorder %s17, 12
    // Predicated region
    $region41: #{stnkd_forward.6} parent=5 // pred_check
      %p319 = pneg %p318
    $region42: #{stnkd_forward.6} parent=5 // pred_check_branch
      %321 = sbr.rel (%p319) target = $region44
    $region43: #{stnkd_forward.6} parent=5 // pred_region
      // Predicated region
      $region45: #{stnkd_forward.6} parent=43 // pred_check
        %p322 = pneg %p51
      $region46: #{stnkd_forward.6} parent=43 // pred_check_branch
        %324 = sbr.rel (%p322) target = $region48
      $region47: #{stnkd_forward.6} parent=43 // pred_region
        %s325 = smul.u32 16, %s25
        %p326 = scmp.lt.s32.totalorder %s24, 3
        %s327 = scalar_select %p326, %s24, 3
        %p328 = scmp.lt.s32.totalorder %s325, 47
        %s329 = scalar_select %p328, %s325, 47
        %s330 = smul.addr %s327, 48
        %s331 = sadd.s32 %s329, %s330
        %s332 = smul.addr %s331, 4
        %s333 = scalar_lea.vmem %s0, %s332
        %s334 = smul.u32 16, %s25
      $region48: #{stnkd_forward.6} parent=43 // pred_fallthru
        _
    $region44: #{stnkd_forward.6} parent=5 // pred_fallthru
      _
    %p335 = scmp.le.s32.totalorder 1, %s17
    %p336 = scmp.lt.s32.totalorder %s17, 13
    %p337 = pnand %p335, %p336
    %p338 = pneg %p337
    // Predicated region
    $region49: #{stnkd_forward.6} parent=5 // pred_check
      _
    $region50: #{stnkd_forward.6} parent=5 // pred_check_branch
      %340 = sbr.rel (%p337) target = $region52
    $region51: #{stnkd_forward.6} parent=5 // pred_region
      %s341 = ssub.s32 %s17, 1
      %s342 = smul.u32 16, %s27
      %p343 = scmp.lt.s32.totalorder %s26, 3
      %s344 = scalar_select %p343, %s26, 3
      %p345 = scmp.lt.s32.totalorder %s342, 47
      %s346 = scalar_select %p345, %s342, 47
      %s347 = smul.addr %s344, 48
      %s348 = sadd.s32 %s346, %s347
      %s349 = smul.addr %s348, 4
      %s350 = scalar_lea.vmem %s0, %s349
      %p351 = pneg %p57
      %p352 = pneg %p54
      %p353 = pneg %p78
      %p354 = pneg %p75
      %p355 = pneg %p99
      %p356 = pneg %p96
      %p357 = pneg %p120
      %p358 = pneg %p117
      %p359 = pneg %p141
      %p360 = pneg %p138
      %p361 = pneg %p162
      %p362 = pneg %p159
      %p363 = pneg %p183
      %p364 = pneg %p180
      %p365 = pneg %p204
      %p366 = pneg %p201
      %p367 = pneg %p230
      %p368 = pneg %p227
      %p369 = scmp.lt.s32.totalorder %s26, 3
      %s370 = scalar_select %p369, %s26, 3
      %s371 = scalar_lea.vmem %s8, %s370
      %p372 = pneg %p256
      %p373 = pneg %p253
      %p374 = scmp.lt.s32.totalorder %s26, 3
      %s375 = scalar_select %p374, %s26, 3
      %s376 = smul.addr %s375, 8
      %s377 = scalar_lea.vmem %s9, %s376
      %p378 = pneg %p282
      %p379 = pneg %p279
      %p380 = scmp.lt.s32.totalorder %s26, 3
      %s381 = scalar_select %p380, %s26, 3
      %s382 = smul.addr %s381, 8
      %s383 = scalar_lea.vmem %s10, %s382
      %s384 = smul.u32 16, %s27
      %p385 = scmp.lt.s32.totalorder %s26, 3
      %s386 = scalar_select %p385, %s26, 3
      %p387 = scmp.lt.s32.totalorder %s384, 47
      %s388 = scalar_select %p387, %s384, 47
      %s389 = smul.addr %s386, 48
      %s390 = sadd.s32 %s388, %s389
      %s391 = smul.addr %s390, 4
      %s392 = scalar_lea.vmem %s0, %s391
      %s393 = smul.u32 16, %s27
      %p394 = scmp.lt.s32.totalorder %s26, 3
      %s395 = scalar_select %p394, %s26, 3
      %s396 = scalar_lea.vmem %s8, %s395
      %p397 = scmp.lt.s32.totalorder %s26, 3
      %s398 = scalar_select %p397, %s26, 3
      %s399 = smul.addr %s398, 8
      %s400 = scalar_lea.vmem %s9, %s399
      %p401 = scmp.lt.s32.totalorder %s26, 3
      %s402 = scalar_select %p401, %s26, 3
      %s403 = smul.addr %s402, 8
      %s404 = scalar_lea.vmem %s10, %s403
      %p406 = scmp.eq.s32.totalorder %s27, 0
      // Predicated region
      $region53: #{stnkd_forward.6} parent=51 // pred_check
        %p407 = pneg %p406
      $region54: #{stnkd_forward.6} parent=51 // pred_check_branch
        %409 = sbr.rel (%p407) target = $region56
      $region55: #{stnkd_forward.6} parent=51 // pred_region
        %410 = vst [vmem:[%s396] sm:$0x1] 0.0
        %411 = vst [vmem:[%s400] sm:$0xff] 0.0
        %412 = vst [vmem:[%s404] sm:$0xff] -inf
      $region56: #{stnkd_forward.6} parent=51 // pred_fallthru
        _
      %v413 = vld [vmem:[%s392] sm:$0xf]
      %v414 = vld [vmem:[%s392 + $0x4] sm:$0xf]
      %v415 = vld [vmem:[%s392 + $0x8] sm:$0xf]
      %v416 = vld [vmem:[%s392 + $0xc] sm:$0xf]
      %v417 = vld [vmem:[%s392 + $0x10] sm:$0xf]
      %v418 = vld [vmem:[%s392 + $0x14] sm:$0xf]
      %v419 = vld [vmem:[%s392 + $0x18] sm:$0xf]
      %v420 = vld [vmem:[%s392 + $0x1c] sm:$0xf]
      %v421 = vld [vmem:[%s392 + $0x20] sm:$0xf]
      %v422 = vld [vmem:[%s392 + $0x24] sm:$0xf]
      %v423 = vld [vmem:[%s392 + $0x28] sm:$0xf]
      %v424 = vld [vmem:[%s392 + $0x2c] sm:$0xf]
      %v425 = vld [vmem:[%s392 + $0x30] sm:$0xf]
      %v426 = vld [vmem:[%s392 + $0x34] sm:$0xf]
      %v427 = vld [vmem:[%s392 + $0x38] sm:$0xf]
      %v428 = vld [vmem:[%s392 + $0x3c] sm:$0xf]
      %v429 = vld [vmem:[%s1] sm:$0xf]
      %v430 = vld [vmem:[%s1 + $0x4] sm:$0xf]
      %v447 = vunpack.c.l.b16 %v413
      %v448 = vunpack.c.l.b16 %v414
      %v449 = vunpack.c.l.b16 %v415
      %v450 = vunpack.c.l.b16 %v416
      %v451 = vunpack.c.l.b16 %v417
      %v452 = vunpack.c.l.b16 %v418
      %v453 = vunpack.c.l.b16 %v419
      %v454 = vunpack.c.l.b16 %v420
      %v455 = vunpack.c.l.b16 %v421
      %v456 = vunpack.c.l.b16 %v422
      %v457 = vunpack.c.l.b16 %v423
      %v458 = vunpack.c.l.b16 %v424
      %v459 = vunpack.c.l.b16 %v425
      %v460 = vunpack.c.l.b16 %v426
      %v461 = vunpack.c.l.b16 %v427
      %v462 = vunpack.c.l.b16 %v428
      %v463 = vpack.c.b16 %v448, %v447
      %v464 = vpack.c.b16 %v450, %v449
      %v465 = vpack.c.b16 %v452, %v451
      %v466 = vpack.c.b16 %v454, %v453
      %v467 = vpack.c.b16 %v456, %v455
      %v468 = vpack.c.b16 %v458, %v457
      %v469 = vpack.c.b16 %v460, %v459
      %v470 = vpack.c.b16 %v462, %v461
      %v473 = vunpack.c.l.b16 %v429
      %v474 = vunpack.c.l.b16 %v430
      %v475 = vpack.c.b16 %v474, %v473
      %vm477 = vcmask 130048
      %v479 = vsel %vm477, %v463, 0
      %v482 = vsel %vm477, %v464, 0
      %v485 = vsel %vm477, %v465, 0
      %v488 = vsel %vm477, %v466, 0
      %v491 = vsel %vm477, %v467, 0
      %v494 = vsel %vm477, %v468, 0
      %v497 = vsel %vm477, %v469, 0
      %v500 = vsel %vm477, %v470, 0
      %502 = vmatprep.subr.bf16.mxu0 0
      %503 = vmatpush1.bf16.msra.mxu0 %v475
      %504 = vmatprep.subr.bf16.mxu0 0
      %505 = vmatpush1.bf16.msra.mxu0 0
      %506 = vmatprep.subr.bf16.mxu0 0
      %507 = vmatpush1.bf16.msra.mxu0 0
      %508 = vmatprep.subr.bf16.mxu0 0
      %509 = vmatpush1.bf16.msra.mxu0 0
      %510 = vmatprep.subr.bf16.mxu0 0
      %511 = vmatpush1.bf16.msra.mxu0 0
      %512 = vmatprep.subr.bf16.mxu0 0
      %513 = vmatpush1.bf16.msra.mxu0 0
      %514 = vmatprep.subr.bf16.mxu0 0
      %515 = vmatpush1.bf16.msra.mxu0 0
      %516 = vmatprep.subr.bf16.mxu0 0
      %517 = vmatpush1.bf16.msra.mxu0 0
      %518 = vmatprep.subr.bf16.mxu0 0
      %519 = vmatpush1.bf16.msra.mxu0 0
      %520 = vmatprep.subr.bf16.mxu0 0
      %521 = vmatpush1.bf16.msra.mxu0 0
      %522 = vmatprep.subr.bf16.mxu0 0
      %523 = vmatpush1.bf16.msra.mxu0 0
      %524 = vmatprep.subr.bf16.mxu0 0
      %525 = vmatpush1.bf16.msra.mxu0 0
      %526 = vmatprep.subr.bf16.mxu0 0
      %527 = vmatpush1.bf16.msra.mxu0 0
      %528 = vmatprep.subr.bf16.mxu0 0
      %529 = vmatpush1.bf16.msra.mxu0 0
      %530 = vmatprep.subr.bf16.mxu0 0
      %531 = vmatpush1.bf16.msra.mxu0 0
      %532 = vmatprep.subr.bf16.mxu0 0
      %533 = vmatpush1.bf16.msra.mxu0 0
      %534 = vmatprep.mubr.bf16.mxu0 0
      %535 = vmatmul.mubr.bf16.gmra.mrb[0].mxu0 %v479
      %v536 = vpop.f32.mrb[0].mxu0
      %v537 = vadd.f32 0.0, %v536
      %v538 = vpop.f32.mrb[0].mxu0
      %v539 = vpop.f32.mrb[0].mxu0
      %v540 = vadd.f32 0.0, %v539
      %v541 = vpop.f32.mrb[0].mxu0
      %542 = vmatprep.mubr.bf16.mxu0 0
      %543 = vmatmul.mubr.bf16.gmra.mrb[0].mxu0 %v482
      %v544 = vpop.f32.mrb[0].mxu0
      %v545 = vadd.f32 0.0, %v544
      %v546 = vpop.f32.mrb[0].mxu0
      %v547 = vpop.f32.mrb[0].mxu0
      %v548 = vadd.f32 0.0, %v547
      %v549 = vpop.f32.mrb[0].mxu0
      %550 = vmatprep.mubr.bf16.mxu0 0
      %551 = vmatmul.mubr.bf16.gmra.mrb[0].mxu0 %v485
      %v552 = vpop.f32.mrb[0].mxu0
      %v553 = vadd.f32 0.0, %v552
      %v554 = vpop.f32.mrb[0].mxu0
      %v555 = vpop.f32.mrb[0].mxu0
      %v556 = vadd.f32 0.0, %v555
      %v557 = vpop.f32.mrb[0].mxu0
      %558 = vmatprep.mubr.bf16.mxu0 0
      %559 = vmatmul.mubr.bf16.gmra.mrb[0].mxu0 %v488
      %v560 = vpop.f32.mrb[0].mxu0
      %v561 = vadd.f32 0.0, %v560
      %v562 = vpop.f32.mrb[0].mxu0
      %v563 = vpop.f32.mrb[0].mxu0
      %v564 = vadd.f32 0.0, %v563
      %v565 = vpop.f32.mrb[0].mxu0
      %566 = vmatprep.mubr.bf16.mxu0 0
      %567 = vmatmul.mubr.bf16.gmra.mrb[0].mxu0 %v491
      %v568 = vpop.f32.mrb[0].mxu0
      %v569 = vadd.f32 0.0, %v568
      %v570 = vpop.f32.mrb[0].mxu0
      %v571 = vpop.f32.mrb[0].mxu0
      %v572 = vadd.f32 0.0, %v571
      %v573 = vpop.f32.mrb[0].mxu0
      %574 = vmatprep.mubr.bf16.mxu0 0
      %575 = vmatmul.mubr.bf16.gmra.mrb[0].mxu0 %v494
      %v576 = vpop.f32.mrb[0].mxu0
      %v577 = vadd.f32 0.0, %v576
      %v578 = vpop.f32.mrb[0].mxu0
      %v579 = vpop.f32.mrb[0].mxu0
      %v580 = vadd.f32 0.0, %v579
      %v581 = vpop.f32.mrb[0].mxu0
      %582 = vmatprep.mubr.bf16.mxu0 0
      %583 = vmatmul.mubr.bf16.gmra.mrb[0].mxu0 %v497
      %v584 = vpop.f32.mrb[0].mxu0
      %v585 = vadd.f32 0.0, %v584
      %v586 = vpop.f32.mrb[0].mxu0
      %v587 = vpop.f32.mrb[0].mxu0
      %v588 = vadd.f32 0.0, %v587
      %v589 = vpop.f32.mrb[0].mxu0
      %590 = vmatprep.mubr.bf16.mxu0 0
      %591 = vmatmul.mubr.bf16.gmra.mrb[0].mxu0 %v500
      %v592 = vpop.f32.mrb[0].mxu0
      %v593 = vadd.f32 0.0, %v592
      %v594 = vpop.f32.mrb[0].mxu0
      %v595 = vpop.f32.mrb[0].mxu0
      %v596 = vadd.f32 0.0, %v595
      %v597 = vpop.f32.mrb[0].mxu0
      %598 = vdwg.mxu0
      %v599 = vld [vmem:[%s2] sm:$0x1]
      %v601 = vlaneseq
      %v602 = vshrl.u32 %v601, 7
      %v603 = vsub.s32 0, %v602
      %v604 = vrot.slane %v599, %v603
      %v606 = vmul.f32 %v537, %v604
      %v607 = vmul.f32 %v540, %v604
      %v608 = vmul.f32 %v545, %v604
      %v609 = vmul.f32 %v548, %v604
      %v610 = vmul.f32 %v553, %v604
      %v611 = vmul.f32 %v556, %v604
      %v612 = vmul.f32 %v561, %v604
      %v613 = vmul.f32 %v564, %v604
      %v614 = vmul.f32 %v569, %v604
      %v615 = vmul.f32 %v572, %v604
      %v616 = vmul.f32 %v577, %v604
      %v617 = vmul.f32 %v580, %v604
      %v618 = vmul.f32 %v585, %v604
      %v619 = vmul.f32 %v588, %v604
      %v620 = vmul.f32 %v593, %v604
      %v621 = vmul.f32 %v596, %v604
      %v622 = vld [vmem:[%s3] sm:$0x1]
      %v624 = vlaneseq
      %v625 = vshrl.u32 %v624, 7
      %v626 = vsub.s32 0, %v625
      %v627 = vrot.slane %v622, %v626
      %v629 = vadd.f32 %v606, %v627
      %v630 = vadd.f32 %v607, %v627
      %v631 = vadd.f32 %v608, %v627
      %v632 = vadd.f32 %v609, %v627
      %v633 = vadd.f32 %v610, %v627
      %v634 = vadd.f32 %v611, %v627
      %v635 = vadd.f32 %v612, %v627
      %v636 = vadd.f32 %v613, %v627
      %v637 = vadd.f32 %v614, %v627
      %v638 = vadd.f32 %v615, %v627
      %v639 = vadd.f32 %v616, %v627
      %v640 = vadd.f32 %v617, %v627
      %v641 = vadd.f32 %v618, %v627
      %v642 = vadd.f32 %v619, %v627
      %v643 = vadd.f32 %v620, %v627
      %v644 = vadd.f32 %v621, %v627
      %v645 = vmax.f32 %v629, 0.0
      %v646 = vmax.f32 %v630, 0.0
      %v647 = vmax.f32 %v631, 0.0
      %v648 = vmax.f32 %v632, 0.0
      %v649 = vmax.f32 %v633, 0.0
      %v650 = vmax.f32 %v634, 0.0
      %v651 = vmax.f32 %v635, 0.0
      %v652 = vmax.f32 %v636, 0.0
      %v653 = vmax.f32 %v637, 0.0
      %v654 = vmax.f32 %v638, 0.0
      %v655 = vmax.f32 %v639, 0.0
      %v656 = vmax.f32 %v640, 0.0
      %v657 = vmax.f32 %v641, 0.0
      %v658 = vmax.f32 %v642, 0.0
      %v659 = vmax.f32 %v643, 0.0
      %v660 = vmax.f32 %v644, 0.0
      %v661 = vpack.c.bf16 %v646, %v645
      %v662 = vpack.c.bf16 %v648, %v647
      %v663 = vpack.c.bf16 %v650, %v649
      %v664 = vpack.c.bf16 %v652, %v651
      %v665 = vpack.c.bf16 %v654, %v653
      %v666 = vpack.c.bf16 %v656, %v655
      %v667 = vpack.c.bf16 %v658, %v657
      %v668 = vpack.c.bf16 %v660, %v659
      %v669 = vld [vmem:[%s4] sm:$0xf]
      %v670 = vld [vmem:[%s4 + $0x4] sm:$0xf]
      %v671 = vld [vmem:[%s4 + $0x8] sm:$0xf]
      %v672 = vld [vmem:[%s4 + $0xc] sm:$0xf]
      %v673 = vld [vmem:[%s4 + $0x10] sm:$0xf]
      %v674 = vld [vmem:[%s4 + $0x14] sm:$0xf]
      %v675 = vld [vmem:[%s4 + $0x18] sm:$0xf]
      %v676 = vld [vmem:[%s4 + $0x1c] sm:$0xf]
      %v685 = vunpack.c.l.b16 %v669
      %v686 = vunpack.c.l.b16 %v670
      %v687 = vunpack.c.l.b16 %v671
      %v688 = vunpack.c.l.b16 %v672
      %v689 = vunpack.c.l.b16 %v673
      %v690 = vunpack.c.l.b16 %v674
      %v691 = vunpack.c.l.b16 %v675
      %v692 = vunpack.c.l.b16 %v676
      %v693 = vpack.c.b16 %v686, %v685
      %v694 = vpack.c.b16 %v688, %v687
      %v695 = vpack.c.b16 %v690, %v689
      %v696 = vpack.c.b16 %v692, %v691
      %vm701 = vcmask 523264
      %v703 = vsel %vm701, %v661, 0
      %v706 = vsel %vm701, %v662, 0
      %v709 = vsel %vm701, %v663, 0
      %v712 = vsel %vm701, %v664, 0
      %v715 = vsel %vm701, %v665, 0
      %v718 = vsel %vm701, %v666, 0
      %v721 = vsel %vm701, %v667, 0
      %v724 = vsel %vm701, %v668, 0
      %726 = vmatprep.subr.bf16.mxu0 0
      %727 = vmatpush1.bf16.msra.mxu0 %v693
      %728 = vmatprep.subr.bf16.mxu0 0
      %729 = vmatpush1.bf16.msra.mxu0 %v694
      %730 = vmatprep.subr.bf16.mxu0 0
      %731 = vmatpush1.bf16.msra.mxu0 %v695
      %732 = vmatprep.subr.bf16.mxu0 0
      %733 = vmatpush1.bf16.msra.mxu0 %v696
      %734 = vmatprep.subr.bf16.mxu0 0
      %735 = vmatpush1.bf16.msra.mxu0 0
      %736 = vmatprep.subr.bf16.mxu0 0
      %737 = vmatpush1.bf16.msra.mxu0 0
      %738 = vmatprep.subr.bf16.mxu0 0
      %739 = vmatpush1.bf16.msra.mxu0 0
      %740 = vmatprep.subr.bf16.mxu0 0
      %741 = vmatpush1.bf16.msra.mxu0 0
      %742 = vmatprep.subr.bf16.mxu0 0
      %743 = vmatpush1.bf16.msra.mxu0 0
      %744 = vmatprep.subr.bf16.mxu0 0
      %745 = vmatpush1.bf16.msra.mxu0 0
      %746 = vmatprep.subr.bf16.mxu0 0
      %747 = vmatpush1.bf16.msra.mxu0 0
      %748 = vmatprep.subr.bf16.mxu0 0
      %749 = vmatpush1.bf16.msra.mxu0 0
      %750 = vmatprep.subr.bf16.mxu0 0
      %751 = vmatpush1.bf16.msra.mxu0 0
      %752 = vmatprep.subr.bf16.mxu0 0
      %753 = vmatpush1.bf16.msra.mxu0 0
      %754 = vmatprep.subr.bf16.mxu0 0
      %755 = vmatpush1.bf16.msra.mxu0 0
      %756 = vmatprep.subr.bf16.mxu0 0
      %757 = vmatpush1.bf16.msra.mxu0 0
      %758 = vmatprep.mubr.bf16.mxu0 0
      %759 = vmatmul.mubr.bf16.gmra.mrb[0].mxu0 %v703
      %v760 = vpop.f32.mrb[0].mxu0
      %v761 = vadd.f32 0.0, %v760
      %v762 = vpop.f32.mrb[0].mxu0
      %v763 = vpop.f32.mrb[0].mxu0
      %v764 = vadd.f32 0.0, %v763
      %v765 = vpop.f32.mrb[0].mxu0
      %766 = vmatprep.mubr.bf16.mxu0 0
      %767 = vmatmul.mubr.bf16.gmra.mrb[0].mxu0 %v706
      %v768 = vpop.f32.mrb[0].mxu0
      %v769 = vadd.f32 0.0, %v768
      %v770 = vpop.f32.mrb[0].mxu0
      %v771 = vpop.f32.mrb[0].mxu0
      %v772 = vadd.f32 0.0, %v771
      %v773 = vpop.f32.mrb[0].mxu0
      %774 = vmatprep.mubr.bf16.mxu0 0
      %775 = vmatmul.mubr.bf16.gmra.mrb[0].mxu0 %v709
      %v776 = vpop.f32.mrb[0].mxu0
      %v777 = vadd.f32 0.0, %v776
      %v778 = vpop.f32.mrb[0].mxu0
      %v779 = vpop.f32.mrb[0].mxu0
      %v780 = vadd.f32 0.0, %v779
      %v781 = vpop.f32.mrb[0].mxu0
      %782 = vmatprep.mubr.bf16.mxu0 0
      %783 = vmatmul.mubr.bf16.gmra.mrb[0].mxu0 %v712
      %v784 = vpop.f32.mrb[0].mxu0
      %v785 = vadd.f32 0.0, %v784
      %v786 = vpop.f32.mrb[0].mxu0
      %v787 = vpop.f32.mrb[0].mxu0
      %v788 = vadd.f32 0.0, %v787
      %v789 = vpop.f32.mrb[0].mxu0
      %790 = vmatprep.mubr.bf16.mxu0 0
      %791 = vmatmul.mubr.bf16.gmra.mrb[0].mxu0 %v715
      %v792 = vpop.f32.mrb[0].mxu0
      %v793 = vadd.f32 0.0, %v792
      %v794 = vpop.f32.mrb[0].mxu0
      %v795 = vpop.f32.mrb[0].mxu0
      %v796 = vadd.f32 0.0, %v795
      %v797 = vpop.f32.mrb[0].mxu0
      %798 = vmatprep.mubr.bf16.mxu0 0
      %799 = vmatmul.mubr.bf16.gmra.mrb[0].mxu0 %v718
      %v800 = vpop.f32.mrb[0].mxu0
      %v801 = vadd.f32 0.0, %v800
      %v802 = vpop.f32.mrb[0].mxu0
      %v803 = vpop.f32.mrb[0].mxu0
      %v804 = vadd.f32 0.0, %v803
      %v805 = vpop.f32.mrb[0].mxu0
      %806 = vmatprep.mubr.bf16.mxu0 0
      %807 = vmatmul.mubr.bf16.gmra.mrb[0].mxu0 %v721
      %v808 = vpop.f32.mrb[0].mxu0
      %v809 = vadd.f32 0.0, %v808
      %v810 = vpop.f32.mrb[0].mxu0
      %v811 = vpop.f32.mrb[0].mxu0
      %v812 = vadd.f32 0.0, %v811
      %v813 = vpop.f32.mrb[0].mxu0
      %814 = vmatprep.mubr.bf16.mxu0 0
      %815 = vmatmul.mubr.bf16.gmra.mrb[0].mxu0 %v724
      %v816 = vpop.f32.mrb[0].mxu0
      %v817 = vadd.f32 0.0, %v816
      %v818 = vpop.f32.mrb[0].mxu0
      %v819 = vpop.f32.mrb[0].mxu0
      %v820 = vadd.f32 0.0, %v819
      %v821 = vpop.f32.mrb[0].mxu0
      %822 = vdwg.mxu0
      %v823 = vld [vmem:[%s5] sm:$0x1]
      %v825 = vlaneseq
      %v826 = vshrl.u32 %v825, 7
      %v827 = vsub.s32 0, %v826
      %v828 = vrot.slane %v823, %v827
      %v830 = vmul.f32 %v761, %v828
      %v831 = vmul.f32 %v764, %v828
      %v832 = vmul.f32 %v769, %v828
      %v833 = vmul.f32 %v772, %v828
      %v834 = vmul.f32 %v777, %v828
      %v835 = vmul.f32 %v780, %v828
      %v836 = vmul.f32 %v785, %v828
      %v837 = vmul.f32 %v788, %v828
      %v838 = vmul.f32 %v793, %v828
      %v839 = vmul.f32 %v796, %v828
      %v840 = vmul.f32 %v801, %v828
      %v841 = vmul.f32 %v804, %v828
      %v842 = vmul.f32 %v809, %v828
      %v843 = vmul.f32 %v812, %v828
      %v844 = vmul.f32 %v817, %v828
      %v845 = vmul.f32 %v820, %v828
      %v846 = vld [vmem:[%s6] sm:$0x1]
      %v848 = vlaneseq
      %v849 = vshrl.u32 %v848, 7
      %v850 = vsub.s32 0, %v849
      %v851 = vrot.slane %v846, %v850
      %v853 = vadd.f32 %v830, %v851
      %v854 = vadd.f32 %v831, %v851
      %v855 = vadd.f32 %v832, %v851
      %v856 = vadd.f32 %v833, %v851
      %v857 = vadd.f32 %v834, %v851
      %v858 = vadd.f32 %v835, %v851
      %v859 = vadd.f32 %v836, %v851
      %v860 = vadd.f32 %v837, %v851
      %v861 = vadd.f32 %v838, %v851
      %v862 = vadd.f32 %v839, %v851
      %v863 = vadd.f32 %v840, %v851
      %v864 = vadd.f32 %v841, %v851
      %v865 = vadd.f32 %v842, %v851
      %v866 = vadd.f32 %v843, %v851
      %v867 = vadd.f32 %v844, %v851
      %v868 = vadd.f32 %v845, %v851
      %v869 = vmax.f32 %v853, 0.0
      %v870 = vmax.f32 %v854, 0.0
      %v871 = vmax.f32 %v855, 0.0
      %v872 = vmax.f32 %v856, 0.0
      %v873 = vmax.f32 %v857, 0.0
      %v874 = vmax.f32 %v858, 0.0
      %v875 = vmax.f32 %v859, 0.0
      %v876 = vmax.f32 %v860, 0.0
      %v877 = vmax.f32 %v861, 0.0
      %v878 = vmax.f32 %v862, 0.0
      %v879 = vmax.f32 %v863, 0.0
      %v880 = vmax.f32 %v864, 0.0
      %v881 = vmax.f32 %v865, 0.0
      %v882 = vmax.f32 %v866, 0.0
      %v883 = vmax.f32 %v867, 0.0
      %v884 = vmax.f32 %v868, 0.0
      %v885 = vpack.c.bf16 %v870, %v869
      %v886 = vpack.c.bf16 %v872, %v871
      %v887 = vpack.c.bf16 %v874, %v873
      %v888 = vpack.c.bf16 %v876, %v875
      %v889 = vpack.c.bf16 %v878, %v877
      %v890 = vpack.c.bf16 %v880, %v879
      %v891 = vpack.c.bf16 %v882, %v881
      %v892 = vpack.c.bf16 %v884, %v883
      %p893 = scmp.ne.s32.totalorder %s27, 2
      // Predicated region
      $region57: #{stnkd_forward.6} parent=51 // pred_check
        %p894 = pneg %p893
      $region58: #{stnkd_forward.6} parent=51 // pred_check_branch
        %896 = sbr.rel (%p894) target = $region60
      $region59: #{stnkd_forward.6} parent=51 // pred_region
        %v897 = vld [vmem:[%s7] sm:$0xff]
        %v898 = vld [vmem:[%s7 + $0x8] sm:$0xff]
        %v899 = vld [vmem:[%s7 + $0x10] sm:$0xff]
        %v900 = vld [vmem:[%s7 + $0x18] sm:$0xff]
        %v901 = vld [vmem:[%s7 + $0x20] sm:$0xff]
        %v902 = vld [vmem:[%s7 + $0x28] sm:$0xff]
        %v903 = vld [vmem:[%s7 + $0x30] sm:$0xff]
        %v904 = vld [vmem:[%s7 + $0x38] sm:$0xff]
        %v905 = vld [vmem:[%s7 + $0x40] sm:$0xff]
        %v906 = vld [vmem:[%s7 + $0x48] sm:$0xff]
        %v907 = vld [vmem:[%s7 + $0x50] sm:$0xff]
        %v908 = vld [vmem:[%s7 + $0x58] sm:$0xff]
        %v909 = vld [vmem:[%s7 + $0x60] sm:$0xff]
        %v910 = vld [vmem:[%s7 + $0x68] sm:$0xff]
        %v911 = vld [vmem:[%s7 + $0x70] sm:$0xff]
        %v912 = vld [vmem:[%s7 + $0x78] sm:$0xff]
        %v913 = vld [vmem:[%s7 + $0x80] sm:$0xff]
        %v914 = vld [vmem:[%s7 + $0x88] sm:$0xff]
        %v915 = vld [vmem:[%s7 + $0x90] sm:$0xff]
        %v916 = vld [vmem:[%s7 + $0x98] sm:$0xff]
        %v917 = vld [vmem:[%s7 + $0xa0] sm:$0xff]
        %v918 = vld [vmem:[%s7 + $0xa8] sm:$0xff]
        %v919 = vld [vmem:[%s7 + $0xb0] sm:$0xff]
        %v920 = vld [vmem:[%s7 + $0xb8] sm:$0xff]
        %v921 = vld [vmem:[%s7 + $0xc0] sm:$0xff]
        %v922 = vld [vmem:[%s7 + $0xc8] sm:$0xff]
        %v923 = vld [vmem:[%s7 + $0xd0] sm:$0xff]
        %v924 = vld [vmem:[%s7 + $0xd8] sm:$0xff]
        %v925 = vld [vmem:[%s7 + $0xe0] sm:$0xff]
        %v926 = vld [vmem:[%s7 + $0xe8] sm:$0xff]
        %v927 = vld [vmem:[%s7 + $0xf0] sm:$0xff]
        %v928 = vld [vmem:[%s7 + $0xf8] sm:$0xff]
        %v929 = vld [vmem:[%s7 + $0x100] sm:$0xff]
        %v930 = vld [vmem:[%s7 + $0x108] sm:$0xff]
        %v931 = vld [vmem:[%s7 + $0x110] sm:$0xff]
        %v932 = vld [vmem:[%s7 + $0x118] sm:$0xff]
        %v933 = vld [vmem:[%s7 + $0x120] sm:$0xff]
        %v934 = vld [vmem:[%s7 + $0x128] sm:$0xff]
        %v935 = vld [vmem:[%s7 + $0x130] sm:$0xff]
        %v936 = vld [vmem:[%s7 + $0x138] sm:$0xff]
        %v937 = vld [vmem:[%s7 + $0x140] sm:$0xff]
        %v938 = vld [vmem:[%s7 + $0x148] sm:$0xff]
        %v939 = vld [vmem:[%s7 + $0x150] sm:$0xff]
        %v940 = vld [vmem:[%s7 + $0x158] sm:$0xff]
        %v941 = vld [vmem:[%s7 + $0x160] sm:$0xff]
        %v942 = vld [vmem:[%s7 + $0x168] sm:$0xff]
        %v943 = vld [vmem:[%s7 + $0x170] sm:$0xff]
        %v944 = vld [vmem:[%s7 + $0x178] sm:$0xff]
        %v945 = vld [vmem:[%s7 + $0x180] sm:$0xff]
        %v946 = vld [vmem:[%s7 + $0x188] sm:$0xff]
        %v947 = vld [vmem:[%s7 + $0x190] sm:$0xff]
        %v948 = vld [vmem:[%s7 + $0x198] sm:$0xff]
        %v949 = vld [vmem:[%s7 + $0x1a0] sm:$0xff]
        %v950 = vld [vmem:[%s7 + $0x1a8] sm:$0xff]
        %v951 = vld [vmem:[%s7 + $0x1b0] sm:$0xff]
        %v952 = vld [vmem:[%s7 + $0x1b8] sm:$0xff]
        %v953 = vld [vmem:[%s7 + $0x1c0] sm:$0xff]
        %v954 = vld [vmem:[%s7 + $0x1c8] sm:$0xff]
        %v955 = vld [vmem:[%s7 + $0x1d0] sm:$0xff]
        %v956 = vld [vmem:[%s7 + $0x1d8] sm:$0xff]
        %v957 = vld [vmem:[%s7 + $0x1e0] sm:$0xff]
        %v958 = vld [vmem:[%s7 + $0x1e8] sm:$0xff]
        %v959 = vld [vmem:[%s7 + $0x1f0] sm:$0xff]
        %v960 = vld [vmem:[%s7 + $0x1f8] sm:$0xff]
        %v1025 = vunpack.c.l.b16 %v897
        %v1026 = vunpack.c.h.b16 %v897
        %v1027 = vunpack.c.l.b16 %v898
        %v1028 = vunpack.c.h.b16 %v898
        %v1029 = vunpack.c.l.b16 %v899
        %v1030 = vunpack.c.h.b16 %v899
        %v1031 = vunpack.c.l.b16 %v900
        %v1032 = vunpack.c.h.b16 %v900
        %v1033 = vunpack.c.l.b16 %v901
        %v1034 = vunpack.c.h.b16 %v901
        %v1035 = vunpack.c.l.b16 %v902
        %v1036 = vunpack.c.h.b16 %v902
        %v1037 = vunpack.c.l.b16 %v903
        %v1038 = vunpack.c.h.b16 %v903
        %v1039 = vunpack.c.l.b16 %v904
        %v1040 = vunpack.c.h.b16 %v904
        %v1041 = vunpack.c.l.b16 %v905
        %v1042 = vunpack.c.h.b16 %v905
        %v1043 = vunpack.c.l.b16 %v906
        %v1044 = vunpack.c.h.b16 %v906
        %v1045 = vunpack.c.l.b16 %v907
        %v1046 = vunpack.c.h.b16 %v907
        %v1047 = vunpack.c.l.b16 %v908
        %v1048 = vunpack.c.h.b16 %v908
        %v1049 = vunpack.c.l.b16 %v909
        %v1050 = vunpack.c.h.b16 %v909
        %v1051 = vunpack.c.l.b16 %v910
        %v1052 = vunpack.c.h.b16 %v910
        %v1053 = vunpack.c.l.b16 %v911
        %v1054 = vunpack.c.h.b16 %v911
        %v1055 = vunpack.c.l.b16 %v912
        %v1056 = vunpack.c.h.b16 %v912
        %v1057 = vunpack.c.l.b16 %v913
        %v1058 = vunpack.c.h.b16 %v913
        %v1059 = vunpack.c.l.b16 %v914
        %v1060 = vunpack.c.h.b16 %v914
        %v1061 = vunpack.c.l.b16 %v915
        %v1062 = vunpack.c.h.b16 %v915
        %v1063 = vunpack.c.l.b16 %v916
        %v1064 = vunpack.c.h.b16 %v916
        %v1065 = vunpack.c.l.b16 %v917
        %v1066 = vunpack.c.h.b16 %v917
        %v1067 = vunpack.c.l.b16 %v918
        %v1068 = vunpack.c.h.b16 %v918
        %v1069 = vunpack.c.l.b16 %v919
        %v1070 = vunpack.c.h.b16 %v919
        %v1071 = vunpack.c.l.b16 %v920
        %v1072 = vunpack.c.h.b16 %v920
        %v1073 = vunpack.c.l.b16 %v921
        %v1074 = vunpack.c.h.b16 %v921
        %v1075 = vunpack.c.l.b16 %v922
        %v1076 = vunpack.c.h.b16 %v922
        %v1077 = vunpack.c.l.b16 %v923
        %v1078 = vunpack.c.h.b16 %v923
        %v1079 = vunpack.c.l.b16 %v924
        %v1080 = vunpack.c.h.b16 %v924
        %v1081 = vunpack.c.l.b16 %v925
        %v1082 = vunpack.c.h.b16 %v925
        %v1083 = vunpack.c.l.b16 %v926
        %v1084 = vunpack.c.h.b16 %v926
        %v1085 = vunpack.c.l.b16 %v927
        %v1086 = vunpack.c.h.b16 %v927
        %v1087 = vunpack.c.l.b16 %v928
        %v1088 = vunpack.c.h.b16 %v928
        %v1089 = vunpack.c.l.b16 %v929
        %v1090 = vunpack.c.h.b16 %v929
        %v1091 = vunpack.c.l.b16 %v930
        %v1092 = vunpack.c.h.b16 %v930
        %v1093 = vunpack.c.l.b16 %v931
        %v1094 = vunpack.c.h.b16 %v931
        %v1095 = vunpack.c.l.b16 %v932
        %v1096 = vunpack.c.h.b16 %v932
        %v1097 = vunpack.c.l.b16 %v933
        %v1098 = vunpack.c.h.b16 %v933
        %v1099 = vunpack.c.l.b16 %v934
        %v1100 = vunpack.c.h.b16 %v934
        %v1101 = vunpack.c.l.b16 %v935
        %v1102 = vunpack.c.h.b16 %v935
        %v1103 = vunpack.c.l.b16 %v936
        %v1104 = vunpack.c.h.b16 %v936
        %v1105 = vunpack.c.l.b16 %v937
        %v1106 = vunpack.c.h.b16 %v937
        %v1107 = vunpack.c.l.b16 %v938
        %v1108 = vunpack.c.h.b16 %v938
        %v1109 = vunpack.c.l.b16 %v939
        %v1110 = vunpack.c.h.b16 %v939
        %v1111 = vunpack.c.l.b16 %v940
        %v1112 = vunpack.c.h.b16 %v940
        %v1113 = vunpack.c.l.b16 %v941
        %v1114 = vunpack.c.h.b16 %v941
        %v1115 = vunpack.c.l.b16 %v942
        %v1116 = vunpack.c.h.b16 %v942
        %v1117 = vunpack.c.l.b16 %v943
        %v1118 = vunpack.c.h.b16 %v943
        %v1119 = vunpack.c.l.b16 %v944
        %v1120 = vunpack.c.h.b16 %v944
        %v1121 = vunpack.c.l.b16 %v945
        %v1122 = vunpack.c.h.b16 %v945
        %v1123 = vunpack.c.l.b16 %v946
        %v1124 = vunpack.c.h.b16 %v946
        %v1125 = vunpack.c.l.b16 %v947
        %v1126 = vunpack.c.h.b16 %v947
        %v1127 = vunpack.c.l.b16 %v948
        %v1128 = vunpack.c.h.b16 %v948
        %v1129 = vunpack.c.l.b16 %v949
        %v1130 = vunpack.c.h.b16 %v949
        %v1131 = vunpack.c.l.b16 %v950
        %v1132 = vunpack.c.h.b16 %v950
        %v1133 = vunpack.c.l.b16 %v951
        %v1134 = vunpack.c.h.b16 %v951
        %v1135 = vunpack.c.l.b16 %v952
        %v1136 = vunpack.c.h.b16 %v952
        %v1137 = vunpack.c.l.b16 %v953
        %v1138 = vunpack.c.h.b16 %v953
        %v1139 = vunpack.c.l.b16 %v954
        %v1140 = vunpack.c.h.b16 %v954
        %v1141 = vunpack.c.l.b16 %v955
        %v1142 = vunpack.c.h.b16 %v955
        %v1143 = vunpack.c.l.b16 %v956
        %v1144 = vunpack.c.h.b16 %v956
        %v1145 = vunpack.c.l.b16 %v957
        %v1146 = vunpack.c.h.b16 %v957
        %v1147 = vunpack.c.l.b16 %v958
        %v1148 = vunpack.c.h.b16 %v958
        %v1149 = vunpack.c.l.b16 %v959
        %v1150 = vunpack.c.h.b16 %v959
        %v1151 = vunpack.c.l.b16 %v960
        %v1152 = vunpack.c.h.b16 %v960
        %v1153 = vpack.c.b16 %v1033, %v1025
        %v1154 = vpack.c.b16 %v1034, %v1026
        %v1155 = vpack.c.b16 %v1035, %v1027
        %v1156 = vpack.c.b16 %v1036, %v1028
        %v1157 = vpack.c.b16 %v1037, %v1029
        %v1158 = vpack.c.b16 %v1038, %v1030
        %v1159 = vpack.c.b16 %v1039, %v1031
        %v1160 = vpack.c.b16 %v1040, %v1032
        %v1161 = vpack.c.b16 %v1049, %v1041
        %v1162 = vpack.c.b16 %v1050, %v1042
        %v1163 = vpack.c.b16 %v1051, %v1043
        %v1164 = vpack.c.b16 %v1052, %v1044
        %v1165 = vpack.c.b16 %v1053, %v1045
        %v1166 = vpack.c.b16 %v1054, %v1046
        %v1167 = vpack.c.b16 %v1055, %v1047
        %v1168 = vpack.c.b16 %v1056, %v1048
        %v1169 = vpack.c.b16 %v1065, %v1057
        %v1170 = vpack.c.b16 %v1066, %v1058
        %v1171 = vpack.c.b16 %v1067, %v1059
        %v1172 = vpack.c.b16 %v1068, %v1060
        %v1173 = vpack.c.b16 %v1069, %v1061
        %v1174 = vpack.c.b16 %v1070, %v1062
        %v1175 = vpack.c.b16 %v1071, %v1063
        %v1176 = vpack.c.b16 %v1072, %v1064
        %v1177 = vpack.c.b16 %v1081, %v1073
        %v1178 = vpack.c.b16 %v1082, %v1074
        %v1179 = vpack.c.b16 %v1083, %v1075
        %v1180 = vpack.c.b16 %v1084, %v1076
        %v1181 = vpack.c.b16 %v1085, %v1077
        %v1182 = vpack.c.b16 %v1086, %v1078
        %v1183 = vpack.c.b16 %v1087, %v1079
        %v1184 = vpack.c.b16 %v1088, %v1080
        %v1185 = vpack.c.b16 %v1097, %v1089
        %v1186 = vpack.c.b16 %v1098, %v1090
        %v1187 = vpack.c.b16 %v1099, %v1091
        %v1188 = vpack.c.b16 %v1100, %v1092
        %v1189 = vpack.c.b16 %v1101, %v1093
        %v1190 = vpack.c.b16 %v1102, %v1094
        %v1191 = vpack.c.b16 %v1103, %v1095
        %v1192 = vpack.c.b16 %v1104, %v1096
        %v1193 = vpack.c.b16 %v1113, %v1105
        %v1194 = vpack.c.b16 %v1114, %v1106
        %v1195 = vpack.c.b16 %v1115, %v1107
        %v1196 = vpack.c.b16 %v1116, %v1108
        %v1197 = vpack.c.b16 %v1117, %v1109
        %v1198 = vpack.c.b16 %v1118, %v1110
        %v1199 = vpack.c.b16 %v1119, %v1111
        %v1200 = vpack.c.b16 %v1120, %v1112
        %v1201 = vpack.c.b16 %v1129, %v1121
        %v1202 = vpack.c.b16 %v1130, %v1122
        %v1203 = vpack.c.b16 %v1131, %v1123
        %v1204 = vpack.c.b16 %v1132, %v1124
        %v1205 = vpack.c.b16 %v1133, %v1125
        %v1206 = vpack.c.b16 %v1134, %v1126
        %v1207 = vpack.c.b16 %v1135, %v1127
        %v1208 = vpack.c.b16 %v1136, %v1128
        %v1209 = vpack.c.b16 %v1145, %v1137
        %v1210 = vpack.c.b16 %v1146, %v1138
        %v1211 = vpack.c.b16 %v1147, %v1139
        %v1212 = vpack.c.b16 %v1148, %v1140
        %v1213 = vpack.c.b16 %v1149, %v1141
        %v1214 = vpack.c.b16 %v1150, %v1142
        %v1215 = vpack.c.b16 %v1151, %v1143
        %v1216 = vpack.c.b16 %v1152, %v1144
        %1281 = vmatprep.subr.bf16.mxu0 %v1154
        %1282 = vmatpush1.bf16.msra.mxu0 %v1153
        %1283 = vmatprep.subr.bf16.mxu0 %v1162
        %1284 = vmatpush1.bf16.msra.mxu0 %v1161
        %1285 = vmatprep.subr.bf16.mxu0 %v1170
        %1286 = vmatpush1.bf16.msra.mxu0 %v1169
        %1287 = vmatprep.subr.bf16.mxu0 %v1178
        %1288 = vmatpush1.bf16.msra.mxu0 %v1177
        %1289 = vmatprep.subr.bf16.mxu0 %v1186
        %1290 = vmatpush1.bf16.msra.mxu0 %v1185
        %1291 = vmatprep.subr.bf16.mxu0 %v1194
        %1292 = vmatpush1.bf16.msra.mxu0 %v1193
        %1293 = vmatprep.subr.bf16.mxu0 %v1202
        %1294 = vmatpush1.bf16.msra.mxu0 %v1201
        %1295 = vmatprep.subr.bf16.mxu0 %v1210
        %1296 = vmatpush1.bf16.msra.mxu0 %v1209
        %1297 = vmatprep.subr.bf16.mxu0 0
        %1298 = vmatpush1.bf16.msra.mxu0 0
        %1299 = vmatprep.subr.bf16.mxu0 0
        %1300 = vmatpush1.bf16.msra.mxu0 0
        %1301 = vmatprep.subr.bf16.mxu0 0
        %1302 = vmatpush1.bf16.msra.mxu0 0
        %1303 = vmatprep.subr.bf16.mxu0 0
        %1304 = vmatpush1.bf16.msra.mxu0 0
        %1305 = vmatprep.subr.bf16.mxu0 0
        %1306 = vmatpush1.bf16.msra.mxu0 0
        %1307 = vmatprep.subr.bf16.mxu0 0
        %1308 = vmatpush1.bf16.msra.mxu0 0
        %1309 = vmatprep.subr.bf16.mxu0 0
        %1310 = vmatpush1.bf16.msra.mxu0 0
        %1311 = vmatprep.subr.bf16.mxu0 0
        %1312 = vmatpush1.bf16.msra.mxu0 0
        %1313 = vmatprep.mubr.bf16.mxu0 0
        %1314 = vmatmul.mubr.bf16.gmra.mrb[0].mxu0 %v885
        %v1315 = vpop.f32.mrb[0].mxu0
        %v1316 = vadd.f32 0.0, %v1315
        %v1317 = vpop.f32.mrb[0].mxu0
        %v1318 = vadd.f32 0.0, %v1317
        %v1319 = vpop.f32.mrb[0].mxu0
        %v1320 = vadd.f32 0.0, %v1319
        %v1321 = vpop.f32.mrb[0].mxu0
        %v1322 = vadd.f32 0.0, %v1321
        %1323 = vmatprep.mubr.bf16.mxu0 0
        %1324 = vmatmul.mubr.bf16.gmra.mrb[0].mxu0 %v886
        %v1325 = vpop.f32.mrb[0].mxu0
        %v1326 = vadd.f32 0.0, %v1325
        %v1327 = vpop.f32.mrb[0].mxu0
        %v1328 = vadd.f32 0.0, %v1327
        %v1329 = vpop.f32.mrb[0].mxu0
        %v1330 = vadd.f32 0.0, %v1329
        %v1331 = vpop.f32.mrb[0].mxu0
        %v1332 = vadd.f32 0.0, %v1331
        %1333 = vmatprep.mubr.bf16.mxu0 0
        %1334 = vmatmul.mubr.bf16.gmra.mrb[0].mxu0 %v887
        %v1335 = vpop.f32.mrb[0].mxu0
        %v1336 = vadd.f32 0.0, %v1335
        %v1337 = vpop.f32.mrb[0].mxu0
        %v1338 = vadd.f32 0.0, %v1337
        %v1339 = vpop.f32.mrb[0].mxu0
        %v1340 = vadd.f32 0.0, %v1339
        %v1341 = vpop.f32.mrb[0].mxu0
        %v1342 = vadd.f32 0.0, %v1341
        %1343 = vmatprep.mubr.bf16.mxu0 0
        %1344 = vmatmul.mubr.bf16.gmra.mrb[0].mxu0 %v888
        %v1345 = vpop.f32.mrb[0].mxu0
        %v1346 = vadd.f32 0.0, %v1345
        %v1347 = vpop.f32.mrb[0].mxu0
        %v1348 = vadd.f32 0.0, %v1347
        %v1349 = vpop.f32.mrb[0].mxu0
        %v1350 = vadd.f32 0.0, %v1349
        %v1351 = vpop.f32.mrb[0].mxu0
        %v1352 = vadd.f32 0.0, %v1351
        %1353 = vmatprep.mubr.bf16.mxu0 0
        %1354 = vmatmul.mubr.bf16.gmra.mrb[0].mxu0 %v889
        %v1355 = vpop.f32.mrb[0].mxu0
        %v1356 = vadd.f32 0.0, %v1355
        %v1357 = vpop.f32.mrb[0].mxu0
        %v1358 = vadd.f32 0.0, %v1357
        %v1359 = vpop.f32.mrb[0].mxu0
        %v1360 = vadd.f32 0.0, %v1359
        %v1361 = vpop.f32.mrb[0].mxu0
        %v1362 = vadd.f32 0.0, %v1361
        %1363 = vmatprep.mubr.bf16.mxu0 0
        %1364 = vmatmul.mubr.bf16.gmra.mrb[0].mxu0 %v890
        %v1365 = vpop.f32.mrb[0].mxu0
        %v1366 = vadd.f32 0.0, %v1365
        %v1367 = vpop.f32.mrb[0].mxu0
        %v1368 = vadd.f32 0.0, %v1367
        %v1369 = vpop.f32.mrb[0].mxu0
        %v1370 = vadd.f32 0.0, %v1369
        %v1371 = vpop.f32.mrb[0].mxu0
        %v1372 = vadd.f32 0.0, %v1371
        %1373 = vmatprep.mubr.bf16.mxu0 0
        %1374 = vmatmul.mubr.bf16.gmra.mrb[0].mxu0 %v891
        %v1375 = vpop.f32.mrb[0].mxu0
        %v1376 = vadd.f32 0.0, %v1375
        %v1377 = vpop.f32.mrb[0].mxu0
        %v1378 = vadd.f32 0.0, %v1377
        %v1379 = vpop.f32.mrb[0].mxu0
        %v1380 = vadd.f32 0.0, %v1379
        %v1381 = vpop.f32.mrb[0].mxu0
        %v1382 = vadd.f32 0.0, %v1381
        %1383 = vmatprep.mubr.bf16.mxu0 0
        %1384 = vmatmul.mubr.bf16.gmra.mrb[0].mxu0 %v892
        %v1385 = vpop.f32.mrb[0].mxu0
        %v1386 = vadd.f32 0.0, %v1385
        %v1387 = vpop.f32.mrb[0].mxu0
        %v1388 = vadd.f32 0.0, %v1387
        %v1389 = vpop.f32.mrb[0].mxu0
        %v1390 = vadd.f32 0.0, %v1389
        %v1391 = vpop.f32.mrb[0].mxu0
        %v1392 = vadd.f32 0.0, %v1391
        %1393 = vdwg.mxu0
        %1394 = vmatprep.subr.bf16.mxu0 %v1156
        %1395 = vmatpush1.bf16.msra.mxu0 %v1155
        %1396 = vmatprep.subr.bf16.mxu0 %v1164
        %1397 = vmatpush1.bf16.msra.mxu0 %v1163
        %1398 = vmatprep.subr.bf16.mxu0 %v1172
        %1399 = vmatpush1.bf16.msra.mxu0 %v1171
        %1400 = vmatprep.subr.bf16.mxu0 %v1180
        %1401 = vmatpush1.bf16.msra.mxu0 %v1179
        %1402 = vmatprep.subr.bf16.mxu0 %v1188
        %1403 = vmatpush1.bf16.msra.mxu0 %v1187
        %1404 = vmatprep.subr.bf16.mxu0 %v1196
        %1405 = vmatpush1.bf16.msra.mxu0 %v1195
        %1406 = vmatprep.subr.bf16.mxu0 %v1204
        %1407 = vmatpush1.bf16.msra.mxu0 %v1203
        %1408 = vmatprep.subr.bf16.mxu0 %v1212
        %1409 = vmatpush1.bf16.msra.mxu0 %v1211
        %1410 = vmatprep.subr.bf16.mxu0 0
        %1411 = vmatpush1.bf16.msra.mxu0 0
        %1412 = vmatprep.subr.bf16.mxu0 0
        %1413 = vmatpush1.bf16.msra.mxu0 0
        %1414 = vmatprep.subr.bf16.mxu0 0
        %1415 = vmatpush1.bf16.msra.mxu0 0
        %1416 = vmatprep.subr.bf16.mxu0 0
        %1417 = vmatpush1.bf16.msra.mxu0 0
        %1418 = vmatprep.subr.bf16.mxu0 0
        %1419 = vmatpush1.bf16.msra.mxu0 0
        %1420 = vmatprep.subr.bf16.mxu0 0
        %1421 = vmatpush1.bf16.msra.mxu0 0
        %1422 = vmatprep.subr.bf16.mxu0 0
        %1423 = vmatpush1.bf16.msra.mxu0 0
        %1424 = vmatprep.subr.bf16.mxu0 0
        %1425 = vmatpush1.bf16.msra.mxu0 0
        %1426 = vmatprep.mubr.bf16.mxu0 0
        %1427 = vmatmul.mubr.bf16.gmra.mrb[0].mxu0 %v885
        %v1428 = vpop.f32.mrb[0].mxu0
        %v1429 = vadd.f32 0.0, %v1428
        %v1430 = vpop.f32.mrb[0].mxu0
        %v1431 = vadd.f32 0.0, %v1430
        %v1432 = vpop.f32.mrb[0].mxu0
        %v1433 = vadd.f32 0.0, %v1432
        %v1434 = vpop.f32.mrb[0].mxu0
        %v1435 = vadd.f32 0.0, %v1434
        %1436 = vmatprep.mubr.bf16.mxu0 0
        %1437 = vmatmul.mubr.bf16.gmra.mrb[0].mxu0 %v886
        %v1438 = vpop.f32.mrb[0].mxu0
        %v1439 = vadd.f32 0.0, %v1438
        %v1440 = vpop.f32.mrb[0].mxu0
        %v1441 = vadd.f32 0.0, %v1440
        %v1442 = vpop.f32.mrb[0].mxu0
        %v1443 = vadd.f32 0.0, %v1442
        %v1444 = vpop.f32.mrb[0].mxu0
        %v1445 = vadd.f32 0.0, %v1444
        %1446 = vmatprep.mubr.bf16.mxu0 0
        %1447 = vmatmul.mubr.bf16.gmra.mrb[0].mxu0 %v887
        %v1448 = vpop.f32.mrb[0].mxu0
        %v1449 = vadd.f32 0.0, %v1448
        %v1450 = vpop.f32.mrb[0].mxu0
        %v1451 = vadd.f32 0.0, %v1450
        %v1452 = vpop.f32.mrb[0].mxu0
        %v1453 = vadd.f32 0.0, %v1452
        %v1454 = vpop.f32.mrb[0].mxu0
        %v1455 = vadd.f32 0.0, %v1454
        %1456 = vmatprep.mubr.bf16.mxu0 0
        %1457 = vmatmul.mubr.bf16.gmra.mrb[0].mxu0 %v888
        %v1458 = vpop.f32.mrb[0].mxu0
        %v1459 = vadd.f32 0.0, %v1458
        %v1460 = vpop.f32.mrb[0].mxu0
        %v1461 = vadd.f32 0.0, %v1460
        %v1462 = vpop.f32.mrb[0].mxu0
        %v1463 = vadd.f32 0.0, %v1462
        %v1464 = vpop.f32.mrb[0].mxu0
        %v1465 = vadd.f32 0.0, %v1464
        %1466 = vmatprep.mubr.bf16.mxu0 0
        %1467 = vmatmul.mubr.bf16.gmra.mrb[0].mxu0 %v889
        %v1468 = vpop.f32.mrb[0].mxu0
        %v1469 = vadd.f32 0.0, %v1468
        %v1470 = vpop.f32.mrb[0].mxu0
        %v1471 = vadd.f32 0.0, %v1470
        %v1472 = vpop.f32.mrb[0].mxu0
        %v1473 = vadd.f32 0.0, %v1472
        %v1474 = vpop.f32.mrb[0].mxu0
        %v1475 = vadd.f32 0.0, %v1474
        %1476 = vmatprep.mubr.bf16.mxu0 0
        %1477 = vmatmul.mubr.bf16.gmra.mrb[0].mxu0 %v890
        %v1478 = vpop.f32.mrb[0].mxu0
        %v1479 = vadd.f32 0.0, %v1478
        %v1480 = vpop.f32.mrb[0].mxu0
        %v1481 = vadd.f32 0.0, %v1480
        %v1482 = vpop.f32.mrb[0].mxu0
        %v1483 = vadd.f32 0.0, %v1482
        %v1484 = vpop.f32.mrb[0].mxu0
        %v1485 = vadd.f32 0.0, %v1484
        %1486 = vmatprep.mubr.bf16.mxu0 0
        %1487 = vmatmul.mubr.bf16.gmra.mrb[0].mxu0 %v891
        %v1488 = vpop.f32.mrb[0].mxu0
        %v1489 = vadd.f32 0.0, %v1488
        %v1490 = vpop.f32.mrb[0].mxu0
        %v1491 = vadd.f32 0.0, %v1490
        %v1492 = vpop.f32.mrb[0].mxu0
        %v1493 = vadd.f32 0.0, %v1492
        %v1494 = vpop.f32.mrb[0].mxu0
        %v1495 = vadd.f32 0.0, %v1494
        %1496 = vmatprep.mubr.bf16.mxu0 0
        %1497 = vmatmul.mubr.bf16.gmra.mrb[0].mxu0 %v892
        %v1498 = vpop.f32.mrb[0].mxu0
        %v1499 = vadd.f32 0.0, %v1498
        %v1500 = vpop.f32.mrb[0].mxu0
        %v1501 = vadd.f32 0.0, %v1500
        %v1502 = vpop.f32.mrb[0].mxu0
        %v1503 = vadd.f32 0.0, %v1502
        %v1504 = vpop.f32.mrb[0].mxu0
        %v1505 = vadd.f32 0.0, %v1504
        %1506 = vdwg.mxu0
        %1507 = vmatprep.subr.bf16.mxu0 %v1158
        %1508 = vmatpush1.bf16.msra.mxu0 %v1157
        %1509 = vmatprep.subr.bf16.mxu0 %v1166
        %1510 = vmatpush1.bf16.msra.mxu0 %v1165
        %1511 = vmatprep.subr.bf16.mxu0 %v1174
        %1512 = vmatpush1.bf16.msra.mxu0 %v1173
        %1513 = vmatprep.subr.bf16.mxu0 %v1182
        %1514 = vmatpush1.bf16.msra.mxu0 %v1181
        %1515 = vmatprep.subr.bf16.mxu0 %v1190
        %1516 = vmatpush1.bf16.msra.mxu0 %v1189
        %1517 = vmatprep.subr.bf16.mxu0 %v1198
        %1518 = vmatpush1.bf16.msra.mxu0 %v1197
        %1519 = vmatprep.subr.bf16.mxu0 %v1206
        %1520 = vmatpush1.bf16.msra.mxu0 %v1205
        %1521 = vmatprep.subr.bf16.mxu0 %v1214
        %1522 = vmatpush1.bf16.msra.mxu0 %v1213
        %1523 = vmatprep.subr.bf16.mxu0 0
        %1524 = vmatpush1.bf16.msra.mxu0 0
        %1525 = vmatprep.subr.bf16.mxu0 0
        %1526 = vmatpush1.bf16.msra.mxu0 0
        %1527 = vmatprep.subr.bf16.mxu0 0
        %1528 = vmatpush1.bf16.msra.mxu0 0
        %1529 = vmatprep.subr.bf16.mxu0 0
        %1530 = vmatpush1.bf16.msra.mxu0 0
        %1531 = vmatprep.subr.bf16.mxu0 0
        %1532 = vmatpush1.bf16.msra.mxu0 0
        %1533 = vmatprep.subr.bf16.mxu0 0
        %1534 = vmatpush1.bf16.msra.mxu0 0
        %1535 = vmatprep.subr.bf16.mxu0 0
        %1536 = vmatpush1.bf16.msra.mxu0 0
        %1537 = vmatprep.subr.bf16.mxu0 0
        %1538 = vmatpush1.bf16.msra.mxu0 0
        %1539 = vmatprep.mubr.bf16.mxu0 0
        %1540 = vmatmul.mubr.bf16.gmra.mrb[0].mxu0 %v885
        %v1541 = vpop.f32.mrb[0].mxu0
        %v1542 = vadd.f32 0.0, %v1541
        %v1543 = vpop.f32.mrb[0].mxu0
        %v1544 = vadd.f32 0.0, %v1543
        %v1545 = vpop.f32.mrb[0].mxu0
        %v1546 = vadd.f32 0.0, %v1545
        %v1547 = vpop.f32.mrb[0].mxu0
        %v1548 = vadd.f32 0.0, %v1547
        %1549 = vmatprep.mubr.bf16.mxu0 0
        %1550 = vmatmul.mubr.bf16.gmra.mrb[0].mxu0 %v886
        %v1551 = vpop.f32.mrb[0].mxu0
        %v1552 = vadd.f32 0.0, %v1551
        %v1553 = vpop.f32.mrb[0].mxu0
        %v1554 = vadd.f32 0.0, %v1553
        %v1555 = vpop.f32.mrb[0].mxu0
        %v1556 = vadd.f32 0.0, %v1555
        %v1557 = vpop.f32.mrb[0].mxu0
        %v1558 = vadd.f32 0.0, %v1557
        %1559 = vmatprep.mubr.bf16.mxu0 0
        %1560 = vmatmul.mubr.bf16.gmra.mrb[0].mxu0 %v887
        %v1561 = vpop.f32.mrb[0].mxu0
        %v1562 = vadd.f32 0.0, %v1561
        %v1563 = vpop.f32.mrb[0].mxu0
        %v1564 = vadd.f32 0.0, %v1563
        %v1565 = vpop.f32.mrb[0].mxu0
        %v1566 = vadd.f32 0.0, %v1565
        %v1567 = vpop.f32.mrb[0].mxu0
        %v1568 = vadd.f32 0.0, %v1567
        %1569 = vmatprep.mubr.bf16.mxu0 0
        %1570 = vmatmul.mubr.bf16.gmra.mrb[0].mxu0 %v888
        %v1571 = vpop.f32.mrb[0].mxu0
        %v1572 = vadd.f32 0.0, %v1571
        %v1573 = vpop.f32.mrb[0].mxu0
        %v1574 = vadd.f32 0.0, %v1573
        %v1575 = vpop.f32.mrb[0].mxu0
        %v1576 = vadd.f32 0.0, %v1575
        %v1577 = vpop.f32.mrb[0].mxu0
        %v1578 = vadd.f32 0.0, %v1577
        %1579 = vmatprep.mubr.bf16.mxu0 0
        %1580 = vmatmul.mubr.bf16.gmra.mrb[0].mxu0 %v889
        %v1581 = vpop.f32.mrb[0].mxu0
        %v1582 = vadd.f32 0.0, %v1581
        %v1583 = vpop.f32.mrb[0].mxu0
        %v1584 = vadd.f32 0.0, %v1583
        %v1585 = vpop.f32.mrb[0].mxu0
        %v1586 = vadd.f32 0.0, %v1585
        %v1587 = vpop.f32.mrb[0].mxu0
        %v1588 = vadd.f32 0.0, %v1587
        %1589 = vmatprep.mubr.bf16.mxu0 0
        %1590 = vmatmul.mubr.bf16.gmra.mrb[0].mxu0 %v890
        %v1591 = vpop.f32.mrb[0].mxu0
        %v1592 = vadd.f32 0.0, %v1591
        %v1593 = vpop.f32.mrb[0].mxu0
        %v1594 = vadd.f32 0.0, %v1593
        %v1595 = vpop.f32.mrb[0].mxu0
        %v1596 = vadd.f32 0.0, %v1595
        %v1597 = vpop.f32.mrb[0].mxu0
        %v1598 = vadd.f32 0.0, %v1597
        %1599 = vmatprep.mubr.bf16.mxu0 0
        %1600 = vmatmul.mubr.bf16.gmra.mrb[0].mxu0 %v891
        %v1601 = vpop.f32.mrb[0].mxu0
        %v1602 = vadd.f32 0.0, %v1601
        %v1603 = vpop.f32.mrb[0].mxu0
        %v1604 = vadd.f32 0.0, %v1603
        %v1605 = vpop.f32.mrb[0].mxu0
        %v1606 = vadd.f32 0.0, %v1605
        %v1607 = vpop.f32.mrb[0].mxu0
        %v1608 = vadd.f32 0.0, %v1607
        %1609 = vmatprep.mubr.bf16.mxu0 0
        %1610 = vmatmul.mubr.bf16.gmra.mrb[0].mxu0 %v892
        %v1611 = vpop.f32.mrb[0].mxu0
        %v1612 = vadd.f32 0.0, %v1611
        %v1613 = vpop.f32.mrb[0].mxu0
        %v1614 = vadd.f32 0.0, %v1613
        %v1615 = vpop.f32.mrb[0].mxu0
        %v1616 = vadd.f32 0.0, %v1615
        %v1617 = vpop.f32.mrb[0].mxu0
        %v1618 = vadd.f32 0.0, %v1617
        %1619 = vdwg.mxu0
        %1620 = vmatprep.subr.bf16.mxu0 %v1160
        %1621 = vmatpush1.bf16.msra.mxu0 %v1159
        %1622 = vmatprep.subr.bf16.mxu0 %v1168
        %1623 = vmatpush1.bf16.msra.mxu0 %v1167
        %1624 = vmatprep.subr.bf16.mxu0 %v1176
        %1625 = vmatpush1.bf16.msra.mxu0 %v1175
        %1626 = vmatprep.subr.bf16.mxu0 %v1184
        %1627 = vmatpush1.bf16.msra.mxu0 %v1183
        %1628 = vmatprep.subr.bf16.mxu0 %v1192
        %1629 = vmatpush1.bf16.msra.mxu0 %v1191
        %1630 = vmatprep.subr.bf16.mxu0 %v1200
        %1631 = vmatpush1.bf16.msra.mxu0 %v1199
        %1632 = vmatprep.subr.bf16.mxu0 %v1208
        %1633 = vmatpush1.bf16.msra.mxu0 %v1207
        %1634 = vmatprep.subr.bf16.mxu0 %v1216
        %1635 = vmatpush1.bf16.msra.mxu0 %v1215
        %1636 = vmatprep.subr.bf16.mxu0 0
        %1637 = vmatpush1.bf16.msra.mxu0 0
        %1638 = vmatprep.subr.bf16.mxu0 0
        %1639 = vmatpush1.bf16.msra.mxu0 0
        %1640 = vmatprep.subr.bf16.mxu0 0
        %1641 = vmatpush1.bf16.msra.mxu0 0
        %1642 = vmatprep.subr.bf16.mxu0 0
        %1643 = vmatpush1.bf16.msra.mxu0 0
        %1644 = vmatprep.subr.bf16.mxu0 0
        %1645 = vmatpush1.bf16.msra.mxu0 0
        %1646 = vmatprep.subr.bf16.mxu0 0
        %1647 = vmatpush1.bf16.msra.mxu0 0
        %1648 = vmatprep.subr.bf16.mxu0 0
        %1649 = vmatpush1.bf16.msra.mxu0 0
        %1650 = vmatprep.subr.bf16.mxu0 0
        %1651 = vmatpush1.bf16.msra.mxu0 0
        %1652 = vmatprep.mubr.bf16.mxu0 0
        %1653 = vmatmul.mubr.bf16.gmra.mrb[0].mxu0 %v885
        %v1654 = vpop.f32.mrb[0].mxu0
        %v1655 = vadd.f32 0.0, %v1654
        %v1656 = vpop.f32.mrb[0].mxu0
        %v1657 = vadd.f32 0.0, %v1656
        %v1658 = vpop.f32.mrb[0].mxu0
        %v1659 = vadd.f32 0.0, %v1658
        %v1660 = vpop.f32.mrb[0].mxu0
        %v1661 = vadd.f32 0.0, %v1660
        %1662 = vmatprep.mubr.bf16.mxu0 0
        %1663 = vmatmul.mubr.bf16.gmra.mrb[0].mxu0 %v886
        %v1664 = vpop.f32.mrb[0].mxu0
        %v1665 = vadd.f32 0.0, %v1664
        %v1666 = vpop.f32.mrb[0].mxu0
        %v1667 = vadd.f32 0.0, %v1666
        %v1668 = vpop.f32.mrb[0].mxu0
        %v1669 = vadd.f32 0.0, %v1668
        %v1670 = vpop.f32.mrb[0].mxu0
        %v1671 = vadd.f32 0.0, %v1670
        %1672 = vmatprep.mubr.bf16.mxu0 0
        %1673 = vmatmul.mubr.bf16.gmra.mrb[0].mxu0 %v887
        %v1674 = vpop.f32.mrb[0].mxu0
        %v1675 = vadd.f32 0.0, %v1674
        %v1676 = vpop.f32.mrb[0].mxu0
        %v1677 = vadd.f32 0.0, %v1676
        %v1678 = vpop.f32.mrb[0].mxu0
        %v1679 = vadd.f32 0.0, %v1678
        %v1680 = vpop.f32.mrb[0].mxu0
        %v1681 = vadd.f32 0.0, %v1680
        %1682 = vmatprep.mubr.bf16.mxu0 0
        %1683 = vmatmul.mubr.bf16.gmra.mrb[0].mxu0 %v888
        %v1684 = vpop.f32.mrb[0].mxu0
        %v1685 = vadd.f32 0.0, %v1684
        %v1686 = vpop.f32.mrb[0].mxu0
        %v1687 = vadd.f32 0.0, %v1686
        %v1688 = vpop.f32.mrb[0].mxu0
        %v1689 = vadd.f32 0.0, %v1688
        %v1690 = vpop.f32.mrb[0].mxu0
        %v1691 = vadd.f32 0.0, %v1690
        %1692 = vmatprep.mubr.bf16.mxu0 0
        %1693 = vmatmul.mubr.bf16.gmra.mrb[0].mxu0 %v889
        %v1694 = vpop.f32.mrb[0].mxu0
        %v1695 = vadd.f32 0.0, %v1694
        %v1696 = vpop.f32.mrb[0].mxu0
        %v1697 = vadd.f32 0.0, %v1696
        %v1698 = vpop.f32.mrb[0].mxu0
        %v1699 = vadd.f32 0.0, %v1698
        %v1700 = vpop.f32.mrb[0].mxu0
        %v1701 = vadd.f32 0.0, %v1700
        %1702 = vmatprep.mubr.bf16.mxu0 0
        %1703 = vmatmul.mubr.bf16.gmra.mrb[0].mxu0 %v890
        %v1704 = vpop.f32.mrb[0].mxu0
        %v1705 = vadd.f32 0.0, %v1704
        %v1706 = vpop.f32.mrb[0].mxu0
        %v1707 = vadd.f32 0.0, %v1706
        %v1708 = vpop.f32.mrb[0].mxu0
        %v1709 = vadd.f32 0.0, %v1708
        %v1710 = vpop.f32.mrb[0].mxu0
        %v1711 = vadd.f32 0.0, %v1710
        %1712 = vmatprep.mubr.bf16.mxu0 0
        %1713 = vmatmul.mubr.bf16.gmra.mrb[0].mxu0 %v891
        %v1714 = vpop.f32.mrb[0].mxu0
        %v1715 = vadd.f32 0.0, %v1714
        %v1716 = vpop.f32.mrb[0].mxu0
        %v1717 = vadd.f32 0.0, %v1716
        %v1718 = vpop.f32.mrb[0].mxu0
        %v1719 = vadd.f32 0.0, %v1718
        %v1720 = vpop.f32.mrb[0].mxu0
        %v1721 = vadd.f32 0.0, %v1720
        %1722 = vmatprep.mubr.bf16.mxu0 0
        %1723 = vmatmul.mubr.bf16.gmra.mrb[0].mxu0 %v892
        %v1724 = vpop.f32.mrb[0].mxu0
        %v1725 = vadd.f32 0.0, %v1724
        %v1726 = vpop.f32.mrb[0].mxu0
        %v1727 = vadd.f32 0.0, %v1726
        %v1728 = vpop.f32.mrb[0].mxu0
        %v1729 = vadd.f32 0.0, %v1728
        %v1730 = vpop.f32.mrb[0].mxu0
        %v1731 = vadd.f32 0.0, %v1730
        %1732 = vdwg.mxu0
        %v1733 = vld [vmem:[%s396] sm:$0x1]
        %v1734 = vunpack.c.l.bf16 %v885
        %v1735 = vunpack.c.h.bf16 %v885
        %v1736 = vunpack.c.l.bf16 %v886
        %v1737 = vunpack.c.h.bf16 %v886
        %v1738 = vunpack.c.l.bf16 %v887
        %v1739 = vunpack.c.h.bf16 %v887
        %v1740 = vunpack.c.l.bf16 %v888
        %v1741 = vunpack.c.h.bf16 %v888
        %v1742 = vunpack.c.l.bf16 %v889
        %v1743 = vunpack.c.h.bf16 %v889
        %v1744 = vunpack.c.l.bf16 %v890
        %v1745 = vunpack.c.h.bf16 %v890
        %v1746 = vunpack.c.l.bf16 %v891
        %v1747 = vunpack.c.h.bf16 %v891
        %v1748 = vunpack.c.l.bf16 %v892
        %v1749 = vunpack.c.h.bf16 %v892
        %v1750 = vadd.f32 %v1734, %v1735
        %v1751 = vadd.f32 %v1750, %v1736
        %v1752 = vadd.f32 %v1751, %v1737
        %v1753 = vadd.f32 %v1752, %v1738
        %v1754 = vadd.f32 %v1753, %v1739
        %v1755 = vadd.f32 %v1754, %v1740
        %v1756 = vadd.f32 %v1755, %v1741
        %v1757 = vadd.f32 %v1756, %v1742
        %v1758 = vadd.f32 %v1757, %v1743
        %v1759 = vadd.f32 %v1758, %v1744
        %v1760 = vadd.f32 %v1759, %v1745
        %v1761 = vadd.f32 %v1760, %v1746
        %v1762 = vadd.f32 %v1761, %v1747
        %v1763 = vadd.f32 %v1762, %v1748
        %v1764 = vadd.f32 %v1763, %v1749
        %v1765 = vrot.slane %v1764, 4
        %v1766 = vadd.f32 %v1764, %v1765
        %v1767 = vrot.slane %v1766, 2
        %v1768 = vadd.f32 %v1766, %v1767
        %v1769 = vrot.slane %v1768, 1
        %v1770 = vadd.f32 %v1768, %v1769
        %v1771 = vadd.f32 %v1733, %v1770
        %1772 = vst [vmem:[%s396] sm:$0x1] %v1771
        %v1773 = vld [vmem:[%s400] sm:$0xff]
        %v1774 = vmul.f32 %v1316, %v1316
        %v1775 = vmul.f32 %v1318, %v1318
        %v1776 = vmul.f32 %v1429, %v1429
        %v1777 = vmul.f32 %v1431, %v1431
        %v1778 = vmul.f32 %v1542, %v1542
        %v1779 = vmul.f32 %v1544, %v1544
        %v1780 = vmul.f32 %v1655, %v1655
        %v1781 = vmul.f32 %v1657, %v1657
        %v1782 = vmul.f32 %v1320, %v1320
        %v1783 = vmul.f32 %v1322, %v1322
        %v1784 = vmul.f32 %v1433, %v1433
        %v1785 = vmul.f32 %v1435, %v1435
        %v1786 = vmul.f32 %v1546, %v1546
        %v1787 = vmul.f32 %v1548, %v1548
        %v1788 = vmul.f32 %v1659, %v1659
        %v1789 = vmul.f32 %v1661, %v1661
        %v1790 = vmul.f32 %v1326, %v1326
        %v1791 = vmul.f32 %v1328, %v1328
        %v1792 = vmul.f32 %v1439, %v1439
        %v1793 = vmul.f32 %v1441, %v1441
        %v1794 = vmul.f32 %v1552, %v1552
        %v1795 = vmul.f32 %v1554, %v1554
        %v1796 = vmul.f32 %v1665, %v1665
        %v1797 = vmul.f32 %v1667, %v1667
        %v1798 = vmul.f32 %v1330, %v1330
        %v1799 = vmul.f32 %v1332, %v1332
        %v1800 = vmul.f32 %v1443, %v1443
        %v1801 = vmul.f32 %v1445, %v1445
        %v1802 = vmul.f32 %v1556, %v1556
        %v1803 = vmul.f32 %v1558, %v1558
        %v1804 = vmul.f32 %v1669, %v1669
        %v1805 = vmul.f32 %v1671, %v1671
        %v1806 = vmul.f32 %v1336, %v1336
        %v1807 = vmul.f32 %v1338, %v1338
        %v1808 = vmul.f32 %v1449, %v1449
        %v1809 = vmul.f32 %v1451, %v1451
        %v1810 = vmul.f32 %v1562, %v1562
        %v1811 = vmul.f32 %v1564, %v1564
        %v1812 = vmul.f32 %v1675, %v1675
        %v1813 = vmul.f32 %v1677, %v1677
        %v1814 = vmul.f32 %v1340, %v1340
        %v1815 = vmul.f32 %v1342, %v1342
        %v1816 = vmul.f32 %v1453, %v1453
        %v1817 = vmul.f32 %v1455, %v1455
        %v1818 = vmul.f32 %v1566, %v1566
        %v1819 = vmul.f32 %v1568, %v1568
        %v1820 = vmul.f32 %v1679, %v1679
        %v1821 = vmul.f32 %v1681, %v1681
        %v1822 = vmul.f32 %v1346, %v1346
        %v1823 = vmul.f32 %v1348, %v1348
        %v1824 = vmul.f32 %v1459, %v1459
        %v1825 = vmul.f32 %v1461, %v1461
        %v1826 = vmul.f32 %v1572, %v1572
        %v1827 = vmul.f32 %v1574, %v1574
        %v1828 = vmul.f32 %v1685, %v1685
        %v1829 = vmul.f32 %v1687, %v1687
        %v1830 = vmul.f32 %v1350, %v1350
        %v1831 = vmul.f32 %v1352, %v1352
        %v1832 = vmul.f32 %v1463, %v1463
        %v1833 = vmul.f32 %v1465, %v1465
        %v1834 = vmul.f32 %v1576, %v1576
        %v1835 = vmul.f32 %v1578, %v1578
        %v1836 = vmul.f32 %v1689, %v1689
        %v1837 = vmul.f32 %v1691, %v1691
        %v1838 = vmul.f32 %v1356, %v1356
        %v1839 = vmul.f32 %v1358, %v1358
        %v1840 = vmul.f32 %v1469, %v1469
        %v1841 = vmul.f32 %v1471, %v1471
        %v1842 = vmul.f32 %v1582, %v1582
        %v1843 = vmul.f32 %v1584, %v1584
        %v1844 = vmul.f32 %v1695, %v1695
        %v1845 = vmul.f32 %v1697, %v1697
        %v1846 = vmul.f32 %v1360, %v1360
        %v1847 = vmul.f32 %v1362, %v1362
        %v1848 = vmul.f32 %v1473, %v1473
        %v1849 = vmul.f32 %v1475, %v1475
        %v1850 = vmul.f32 %v1586, %v1586
        %v1851 = vmul.f32 %v1588, %v1588
        %v1852 = vmul.f32 %v1699, %v1699
        %v1853 = vmul.f32 %v1701, %v1701
        %v1854 = vmul.f32 %v1366, %v1366
        %v1855 = vmul.f32 %v1368, %v1368
        %v1856 = vmul.f32 %v1479, %v1479
        %v1857 = vmul.f32 %v1481, %v1481
        %v1858 = vmul.f32 %v1592, %v1592
        %v1859 = vmul.f32 %v1594, %v1594
        %v1860 = vmul.f32 %v1705, %v1705
        %v1861 = vmul.f32 %v1707, %v1707
        %v1862 = vmul.f32 %v1370, %v1370
        %v1863 = vmul.f32 %v1372, %v1372
        %v1864 = vmul.f32 %v1483, %v1483
        %v1865 = vmul.f32 %v1485, %v1485
        %v1866 = vmul.f32 %v1596, %v1596
        %v1867 = vmul.f32 %v1598, %v1598
        %v1868 = vmul.f32 %v1709, %v1709
        %v1869 = vmul.f32 %v1711, %v1711
        %v1870 = vmul.f32 %v1376, %v1376
        %v1871 = vmul.f32 %v1378, %v1378
        %v1872 = vmul.f32 %v1489, %v1489
        %v1873 = vmul.f32 %v1491, %v1491
        %v1874 = vmul.f32 %v1602, %v1602
        %v1875 = vmul.f32 %v1604, %v1604
        %v1876 = vmul.f32 %v1715, %v1715
        %v1877 = vmul.f32 %v1717, %v1717
        %v1878 = vmul.f32 %v1380, %v1380
        %v1879 = vmul.f32 %v1382, %v1382
        %v1880 = vmul.f32 %v1493, %v1493
        %v1881 = vmul.f32 %v1495, %v1495
        %v1882 = vmul.f32 %v1606, %v1606
        %v1883 = vmul.f32 %v1608, %v1608
        %v1884 = vmul.f32 %v1719, %v1719
        %v1885 = vmul.f32 %v1721, %v1721
        %v1886 = vmul.f32 %v1386, %v1386
        %v1887 = vmul.f32 %v1388, %v1388
        %v1888 = vmul.f32 %v1499, %v1499
        %v1889 = vmul.f32 %v1501, %v1501
        %v1890 = vmul.f32 %v1612, %v1612
        %v1891 = vmul.f32 %v1614, %v1614
        %v1892 = vmul.f32 %v1725, %v1725
        %v1893 = vmul.f32 %v1727, %v1727
        %v1894 = vmul.f32 %v1390, %v1390
        %v1895 = vmul.f32 %v1392, %v1392
        %v1896 = vmul.f32 %v1503, %v1503
        %v1897 = vmul.f32 %v1505, %v1505
        %v1898 = vmul.f32 %v1616, %v1616
        %v1899 = vmul.f32 %v1618, %v1618
        %v1900 = vmul.f32 %v1729, %v1729
        %v1901 = vmul.f32 %v1731, %v1731
        %v1902 = vadd.f32 %v1774, %v1782
        %v1903 = vadd.f32 %v1902, %v1790
        %v1904 = vadd.f32 %v1903, %v1798
        %v1905 = vadd.f32 %v1904, %v1806
        %v1906 = vadd.f32 %v1905, %v1814
        %v1907 = vadd.f32 %v1906, %v1822
        %v1908 = vadd.f32 %v1907, %v1830
        %v1909 = vadd.f32 %v1908, %v1838
        %v1910 = vadd.f32 %v1909, %v1846
        %v1911 = vadd.f32 %v1910, %v1854
        %v1912 = vadd.f32 %v1911, %v1862
        %v1913 = vadd.f32 %v1912, %v1870
        %v1914 = vadd.f32 %v1913, %v1878
        %v1915 = vadd.f32 %v1914, %v1886
        %v1916 = vadd.f32 %v1915, %v1894
        %v1917 = vrot.slane %v1916, 4
        %v1918 = vadd.f32 %v1916, %v1917
        %v1919 = vrot.slane %v1918, 2
        %v1920 = vadd.f32 %v1918, %v1919
        %v1921 = vrot.slane %v1920, 1
        %v1922 = vadd.f32 %v1920, %v1921
        %v1923 = vadd.f32 %v1775, %v1783
        %v1924 = vadd.f32 %v1923, %v1791
        %v1925 = vadd.f32 %v1924, %v1799
        %v1926 = vadd.f32 %v1925, %v1807
        %v1927 = vadd.f32 %v1926, %v1815
        %v1928 = vadd.f32 %v1927, %v1823
        %v1929 = vadd.f32 %v1928, %v1831
        %v1930 = vadd.f32 %v1929, %v1839
        %v1931 = vadd.f32 %v1930, %v1847
        %v1932 = vadd.f32 %v1931, %v1855
        %v1933 = vadd.f32 %v1932, %v1863
        %v1934 = vadd.f32 %v1933, %v1871
        %v1935 = vadd.f32 %v1934, %v1879
        %v1936 = vadd.f32 %v1935, %v1887
        %v1937 = vadd.f32 %v1936, %v1895
        %v1938 = vrot.slane %v1937, 4
        %v1939 = vadd.f32 %v1937, %v1938
        %v1940 = vrot.slane %v1939, 2
        %v1941 = vadd.f32 %v1939, %v1940
        %v1942 = vrot.slane %v1941, 1
        %v1943 = vadd.f32 %v1941, %v1942
        %v1944 = vadd.f32 %v1776, %v1784
        %v1945 = vadd.f32 %v1944, %v1792
        %v1946 = vadd.f32 %v1945, %v1800
        %v1947 = vadd.f32 %v1946, %v1808
        %v1948 = vadd.f32 %v1947, %v1816
        %v1949 = vadd.f32 %v1948, %v1824
        %v1950 = vadd.f32 %v1949, %v1832
        %v1951 = vadd.f32 %v1950, %v1840
        %v1952 = vadd.f32 %v1951, %v1848
        %v1953 = vadd.f32 %v1952, %v1856
        %v1954 = vadd.f32 %v1953, %v1864
        %v1955 = vadd.f32 %v1954, %v1872
        %v1956 = vadd.f32 %v1955, %v1880
        %v1957 = vadd.f32 %v1956, %v1888
        %v1958 = vadd.f32 %v1957, %v1896
        %v1959 = vrot.slane %v1958, 4
        %v1960 = vadd.f32 %v1958, %v1959
        %v1961 = vrot.slane %v1960, 2
        %v1962 = vadd.f32 %v1960, %v1961
        %v1963 = vrot.slane %v1962, 1
        %v1964 = vadd.f32 %v1962, %v1963
        %v1965 = vadd.f32 %v1777, %v1785
        %v1966 = vadd.f32 %v1965, %v1793
        %v1967 = vadd.f32 %v1966, %v1801
        %v1968 = vadd.f32 %v1967, %v1809
        %v1969 = vadd.f32 %v1968, %v1817
        %v1970 = vadd.f32 %v1969, %v1825
        %v1971 = vadd.f32 %v1970, %v1833
        %v1972 = vadd.f32 %v1971, %v1841
        %v1973 = vadd.f32 %v1972, %v1849
        %v1974 = vadd.f32 %v1973, %v1857
        %v1975 = vadd.f32 %v1974, %v1865
        %v1976 = vadd.f32 %v1975, %v1873
        %v1977 = vadd.f32 %v1976, %v1881
        %v1978 = vadd.f32 %v1977, %v1889
        %v1979 = vadd.f32 %v1978, %v1897
        %v1980 = vrot.slane %v1979, 4
        %v1981 = vadd.f32 %v1979, %v1980
        %v1982 = vrot.slane %v1981, 2
        %v1983 = vadd.f32 %v1981, %v1982
        %v1984 = vrot.slane %v1983, 1
        %v1985 = vadd.f32 %v1983, %v1984
        %v1986 = vadd.f32 %v1778, %v1786
        %v1987 = vadd.f32 %v1986, %v1794
        %v1988 = vadd.f32 %v1987, %v1802
        %v1989 = vadd.f32 %v1988, %v1810
        %v1990 = vadd.f32 %v1989, %v1818
        %v1991 = vadd.f32 %v1990, %v1826
        %v1992 = vadd.f32 %v1991, %v1834
        %v1993 = vadd.f32 %v1992, %v1842
        %v1994 = vadd.f32 %v1993, %v1850
        %v1995 = vadd.f32 %v1994, %v1858
        %v1996 = vadd.f32 %v1995, %v1866
        %v1997 = vadd.f32 %v1996, %v1874
        %v1998 = vadd.f32 %v1997, %v1882
        %v1999 = vadd.f32 %v1998, %v1890
        %v2000 = vadd.f32 %v1999, %v1898
        %v2001 = vrot.slane %v2000, 4
        %v2002 = vadd.f32 %v2000, %v2001
        %v2003 = vrot.slane %v2002, 2
        %v2004 = vadd.f32 %v2002, %v2003
        %v2005 = vrot.slane %v2004, 1
        %v2006 = vadd.f32 %v2004, %v2005
        %v2007 = vadd.f32 %v1779, %v1787
        %v2008 = vadd.f32 %v2007, %v1795
        %v2009 = vadd.f32 %v2008, %v1803
        %v2010 = vadd.f32 %v2009, %v1811
        %v2011 = vadd.f32 %v2010, %v1819
        %v2012 = vadd.f32 %v2011, %v1827
        %v2013 = vadd.f32 %v2012, %v1835
        %v2014 = vadd.f32 %v2013, %v1843
        %v2015 = vadd.f32 %v2014, %v1851
        %v2016 = vadd.f32 %v2015, %v1859
        %v2017 = vadd.f32 %v2016, %v1867
        %v2018 = vadd.f32 %v2017, %v1875
        %v2019 = vadd.f32 %v2018, %v1883
        %v2020 = vadd.f32 %v2019, %v1891
        %v2021 = vadd.f32 %v2020, %v1899
        %v2022 = vrot.slane %v2021, 4
        %v2023 = vadd.f32 %v2021, %v2022
        %v2024 = vrot.slane %v2023, 2
        %v2025 = vadd.f32 %v2023, %v2024
        %v2026 = vrot.slane %v2025, 1
        %v2027 = vadd.f32 %v2025, %v2026
        %v2028 = vadd.f32 %v1780, %v1788
        %v2029 = vadd.f32 %v2028, %v1796
        %v2030 = vadd.f32 %v2029, %v1804
        %v2031 = vadd.f32 %v2030, %v1812
        %v2032 = vadd.f32 %v2031, %v1820
        %v2033 = vadd.f32 %v2032, %v1828
        %v2034 = vadd.f32 %v2033, %v1836
        %v2035 = vadd.f32 %v2034, %v1844
        %v2036 = vadd.f32 %v2035, %v1852
        %v2037 = vadd.f32 %v2036, %v1860
        %v2038 = vadd.f32 %v2037, %v1868
        %v2039 = vadd.f32 %v2038, %v1876
        %v2040 = vadd.f32 %v2039, %v1884
        %v2041 = vadd.f32 %v2040, %v1892
        %v2042 = vadd.f32 %v2041, %v1900
        %v2043 = vrot.slane %v2042, 4
        %v2044 = vadd.f32 %v2042, %v2043
        %v2045 = vrot.slane %v2044, 2
        %v2046 = vadd.f32 %v2044, %v2045
        %v2047 = vrot.slane %v2046, 1
        %v2048 = vadd.f32 %v2046, %v2047
        %v2049 = vadd.f32 %v1781, %v1789
        %v2050 = vadd.f32 %v2049, %v1797
        %v2051 = vadd.f32 %v2050, %v1805
        %v2052 = vadd.f32 %v2051, %v1813
        %v2053 = vadd.f32 %v2052, %v1821
        %v2054 = vadd.f32 %v2053, %v1829
        %v2055 = vadd.f32 %v2054, %v1837
        %v2056 = vadd.f32 %v2055, %v1845
        %v2057 = vadd.f32 %v2056, %v1853
        %v2058 = vadd.f32 %v2057, %v1861
        %v2059 = vadd.f32 %v2058, %v1869
        %v2060 = vadd.f32 %v2059, %v1877
        %v2061 = vadd.f32 %v2060, %v1885
        %v2062 = vadd.f32 %v2061, %v1893
        %v2063 = vadd.f32 %v2062, %v1901
        %v2064 = vrot.slane %v2063, 4
        %v2065 = vadd.f32 %v2063, %v2064
        %v2066 = vrot.slane %v2065, 2
        %v2067 = vadd.f32 %v2065, %v2066
        %v2068 = vrot.slane %v2067, 1
        %v2069 = vadd.f32 %v2067, %v2068
        %v2078 = vcombine.low %v1922, %v1943
        %v2079 = vcombine.low %v1964, %v1985
        %v2080 = vcombine.low %v2006, %v2027
        %v2081 = vcombine.low %v2048, %v2069
        %v2083 = vunpack.c.l.s4 1966171168
        %v2084 = vunpack.c.0.s8 %v2083
        %v2085 = vlaneseq
        %v2086 = vshrl.u32 %v2085, 7
        %v2087 = vsub.s32 %v2084, %v2086
        %v2088 = vrot.slane %v2078, %v2087
        %v2090 = vunpack.c.l.s4 1966171168
        %v2091 = vunpack.c.0.s8 %v2090
        %v2092 = vlaneseq
        %v2093 = vshrl.u32 %v2092, 7
        %v2094 = vsub.s32 %v2091, %v2093
        %v2095 = vrot.slane %v2079, %v2094
        %v2097 = vunpack.c.l.s4 1966171168
        %v2098 = vunpack.c.0.s8 %v2097
        %v2099 = vlaneseq
        %v2100 = vshrl.u32 %v2099, 7
        %v2101 = vsub.s32 %v2098, %v2100
        %v2102 = vrot.slane %v2080, %v2101
        %v2104 = vunpack.c.l.s4 1966171168
        %v2105 = vunpack.c.0.s8 %v2104
        %v2106 = vlaneseq
        %v2107 = vshrl.u32 %v2106, 7
        %v2108 = vsub.s32 %v2105, %v2107
        %v2109 = vrot.slane %v2081, %v2108
        %v2110 = vcombine.low %v2088, %v2095
        %v2111 = vcombine.low %v2102, %v2109
        %v2113 = vunpack.c.l.s4 1966171168
        %v2114 = vunpack.c.0.s8 %v2113
        %v2115 = vlaneseq
        %v2116 = vshrl.u32 %v2115, 7
        %v2117 = vsub.s32 %v2114, %v2116
        %v2118 = vrot.slane %v2110, %v2117
        %v2120 = vunpack.c.l.s4 1966171168
        %v2121 = vunpack.c.0.s8 %v2120
        %v2122 = vlaneseq
        %v2123 = vshrl.u32 %v2122, 7
        %v2124 = vsub.s32 %v2121, %v2123
        %v2125 = vrot.slane %v2111, %v2124
        %v2126 = vcombine.low %v2118, %v2125
        %v2128 = vadd.f32 %v1773, %v2126
        %2129 = vst [vmem:[%s400] sm:$0xff] %v2128
        %v2130 = vld [vmem:[%s404] sm:$0xff]
        %v2131 = vmax.f32 %v1316, %v1320
        %v2132 = vmax.f32 %v2131, %v1326
        %v2133 = vmax.f32 %v2132, %v1330
        %v2134 = vmax.f32 %v2133, %v1336
        %v2135 = vmax.f32 %v2134, %v1340
        %v2136 = vmax.f32 %v2135, %v1346
        %v2137 = vmax.f32 %v2136, %v1350
        %v2138 = vmax.f32 %v2137, %v1356
        %v2139 = vmax.f32 %v2138, %v1360
        %v2140 = vmax.f32 %v2139, %v1366
        %v2141 = vmax.f32 %v2140, %v1370
        %v2142 = vmax.f32 %v2141, %v1376
        %v2143 = vmax.f32 %v2142, %v1380
        %v2144 = vmax.f32 %v2143, %v1386
        %v2145 = vmax.f32 %v2144, %v1390
        %v2146 = vrot.slane %v2145, 4
        %v2147 = vmax.f32 %v2145, %v2146
        %v2148 = vrot.slane %v2147, 2
        %v2149 = vmax.f32 %v2147, %v2148
        %v2150 = vrot.slane %v2149, 1
        %v2151 = vmax.f32 %v2149, %v2150
        %v2152 = vmax.f32 %v1318, %v1322
        %v2153 = vmax.f32 %v2152, %v1328
        %v2154 = vmax.f32 %v2153, %v1332
        %v2155 = vmax.f32 %v2154, %v1338
        %v2156 = vmax.f32 %v2155, %v1342
        %v2157 = vmax.f32 %v2156, %v1348
        %v2158 = vmax.f32 %v2157, %v1352
        %v2159 = vmax.f32 %v2158, %v1358
        %v2160 = vmax.f32 %v2159, %v1362
        %v2161 = vmax.f32 %v2160, %v1368
        %v2162 = vmax.f32 %v2161, %v1372
        %v2163 = vmax.f32 %v2162, %v1378
        %v2164 = vmax.f32 %v2163, %v1382
        %v2165 = vmax.f32 %v2164, %v1388
        %v2166 = vmax.f32 %v2165, %v1392
        %v2167 = vrot.slane %v2166, 4
        %v2168 = vmax.f32 %v2166, %v2167
        %v2169 = vrot.slane %v2168, 2
        %v2170 = vmax.f32 %v2168, %v2169
        %v2171 = vrot.slane %v2170, 1
        %v2172 = vmax.f32 %v2170, %v2171
        %v2173 = vmax.f32 %v1429, %v1433
        %v2174 = vmax.f32 %v2173, %v1439
        %v2175 = vmax.f32 %v2174, %v1443
        %v2176 = vmax.f32 %v2175, %v1449
        %v2177 = vmax.f32 %v2176, %v1453
        %v2178 = vmax.f32 %v2177, %v1459
        %v2179 = vmax.f32 %v2178, %v1463
        %v2180 = vmax.f32 %v2179, %v1469
        %v2181 = vmax.f32 %v2180, %v1473
        %v2182 = vmax.f32 %v2181, %v1479
        %v2183 = vmax.f32 %v2182, %v1483
        %v2184 = vmax.f32 %v2183, %v1489
        %v2185 = vmax.f32 %v2184, %v1493
        %v2186 = vmax.f32 %v2185, %v1499
        %v2187 = vmax.f32 %v2186, %v1503
        %v2188 = vrot.slane %v2187, 4
        %v2189 = vmax.f32 %v2187, %v2188
        %v2190 = vrot.slane %v2189, 2
        %v2191 = vmax.f32 %v2189, %v2190
        %v2192 = vrot.slane %v2191, 1
        %v2193 = vmax.f32 %v2191, %v2192
        %v2194 = vmax.f32 %v1431, %v1435
        %v2195 = vmax.f32 %v2194, %v1441
        %v2196 = vmax.f32 %v2195, %v1445
        %v2197 = vmax.f32 %v2196, %v1451
        %v2198 = vmax.f32 %v2197, %v1455
        %v2199 = vmax.f32 %v2198, %v1461
        %v2200 = vmax.f32 %v2199, %v1465
        %v2201 = vmax.f32 %v2200, %v1471
        %v2202 = vmax.f32 %v2201, %v1475
        %v2203 = vmax.f32 %v2202, %v1481
        %v2204 = vmax.f32 %v2203, %v1485
        %v2205 = vmax.f32 %v2204, %v1491
        %v2206 = vmax.f32 %v2205, %v1495
        %v2207 = vmax.f32 %v2206, %v1501
        %v2208 = vmax.f32 %v2207, %v1505
        %v2209 = vrot.slane %v2208, 4
        %v2210 = vmax.f32 %v2208, %v2209
        %v2211 = vrot.slane %v2210, 2
        %v2212 = vmax.f32 %v2210, %v2211
        %v2213 = vrot.slane %v2212, 1
        %v2214 = vmax.f32 %v2212, %v2213
        %v2215 = vmax.f32 %v1542, %v1546
        %v2216 = vmax.f32 %v2215, %v1552
        %v2217 = vmax.f32 %v2216, %v1556
        %v2218 = vmax.f32 %v2217, %v1562
        %v2219 = vmax.f32 %v2218, %v1566
        %v2220 = vmax.f32 %v2219, %v1572
        %v2221 = vmax.f32 %v2220, %v1576
        %v2222 = vmax.f32 %v2221, %v1582
        %v2223 = vmax.f32 %v2222, %v1586
        %v2224 = vmax.f32 %v2223, %v1592
        %v2225 = vmax.f32 %v2224, %v1596
        %v2226 = vmax.f32 %v2225, %v1602
        %v2227 = vmax.f32 %v2226, %v1606
        %v2228 = vmax.f32 %v2227, %v1612
        %v2229 = vmax.f32 %v2228, %v1616
        %v2230 = vrot.slane %v2229, 4
        %v2231 = vmax.f32 %v2229, %v2230
        %v2232 = vrot.slane %v2231, 2
        %v2233 = vmax.f32 %v2231, %v2232
        %v2234 = vrot.slane %v2233, 1
        %v2235 = vmax.f32 %v2233, %v2234
        %v2236 = vmax.f32 %v1544, %v1548
        %v2237 = vmax.f32 %v2236, %v1554
        %v2238 = vmax.f32 %v2237, %v1558
        %v2239 = vmax.f32 %v2238, %v1564
        %v2240 = vmax.f32 %v2239, %v1568
        %v2241 = vmax.f32 %v2240, %v1574
        %v2242 = vmax.f32 %v2241, %v1578
        %v2243 = vmax.f32 %v2242, %v1584
        %v2244 = vmax.f32 %v2243, %v1588
        %v2245 = vmax.f32 %v2244, %v1594
        %v2246 = vmax.f32 %v2245, %v1598
        %v2247 = vmax.f32 %v2246, %v1604
        %v2248 = vmax.f32 %v2247, %v1608
        %v2249 = vmax.f32 %v2248, %v1614
        %v2250 = vmax.f32 %v2249, %v1618
        %v2251 = vrot.slane %v2250, 4
        %v2252 = vmax.f32 %v2250, %v2251
        %v2253 = vrot.slane %v2252, 2
        %v2254 = vmax.f32 %v2252, %v2253
        %v2255 = vrot.slane %v2254, 1
        %v2256 = vmax.f32 %v2254, %v2255
        %v2257 = vmax.f32 %v1655, %v1659
        %v2258 = vmax.f32 %v2257, %v1665
        %v2259 = vmax.f32 %v2258, %v1669
        %v2260 = vmax.f32 %v2259, %v1675
        %v2261 = vmax.f32 %v2260, %v1679
        %v2262 = vmax.f32 %v2261, %v1685
        %v2263 = vmax.f32 %v2262, %v1689
        %v2264 = vmax.f32 %v2263, %v1695
        %v2265 = vmax.f32 %v2264, %v1699
        %v2266 = vmax.f32 %v2265, %v1705
        %v2267 = vmax.f32 %v2266, %v1709
        %v2268 = vmax.f32 %v2267, %v1715
        %v2269 = vmax.f32 %v2268, %v1719
        %v2270 = vmax.f32 %v2269, %v1725
        %v2271 = vmax.f32 %v2270, %v1729
        %v2272 = vrot.slane %v2271, 4
        %v2273 = vmax.f32 %v2271, %v2272
        %v2274 = vrot.slane %v2273, 2
        %v2275 = vmax.f32 %v2273, %v2274
        %v2276 = vrot.slane %v2275, 1
        %v2277 = vmax.f32 %v2275, %v2276
        %v2278 = vmax.f32 %v1657, %v1661
        %v2279 = vmax.f32 %v2278, %v1667
        %v2280 = vmax.f32 %v2279, %v1671
        %v2281 = vmax.f32 %v2280, %v1677
        %v2282 = vmax.f32 %v2281, %v1681
        %v2283 = vmax.f32 %v2282, %v1687
        %v2284 = vmax.f32 %v2283, %v1691
        %v2285 = vmax.f32 %v2284, %v1697
        %v2286 = vmax.f32 %v2285, %v1701
        %v2287 = vmax.f32 %v2286, %v1707
        %v2288 = vmax.f32 %v2287, %v1711
        %v2289 = vmax.f32 %v2288, %v1717
        %v2290 = vmax.f32 %v2289, %v1721
        %v2291 = vmax.f32 %v2290, %v1727
        %v2292 = vmax.f32 %v2291, %v1731
        %v2293 = vrot.slane %v2292, 4
        %v2294 = vmax.f32 %v2292, %v2293
        %v2295 = vrot.slane %v2294, 2
        %v2296 = vmax.f32 %v2294, %v2295
        %v2297 = vrot.slane %v2296, 1
        %v2298 = vmax.f32 %v2296, %v2297
        %v2307 = vcombine.low %v2151, %v2172
        %v2308 = vcombine.low %v2193, %v2214
        %v2309 = vcombine.low %v2235, %v2256
        %v2310 = vcombine.low %v2277, %v2298
        %v2312 = vunpack.c.l.s4 1966171168
        %v2313 = vunpack.c.0.s8 %v2312
        %v2314 = vlaneseq
        %v2315 = vshrl.u32 %v2314, 7
        %v2316 = vsub.s32 %v2313, %v2315
        %v2317 = vrot.slane %v2307, %v2316
        %v2319 = vunpack.c.l.s4 1966171168
        %v2320 = vunpack.c.0.s8 %v2319
        %v2321 = vlaneseq
        %v2322 = vshrl.u32 %v2321, 7
        %v2323 = vsub.s32 %v2320, %v2322
        %v2324 = vrot.slane %v2308, %v2323
        %v2326 = vunpack.c.l.s4 1966171168
        %v2327 = vunpack.c.0.s8 %v2326
        %v2328 = vlaneseq
        %v2329 = vshrl.u32 %v2328, 7
        %v2330 = vsub.s32 %v2327, %v2329
        %v2331 = vrot.slane %v2309, %v2330
        %v2333 = vunpack.c.l.s4 1966171168
        %v2334 = vunpack.c.0.s8 %v2333
        %v2335 = vlaneseq
        %v2336 = vshrl.u32 %v2335, 7
        %v2337 = vsub.s32 %v2334, %v2336
        %v2338 = vrot.slane %v2310, %v2337
        %v2339 = vcombine.low %v2317, %v2324
        %v2340 = vcombine.low %v2331, %v2338
        %v2342 = vunpack.c.l.s4 1966171168
        %v2343 = vunpack.c.0.s8 %v2342
        %v2344 = vlaneseq
        %v2345 = vshrl.u32 %v2344, 7
        %v2346 = vsub.s32 %v2343, %v2345
        %v2347 = vrot.slane %v2339, %v2346
        %v2349 = vunpack.c.l.s4 1966171168
        %v2350 = vunpack.c.0.s8 %v2349
        %v2351 = vlaneseq
        %v2352 = vshrl.u32 %v2351, 7
        %v2353 = vsub.s32 %v2350, %v2352
        %v2354 = vrot.slane %v2340, %v2353
        %v2355 = vcombine.low %v2347, %v2354
        %v2357 = vmax.f32 %v2130, %v2355
        %2358 = vst [vmem:[%s404] sm:$0xff] %v2357
      $region60: #{stnkd_forward.6} parent=51 // pred_fallthru
        _
      %p2359 = scmp.eq.s32.totalorder %s27, 2
      // Predicated region
      $region61: #{stnkd_forward.6} parent=51 // pred_check
        %p2360 = pneg %p2359
      $region62: #{stnkd_forward.6} parent=51 // pred_check_branch
        %2362 = sbr.rel (%p2360) target = $region64
      $region63: #{stnkd_forward.6} parent=51 // pred_region
        %v2363 = vlaneseq
        %v2364 = vshrl.u32 %v2363, 7
        %v2365 = vadd.s32 %v2364, 8
        %v2366 = vadd.s32 %v2364, 16
        %v2367 = vadd.s32 %v2364, 24
        %v2368 = vadd.s32 %v2364, 32
        %v2369 = vadd.s32 %v2364, 40
        %v2370 = vadd.s32 %v2364, 48
        %v2371 = vadd.s32 %v2364, 56
        %v2372 = vadd.s32 %v2364, 64
        %v2373 = vadd.s32 %v2364, 72
        %v2374 = vadd.s32 %v2364, 80
        %v2375 = vadd.s32 %v2364, 88
        %v2376 = vadd.s32 %v2364, 96
        %v2377 = vadd.s32 %v2364, 104
        %v2378 = vadd.s32 %v2364, 112
        %v2379 = vadd.s32 %v2364, 120
        %s2380 = smul.u32 %s27, 128
        %s2381 = ssub.s32 300, %s2380
        %v2382 = vstv %s2381
        %vm2383 = vcmp.lt.s32.totalorder %v2364, %v2382
        %vm2384 = vcmp.lt.s32.totalorder %v2365, %v2382
        %vm2385 = vcmp.lt.s32.totalorder %v2366, %v2382
        %vm2386 = vcmp.lt.s32.totalorder %v2367, %v2382
        %vm2387 = vcmp.lt.s32.totalorder %v2368, %v2382
        %vm2388 = vcmp.lt.s32.totalorder %v2369, %v2382
        %vm2389 = vcmp.lt.s32.totalorder %v2370, %v2382
        %vm2390 = vcmp.lt.s32.totalorder %v2371, %v2382
        %vm2391 = vcmp.lt.s32.totalorder %v2372, %v2382
        %vm2392 = vcmp.lt.s32.totalorder %v2373, %v2382
        %vm2393 = vcmp.lt.s32.totalorder %v2374, %v2382
        %vm2394 = vcmp.lt.s32.totalorder %v2375, %v2382
        %vm2395 = vcmp.lt.s32.totalorder %v2376, %v2382
        %vm2396 = vcmp.lt.s32.totalorder %v2377, %v2382
        %vm2397 = vcmp.lt.s32.totalorder %v2378, %v2382
        %vm2398 = vcmp.lt.s32.totalorder %v2379, %v2382
        %v2399 = vsel %vm2383, 1, 0
        %v2400 = vsel %vm2384, 1, 0
        %v2401 = vsel %vm2385, 1, 0
        %v2402 = vsel %vm2386, 1, 0
        %v2403 = vsel %vm2387, 1, 0
        %v2404 = vsel %vm2388, 1, 0
        %v2405 = vsel %vm2389, 1, 0
        %v2406 = vsel %vm2390, 1, 0
        %v2407 = vsel %vm2391, 1, 0
        %v2408 = vsel %vm2392, 1, 0
        %v2409 = vsel %vm2393, 1, 0
        %v2410 = vsel %vm2394, 1, 0
        %v2411 = vsel %vm2395, 1, 0
        %v2412 = vsel %vm2396, 1, 0
        %v2413 = vsel %vm2397, 1, 0
        %v2414 = vsel %vm2398, 1, 0
        %v2415 = vcvt.s32.f32 %v2399
        %v2416 = vcvt.s32.f32 %v2400
        %v2417 = vcvt.s32.f32 %v2401
        %v2418 = vcvt.s32.f32 %v2402
        %v2419 = vcvt.s32.f32 %v2403
        %v2420 = vcvt.s32.f32 %v2404
        %v2421 = vcvt.s32.f32 %v2405
        %v2422 = vcvt.s32.f32 %v2406
        %v2423 = vcvt.s32.f32 %v2407
        %v2424 = vcvt.s32.f32 %v2408
        %v2425 = vcvt.s32.f32 %v2409
        %v2426 = vcvt.s32.f32 %v2410
        %v2427 = vcvt.s32.f32 %v2411
        %v2428 = vcvt.s32.f32 %v2412
        %v2429 = vcvt.s32.f32 %v2413
        %v2430 = vcvt.s32.f32 %v2414
        %v2431 = vpack.c.bf16 %v2416, %v2415
        %v2432 = vpack.c.bf16 %v2418, %v2417
        %v2433 = vpack.c.bf16 %v2420, %v2419
        %v2434 = vpack.c.bf16 %v2422, %v2421
        %v2435 = vpack.c.bf16 %v2424, %v2423
        %v2436 = vpack.c.bf16 %v2426, %v2425
        %v2437 = vpack.c.bf16 %v2428, %v2427
        %v2438 = vpack.c.bf16 %v2430, %v2429
        %v2439 = vmul.bf16 %v885, %v2431
        %v2440 = vmul.bf16 %v886, %v2432
        %v2441 = vmul.bf16 %v887, %v2433
        %v2442 = vmul.bf16 %v888, %v2434
        %v2443 = vmul.bf16 %v889, %v2435
        %v2444 = vmul.bf16 %v890, %v2436
        %v2445 = vmul.bf16 %v891, %v2437
        %v2446 = vmul.bf16 %v892, %v2438
        %v2447 = vld [vmem:[%s7] sm:$0xff]
        %v2448 = vld [vmem:[%s7 + $0x8] sm:$0xff]
        %v2449 = vld [vmem:[%s7 + $0x10] sm:$0xff]
        %v2450 = vld [vmem:[%s7 + $0x18] sm:$0xff]
        %v2451 = vld [vmem:[%s7 + $0x20] sm:$0xff]
        %v2452 = vld [vmem:[%s7 + $0x28] sm:$0xff]
        %v2453 = vld [vmem:[%s7 + $0x30] sm:$0xff]
        %v2454 = vld [vmem:[%s7 + $0x38] sm:$0xff]
        %v2455 = vld [vmem:[%s7 + $0x40] sm:$0xff]
        %v2456 = vld [vmem:[%s7 + $0x48] sm:$0xff]
        %v2457 = vld [vmem:[%s7 + $0x50] sm:$0xff]
        %v2458 = vld [vmem:[%s7 + $0x58] sm:$0xff]
        %v2459 = vld [vmem:[%s7 + $0x60] sm:$0xff]
        %v2460 = vld [vmem:[%s7 + $0x68] sm:$0xff]
        %v2461 = vld [vmem:[%s7 + $0x70] sm:$0xff]
        %v2462 = vld [vmem:[%s7 + $0x78] sm:$0xff]
        %v2463 = vld [vmem:[%s7 + $0x80] sm:$0xff]
        %v2464 = vld [vmem:[%s7 + $0x88] sm:$0xff]
        %v2465 = vld [vmem:[%s7 + $0x90] sm:$0xff]
        %v2466 = vld [vmem:[%s7 + $0x98] sm:$0xff]
        %v2467 = vld [vmem:[%s7 + $0xa0] sm:$0xff]
        %v2468 = vld [vmem:[%s7 + $0xa8] sm:$0xff]
        %v2469 = vld [vmem:[%s7 + $0xb0] sm:$0xff]
        %v2470 = vld [vmem:[%s7 + $0xb8] sm:$0xff]
        %v2471 = vld [vmem:[%s7 + $0xc0] sm:$0xff]
        %v2472 = vld [vmem:[%s7 + $0xc8] sm:$0xff]
        %v2473 = vld [vmem:[%s7 + $0xd0] sm:$0xff]
        %v2474 = vld [vmem:[%s7 + $0xd8] sm:$0xff]
        %v2475 = vld [vmem:[%s7 + $0xe0] sm:$0xff]
        %v2476 = vld [vmem:[%s7 + $0xe8] sm:$0xff]
        %v2477 = vld [vmem:[%s7 + $0xf0] sm:$0xff]
        %v2478 = vld [vmem:[%s7 + $0xf8] sm:$0xff]
        %v2479 = vld [vmem:[%s7 + $0x100] sm:$0xff]
        %v2480 = vld [vmem:[%s7 + $0x108] sm:$0xff]
        %v2481 = vld [vmem:[%s7 + $0x110] sm:$0xff]
        %v2482 = vld [vmem:[%s7 + $0x118] sm:$0xff]
        %v2483 = vld [vmem:[%s7 + $0x120] sm:$0xff]
        %v2484 = vld [vmem:[%s7 + $0x128] sm:$0xff]
        %v2485 = vld [vmem:[%s7 + $0x130] sm:$0xff]
        %v2486 = vld [vmem:[%s7 + $0x138] sm:$0xff]
        %v2487 = vld [vmem:[%s7 + $0x140] sm:$0xff]
        %v2488 = vld [vmem:[%s7 + $0x148] sm:$0xff]
        %v2489 = vld [vmem:[%s7 + $0x150] sm:$0xff]
        %v2490 = vld [vmem:[%s7 + $0x158] sm:$0xff]
        %v2491 = vld [vmem:[%s7 + $0x160] sm:$0xff]
        %v2492 = vld [vmem:[%s7 + $0x168] sm:$0xff]
        %v2493 = vld [vmem:[%s7 + $0x170] sm:$0xff]
        %v2494 = vld [vmem:[%s7 + $0x178] sm:$0xff]
        %v2495 = vld [vmem:[%s7 + $0x180] sm:$0xff]
        %v2496 = vld [vmem:[%s7 + $0x188] sm:$0xff]
        %v2497 = vld [vmem:[%s7 + $0x190] sm:$0xff]
        %v2498 = vld [vmem:[%s7 + $0x198] sm:$0xff]
        %v2499 = vld [vmem:[%s7 + $0x1a0] sm:$0xff]
        %v2500 = vld [vmem:[%s7 + $0x1a8] sm:$0xff]
        %v2501 = vld [vmem:[%s7 + $0x1b0] sm:$0xff]
        %v2502 = vld [vmem:[%s7 + $0x1b8] sm:$0xff]
        %v2503 = vld [vmem:[%s7 + $0x1c0] sm:$0xff]
        %v2504 = vld [vmem:[%s7 + $0x1c8] sm:$0xff]
        %v2505 = vld [vmem:[%s7 + $0x1d0] sm:$0xff]
        %v2506 = vld [vmem:[%s7 + $0x1d8] sm:$0xff]
        %v2507 = vld [vmem:[%s7 + $0x1e0] sm:$0xff]
        %v2508 = vld [vmem:[%s7 + $0x1e8] sm:$0xff]
        %v2509 = vld [vmem:[%s7 + $0x1f0] sm:$0xff]
        %v2510 = vld [vmem:[%s7 + $0x1f8] sm:$0xff]
        %v2575 = vunpack.c.l.b16 %v2447
        %v2576 = vunpack.c.h.b16 %v2447
        %v2577 = vunpack.c.l.b16 %v2448
        %v2578 = vunpack.c.h.b16 %v2448
        %v2579 = vunpack.c.l.b16 %v2449
        %v2580 = vunpack.c.h.b16 %v2449
        %v2581 = vunpack.c.l.b16 %v2450
        %v2582 = vunpack.c.h.b16 %v2450
        %v2583 = vunpack.c.l.b16 %v2451
        %v2584 = vunpack.c.h.b16 %v2451
        %v2585 = vunpack.c.l.b16 %v2452
        %v2586 = vunpack.c.h.b16 %v2452
        %v2587 = vunpack.c.l.b16 %v2453
        %v2588 = vunpack.c.h.b16 %v2453
        %v2589 = vunpack.c.l.b16 %v2454
        %v2590 = vunpack.c.h.b16 %v2454
        %v2591 = vunpack.c.l.b16 %v2455
        %v2592 = vunpack.c.h.b16 %v2455
        %v2593 = vunpack.c.l.b16 %v2456
        %v2594 = vunpack.c.h.b16 %v2456
        %v2595 = vunpack.c.l.b16 %v2457
        %v2596 = vunpack.c.h.b16 %v2457
        %v2597 = vunpack.c.l.b16 %v2458
        %v2598 = vunpack.c.h.b16 %v2458
        %v2599 = vunpack.c.l.b16 %v2459
        %v2600 = vunpack.c.h.b16 %v2459
        %v2601 = vunpack.c.l.b16 %v2460
        %v2602 = vunpack.c.h.b16 %v2460
        %v2603 = vunpack.c.l.b16 %v2461
        %v2604 = vunpack.c.h.b16 %v2461
        %v2605 = vunpack.c.l.b16 %v2462
        %v2606 = vunpack.c.h.b16 %v2462
        %v2607 = vunpack.c.l.b16 %v2463
        %v2608 = vunpack.c.h.b16 %v2463
        %v2609 = vunpack.c.l.b16 %v2464
        %v2610 = vunpack.c.h.b16 %v2464
        %v2611 = vunpack.c.l.b16 %v2465
        %v2612 = vunpack.c.h.b16 %v2465
        %v2613 = vunpack.c.l.b16 %v2466
        %v2614 = vunpack.c.h.b16 %v2466
        %v2615 = vunpack.c.l.b16 %v2467
        %v2616 = vunpack.c.h.b16 %v2467
        %v2617 = vunpack.c.l.b16 %v2468
        %v2618 = vunpack.c.h.b16 %v2468
        %v2619 = vunpack.c.l.b16 %v2469
        %v2620 = vunpack.c.h.b16 %v2469
        %v2621 = vunpack.c.l.b16 %v2470
        %v2622 = vunpack.c.h.b16 %v2470
        %v2623 = vunpack.c.l.b16 %v2471
        %v2624 = vunpack.c.h.b16 %v2471
        %v2625 = vunpack.c.l.b16 %v2472
        %v2626 = vunpack.c.h.b16 %v2472
        %v2627 = vunpack.c.l.b16 %v2473
        %v2628 = vunpack.c.h.b16 %v2473
        %v2629 = vunpack.c.l.b16 %v2474
        %v2630 = vunpack.c.h.b16 %v2474
        %v2631 = vunpack.c.l.b16 %v2475
        %v2632 = vunpack.c.h.b16 %v2475
        %v2633 = vunpack.c.l.b16 %v2476
        %v2634 = vunpack.c.h.b16 %v2476
        %v2635 = vunpack.c.l.b16 %v2477
        %v2636 = vunpack.c.h.b16 %v2477
        %v2637 = vunpack.c.l.b16 %v2478
        %v2638 = vunpack.c.h.b16 %v2478
        %v2639 = vunpack.c.l.b16 %v2479
        %v2640 = vunpack.c.h.b16 %v2479
        %v2641 = vunpack.c.l.b16 %v2480
        %v2642 = vunpack.c.h.b16 %v2480
        %v2643 = vunpack.c.l.b16 %v2481
        %v2644 = vunpack.c.h.b16 %v2481
        %v2645 = vunpack.c.l.b16 %v2482
        %v2646 = vunpack.c.h.b16 %v2482
        %v2647 = vunpack.c.l.b16 %v2483
        %v2648 = vunpack.c.h.b16 %v2483
        %v2649 = vunpack.c.l.b16 %v2484
        %v2650 = vunpack.c.h.b16 %v2484
        %v2651 = vunpack.c.l.b16 %v2485
        %v2652 = vunpack.c.h.b16 %v2485
        %v2653 = vunpack.c.l.b16 %v2486
        %v2654 = vunpack.c.h.b16 %v2486
        %v2655 = vunpack.c.l.b16 %v2487
        %v2656 = vunpack.c.h.b16 %v2487
        %v2657 = vunpack.c.l.b16 %v2488
        %v2658 = vunpack.c.h.b16 %v2488
        %v2659 = vunpack.c.l.b16 %v2489
        %v2660 = vunpack.c.h.b16 %v2489
        %v2661 = vunpack.c.l.b16 %v2490
        %v2662 = vunpack.c.h.b16 %v2490
        %v2663 = vunpack.c.l.b16 %v2491
        %v2664 = vunpack.c.h.b16 %v2491
        %v2665 = vunpack.c.l.b16 %v2492
        %v2666 = vunpack.c.h.b16 %v2492
        %v2667 = vunpack.c.l.b16 %v2493
        %v2668 = vunpack.c.h.b16 %v2493
        %v2669 = vunpack.c.l.b16 %v2494
        %v2670 = vunpack.c.h.b16 %v2494
        %v2671 = vunpack.c.l.b16 %v2495
        %v2672 = vunpack.c.h.b16 %v2495
        %v2673 = vunpack.c.l.b16 %v2496
        %v2674 = vunpack.c.h.b16 %v2496
        %v2675 = vunpack.c.l.b16 %v2497
        %v2676 = vunpack.c.h.b16 %v2497
        %v2677 = vunpack.c.l.b16 %v2498
        %v2678 = vunpack.c.h.b16 %v2498
        %v2679 = vunpack.c.l.b16 %v2499
        %v2680 = vunpack.c.h.b16 %v2499
        %v2681 = vunpack.c.l.b16 %v2500
        %v2682 = vunpack.c.h.b16 %v2500
        %v2683 = vunpack.c.l.b16 %v2501
        %v2684 = vunpack.c.h.b16 %v2501
        %v2685 = vunpack.c.l.b16 %v2502
        %v2686 = vunpack.c.h.b16 %v2502
        %v2687 = vunpack.c.l.b16 %v2503
        %v2688 = vunpack.c.h.b16 %v2503
        %v2689 = vunpack.c.l.b16 %v2504
        %v2690 = vunpack.c.h.b16 %v2504
        %v2691 = vunpack.c.l.b16 %v2505
        %v2692 = vunpack.c.h.b16 %v2505
        %v2693 = vunpack.c.l.b16 %v2506
        %v2694 = vunpack.c.h.b16 %v2506
        %v2695 = vunpack.c.l.b16 %v2507
        %v2696 = vunpack.c.h.b16 %v2507
        %v2697 = vunpack.c.l.b16 %v2508
        %v2698 = vunpack.c.h.b16 %v2508
        %v2699 = vunpack.c.l.b16 %v2509
        %v2700 = vunpack.c.h.b16 %v2509
        %v2701 = vunpack.c.l.b16 %v2510
        %v2702 = vunpack.c.h.b16 %v2510
        %v2703 = vpack.c.b16 %v2583, %v2575
        %v2704 = vpack.c.b16 %v2584, %v2576
        %v2705 = vpack.c.b16 %v2585, %v2577
        %v2706 = vpack.c.b16 %v2586, %v2578
        %v2707 = vpack.c.b16 %v2587, %v2579
        %v2708 = vpack.c.b16 %v2588, %v2580
        %v2709 = vpack.c.b16 %v2589, %v2581
        %v2710 = vpack.c.b16 %v2590, %v2582
        %v2711 = vpack.c.b16 %v2599, %v2591
        %v2712 = vpack.c.b16 %v2600, %v2592
        %v2713 = vpack.c.b16 %v2601, %v2593
        %v2714 = vpack.c.b16 %v2602, %v2594
        %v2715 = vpack.c.b16 %v2603, %v2595
        %v2716 = vpack.c.b16 %v2604, %v2596
        %v2717 = vpack.c.b16 %v2605, %v2597
        %v2718 = vpack.c.b16 %v2606, %v2598
        %v2719 = vpack.c.b16 %v2615, %v2607
        %v2720 = vpack.c.b16 %v2616, %v2608
        %v2721 = vpack.c.b16 %v2617, %v2609
        %v2722 = vpack.c.b16 %v2618, %v2610
        %v2723 = vpack.c.b16 %v2619, %v2611
        %v2724 = vpack.c.b16 %v2620, %v2612
        %v2725 = vpack.c.b16 %v2621, %v2613
        %v2726 = vpack.c.b16 %v2622, %v2614
        %v2727 = vpack.c.b16 %v2631, %v2623
        %v2728 = vpack.c.b16 %v2632, %v2624
        %v2729 = vpack.c.b16 %v2633, %v2625
        %v2730 = vpack.c.b16 %v2634, %v2626
        %v2731 = vpack.c.b16 %v2635, %v2627
        %v2732 = vpack.c.b16 %v2636, %v2628
        %v2733 = vpack.c.b16 %v2637, %v2629
        %v2734 = vpack.c.b16 %v2638, %v2630
        %v2735 = vpack.c.b16 %v2647, %v2639
        %v2736 = vpack.c.b16 %v2648, %v2640
        %v2737 = vpack.c.b16 %v2649, %v2641
        %v2738 = vpack.c.b16 %v2650, %v2642
        %v2739 = vpack.c.b16 %v2651, %v2643
        %v2740 = vpack.c.b16 %v2652, %v2644
        %v2741 = vpack.c.b16 %v2653, %v2645
        %v2742 = vpack.c.b16 %v2654, %v2646
        %v2743 = vpack.c.b16 %v2663, %v2655
        %v2744 = vpack.c.b16 %v2664, %v2656
        %v2745 = vpack.c.b16 %v2665, %v2657
        %v2746 = vpack.c.b16 %v2666, %v2658
        %v2747 = vpack.c.b16 %v2667, %v2659
        %v2748 = vpack.c.b16 %v2668, %v2660
        %v2749 = vpack.c.b16 %v2669, %v2661
        %v2750 = vpack.c.b16 %v2670, %v2662
        %v2751 = vpack.c.b16 %v2679, %v2671
        %v2752 = vpack.c.b16 %v2680, %v2672
        %v2753 = vpack.c.b16 %v2681, %v2673
        %v2754 = vpack.c.b16 %v2682, %v2674
        %v2755 = vpack.c.b16 %v2683, %v2675
        %v2756 = vpack.c.b16 %v2684, %v2676
        %v2757 = vpack.c.b16 %v2685, %v2677
        %v2758 = vpack.c.b16 %v2686, %v2678
        %v2759 = vpack.c.b16 %v2695, %v2687
        %v2760 = vpack.c.b16 %v2696, %v2688
        %v2761 = vpack.c.b16 %v2697, %v2689
        %v2762 = vpack.c.b16 %v2698, %v2690
        %v2763 = vpack.c.b16 %v2699, %v2691
        %v2764 = vpack.c.b16 %v2700, %v2692
        %v2765 = vpack.c.b16 %v2701, %v2693
        %v2766 = vpack.c.b16 %v2702, %v2694
        %2831 = vmatprep.subr.bf16.mxu0 %v2704
        %2832 = vmatpush1.bf16.msra.mxu0 %v2703
        %2833 = vmatprep.subr.bf16.mxu0 %v2712
        %2834 = vmatpush1.bf16.msra.mxu0 %v2711
        %2835 = vmatprep.subr.bf16.mxu0 %v2720
        %2836 = vmatpush1.bf16.msra.mxu0 %v2719
        %2837 = vmatprep.subr.bf16.mxu0 %v2728
        %2838 = vmatpush1.bf16.msra.mxu0 %v2727
        %2839 = vmatprep.subr.bf16.mxu0 %v2736
        %2840 = vmatpush1.bf16.msra.mxu0 %v2735
        %2841 = vmatprep.subr.bf16.mxu0 %v2744
        %2842 = vmatpush1.bf16.msra.mxu0 %v2743
        %2843 = vmatprep.subr.bf16.mxu0 %v2752
        %2844 = vmatpush1.bf16.msra.mxu0 %v2751
        %2845 = vmatprep.subr.bf16.mxu0 %v2760
        %2846 = vmatpush1.bf16.msra.mxu0 %v2759
        %2847 = vmatprep.subr.bf16.mxu0 0
        %2848 = vmatpush1.bf16.msra.mxu0 0
        %2849 = vmatprep.subr.bf16.mxu0 0
        %2850 = vmatpush1.bf16.msra.mxu0 0
        %2851 = vmatprep.subr.bf16.mxu0 0
        %2852 = vmatpush1.bf16.msra.mxu0 0
        %2853 = vmatprep.subr.bf16.mxu0 0
        %2854 = vmatpush1.bf16.msra.mxu0 0
        %2855 = vmatprep.subr.bf16.mxu0 0
        %2856 = vmatpush1.bf16.msra.mxu0 0
        %2857 = vmatprep.subr.bf16.mxu0 0
        %2858 = vmatpush1.bf16.msra.mxu0 0
        %2859 = vmatprep.subr.bf16.mxu0 0
        %2860 = vmatpush1.bf16.msra.mxu0 0
        %2861 = vmatprep.subr.bf16.mxu0 0
        %2862 = vmatpush1.bf16.msra.mxu0 0
        %2863 = vmatprep.mubr.bf16.mxu0 0
        %2864 = vmatmul.mubr.bf16.gmra.mrb[0].mxu0 %v2439
        %v2865 = vpop.f32.mrb[0].mxu0
        %v2866 = vadd.f32 0.0, %v2865
        %v2867 = vpop.f32.mrb[0].mxu0
        %v2868 = vadd.f32 0.0, %v2867
        %v2869 = vpop.f32.mrb[0].mxu0
        %v2870 = vadd.f32 0.0, %v2869
        %v2871 = vpop.f32.mrb[0].mxu0
        %v2872 = vadd.f32 0.0, %v2871
        %2873 = vmatprep.mubr.bf16.mxu0 0
        %2874 = vmatmul.mubr.bf16.gmra.mrb[0].mxu0 %v2440
        %v2875 = vpop.f32.mrb[0].mxu0
        %v2876 = vadd.f32 0.0, %v2875
        %v2877 = vpop.f32.mrb[0].mxu0
        %v2878 = vadd.f32 0.0, %v2877
        %v2879 = vpop.f32.mrb[0].mxu0
        %v2880 = vadd.f32 0.0, %v2879
        %v2881 = vpop.f32.mrb[0].mxu0
        %v2882 = vadd.f32 0.0, %v2881
        %2883 = vmatprep.mubr.bf16.mxu0 0
        %2884 = vmatmul.mubr.bf16.gmra.mrb[0].mxu0 %v2441
        %v2885 = vpop.f32.mrb[0].mxu0
        %v2886 = vadd.f32 0.0, %v2885
        %v2887 = vpop.f32.mrb[0].mxu0
        %v2888 = vadd.f32 0.0, %v2887
        %v2889 = vpop.f32.mrb[0].mxu0
        %v2890 = vadd.f32 0.0, %v2889
        %v2891 = vpop.f32.mrb[0].mxu0
        %v2892 = vadd.f32 0.0, %v2891
        %2893 = vmatprep.mubr.bf16.mxu0 0
        %2894 = vmatmul.mubr.bf16.gmra.mrb[0].mxu0 %v2442
        %v2895 = vpop.f32.mrb[0].mxu0
        %v2896 = vadd.f32 0.0, %v2895
        %v2897 = vpop.f32.mrb[0].mxu0
        %v2898 = vadd.f32 0.0, %v2897
        %v2899 = vpop.f32.mrb[0].mxu0
        %v2900 = vadd.f32 0.0, %v2899
        %v2901 = vpop.f32.mrb[0].mxu0
        %v2902 = vadd.f32 0.0, %v2901
        %2903 = vmatprep.mubr.bf16.mxu0 0
        %2904 = vmatmul.mubr.bf16.gmra.mrb[0].mxu0 %v2443
        %v2905 = vpop.f32.mrb[0].mxu0
        %v2906 = vadd.f32 0.0, %v2905
        %v2907 = vpop.f32.mrb[0].mxu0
        %v2908 = vadd.f32 0.0, %v2907
        %v2909 = vpop.f32.mrb[0].mxu0
        %v2910 = vadd.f32 0.0, %v2909
        %v2911 = vpop.f32.mrb[0].mxu0
        %v2912 = vadd.f32 0.0, %v2911
        %2913 = vmatprep.mubr.bf16.mxu0 0
        %2914 = vmatmul.mubr.bf16.gmra.mrb[0].mxu0 %v2444
        %v2915 = vpop.f32.mrb[0].mxu0
        %v2916 = vadd.f32 0.0, %v2915
        %v2917 = vpop.f32.mrb[0].mxu0
        %v2918 = vadd.f32 0.0, %v2917
        %v2919 = vpop.f32.mrb[0].mxu0
        %v2920 = vadd.f32 0.0, %v2919
        %v2921 = vpop.f32.mrb[0].mxu0
        %v2922 = vadd.f32 0.0, %v2921
        %2923 = vmatprep.mubr.bf16.mxu0 0
        %2924 = vmatmul.mubr.bf16.gmra.mrb[0].mxu0 %v2445
        %v2925 = vpop.f32.mrb[0].mxu0
        %v2926 = vadd.f32 0.0, %v2925
        %v2927 = vpop.f32.mrb[0].mxu0
        %v2928 = vadd.f32 0.0, %v2927
        %v2929 = vpop.f32.mrb[0].mxu0
        %v2930 = vadd.f32 0.0, %v2929
        %v2931 = vpop.f32.mrb[0].mxu0
        %v2932 = vadd.f32 0.0, %v2931
        %2933 = vmatprep.mubr.bf16.mxu0 0
        %2934 = vmatmul.mubr.bf16.gmra.mrb[0].mxu0 %v2446
        %v2935 = vpop.f32.mrb[0].mxu0
        %v2936 = vadd.f32 0.0, %v2935
        %v2937 = vpop.f32.mrb[0].mxu0
        %v2938 = vadd.f32 0.0, %v2937
        %v2939 = vpop.f32.mrb[0].mxu0
        %v2940 = vadd.f32 0.0, %v2939
        %v2941 = vpop.f32.mrb[0].mxu0
        %v2942 = vadd.f32 0.0, %v2941
        %2943 = vdwg.mxu0
        %2944 = vmatprep.subr.bf16.mxu0 %v2706
        %2945 = vmatpush1.bf16.msra.mxu0 %v2705
        %2946 = vmatprep.subr.bf16.mxu0 %v2714
        %2947 = vmatpush1.bf16.msra.mxu0 %v2713
        %2948 = vmatprep.subr.bf16.mxu0 %v2722
        %2949 = vmatpush1.bf16.msra.mxu0 %v2721
        %2950 = vmatprep.subr.bf16.mxu0 %v2730
        %2951 = vmatpush1.bf16.msra.mxu0 %v2729
        %2952 = vmatprep.subr.bf16.mxu0 %v2738
        %2953 = vmatpush1.bf16.msra.mxu0 %v2737
        %2954 = vmatprep.subr.bf16.mxu0 %v2746
        %2955 = vmatpush1.bf16.msra.mxu0 %v2745
        %2956 = vmatprep.subr.bf16.mxu0 %v2754
        %2957 = vmatpush1.bf16.msra.mxu0 %v2753
        %2958 = vmatprep.subr.bf16.mxu0 %v2762
        %2959 = vmatpush1.bf16.msra.mxu0 %v2761
        %2960 = vmatprep.subr.bf16.mxu0 0
        %2961 = vmatpush1.bf16.msra.mxu0 0
        %2962 = vmatprep.subr.bf16.mxu0 0
        %2963 = vmatpush1.bf16.msra.mxu0 0
        %2964 = vmatprep.subr.bf16.mxu0 0
        %2965 = vmatpush1.bf16.msra.mxu0 0
        %2966 = vmatprep.subr.bf16.mxu0 0
        %2967 = vmatpush1.bf16.msra.mxu0 0
        %2968 = vmatprep.subr.bf16.mxu0 0
        %2969 = vmatpush1.bf16.msra.mxu0 0
        %2970 = vmatprep.subr.bf16.mxu0 0
        %2971 = vmatpush1.bf16.msra.mxu0 0
        %2972 = vmatprep.subr.bf16.mxu0 0
        %2973 = vmatpush1.bf16.msra.mxu0 0
        %2974 = vmatprep.subr.bf16.mxu0 0
        %2975 = vmatpush1.bf16.msra.mxu0 0
        %2976 = vmatprep.mubr.bf16.mxu0 0
        %2977 = vmatmul.mubr.bf16.gmra.mrb[0].mxu0 %v2439
        %v2978 = vpop.f32.mrb[0].mxu0
        %v2979 = vadd.f32 0.0, %v2978
        %v2980 = vpop.f32.mrb[0].mxu0
        %v2981 = vadd.f32 0.0, %v2980
        %v2982 = vpop.f32.mrb[0].mxu0
        %v2983 = vadd.f32 0.0, %v2982
        %v2984 = vpop.f32.mrb[0].mxu0
        %v2985 = vadd.f32 0.0, %v2984
        %2986 = vmatprep.mubr.bf16.mxu0 0
        %2987 = vmatmul.mubr.bf16.gmra.mrb[0].mxu0 %v2440
        %v2988 = vpop.f32.mrb[0].mxu0
        %v2989 = vadd.f32 0.0, %v2988
        %v2990 = vpop.f32.mrb[0].mxu0
        %v2991 = vadd.f32 0.0, %v2990
        %v2992 = vpop.f32.mrb[0].mxu0
        %v2993 = vadd.f32 0.0, %v2992
        %v2994 = vpop.f32.mrb[0].mxu0
        %v2995 = vadd.f32 0.0, %v2994
        %2996 = vmatprep.mubr.bf16.mxu0 0
        %2997 = vmatmul.mubr.bf16.gmra.mrb[0].mxu0 %v2441
        %v2998 = vpop.f32.mrb[0].mxu0
        %v2999 = vadd.f32 0.0, %v2998
        %v3000 = vpop.f32.mrb[0].mxu0
        %v3001 = vadd.f32 0.0, %v3000
        %v3002 = vpop.f32.mrb[0].mxu0
        %v3003 = vadd.f32 0.0, %v3002
        %v3004 = vpop.f32.mrb[0].mxu0
        %v3005 = vadd.f32 0.0, %v3004
        %3006 = vmatprep.mubr.bf16.mxu0 0
        %3007 = vmatmul.mubr.bf16.gmra.mrb[0].mxu0 %v2442
        %v3008 = vpop.f32.mrb[0].mxu0
        %v3009 = vadd.f32 0.0, %v3008
        %v3010 = vpop.f32.mrb[0].mxu0
        %v3011 = vadd.f32 0.0, %v3010
        %v3012 = vpop.f32.mrb[0].mxu0
        %v3013 = vadd.f32 0.0, %v3012
        %v3014 = vpop.f32.mrb[0].mxu0
        %v3015 = vadd.f32 0.0, %v3014
        %3016 = vmatprep.mubr.bf16.mxu0 0
        %3017 = vmatmul.mubr.bf16.gmra.mrb[0].mxu0 %v2443
        %v3018 = vpop.f32.mrb[0].mxu0
        %v3019 = vadd.f32 0.0, %v3018
        %v3020 = vpop.f32.mrb[0].mxu0
        %v3021 = vadd.f32 0.0, %v3020
        %v3022 = vpop.f32.mrb[0].mxu0
        %v3023 = vadd.f32 0.0, %v3022
        %v3024 = vpop.f32.mrb[0].mxu0
        %v3025 = vadd.f32 0.0, %v3024
        %3026 = vmatprep.mubr.bf16.mxu0 0
        %3027 = vmatmul.mubr.bf16.gmra.mrb[0].mxu0 %v2444
        %v3028 = vpop.f32.mrb[0].mxu0
        %v3029 = vadd.f32 0.0, %v3028
        %v3030 = vpop.f32.mrb[0].mxu0
        %v3031 = vadd.f32 0.0, %v3030
        %v3032 = vpop.f32.mrb[0].mxu0
        %v3033 = vadd.f32 0.0, %v3032
        %v3034 = vpop.f32.mrb[0].mxu0
        %v3035 = vadd.f32 0.0, %v3034
        %3036 = vmatprep.mubr.bf16.mxu0 0
        %3037 = vmatmul.mubr.bf16.gmra.mrb[0].mxu0 %v2445
        %v3038 = vpop.f32.mrb[0].mxu0
        %v3039 = vadd.f32 0.0, %v3038
        %v3040 = vpop.f32.mrb[0].mxu0
        %v3041 = vadd.f32 0.0, %v3040
        %v3042 = vpop.f32.mrb[0].mxu0
        %v3043 = vadd.f32 0.0, %v3042
        %v3044 = vpop.f32.mrb[0].mxu0
        %v3045 = vadd.f32 0.0, %v3044
        %3046 = vmatprep.mubr.bf16.mxu0 0
        %3047 = vmatmul.mubr.bf16.gmra.mrb[0].mxu0 %v2446
        %v3048 = vpop.f32.mrb[0].mxu0
        %v3049 = vadd.f32 0.0, %v3048
        %v3050 = vpop.f32.mrb[0].mxu0
        %v3051 = vadd.f32 0.0, %v3050
        %v3052 = vpop.f32.mrb[0].mxu0
        %v3053 = vadd.f32 0.0, %v3052
        %v3054 = vpop.f32.mrb[0].mxu0
        %v3055 = vadd.f32 0.0, %v3054
        %3056 = vdwg.mxu0
        %3057 = vmatprep.subr.bf16.mxu0 %v2708
        %3058 = vmatpush1.bf16.msra.mxu0 %v2707
        %3059 = vmatprep.subr.bf16.mxu0 %v2716
        %3060 = vmatpush1.bf16.msra.mxu0 %v2715
        %3061 = vmatprep.subr.bf16.mxu0 %v2724
        %3062 = vmatpush1.bf16.msra.mxu0 %v2723
        %3063 = vmatprep.subr.bf16.mxu0 %v2732
        %3064 = vmatpush1.bf16.msra.mxu0 %v2731
        %3065 = vmatprep.subr.bf16.mxu0 %v2740
        %3066 = vmatpush1.bf16.msra.mxu0 %v2739
        %3067 = vmatprep.subr.bf16.mxu0 %v2748
        %3068 = vmatpush1.bf16.msra.mxu0 %v2747
        %3069 = vmatprep.subr.bf16.mxu0 %v2756
        %3070 = vmatpush1.bf16.msra.mxu0 %v2755
        %3071 = vmatprep.subr.bf16.mxu0 %v2764
        %3072 = vmatpush1.bf16.msra.mxu0 %v2763
        %3073 = vmatprep.subr.bf16.mxu0 0
        %3074 = vmatpush1.bf16.msra.mxu0 0
        %3075 = vmatprep.subr.bf16.mxu0 0
        %3076 = vmatpush1.bf16.msra.mxu0 0
        %3077 = vmatprep.subr.bf16.mxu0 0
        %3078 = vmatpush1.bf16.msra.mxu0 0
        %3079 = vmatprep.subr.bf16.mxu0 0
        %3080 = vmatpush1.bf16.msra.mxu0 0
        %3081 = vmatprep.subr.bf16.mxu0 0
        %3082 = vmatpush1.bf16.msra.mxu0 0
        %3083 = vmatprep.subr.bf16.mxu0 0
        %3084 = vmatpush1.bf16.msra.mxu0 0
        %3085 = vmatprep.subr.bf16.mxu0 0
        %3086 = vmatpush1.bf16.msra.mxu0 0
        %3087 = vmatprep.subr.bf16.mxu0 0
        %3088 = vmatpush1.bf16.msra.mxu0 0
        %3089 = vmatprep.mubr.bf16.mxu0 0
        %3090 = vmatmul.mubr.bf16.gmra.mrb[0].mxu0 %v2439
        %v3091 = vpop.f32.mrb[0].mxu0
        %v3092 = vadd.f32 0.0, %v3091
        %v3093 = vpop.f32.mrb[0].mxu0
        %v3094 = vadd.f32 0.0, %v3093
        %v3095 = vpop.f32.mrb[0].mxu0
        %v3096 = vadd.f32 0.0, %v3095
        %v3097 = vpop.f32.mrb[0].mxu0
        %v3098 = vadd.f32 0.0, %v3097
        %3099 = vmatprep.mubr.bf16.mxu0 0
        %3100 = vmatmul.mubr.bf16.gmra.mrb[0].mxu0 %v2440
        %v3101 = vpop.f32.mrb[0].mxu0
        %v3102 = vadd.f32 0.0, %v3101
        %v3103 = vpop.f32.mrb[0].mxu0
        %v3104 = vadd.f32 0.0, %v3103
        %v3105 = vpop.f32.mrb[0].mxu0
        %v3106 = vadd.f32 0.0, %v3105
        %v3107 = vpop.f32.mrb[0].mxu0
        %v3108 = vadd.f32 0.0, %v3107
        %3109 = vmatprep.mubr.bf16.mxu0 0
        %3110 = vmatmul.mubr.bf16.gmra.mrb[0].mxu0 %v2441
        %v3111 = vpop.f32.mrb[0].mxu0
        %v3112 = vadd.f32 0.0, %v3111
        %v3113 = vpop.f32.mrb[0].mxu0
        %v3114 = vadd.f32 0.0, %v3113
        %v3115 = vpop.f32.mrb[0].mxu0
        %v3116 = vadd.f32 0.0, %v3115
        %v3117 = vpop.f32.mrb[0].mxu0
        %v3118 = vadd.f32 0.0, %v3117
        %3119 = vmatprep.mubr.bf16.mxu0 0
        %3120 = vmatmul.mubr.bf16.gmra.mrb[0].mxu0 %v2442
        %v3121 = vpop.f32.mrb[0].mxu0
        %v3122 = vadd.f32 0.0, %v3121
        %v3123 = vpop.f32.mrb[0].mxu0
        %v3124 = vadd.f32 0.0, %v3123
        %v3125 = vpop.f32.mrb[0].mxu0
        %v3126 = vadd.f32 0.0, %v3125
        %v3127 = vpop.f32.mrb[0].mxu0
        %v3128 = vadd.f32 0.0, %v3127
        %3129 = vmatprep.mubr.bf16.mxu0 0
        %3130 = vmatmul.mubr.bf16.gmra.mrb[0].mxu0 %v2443
        %v3131 = vpop.f32.mrb[0].mxu0
        %v3132 = vadd.f32 0.0, %v3131
        %v3133 = vpop.f32.mrb[0].mxu0
        %v3134 = vadd.f32 0.0, %v3133
        %v3135 = vpop.f32.mrb[0].mxu0
        %v3136 = vadd.f32 0.0, %v3135
        %v3137 = vpop.f32.mrb[0].mxu0
        %v3138 = vadd.f32 0.0, %v3137
        %3139 = vmatprep.mubr.bf16.mxu0 0
        %3140 = vmatmul.mubr.bf16.gmra.mrb[0].mxu0 %v2444
        %v3141 = vpop.f32.mrb[0].mxu0
        %v3142 = vadd.f32 0.0, %v3141
        %v3143 = vpop.f32.mrb[0].mxu0
        %v3144 = vadd.f32 0.0, %v3143
        %v3145 = vpop.f32.mrb[0].mxu0
        %v3146 = vadd.f32 0.0, %v3145
        %v3147 = vpop.f32.mrb[0].mxu0
        %v3148 = vadd.f32 0.0, %v3147
        %3149 = vmatprep.mubr.bf16.mxu0 0
        %3150 = vmatmul.mubr.bf16.gmra.mrb[0].mxu0 %v2445
        %v3151 = vpop.f32.mrb[0].mxu0
        %v3152 = vadd.f32 0.0, %v3151
        %v3153 = vpop.f32.mrb[0].mxu0
        %v3154 = vadd.f32 0.0, %v3153
        %v3155 = vpop.f32.mrb[0].mxu0
        %v3156 = vadd.f32 0.0, %v3155
        %v3157 = vpop.f32.mrb[0].mxu0
        %v3158 = vadd.f32 0.0, %v3157
        %3159 = vmatprep.mubr.bf16.mxu0 0
        %3160 = vmatmul.mubr.bf16.gmra.mrb[0].mxu0 %v2446
        %v3161 = vpop.f32.mrb[0].mxu0
        %v3162 = vadd.f32 0.0, %v3161
        %v3163 = vpop.f32.mrb[0].mxu0
        %v3164 = vadd.f32 0.0, %v3163
        %v3165 = vpop.f32.mrb[0].mxu0
        %v3166 = vadd.f32 0.0, %v3165
        %v3167 = vpop.f32.mrb[0].mxu0
        %v3168 = vadd.f32 0.0, %v3167
        %3169 = vdwg.mxu0
        %3170 = vmatprep.subr.bf16.mxu0 %v2710
        %3171 = vmatpush1.bf16.msra.mxu0 %v2709
        %3172 = vmatprep.subr.bf16.mxu0 %v2718
        %3173 = vmatpush1.bf16.msra.mxu0 %v2717
        %3174 = vmatprep.subr.bf16.mxu0 %v2726
        %3175 = vmatpush1.bf16.msra.mxu0 %v2725
        %3176 = vmatprep.subr.bf16.mxu0 %v2734
        %3177 = vmatpush1.bf16.msra.mxu0 %v2733
        %3178 = vmatprep.subr.bf16.mxu0 %v2742
        %3179 = vmatpush1.bf16.msra.mxu0 %v2741
        %3180 = vmatprep.subr.bf16.mxu0 %v2750
        %3181 = vmatpush1.bf16.msra.mxu0 %v2749
        %3182 = vmatprep.subr.bf16.mxu0 %v2758
        %3183 = vmatpush1.bf16.msra.mxu0 %v2757
        %3184 = vmatprep.subr.bf16.mxu0 %v2766
        %3185 = vmatpush1.bf16.msra.mxu0 %v2765
        %3186 = vmatprep.subr.bf16.mxu0 0
        %3187 = vmatpush1.bf16.msra.mxu0 0
        %3188 = vmatprep.subr.bf16.mxu0 0
        %3189 = vmatpush1.bf16.msra.mxu0 0
        %3190 = vmatprep.subr.bf16.mxu0 0
        %3191 = vmatpush1.bf16.msra.mxu0 0
        %3192 = vmatprep.subr.bf16.mxu0 0
        %3193 = vmatpush1.bf16.msra.mxu0 0
        %3194 = vmatprep.subr.bf16.mxu0 0
        %3195 = vmatpush1.bf16.msra.mxu0 0
        %3196 = vmatprep.subr.bf16.mxu0 0
        %3197 = vmatpush1.bf16.msra.mxu0 0
        %3198 = vmatprep.subr.bf16.mxu0 0
        %3199 = vmatpush1.bf16.msra.mxu0 0
        %3200 = vmatprep.subr.bf16.mxu0 0
        %3201 = vmatpush1.bf16.msra.mxu0 0
        %3202 = vmatprep.mubr.bf16.mxu0 0
        %3203 = vmatmul.mubr.bf16.gmra.mrb[0].mxu0 %v2439
        %v3204 = vpop.f32.mrb[0].mxu0
        %v3205 = vadd.f32 0.0, %v3204
        %v3206 = vpop.f32.mrb[0].mxu0
        %v3207 = vadd.f32 0.0, %v3206
        %v3208 = vpop.f32.mrb[0].mxu0
        %v3209 = vadd.f32 0.0, %v3208
        %v3210 = vpop.f32.mrb[0].mxu0
        %v3211 = vadd.f32 0.0, %v3210
        %3212 = vmatprep.mubr.bf16.mxu0 0
        %3213 = vmatmul.mubr.bf16.gmra.mrb[0].mxu0 %v2440
        %v3214 = vpop.f32.mrb[0].mxu0
        %v3215 = vadd.f32 0.0, %v3214
        %v3216 = vpop.f32.mrb[0].mxu0
        %v3217 = vadd.f32 0.0, %v3216
        %v3218 = vpop.f32.mrb[0].mxu0
        %v3219 = vadd.f32 0.0, %v3218
        %v3220 = vpop.f32.mrb[0].mxu0
        %v3221 = vadd.f32 0.0, %v3220
        %3222 = vmatprep.mubr.bf16.mxu0 0
        %3223 = vmatmul.mubr.bf16.gmra.mrb[0].mxu0 %v2441
        %v3224 = vpop.f32.mrb[0].mxu0
        %v3225 = vadd.f32 0.0, %v3224
        %v3226 = vpop.f32.mrb[0].mxu0
        %v3227 = vadd.f32 0.0, %v3226
        %v3228 = vpop.f32.mrb[0].mxu0
        %v3229 = vadd.f32 0.0, %v3228
        %v3230 = vpop.f32.mrb[0].mxu0
        %v3231 = vadd.f32 0.0, %v3230
        %3232 = vmatprep.mubr.bf16.mxu0 0
        %3233 = vmatmul.mubr.bf16.gmra.mrb[0].mxu0 %v2442
        %v3234 = vpop.f32.mrb[0].mxu0
        %v3235 = vadd.f32 0.0, %v3234
        %v3236 = vpop.f32.mrb[0].mxu0
        %v3237 = vadd.f32 0.0, %v3236
        %v3238 = vpop.f32.mrb[0].mxu0
        %v3239 = vadd.f32 0.0, %v3238
        %v3240 = vpop.f32.mrb[0].mxu0
        %v3241 = vadd.f32 0.0, %v3240
        %3242 = vmatprep.mubr.bf16.mxu0 0
        %3243 = vmatmul.mubr.bf16.gmra.mrb[0].mxu0 %v2443
        %v3244 = vpop.f32.mrb[0].mxu0
        %v3245 = vadd.f32 0.0, %v3244
        %v3246 = vpop.f32.mrb[0].mxu0
        %v3247 = vadd.f32 0.0, %v3246
        %v3248 = vpop.f32.mrb[0].mxu0
        %v3249 = vadd.f32 0.0, %v3248
        %v3250 = vpop.f32.mrb[0].mxu0
        %v3251 = vadd.f32 0.0, %v3250
        %3252 = vmatprep.mubr.bf16.mxu0 0
        %3253 = vmatmul.mubr.bf16.gmra.mrb[0].mxu0 %v2444
        %v3254 = vpop.f32.mrb[0].mxu0
        %v3255 = vadd.f32 0.0, %v3254
        %v3256 = vpop.f32.mrb[0].mxu0
        %v3257 = vadd.f32 0.0, %v3256
        %v3258 = vpop.f32.mrb[0].mxu0
        %v3259 = vadd.f32 0.0, %v3258
        %v3260 = vpop.f32.mrb[0].mxu0
        %v3261 = vadd.f32 0.0, %v3260
        %3262 = vmatprep.mubr.bf16.mxu0 0
        %3263 = vmatmul.mubr.bf16.gmra.mrb[0].mxu0 %v2445
        %v3264 = vpop.f32.mrb[0].mxu0
        %v3265 = vadd.f32 0.0, %v3264
        %v3266 = vpop.f32.mrb[0].mxu0
        %v3267 = vadd.f32 0.0, %v3266
        %v3268 = vpop.f32.mrb[0].mxu0
        %v3269 = vadd.f32 0.0, %v3268
        %v3270 = vpop.f32.mrb[0].mxu0
        %v3271 = vadd.f32 0.0, %v3270
        %3272 = vmatprep.mubr.bf16.mxu0 0
        %3273 = vmatmul.mubr.bf16.gmra.mrb[0].mxu0 %v2446
        %v3274 = vpop.f32.mrb[0].mxu0
        %v3275 = vadd.f32 0.0, %v3274
        %v3276 = vpop.f32.mrb[0].mxu0
        %v3277 = vadd.f32 0.0, %v3276
        %v3278 = vpop.f32.mrb[0].mxu0
        %v3279 = vadd.f32 0.0, %v3278
        %v3280 = vpop.f32.mrb[0].mxu0
        %v3281 = vadd.f32 0.0, %v3280
        %3282 = vdwg.mxu0
        %v3283 = vld [vmem:[%s396] sm:$0x1]
        %v3284 = vunpack.c.l.bf16 %v2439
        %v3285 = vunpack.c.h.bf16 %v2439
        %v3286 = vunpack.c.l.bf16 %v2440
        %v3287 = vunpack.c.h.bf16 %v2440
        %v3288 = vunpack.c.l.bf16 %v2441
        %v3289 = vunpack.c.h.bf16 %v2441
        %v3290 = vunpack.c.l.bf16 %v2442
        %v3291 = vunpack.c.h.bf16 %v2442
        %v3292 = vunpack.c.l.bf16 %v2443
        %v3293 = vunpack.c.h.bf16 %v2443
        %v3294 = vunpack.c.l.bf16 %v2444
        %v3295 = vunpack.c.h.bf16 %v2444
        %v3296 = vunpack.c.l.bf16 %v2445
        %v3297 = vunpack.c.h.bf16 %v2445
        %v3298 = vunpack.c.l.bf16 %v2446
        %v3299 = vunpack.c.h.bf16 %v2446
        %v3300 = vadd.f32 %v3284, %v3285
        %v3301 = vadd.f32 %v3300, %v3286
        %v3302 = vadd.f32 %v3301, %v3287
        %v3303 = vadd.f32 %v3302, %v3288
        %v3304 = vadd.f32 %v3303, %v3289
        %v3305 = vadd.f32 %v3304, %v3290
        %v3306 = vadd.f32 %v3305, %v3291
        %v3307 = vadd.f32 %v3306, %v3292
        %v3308 = vadd.f32 %v3307, %v3293
        %v3309 = vadd.f32 %v3308, %v3294
        %v3310 = vadd.f32 %v3309, %v3295
        %v3311 = vadd.f32 %v3310, %v3296
        %v3312 = vadd.f32 %v3311, %v3297
        %v3313 = vadd.f32 %v3312, %v3298
        %v3314 = vadd.f32 %v3313, %v3299
        %v3315 = vrot.slane %v3314, 4
        %v3316 = vadd.f32 %v3314, %v3315
        %v3317 = vrot.slane %v3316, 2
        %v3318 = vadd.f32 %v3316, %v3317
        %v3319 = vrot.slane %v3318, 1
        %v3320 = vadd.f32 %v3318, %v3319
        %v3321 = vadd.f32 %v3283, %v3320
        %3322 = vst [vmem:[%s396] sm:$0x1] %v3321
        %v3323 = vld [vmem:[%s400] sm:$0xff]
        %v3324 = vmul.f32 %v2866, %v2866
        %v3325 = vmul.f32 %v2868, %v2868
        %v3326 = vmul.f32 %v2979, %v2979
        %v3327 = vmul.f32 %v2981, %v2981
        %v3328 = vmul.f32 %v3092, %v3092
        %v3329 = vmul.f32 %v3094, %v3094
        %v3330 = vmul.f32 %v3205, %v3205
        %v3331 = vmul.f32 %v3207, %v3207
        %v3332 = vmul.f32 %v2870, %v2870
        %v3333 = vmul.f32 %v2872, %v2872
        %v3334 = vmul.f32 %v2983, %v2983
        %v3335 = vmul.f32 %v2985, %v2985
        %v3336 = vmul.f32 %v3096, %v3096
        %v3337 = vmul.f32 %v3098, %v3098
        %v3338 = vmul.f32 %v3209, %v3209
        %v3339 = vmul.f32 %v3211, %v3211
        %v3340 = vmul.f32 %v2876, %v2876
        %v3341 = vmul.f32 %v2878, %v2878
        %v3342 = vmul.f32 %v2989, %v2989
        %v3343 = vmul.f32 %v2991, %v2991
        %v3344 = vmul.f32 %v3102, %v3102
        %v3345 = vmul.f32 %v3104, %v3104
        %v3346 = vmul.f32 %v3215, %v3215
        %v3347 = vmul.f32 %v3217, %v3217
        %v3348 = vmul.f32 %v2880, %v2880
        %v3349 = vmul.f32 %v2882, %v2882
        %v3350 = vmul.f32 %v2993, %v2993
        %v3351 = vmul.f32 %v2995, %v2995
        %v3352 = vmul.f32 %v3106, %v3106
        %v3353 = vmul.f32 %v3108, %v3108
        %v3354 = vmul.f32 %v3219, %v3219
        %v3355 = vmul.f32 %v3221, %v3221
        %v3356 = vmul.f32 %v2886, %v2886
        %v3357 = vmul.f32 %v2888, %v2888
        %v3358 = vmul.f32 %v2999, %v2999
        %v3359 = vmul.f32 %v3001, %v3001
        %v3360 = vmul.f32 %v3112, %v3112
        %v3361 = vmul.f32 %v3114, %v3114
        %v3362 = vmul.f32 %v3225, %v3225
        %v3363 = vmul.f32 %v3227, %v3227
        %v3364 = vmul.f32 %v2890, %v2890
        %v3365 = vmul.f32 %v2892, %v2892
        %v3366 = vmul.f32 %v3003, %v3003
        %v3367 = vmul.f32 %v3005, %v3005
        %v3368 = vmul.f32 %v3116, %v3116
        %v3369 = vmul.f32 %v3118, %v3118
        %v3370 = vmul.f32 %v3229, %v3229
        %v3371 = vmul.f32 %v3231, %v3231
        %v3372 = vmul.f32 %v2896, %v2896
        %v3373 = vmul.f32 %v2898, %v2898
        %v3374 = vmul.f32 %v3009, %v3009
        %v3375 = vmul.f32 %v3011, %v3011
        %v3376 = vmul.f32 %v3122, %v3122
        %v3377 = vmul.f32 %v3124, %v3124
        %v3378 = vmul.f32 %v3235, %v3235
        %v3379 = vmul.f32 %v3237, %v3237
        %v3380 = vmul.f32 %v2900, %v2900
        %v3381 = vmul.f32 %v2902, %v2902
        %v3382 = vmul.f32 %v3013, %v3013
        %v3383 = vmul.f32 %v3015, %v3015
        %v3384 = vmul.f32 %v3126, %v3126
        %v3385 = vmul.f32 %v3128, %v3128
        %v3386 = vmul.f32 %v3239, %v3239
        %v3387 = vmul.f32 %v3241, %v3241
        %v3388 = vmul.f32 %v2906, %v2906
        %v3389 = vmul.f32 %v2908, %v2908
        %v3390 = vmul.f32 %v3019, %v3019
        %v3391 = vmul.f32 %v3021, %v3021
        %v3392 = vmul.f32 %v3132, %v3132
        %v3393 = vmul.f32 %v3134, %v3134
        %v3394 = vmul.f32 %v3245, %v3245
        %v3395 = vmul.f32 %v3247, %v3247
        %v3396 = vmul.f32 %v2910, %v2910
        %v3397 = vmul.f32 %v2912, %v2912
        %v3398 = vmul.f32 %v3023, %v3023
        %v3399 = vmul.f32 %v3025, %v3025
        %v3400 = vmul.f32 %v3136, %v3136
        %v3401 = vmul.f32 %v3138, %v3138
        %v3402 = vmul.f32 %v3249, %v3249
        %v3403 = vmul.f32 %v3251, %v3251
        %v3404 = vmul.f32 %v2916, %v2916
        %v3405 = vmul.f32 %v2918, %v2918
        %v3406 = vmul.f32 %v3029, %v3029
        %v3407 = vmul.f32 %v3031, %v3031
        %v3408 = vmul.f32 %v3142, %v3142
        %v3409 = vmul.f32 %v3144, %v3144
        %v3410 = vmul.f32 %v3255, %v3255
        %v3411 = vmul.f32 %v3257, %v3257
        %v3412 = vmul.f32 %v2920, %v2920
        %v3413 = vmul.f32 %v2922, %v2922
        %v3414 = vmul.f32 %v3033, %v3033
        %v3415 = vmul.f32 %v3035, %v3035
        %v3416 = vmul.f32 %v3146, %v3146
        %v3417 = vmul.f32 %v3148, %v3148
        %v3418 = vmul.f32 %v3259, %v3259
        %v3419 = vmul.f32 %v3261, %v3261
        %v3420 = vmul.f32 %v2926, %v2926
        %v3421 = vmul.f32 %v2928, %v2928
        %v3422 = vmul.f32 %v3039, %v3039
        %v3423 = vmul.f32 %v3041, %v3041
        %v3424 = vmul.f32 %v3152, %v3152
        %v3425 = vmul.f32 %v3154, %v3154
        %v3426 = vmul.f32 %v3265, %v3265
        %v3427 = vmul.f32 %v3267, %v3267
        %v3428 = vmul.f32 %v2930, %v2930
        %v3429 = vmul.f32 %v2932, %v2932
        %v3430 = vmul.f32 %v3043, %v3043
        %v3431 = vmul.f32 %v3045, %v3045
        %v3432 = vmul.f32 %v3156, %v3156
        %v3433 = vmul.f32 %v3158, %v3158
        %v3434 = vmul.f32 %v3269, %v3269
        %v3435 = vmul.f32 %v3271, %v3271
        %v3436 = vmul.f32 %v2936, %v2936
        %v3437 = vmul.f32 %v2938, %v2938
        %v3438 = vmul.f32 %v3049, %v3049
        %v3439 = vmul.f32 %v3051, %v3051
        %v3440 = vmul.f32 %v3162, %v3162
        %v3441 = vmul.f32 %v3164, %v3164
        %v3442 = vmul.f32 %v3275, %v3275
        %v3443 = vmul.f32 %v3277, %v3277
        %v3444 = vmul.f32 %v2940, %v2940
        %v3445 = vmul.f32 %v2942, %v2942
        %v3446 = vmul.f32 %v3053, %v3053
        %v3447 = vmul.f32 %v3055, %v3055
        %v3448 = vmul.f32 %v3166, %v3166
        %v3449 = vmul.f32 %v3168, %v3168
        %v3450 = vmul.f32 %v3279, %v3279
        %v3451 = vmul.f32 %v3281, %v3281
        %v3452 = vadd.f32 %v3324, %v3332
        %v3453 = vadd.f32 %v3452, %v3340
        %v3454 = vadd.f32 %v3453, %v3348
        %v3455 = vadd.f32 %v3454, %v3356
        %v3456 = vadd.f32 %v3455, %v3364
        %v3457 = vadd.f32 %v3456, %v3372
        %v3458 = vadd.f32 %v3457, %v3380
        %v3459 = vadd.f32 %v3458, %v3388
        %v3460 = vadd.f32 %v3459, %v3396
        %v3461 = vadd.f32 %v3460, %v3404
        %v3462 = vadd.f32 %v3461, %v3412
        %v3463 = vadd.f32 %v3462, %v3420
        %v3464 = vadd.f32 %v3463, %v3428
        %v3465 = vadd.f32 %v3464, %v3436
        %v3466 = vadd.f32 %v3465, %v3444
        %v3467 = vrot.slane %v3466, 4
        %v3468 = vadd.f32 %v3466, %v3467
        %v3469 = vrot.slane %v3468, 2
        %v3470 = vadd.f32 %v3468, %v3469
        %v3471 = vrot.slane %v3470, 1
        %v3472 = vadd.f32 %v3470, %v3471
        %v3473 = vadd.f32 %v3325, %v3333
        %v3474 = vadd.f32 %v3473, %v3341
        %v3475 = vadd.f32 %v3474, %v3349
        %v3476 = vadd.f32 %v3475, %v3357
        %v3477 = vadd.f32 %v3476, %v3365
        %v3478 = vadd.f32 %v3477, %v3373
        %v3479 = vadd.f32 %v3478, %v3381
        %v3480 = vadd.f32 %v3479, %v3389
        %v3481 = vadd.f32 %v3480, %v3397
        %v3482 = vadd.f32 %v3481, %v3405
        %v3483 = vadd.f32 %v3482, %v3413
        %v3484 = vadd.f32 %v3483, %v3421
        %v3485 = vadd.f32 %v3484, %v3429
        %v3486 = vadd.f32 %v3485, %v3437
        %v3487 = vadd.f32 %v3486, %v3445
        %v3488 = vrot.slane %v3487, 4
        %v3489 = vadd.f32 %v3487, %v3488
        %v3490 = vrot.slane %v3489, 2
        %v3491 = vadd.f32 %v3489, %v3490
        %v3492 = vrot.slane %v3491, 1
        %v3493 = vadd.f32 %v3491, %v3492
        %v3494 = vadd.f32 %v3326, %v3334
        %v3495 = vadd.f32 %v3494, %v3342
        %v3496 = vadd.f32 %v3495, %v3350
        %v3497 = vadd.f32 %v3496, %v3358
        %v3498 = vadd.f32 %v3497, %v3366
        %v3499 = vadd.f32 %v3498, %v3374
        %v3500 = vadd.f32 %v3499, %v3382
        %v3501 = vadd.f32 %v3500, %v3390
        %v3502 = vadd.f32 %v3501, %v3398
        %v3503 = vadd.f32 %v3502, %v3406
        %v3504 = vadd.f32 %v3503, %v3414
        %v3505 = vadd.f32 %v3504, %v3422
        %v3506 = vadd.f32 %v3505, %v3430
        %v3507 = vadd.f32 %v3506, %v3438
        %v3508 = vadd.f32 %v3507, %v3446
        %v3509 = vrot.slane %v3508, 4
        %v3510 = vadd.f32 %v3508, %v3509
        %v3511 = vrot.slane %v3510, 2
        %v3512 = vadd.f32 %v3510, %v3511
        %v3513 = vrot.slane %v3512, 1
        %v3514 = vadd.f32 %v3512, %v3513
        %v3515 = vadd.f32 %v3327, %v3335
        %v3516 = vadd.f32 %v3515, %v3343
        %v3517 = vadd.f32 %v3516, %v3351
        %v3518 = vadd.f32 %v3517, %v3359
        %v3519 = vadd.f32 %v3518, %v3367
        %v3520 = vadd.f32 %v3519, %v3375
        %v3521 = vadd.f32 %v3520, %v3383
        %v3522 = vadd.f32 %v3521, %v3391
        %v3523 = vadd.f32 %v3522, %v3399
        %v3524 = vadd.f32 %v3523, %v3407
        %v3525 = vadd.f32 %v3524, %v3415
        %v3526 = vadd.f32 %v3525, %v3423
        %v3527 = vadd.f32 %v3526, %v3431
        %v3528 = vadd.f32 %v3527, %v3439
        %v3529 = vadd.f32 %v3528, %v3447
        %v3530 = vrot.slane %v3529, 4
        %v3531 = vadd.f32 %v3529, %v3530
        %v3532 = vrot.slane %v3531, 2
        %v3533 = vadd.f32 %v3531, %v3532
        %v3534 = vrot.slane %v3533, 1
        %v3535 = vadd.f32 %v3533, %v3534
        %v3536 = vadd.f32 %v3328, %v3336
        %v3537 = vadd.f32 %v3536, %v3344
        %v3538 = vadd.f32 %v3537, %v3352
        %v3539 = vadd.f32 %v3538, %v3360
        %v3540 = vadd.f32 %v3539, %v3368
        %v3541 = vadd.f32 %v3540, %v3376
        %v3542 = vadd.f32 %v3541, %v3384
        %v3543 = vadd.f32 %v3542, %v3392
        %v3544 = vadd.f32 %v3543, %v3400
        %v3545 = vadd.f32 %v3544, %v3408
        %v3546 = vadd.f32 %v3545, %v3416
        %v3547 = vadd.f32 %v3546, %v3424
        %v3548 = vadd.f32 %v3547, %v3432
        %v3549 = vadd.f32 %v3548, %v3440
        %v3550 = vadd.f32 %v3549, %v3448
        %v3551 = vrot.slane %v3550, 4
        %v3552 = vadd.f32 %v3550, %v3551
        %v3553 = vrot.slane %v3552, 2
        %v3554 = vadd.f32 %v3552, %v3553
        %v3555 = vrot.slane %v3554, 1
        %v3556 = vadd.f32 %v3554, %v3555
        %v3557 = vadd.f32 %v3329, %v3337
        %v3558 = vadd.f32 %v3557, %v3345
        %v3559 = vadd.f32 %v3558, %v3353
        %v3560 = vadd.f32 %v3559, %v3361
        %v3561 = vadd.f32 %v3560, %v3369
        %v3562 = vadd.f32 %v3561, %v3377
        %v3563 = vadd.f32 %v3562, %v3385
        %v3564 = vadd.f32 %v3563, %v3393
        %v3565 = vadd.f32 %v3564, %v3401
        %v3566 = vadd.f32 %v3565, %v3409
        %v3567 = vadd.f32 %v3566, %v3417
        %v3568 = vadd.f32 %v3567, %v3425
        %v3569 = vadd.f32 %v3568, %v3433
        %v3570 = vadd.f32 %v3569, %v3441
        %v3571 = vadd.f32 %v3570, %v3449
        %v3572 = vrot.slane %v3571, 4
        %v3573 = vadd.f32 %v3571, %v3572
        %v3574 = vrot.slane %v3573, 2
        %v3575 = vadd.f32 %v3573, %v3574
        %v3576 = vrot.slane %v3575, 1
        %v3577 = vadd.f32 %v3575, %v3576
        %v3578 = vadd.f32 %v3330, %v3338
        %v3579 = vadd.f32 %v3578, %v3346
        %v3580 = vadd.f32 %v3579, %v3354
        %v3581 = vadd.f32 %v3580, %v3362
        %v3582 = vadd.f32 %v3581, %v3370
        %v3583 = vadd.f32 %v3582, %v3378
        %v3584 = vadd.f32 %v3583, %v3386
        %v3585 = vadd.f32 %v3584, %v3394
        %v3586 = vadd.f32 %v3585, %v3402
        %v3587 = vadd.f32 %v3586, %v3410
        %v3588 = vadd.f32 %v3587, %v3418
        %v3589 = vadd.f32 %v3588, %v3426
        %v3590 = vadd.f32 %v3589, %v3434
        %v3591 = vadd.f32 %v3590, %v3442
        %v3592 = vadd.f32 %v3591, %v3450
        %v3593 = vrot.slane %v3592, 4
        %v3594 = vadd.f32 %v3592, %v3593
        %v3595 = vrot.slane %v3594, 2
        %v3596 = vadd.f32 %v3594, %v3595
        %v3597 = vrot.slane %v3596, 1
        %v3598 = vadd.f32 %v3596, %v3597
        %v3599 = vadd.f32 %v3331, %v3339
        %v3600 = vadd.f32 %v3599, %v3347
        %v3601 = vadd.f32 %v3600, %v3355
        %v3602 = vadd.f32 %v3601, %v3363
        %v3603 = vadd.f32 %v3602, %v3371
        %v3604 = vadd.f32 %v3603, %v3379
        %v3605 = vadd.f32 %v3604, %v3387
        %v3606 = vadd.f32 %v3605, %v3395
        %v3607 = vadd.f32 %v3606, %v3403
        %v3608 = vadd.f32 %v3607, %v3411
        %v3609 = vadd.f32 %v3608, %v3419
        %v3610 = vadd.f32 %v3609, %v3427
        %v3611 = vadd.f32 %v3610, %v3435
        %v3612 = vadd.f32 %v3611, %v3443
        %v3613 = vadd.f32 %v3612, %v3451
        %v3614 = vrot.slane %v3613, 4
        %v3615 = vadd.f32 %v3613, %v3614
        %v3616 = vrot.slane %v3615, 2
        %v3617 = vadd.f32 %v3615, %v3616
        %v3618 = vrot.slane %v3617, 1
        %v3619 = vadd.f32 %v3617, %v3618
        %v3628 = vcombine.low %v3472, %v3493
        %v3629 = vcombine.low %v3514, %v3535
        %v3630 = vcombine.low %v3556, %v3577
        %v3631 = vcombine.low %v3598, %v3619
        %v3633 = vunpack.c.l.s4 1966171168
        %v3634 = vunpack.c.0.s8 %v3633
        %v3635 = vlaneseq
        %v3636 = vshrl.u32 %v3635, 7
        %v3637 = vsub.s32 %v3634, %v3636
        %v3638 = vrot.slane %v3628, %v3637
        %v3640 = vunpack.c.l.s4 1966171168
        %v3641 = vunpack.c.0.s8 %v3640
        %v3642 = vlaneseq
        %v3643 = vshrl.u32 %v3642, 7
        %v3644 = vsub.s32 %v3641, %v3643
        %v3645 = vrot.slane %v3629, %v3644
        %v3647 = vunpack.c.l.s4 1966171168
        %v3648 = vunpack.c.0.s8 %v3647
        %v3649 = vlaneseq
        %v3650 = vshrl.u32 %v3649, 7
        %v3651 = vsub.s32 %v3648, %v3650
        %v3652 = vrot.slane %v3630, %v3651
        %v3654 = vunpack.c.l.s4 1966171168
        %v3655 = vunpack.c.0.s8 %v3654
        %v3656 = vlaneseq
        %v3657 = vshrl.u32 %v3656, 7
        %v3658 = vsub.s32 %v3655, %v3657
        %v3659 = vrot.slane %v3631, %v3658
        %v3660 = vcombine.low %v3638, %v3645
        %v3661 = vcombine.low %v3652, %v3659
        %v3663 = vunpack.c.l.s4 1966171168
        %v3664 = vunpack.c.0.s8 %v3663
        %v3665 = vlaneseq
        %v3666 = vshrl.u32 %v3665, 7
        %v3667 = vsub.s32 %v3664, %v3666
        %v3668 = vrot.slane %v3660, %v3667
        %v3670 = vunpack.c.l.s4 1966171168
        %v3671 = vunpack.c.0.s8 %v3670
        %v3672 = vlaneseq
        %v3673 = vshrl.u32 %v3672, 7
        %v3674 = vsub.s32 %v3671, %v3673
        %v3675 = vrot.slane %v3661, %v3674
        %v3676 = vcombine.low %v3668, %v3675
        %v3678 = vadd.f32 %v3323, %v3676
        %3679 = vst [vmem:[%s400] sm:$0xff] %v3678
        %vm3680 = vcmp.eq.s32.totalorder %v2399, 1
        %vm3681 = vcmp.eq.s32.totalorder %v2400, 1
        %vm3682 = vcmp.eq.s32.totalorder %v2401, 1
        %vm3683 = vcmp.eq.s32.totalorder %v2402, 1
        %vm3684 = vcmp.eq.s32.totalorder %v2403, 1
        %vm3685 = vcmp.eq.s32.totalorder %v2404, 1
        %vm3686 = vcmp.eq.s32.totalorder %v2405, 1
        %vm3687 = vcmp.eq.s32.totalorder %v2406, 1
        %vm3688 = vcmp.eq.s32.totalorder %v2407, 1
        %vm3689 = vcmp.eq.s32.totalorder %v2408, 1
        %vm3690 = vcmp.eq.s32.totalorder %v2409, 1
        %vm3691 = vcmp.eq.s32.totalorder %v2410, 1
        %vm3692 = vcmp.eq.s32.totalorder %v2411, 1
        %vm3693 = vcmp.eq.s32.totalorder %v2412, 1
        %vm3694 = vcmp.eq.s32.totalorder %v2413, 1
        %vm3695 = vcmp.eq.s32.totalorder %v2414, 1
        %v3696 = vsel %vm3680, %v2866, -inf
        %v3697 = vsel %vm3680, %v2868, -inf
        %v3698 = vsel %vm3680, %v2979, -inf
        %v3699 = vsel %vm3680, %v2981, -inf
        %v3700 = vsel %vm3680, %v3092, -inf
        %v3701 = vsel %vm3680, %v3094, -inf
        %v3702 = vsel %vm3680, %v3205, -inf
        %v3703 = vsel %vm3680, %v3207, -inf
        %v3704 = vsel %vm3681, %v2870, -inf
        %v3705 = vsel %vm3681, %v2872, -inf
        %v3706 = vsel %vm3681, %v2983, -inf
        %v3707 = vsel %vm3681, %v2985, -inf
        %v3708 = vsel %vm3681, %v3096, -inf
        %v3709 = vsel %vm3681, %v3098, -inf
        %v3710 = vsel %vm3681, %v3209, -inf
        %v3711 = vsel %vm3681, %v3211, -inf
        %v3712 = vsel %vm3682, %v2876, -inf
        %v3713 = vsel %vm3682, %v2878, -inf
        %v3714 = vsel %vm3682, %v2989, -inf
        %v3715 = vsel %vm3682, %v2991, -inf
        %v3716 = vsel %vm3682, %v3102, -inf
        %v3717 = vsel %vm3682, %v3104, -inf
        %v3718 = vsel %vm3682, %v3215, -inf
        %v3719 = vsel %vm3682, %v3217, -inf
        %v3720 = vsel %vm3683, %v2880, -inf
        %v3721 = vsel %vm3683, %v2882, -inf
        %v3722 = vsel %vm3683, %v2993, -inf
        %v3723 = vsel %vm3683, %v2995, -inf
        %v3724 = vsel %vm3683, %v3106, -inf
        %v3725 = vsel %vm3683, %v3108, -inf
        %v3726 = vsel %vm3683, %v3219, -inf
        %v3727 = vsel %vm3683, %v3221, -inf
        %v3728 = vsel %vm3684, %v2886, -inf
        %v3729 = vsel %vm3684, %v2888, -inf
        %v3730 = vsel %vm3684, %v2999, -inf
        %v3731 = vsel %vm3684, %v3001, -inf
        %v3732 = vsel %vm3684, %v3112, -inf
        %v3733 = vsel %vm3684, %v3114, -inf
        %v3734 = vsel %vm3684, %v3225, -inf
        %v3735 = vsel %vm3684, %v3227, -inf
        %v3736 = vsel %vm3685, %v2890, -inf
        %v3737 = vsel %vm3685, %v2892, -inf
        %v3738 = vsel %vm3685, %v3003, -inf
        %v3739 = vsel %vm3685, %v3005, -inf
        %v3740 = vsel %vm3685, %v3116, -inf
        %v3741 = vsel %vm3685, %v3118, -inf
        %v3742 = vsel %vm3685, %v3229, -inf
        %v3743 = vsel %vm3685, %v3231, -inf
        %v3744 = vsel %vm3686, %v2896, -inf
        %v3745 = vsel %vm3686, %v2898, -inf
        %v3746 = vsel %vm3686, %v3009, -inf
        %v3747 = vsel %vm3686, %v3011, -inf
        %v3748 = vsel %vm3686, %v3122, -inf
        %v3749 = vsel %vm3686, %v3124, -inf
        %v3750 = vsel %vm3686, %v3235, -inf
        %v3751 = vsel %vm3686, %v3237, -inf
        %v3752 = vsel %vm3687, %v2900, -inf
        %v3753 = vsel %vm3687, %v2902, -inf
        %v3754 = vsel %vm3687, %v3013, -inf
        %v3755 = vsel %vm3687, %v3015, -inf
        %v3756 = vsel %vm3687, %v3126, -inf
        %v3757 = vsel %vm3687, %v3128, -inf
        %v3758 = vsel %vm3687, %v3239, -inf
        %v3759 = vsel %vm3687, %v3241, -inf
        %v3760 = vsel %vm3688, %v2906, -inf
        %v3761 = vsel %vm3688, %v2908, -inf
        %v3762 = vsel %vm3688, %v3019, -inf
        %v3763 = vsel %vm3688, %v3021, -inf
        %v3764 = vsel %vm3688, %v3132, -inf
        %v3765 = vsel %vm3688, %v3134, -inf
        %v3766 = vsel %vm3688, %v3245, -inf
        %v3767 = vsel %vm3688, %v3247, -inf
        %v3768 = vsel %vm3689, %v2910, -inf
        %v3769 = vsel %vm3689, %v2912, -inf
        %v3770 = vsel %vm3689, %v3023, -inf
        %v3771 = vsel %vm3689, %v3025, -inf
        %v3772 = vsel %vm3689, %v3136, -inf
        %v3773 = vsel %vm3689, %v3138, -inf
        %v3774 = vsel %vm3689, %v3249, -inf
        %v3775 = vsel %vm3689, %v3251, -inf
        %v3776 = vsel %vm3690, %v2916, -inf
        %v3777 = vsel %vm3690, %v2918, -inf
        %v3778 = vsel %vm3690, %v3029, -inf
        %v3779 = vsel %vm3690, %v3031, -inf
        %v3780 = vsel %vm3690, %v3142, -inf
        %v3781 = vsel %vm3690, %v3144, -inf
        %v3782 = vsel %vm3690, %v3255, -inf
        %v3783 = vsel %vm3690, %v3257, -inf
        %v3784 = vsel %vm3691, %v2920, -inf
        %v3785 = vsel %vm3691, %v2922, -inf
        %v3786 = vsel %vm3691, %v3033, -inf
        %v3787 = vsel %vm3691, %v3035, -inf
        %v3788 = vsel %vm3691, %v3146, -inf
        %v3789 = vsel %vm3691, %v3148, -inf
        %v3790 = vsel %vm3691, %v3259, -inf
        %v3791 = vsel %vm3691, %v3261, -inf
        %v3792 = vsel %vm3692, %v2926, -inf
        %v3793 = vsel %vm3692, %v2928, -inf
        %v3794 = vsel %vm3692, %v3039, -inf
        %v3795 = vsel %vm3692, %v3041, -inf
        %v3796 = vsel %vm3692, %v3152, -inf
        %v3797 = vsel %vm3692, %v3154, -inf
        %v3798 = vsel %vm3692, %v3265, -inf
        %v3799 = vsel %vm3692, %v3267, -inf
        %v3800 = vsel %vm3693, %v2930, -inf
        %v3801 = vsel %vm3693, %v2932, -inf
        %v3802 = vsel %vm3693, %v3043, -inf
        %v3803 = vsel %vm3693, %v3045, -inf
        %v3804 = vsel %vm3693, %v3156, -inf
        %v3805 = vsel %vm3693, %v3158, -inf
        %v3806 = vsel %vm3693, %v3269, -inf
        %v3807 = vsel %vm3693, %v3271, -inf
        %v3808 = vsel %vm3694, %v2936, -inf
        %v3809 = vsel %vm3694, %v2938, -inf
        %v3810 = vsel %vm3694, %v3049, -inf
        %v3811 = vsel %vm3694, %v3051, -inf
        %v3812 = vsel %vm3694, %v3162, -inf
        %v3813 = vsel %vm3694, %v3164, -inf
        %v3814 = vsel %vm3694, %v3275, -inf
        %v3815 = vsel %vm3694, %v3277, -inf
        %v3816 = vsel %vm3695, %v2940, -inf
        %v3817 = vsel %vm3695, %v2942, -inf
        %v3818 = vsel %vm3695, %v3053, -inf
        %v3819 = vsel %vm3695, %v3055, -inf
        %v3820 = vsel %vm3695, %v3166, -inf
        %v3821 = vsel %vm3695, %v3168, -inf
        %v3822 = vsel %vm3695, %v3279, -inf
        %v3823 = vsel %vm3695, %v3281, -inf
        %v3824 = vld [vmem:[%s404] sm:$0xff]
        %v3825 = vmax.f32 %v3696, %v3704
        %v3826 = vmax.f32 %v3825, %v3712
        %v3827 = vmax.f32 %v3826, %v3720
        %v3828 = vmax.f32 %v3827, %v3728
        %v3829 = vmax.f32 %v3828, %v3736
        %v3830 = vmax.f32 %v3829, %v3744
        %v3831 = vmax.f32 %v3830, %v3752
        %v3832 = vmax.f32 %v3831, %v3760
        %v3833 = vmax.f32 %v3832, %v3768
        %v3834 = vmax.f32 %v3833, %v3776
        %v3835 = vmax.f32 %v3834, %v3784
        %v3836 = vmax.f32 %v3835, %v3792
        %v3837 = vmax.f32 %v3836, %v3800
        %v3838 = vmax.f32 %v3837, %v3808
        %v3839 = vmax.f32 %v3838, %v3816
        %v3840 = vrot.slane %v3839, 4
        %v3841 = vmax.f32 %v3839, %v3840
        %v3842 = vrot.slane %v3841, 2
        %v3843 = vmax.f32 %v3841, %v3842
        %v3844 = vrot.slane %v3843, 1
        %v3845 = vmax.f32 %v3843, %v3844
        %v3846 = vmax.f32 %v3697, %v3705
        %v3847 = vmax.f32 %v3846, %v3713
        %v3848 = vmax.f32 %v3847, %v3721
        %v3849 = vmax.f32 %v3848, %v3729
        %v3850 = vmax.f32 %v3849, %v3737
        %v3851 = vmax.f32 %v3850, %v3745
        %v3852 = vmax.f32 %v3851, %v3753
        %v3853 = vmax.f32 %v3852, %v3761
        %v3854 = vmax.f32 %v3853, %v3769
        %v3855 = vmax.f32 %v3854, %v3777
        %v3856 = vmax.f32 %v3855, %v3785
        %v3857 = vmax.f32 %v3856, %v3793
        %v3858 = vmax.f32 %v3857, %v3801
        %v3859 = vmax.f32 %v3858, %v3809
        %v3860 = vmax.f32 %v3859, %v3817
        %v3861 = vrot.slane %v3860, 4
        %v3862 = vmax.f32 %v3860, %v3861
        %v3863 = vrot.slane %v3862, 2
        %v3864 = vmax.f32 %v3862, %v3863
        %v3865 = vrot.slane %v3864, 1
        %v3866 = vmax.f32 %v3864, %v3865
        %v3867 = vmax.f32 %v3698, %v3706
        %v3868 = vmax.f32 %v3867, %v3714
        %v3869 = vmax.f32 %v3868, %v3722
        %v3870 = vmax.f32 %v3869, %v3730
        %v3871 = vmax.f32 %v3870, %v3738
        %v3872 = vmax.f32 %v3871, %v3746
        %v3873 = vmax.f32 %v3872, %v3754
        %v3874 = vmax.f32 %v3873, %v3762
        %v3875 = vmax.f32 %v3874, %v3770
        %v3876 = vmax.f32 %v3875, %v3778
        %v3877 = vmax.f32 %v3876, %v3786
        %v3878 = vmax.f32 %v3877, %v3794
        %v3879 = vmax.f32 %v3878, %v3802
        %v3880 = vmax.f32 %v3879, %v3810
        %v3881 = vmax.f32 %v3880, %v3818
        %v3882 = vrot.slane %v3881, 4
        %v3883 = vmax.f32 %v3881, %v3882
        %v3884 = vrot.slane %v3883, 2
        %v3885 = vmax.f32 %v3883, %v3884
        %v3886 = vrot.slane %v3885, 1
        %v3887 = vmax.f32 %v3885, %v3886
        %v3888 = vmax.f32 %v3699, %v3707
        %v3889 = vmax.f32 %v3888, %v3715
        %v3890 = vmax.f32 %v3889, %v3723
        %v3891 = vmax.f32 %v3890, %v3731
        %v3892 = vmax.f32 %v3891, %v3739
        %v3893 = vmax.f32 %v3892, %v3747
        %v3894 = vmax.f32 %v3893, %v3755
        %v3895 = vmax.f32 %v3894, %v3763
        %v3896 = vmax.f32 %v3895, %v3771
        %v3897 = vmax.f32 %v3896, %v3779
        %v3898 = vmax.f32 %v3897, %v3787
        %v3899 = vmax.f32 %v3898, %v3795
        %v3900 = vmax.f32 %v3899, %v3803
        %v3901 = vmax.f32 %v3900, %v3811
        %v3902 = vmax.f32 %v3901, %v3819
        %v3903 = vrot.slane %v3902, 4
        %v3904 = vmax.f32 %v3902, %v3903
        %v3905 = vrot.slane %v3904, 2
        %v3906 = vmax.f32 %v3904, %v3905
        %v3907 = vrot.slane %v3906, 1
        %v3908 = vmax.f32 %v3906, %v3907
        %v3909 = vmax.f32 %v3700, %v3708
        %v3910 = vmax.f32 %v3909, %v3716
        %v3911 = vmax.f32 %v3910, %v3724
        %v3912 = vmax.f32 %v3911, %v3732
        %v3913 = vmax.f32 %v3912, %v3740
        %v3914 = vmax.f32 %v3913, %v3748
        %v3915 = vmax.f32 %v3914, %v3756
        %v3916 = vmax.f32 %v3915, %v3764
        %v3917 = vmax.f32 %v3916, %v3772
        %v3918 = vmax.f32 %v3917, %v3780
        %v3919 = vmax.f32 %v3918, %v3788
        %v3920 = vmax.f32 %v3919, %v3796
        %v3921 = vmax.f32 %v3920, %v3804
        %v3922 = vmax.f32 %v3921, %v3812
        %v3923 = vmax.f32 %v3922, %v3820
        %v3924 = vrot.slane %v3923, 4
        %v3925 = vmax.f32 %v3923, %v3924
        %v3926 = vrot.slane %v3925, 2
        %v3927 = vmax.f32 %v3925, %v3926
        %v3928 = vrot.slane %v3927, 1
        %v3929 = vmax.f32 %v3927, %v3928
        %v3930 = vmax.f32 %v3701, %v3709
        %v3931 = vmax.f32 %v3930, %v3717
        %v3932 = vmax.f32 %v3931, %v3725
        %v3933 = vmax.f32 %v3932, %v3733
        %v3934 = vmax.f32 %v3933, %v3741
        %v3935 = vmax.f32 %v3934, %v3749
        %v3936 = vmax.f32 %v3935, %v3757
        %v3937 = vmax.f32 %v3936, %v3765
        %v3938 = vmax.f32 %v3937, %v3773
        %v3939 = vmax.f32 %v3938, %v3781
        %v3940 = vmax.f32 %v3939, %v3789
        %v3941 = vmax.f32 %v3940, %v3797
        %v3942 = vmax.f32 %v3941, %v3805
        %v3943 = vmax.f32 %v3942, %v3813
        %v3944 = vmax.f32 %v3943, %v3821
        %v3945 = vrot.slane %v3944, 4
        %v3946 = vmax.f32 %v3944, %v3945
        %v3947 = vrot.slane %v3946, 2
        %v3948 = vmax.f32 %v3946, %v3947
        %v3949 = vrot.slane %v3948, 1
        %v3950 = vmax.f32 %v3948, %v3949
        %v3951 = vmax.f32 %v3702, %v3710
        %v3952 = vmax.f32 %v3951, %v3718
        %v3953 = vmax.f32 %v3952, %v3726
        %v3954 = vmax.f32 %v3953, %v3734
        %v3955 = vmax.f32 %v3954, %v3742
        %v3956 = vmax.f32 %v3955, %v3750
        %v3957 = vmax.f32 %v3956, %v3758
        %v3958 = vmax.f32 %v3957, %v3766
        %v3959 = vmax.f32 %v3958, %v3774
        %v3960 = vmax.f32 %v3959, %v3782
        %v3961 = vmax.f32 %v3960, %v3790
        %v3962 = vmax.f32 %v3961, %v3798
        %v3963 = vmax.f32 %v3962, %v3806
        %v3964 = vmax.f32 %v3963, %v3814
        %v3965 = vmax.f32 %v3964, %v3822
        %v3966 = vrot.slane %v3965, 4
        %v3967 = vmax.f32 %v3965, %v3966
        %v3968 = vrot.slane %v3967, 2
        %v3969 = vmax.f32 %v3967, %v3968
        %v3970 = vrot.slane %v3969, 1
        %v3971 = vmax.f32 %v3969, %v3970
        %v3972 = vmax.f32 %v3703, %v3711
        %v3973 = vmax.f32 %v3972, %v3719
        %v3974 = vmax.f32 %v3973, %v3727
        %v3975 = vmax.f32 %v3974, %v3735
        %v3976 = vmax.f32 %v3975, %v3743
        %v3977 = vmax.f32 %v3976, %v3751
        %v3978 = vmax.f32 %v3977, %v3759
        %v3979 = vmax.f32 %v3978, %v3767
        %v3980 = vmax.f32 %v3979, %v3775
        %v3981 = vmax.f32 %v3980, %v3783
        %v3982 = vmax.f32 %v3981, %v3791
        %v3983 = vmax.f32 %v3982, %v3799
        %v3984 = vmax.f32 %v3983, %v3807
        %v3985 = vmax.f32 %v3984, %v3815
        %v3986 = vmax.f32 %v3985, %v3823
        %v3987 = vrot.slane %v3986, 4
        %v3988 = vmax.f32 %v3986, %v3987
        %v3989 = vrot.slane %v3988, 2
        %v3990 = vmax.f32 %v3988, %v3989
        %v3991 = vrot.slane %v3990, 1
        %v3992 = vmax.f32 %v3990, %v3991
        %v4001 = vcombine.low %v3845, %v3866
        %v4002 = vcombine.low %v3887, %v3908
        %v4003 = vcombine.low %v3929, %v3950
        %v4004 = vcombine.low %v3971, %v3992
        %v4006 = vunpack.c.l.s4 1966171168
        %v4007 = vunpack.c.0.s8 %v4006
        %v4008 = vlaneseq
        %v4009 = vshrl.u32 %v4008, 7
        %v4010 = vsub.s32 %v4007, %v4009
        %v4011 = vrot.slane %v4001, %v4010
        %v4013 = vunpack.c.l.s4 1966171168
        %v4014 = vunpack.c.0.s8 %v4013
        %v4015 = vlaneseq
        %v4016 = vshrl.u32 %v4015, 7
        %v4017 = vsub.s32 %v4014, %v4016
        %v4018 = vrot.slane %v4002, %v4017
        %v4020 = vunpack.c.l.s4 1966171168
        %v4021 = vunpack.c.0.s8 %v4020
        %v4022 = vlaneseq
        %v4023 = vshrl.u32 %v4022, 7
        %v4024 = vsub.s32 %v4021, %v4023
        %v4025 = vrot.slane %v4003, %v4024
        %v4027 = vunpack.c.l.s4 1966171168
        %v4028 = vunpack.c.0.s8 %v4027
        %v4029 = vlaneseq
        %v4030 = vshrl.u32 %v4029, 7
        %v4031 = vsub.s32 %v4028, %v4030
        %v4032 = vrot.slane %v4004, %v4031
        %v4033 = vcombine.low %v4011, %v4018
        %v4034 = vcombine.low %v4025, %v4032
        %v4036 = vunpack.c.l.s4 1966171168
        %v4037 = vunpack.c.0.s8 %v4036
        %v4038 = vlaneseq
        %v4039 = vshrl.u32 %v4038, 7
        %v4040 = vsub.s32 %v4037, %v4039
        %v4041 = vrot.slane %v4033, %v4040
        %v4043 = vunpack.c.l.s4 1966171168
        %v4044 = vunpack.c.0.s8 %v4043
        %v4045 = vlaneseq
        %v4046 = vshrl.u32 %v4045, 7
        %v4047 = vsub.s32 %v4044, %v4046
        %v4048 = vrot.slane %v4034, %v4047
        %v4049 = vcombine.low %v4041, %v4048
        %v4051 = vmax.f32 %v3824, %v4049
        %4052 = vst [vmem:[%s404] sm:$0xff] %v4051
      $region64: #{stnkd_forward.6} parent=51 // pred_fallthru
        _
      %p4053 = scmp.lt.s32.totalorder %s26, 3
      %s4054 = scalar_select %p4053, %s26, 3
      %s4055 = scalar_lea.vmem %s8, %s4054
      %p4056 = scmp.lt.s32.totalorder %s26, 3
      %s4057 = scalar_select %p4056, %s26, 3
      %s4058 = smul.addr %s4057, 8
      %s4059 = scalar_lea.vmem %s9, %s4058
      %p4060 = scmp.lt.s32.totalorder %s26, 3
      %s4061 = scalar_select %p4060, %s26, 3
      %s4062 = smul.addr %s4061, 8
      %s4063 = scalar_lea.vmem %s10, %s4062
      // Predicated region
      $region65: #{stnkd_forward.6} parent=51 // pred_check
        %p4064 = pneg %p227
      $region66: #{stnkd_forward.6} parent=51 // pred_check_branch
        %4066 = sbr.rel (%p4064) target = $region68
      $region67: #{stnkd_forward.6} parent=51 // pred_region
        _
      $region68: #{stnkd_forward.6} parent=51 // pred_fallthru
        _
      // Predicated region
      $region69: #{stnkd_forward.6} parent=51 // pred_check
        %p4067 = pneg %p253
      $region70: #{stnkd_forward.6} parent=51 // pred_check_branch
        %4069 = sbr.rel (%p4067) target = $region72
      $region71: #{stnkd_forward.6} parent=51 // pred_region
        _
      $region72: #{stnkd_forward.6} parent=51 // pred_fallthru
        _
      // Predicated region
      $region73: #{stnkd_forward.6} parent=51 // pred_check
        %p4070 = pneg %p279
      $region74: #{stnkd_forward.6} parent=51 // pred_check_branch
        %4072 = sbr.rel (%p4070) target = $region76
      $region75: #{stnkd_forward.6} parent=51 // pred_region
        _
      $region76: #{stnkd_forward.6} parent=51 // pred_fallthru
        _
    $region52: #{stnkd_forward.6} parent=5 // pred_fallthru
      _
    %p4073 = scmp.le.s32.totalorder 2, %s17
    // Predicated region
    $region77: #{stnkd_forward.6} parent=5 // pred_check
      %p4074 = pneg %p4073
    $region78: #{stnkd_forward.6} parent=5 // pred_check_branch
      %4076 = sbr.rel (%p4074) target = $region80
    $region79: #{stnkd_forward.6} parent=5 // pred_region
      %s4077 = ssub.s32 %s17, 2
      // Predicated region
      $region81: #{stnkd_forward.6} parent=79 // pred_check
        %p4078 = pneg %p233
      $region82: #{stnkd_forward.6} parent=79 // pred_check_branch
        %4080 = sbr.rel (%p4078) target = $region84
      $region83: #{stnkd_forward.6} parent=79 // pred_region
        %p4081 = scmp.lt.s32.totalorder %s28, 3
        %s4082 = scalar_select %p4081, %s28, 3
        %s4083 = scalar_lea.vmem %s8, %s4082
      $region84: #{stnkd_forward.6} parent=79 // pred_fallthru
        _
      // Predicated region
      $region85: #{stnkd_forward.6} parent=79 // pred_check
        %p4084 = pneg %p259
      $region86: #{stnkd_forward.6} parent=79 // pred_check_branch
        %4086 = sbr.rel (%p4084) target = $region88
      $region87: #{stnkd_forward.6} parent=79 // pred_region
        %p4087 = scmp.lt.s32.totalorder %s28, 3
        %s4088 = scalar_select %p4087, %s28, 3
        %s4089 = smul.addr %s4088, 8
        %s4090 = scalar_lea.vmem %s9, %s4089
      $region88: #{stnkd_forward.6} parent=79 // pred_fallthru
        _
      // Predicated region
      $region89: #{stnkd_forward.6} parent=79 // pred_check
        %p4091 = pneg %p285
      $region90: #{stnkd_forward.6} parent=79 // pred_check_branch
        %4093 = sbr.rel (%p4091) target = $region92
      $region91: #{stnkd_forward.6} parent=79 // pred_region
        %p4094 = scmp.lt.s32.totalorder %s28, 3
        %s4095 = scalar_select %p4094, %s28, 3
        %s4096 = smul.addr %s4095, 8
        %s4097 = scalar_lea.vmem %s10, %s4096
      $region92: #{stnkd_forward.6} parent=79 // pred_fallthru
        _
    $region80: #{stnkd_forward.6} parent=5 // pred_fallthru
      _
  $region6: #{stnkd_forward.6} parent=0 // loop_footer
    %s21 = sadd.s32 1, %s17
  $region7: #{stnkd_forward.6} parent=0 // loop_footer_branch
    %16 = sbr.rel target = $region3
  $region8: #{stnkd_forward.6} parent=0 // loop_exit
    _

// kernel: stnkd_forward.7
$region0: #{stnkd_forward.7}
  #allocation0 [shape = 'u32[]', space=smem, size = 0x4, offset = 0x4, fixed_abs, tag = 'smem constant byte address 0x4 - core index']
  #allocation1 [shape = 'u32[144,128]{1,0:T(1,128)}', space=vmem, size = 0x12000, scoped, tag = 'internal scratch']
  %s0 = inlined_call_operand.vmem [shape: f32[4,1024], index: 0, kind: input, shape index: {}]
  %s1 = inlined_call_operand.vmem [shape: f32[1,1024], index: 1, kind: input, shape index: {}]
  %s2 = inlined_call_operand.vmem [shape: f32[1,1024], index: 2, kind: input, shape index: {}]
  %s3 = inlined_call_operand.vmem [shape: bf16[1024,512], index: 3, kind: input, shape index: {}]
  %s4 = inlined_call_operand.vmem [shape: f32[1,512], index: 4, kind: input, shape index: {}]
  %s5 = inlined_call_operand.vmem [shape: f32[1,512], index: 5, kind: input, shape index: {}]
  %s6 = inlined_call_operand.vmem [shape: bf16[512,256], index: 6, kind: input, shape index: {}]
  %s7 = inlined_call_operand.vmem [shape: f32[1,256], index: 7, kind: input, shape index: {}]
  %s8 = inlined_call_operand.vmem [shape: f32[1,256], index: 8, kind: input, shape index: {}]
  %s9 = inlined_call_operand.vmem [shape: bf16[256,256], index: 9, kind: input, shape index: {}]
  %s10 = inlined_call_operand.vmem [shape: f32[1,256], index: 10, kind: input, shape index: {}]
  %s11 = inlined_call_operand.vmem [shape: f32[4,256], index: 11, kind: output, shape index: {}]
  %s12 = sld [smem:[#allocation0]]
  $region54: #{stnkd_forward.7} parent=0
    _
  %s14 = ssub.s32 1, %s12
  %s15 = scalar_select 0, %s14, %s12
  // Predicated region
  $region2: #{stnkd_forward.7} parent=0 // pred_check
    _
  $region3: #{stnkd_forward.7} parent=0 // pred_check_branch
    %17 = sbr.rel (0) target = $region5
  $region4: #{stnkd_forward.7} parent=0 // pred_region
    _
  $region5: #{stnkd_forward.7} parent=0 // pred_fallthru
    _
  // Predicated region
  $region6: #{stnkd_forward.7} parent=0 // pred_check
    _
  $region7: #{stnkd_forward.7} parent=0 // pred_check_branch
    %19 = sbr.rel (0) target = $region9
  $region8: #{stnkd_forward.7} parent=0 // pred_region
    _
  $region9: #{stnkd_forward.7} parent=0 // pred_fallthru
    _
  // Predicated region
  $region10: #{stnkd_forward.7} parent=0 // pred_check
    _
  $region11: #{stnkd_forward.7} parent=0 // pred_check_branch
    %21 = sbr.rel (0) target = $region13
  $region12: #{stnkd_forward.7} parent=0 // pred_region
    _
  $region13: #{stnkd_forward.7} parent=0 // pred_fallthru
    _
  // Predicated region
  $region14: #{stnkd_forward.7} parent=0 // pred_check
    _
  $region15: #{stnkd_forward.7} parent=0 // pred_check_branch
    %23 = sbr.rel (0) target = $region17
  $region16: #{stnkd_forward.7} parent=0 // pred_region
    _
  $region17: #{stnkd_forward.7} parent=0 // pred_fallthru
    _
  // Predicated region
  $region18: #{stnkd_forward.7} parent=0 // pred_check
    _
  $region19: #{stnkd_forward.7} parent=0 // pred_check_branch
    %25 = sbr.rel (0) target = $region21
  $region20: #{stnkd_forward.7} parent=0 // pred_region
    _
  $region21: #{stnkd_forward.7} parent=0 // pred_fallthru
    _
  // Predicated region
  $region22: #{stnkd_forward.7} parent=0 // pred_check
    _
  $region23: #{stnkd_forward.7} parent=0 // pred_check_branch
    %27 = sbr.rel (0) target = $region25
  $region24: #{stnkd_forward.7} parent=0 // pred_region
    _
  $region25: #{stnkd_forward.7} parent=0 // pred_fallthru
    _
  // Predicated region
  $region26: #{stnkd_forward.7} parent=0 // pred_check
    _
  $region27: #{stnkd_forward.7} parent=0 // pred_check_branch
    %29 = sbr.rel (0) target = $region29
  $region28: #{stnkd_forward.7} parent=0 // pred_region
    _
  $region29: #{stnkd_forward.7} parent=0 // pred_fallthru
    _
  // Predicated region
  $region30: #{stnkd_forward.7} parent=0 // pred_check
    _
  $region31: #{stnkd_forward.7} parent=0 // pred_check_branch
    %31 = sbr.rel (0) target = $region33
  $region32: #{stnkd_forward.7} parent=0 // pred_region
    _
  $region33: #{stnkd_forward.7} parent=0 // pred_fallthru
    _
  // Predicated region
  $region34: #{stnkd_forward.7} parent=0 // pred_check
    _
  $region35: #{stnkd_forward.7} parent=0 // pred_check_branch
    %33 = sbr.rel (0) target = $region37
  $region36: #{stnkd_forward.7} parent=0 // pred_region
    _
  $region37: #{stnkd_forward.7} parent=0 // pred_fallthru
    _
  // Predicated region
  $region38: #{stnkd_forward.7} parent=0 // pred_check
    _
  $region39: #{stnkd_forward.7} parent=0 // pred_check_branch
    %35 = sbr.rel (0) target = $region41
  $region40: #{stnkd_forward.7} parent=0 // pred_region
    _
  $region41: #{stnkd_forward.7} parent=0 // pred_fallthru
    _
  // Predicated region
  $region42: #{stnkd_forward.7} parent=0 // pred_check
    _
  $region43: #{stnkd_forward.7} parent=0 // pred_check_branch
    %37 = sbr.rel (0) target = $region45
  $region44: #{stnkd_forward.7} parent=0 // pred_region
    _
  $region45: #{stnkd_forward.7} parent=0 // pred_fallthru
    _
  %v38 = vld [vmem:[%s0] sm:$0xff]
  %v39 = vld [vmem:[%s0 + $0x8] sm:$0xff]
  %v40 = vld [vmem:[%s0 + $0x10] sm:$0xff]
  %v41 = vld [vmem:[%s0 + $0x18] sm:$0xff]
  %v42 = vld [vmem:[%s1] sm:$0xff]
  %v44 = vlaneseq
  %v45 = vshrl.u32 %v44, 7
  %v46 = vsub.s32 0, %v45
  %v47 = vrot.slane %v42, %v46
  %v48 = vlaneseq
  %v49 = vshrl.u32 %v48, 7
  %v50 = vsub.s32 1, %v49
  %v51 = vrot.slane %v42, %v50
  %v52 = vlaneseq
  %v53 = vshrl.u32 %v52, 7
  %v54 = vsub.s32 2, %v53
  %v55 = vrot.slane %v42, %v54
  %v56 = vlaneseq
  %v57 = vshrl.u32 %v56, 7
  %v58 = vsub.s32 3, %v57
  %v59 = vrot.slane %v42, %v58
  %v60 = vlaneseq
  %v61 = vshrl.u32 %v60, 7
  %v62 = vsub.s32 4, %v61
  %v63 = vrot.slane %v42, %v62
  %v64 = vlaneseq
  %v65 = vshrl.u32 %v64, 7
  %v66 = vsub.s32 5, %v65
  %v67 = vrot.slane %v42, %v66
  %v68 = vlaneseq
  %v69 = vshrl.u32 %v68, 7
  %v70 = vsub.s32 6, %v69
  %v71 = vrot.slane %v42, %v70
  %v72 = vlaneseq
  %v73 = vshrl.u32 %v72, 7
  %v74 = vsub.s32 7, %v73
  %v75 = vrot.slane %v42, %v74
  %v76 = vcombine.low %v47, %v51
  %v77 = vcombine.low %v55, %v59
  %v78 = vcombine.low %v63, %v67
  %v79 = vcombine.low %v71, %v75
  %v84 = vmul.f32 %v38, %v76
  %v85 = vmul.f32 %v39, %v77
  %v86 = vmul.f32 %v40, %v78
  %v87 = vmul.f32 %v41, %v79
  %v88 = vld [vmem:[%s2] sm:$0xff]
  %v90 = vlaneseq
  %v91 = vshrl.u32 %v90, 7
  %v92 = vsub.s32 0, %v91
  %v93 = vrot.slane %v88, %v92
  %v94 = vlaneseq
  %v95 = vshrl.u32 %v94, 7
  %v96 = vsub.s32 1, %v95
  %v97 = vrot.slane %v88, %v96
  %v98 = vlaneseq
  %v99 = vshrl.u32 %v98, 7
  %v100 = vsub.s32 2, %v99
  %v101 = vrot.slane %v88, %v100
  %v102 = vlaneseq
  %v103 = vshrl.u32 %v102, 7
  %v104 = vsub.s32 3, %v103
  %v105 = vrot.slane %v88, %v104
  %v106 = vlaneseq
  %v107 = vshrl.u32 %v106, 7
  %v108 = vsub.s32 4, %v107
  %v109 = vrot.slane %v88, %v108
  %v110 = vlaneseq
  %v111 = vshrl.u32 %v110, 7
  %v112 = vsub.s32 5, %v111
  %v113 = vrot.slane %v88, %v112
  %v114 = vlaneseq
  %v115 = vshrl.u32 %v114, 7
  %v116 = vsub.s32 6, %v115
  %v117 = vrot.slane %v88, %v116
  %v118 = vlaneseq
  %v119 = vshrl.u32 %v118, 7
  %v120 = vsub.s32 7, %v119
  %v121 = vrot.slane %v88, %v120
  %v122 = vcombine.low %v93, %v97
  %v123 = vcombine.low %v101, %v105
  %v124 = vcombine.low %v109, %v113
  %v125 = vcombine.low %v117, %v121
  %v130 = vadd.f32 %v84, %v122
  %v131 = vadd.f32 %v85, %v123
  %v132 = vadd.f32 %v86, %v124
  %v133 = vadd.f32 %v87, %v125
  %v134 = vmax.f32 %v130, 0.0
  %v135 = vmax.f32 %v131, 0.0
  %v136 = vmax.f32 %v132, 0.0
  %v137 = vmax.f32 %v133, 0.0
  %v142 = vcombine.high %v134, %v134
  %v143 = vcombine.high %v135, %v135
  %v144 = vcombine.high %v136, %v136
  %v145 = vcombine.high %v137, %v137
  %v150 = vpack.c.bf16 %v134, %v134
  %v151 = vpack.c.bf16 %v142, %v142
  %v152 = vpack.c.bf16 %v135, %v135
  %v153 = vpack.c.bf16 %v143, %v143
  %v154 = vpack.c.bf16 %v136, %v136
  %v155 = vpack.c.bf16 %v144, %v144
  %v156 = vpack.c.bf16 %v137, %v137
  %v157 = vpack.c.bf16 %v145, %v145
  %v158 = vld [vmem:[%s3] sm:$0xff]
  %v159 = vld [vmem:[%s3 + $0x8] sm:$0xff]
  %v160 = vld [vmem:[%s3 + $0x10] sm:$0xff]
  %v161 = vld [vmem:[%s3 + $0x18] sm:$0xff]
  %v162 = vld [vmem:[%s3 + $0x20] sm:$0xff]
  %v163 = vld [vmem:[%s3 + $0x28] sm:$0xff]
  %v164 = vld [vmem:[%s3 + $0x30] sm:$0xff]
  %v165 = vld [vmem:[%s3 + $0x38] sm:$0xff]
  %v166 = vld [vmem:[%s3 + $0x40] sm:$0xff]
  %v167 = vld [vmem:[%s3 + $0x48] sm:$0xff]
  %v168 = vld [vmem:[%s3 + $0x50] sm:$0xff]
  %v169 = vld [vmem:[%s3 + $0x58] sm:$0xff]
  %v170 = vld [vmem:[%s3 + $0x60] sm:$0xff]
  %v171 = vld [vmem:[%s3 + $0x68] sm:$0xff]
  %v172 = vld [vmem:[%s3 + $0x70] sm:$0xff]
  %v173 = vld [vmem:[%s3 + $0x78] sm:$0xff]
  %v174 = vld [vmem:[%s3 + $0x80] sm:$0xff]
  %v175 = vld [vmem:[%s3 + $0x88] sm:$0xff]
  %v176 = vld [vmem:[%s3 + $0x90] sm:$0xff]
  %v177 = vld [vmem:[%s3 + $0x98] sm:$0xff]
  %v178 = vld [vmem:[%s3 + $0xa0] sm:$0xff]
  %v179 = vld [vmem:[%s3 + $0xa8] sm:$0xff]
  %v180 = vld [vmem:[%s3 + $0xb0] sm:$0xff]
  %v181 = vld [vmem:[%s3 + $0xb8] sm:$0xff]
  %v182 = vld [vmem:[%s3 + $0xc0] sm:$0xff]
  %v183 = vld [vmem:[%s3 + $0xc8] sm:$0xff]
  %v184 = vld [vmem:[%s3 + $0xd0] sm:$0xff]
  %v185 = vld [vmem:[%s3 + $0xd8] sm:$0xff]
  %v186 = vld [vmem:[%s3 + $0xe0] sm:$0xff]
  %v187 = vld [vmem:[%s3 + $0xe8] sm:$0xff]
  %v188 = vld [vmem:[%s3 + $0xf0] sm:$0xff]
  %v189 = vld [vmem:[%s3 + $0xf8] sm:$0xff]
  %v190 = vld [vmem:[%s3 + $0x100] sm:$0xff]
  %v191 = vld [vmem:[%s3 + $0x108] sm:$0xff]
  %v192 = vld [vmem:[%s3 + $0x110] sm:$0xff]
  %v193 = vld [vmem:[%s3 + $0x118] sm:$0xff]
  %v194 = vld [vmem:[%s3 + $0x120] sm:$0xff]
  %v195 = vld [vmem:[%s3 + $0x128] sm:$0xff]
  %v196 = vld [vmem:[%s3 + $0x130] sm:$0xff]
  %v197 = vld [vmem:[%s3 + $0x138] sm:$0xff]
  %v198 = vld [vmem:[%s3 + $0x140] sm:$0xff]
  %v199 = vld [vmem:[%s3 + $0x148] sm:$0xff]
  %v200 = vld [vmem:[%s3 + $0x150] sm:$0xff]
  %v201 = vld [vmem:[%s3 + $0x158] sm:$0xff]
  %v202 = vld [vmem:[%s3 + $0x160] sm:$0xff]
  %v203 = vld [vmem:[%s3 + $0x168] sm:$0xff]
  %v204 = vld [vmem:[%s3 + $0x170] sm:$0xff]
  %v205 = vld [vmem:[%s3 + $0x178] sm:$0xff]
  %v206 = vld [vmem:[%s3 + $0x180] sm:$0xff]
  %v207 = vld [vmem:[%s3 + $0x188] sm:$0xff]
  %v208 = vld [vmem:[%s3 + $0x190] sm:$0xff]
  %v209 = vld [vmem:[%s3 + $0x198] sm:$0xff]
  %v210 = vld [vmem:[%s3 + $0x1a0] sm:$0xff]
  %v211 = vld [vmem:[%s3 + $0x1a8] sm:$0xff]
  %v212 = vld [vmem:[%s3 + $0x1b0] sm:$0xff]
  %v213 = vld [vmem:[%s3 + $0x1b8] sm:$0xff]
  %v214 = vld [vmem:[%s3 + $0x1c0] sm:$0xff]
  %v215 = vld [vmem:[%s3 + $0x1c8] sm:$0xff]
  %v216 = vld [vmem:[%s3 + $0x1d0] sm:$0xff]
  %v217 = vld [vmem:[%s3 + $0x1d8] sm:$0xff]
  %v218 = vld [vmem:[%s3 + $0x1e0] sm:$0xff]
  %v219 = vld [vmem:[%s3 + $0x1e8] sm:$0xff]
  %v220 = vld [vmem:[%s3 + $0x1f0] sm:$0xff]
  %v221 = vld [vmem:[%s3 + $0x1f8] sm:$0xff]
  %v222 = vld [vmem:[%s3 + $0x200] sm:$0xff]
  %v223 = vld [vmem:[%s3 + $0x208] sm:$0xff]
  %v224 = vld [vmem:[%s3 + $0x210] sm:$0xff]
  %v225 = vld [vmem:[%s3 + $0x218] sm:$0xff]
  %v226 = vld [vmem:[%s3 + $0x220] sm:$0xff]
  %v227 = vld [vmem:[%s3 + $0x228] sm:$0xff]
  %v228 = vld [vmem:[%s3 + $0x230] sm:$0xff]
  %v229 = vld [vmem:[%s3 + $0x238] sm:$0xff]
  %v230 = vld [vmem:[%s3 + $0x240] sm:$0xff]
  %v231 = vld [vmem:[%s3 + $0x248] sm:$0xff]
  %v232 = vld [vmem:[%s3 + $0x250] sm:$0xff]
  %v233 = vld [vmem:[%s3 + $0x258] sm:$0xff]
  %v234 = vld [vmem:[%s3 + $0x260] sm:$0xff]
  %v235 = vld [vmem:[%s3 + $0x268] sm:$0xff]
  %v236 = vld [vmem:[%s3 + $0x270] sm:$0xff]
  %v237 = vld [vmem:[%s3 + $0x278] sm:$0xff]
  %v238 = vld [vmem:[%s3 + $0x280] sm:$0xff]
  %v239 = vld [vmem:[%s3 + $0x288] sm:$0xff]
  %v240 = vld [vmem:[%s3 + $0x290] sm:$0xff]
  %v241 = vld [vmem:[%s3 + $0x298] sm:$0xff]
  %v242 = vld [vmem:[%s3 + $0x2a0] sm:$0xff]
  %v243 = vld [vmem:[%s3 + $0x2a8] sm:$0xff]
  %v244 = vld [vmem:[%s3 + $0x2b0] sm:$0xff]
  %v245 = vld [vmem:[%s3 + $0x2b8] sm:$0xff]
  %v246 = vld [vmem:[%s3 + $0x2c0] sm:$0xff]
  %v247 = vld [vmem:[%s3 + $0x2c8] sm:$0xff]
  %v248 = vld [vmem:[%s3 + $0x2d0] sm:$0xff]
  %v249 = vld [vmem:[%s3 + $0x2d8] sm:$0xff]
  %v250 = vld [vmem:[%s3 + $0x2e0] sm:$0xff]
  %v251 = vld [vmem:[%s3 + $0x2e8] sm:$0xff]
  %v252 = vld [vmem:[%s3 + $0x2f0] sm:$0xff]
  %v253 = vld [vmem:[%s3 + $0x2f8] sm:$0xff]
  %v254 = vld [vmem:[%s3 + $0x300] sm:$0xff]
  %v255 = vld [vmem:[%s3 + $0x308] sm:$0xff]
  %v256 = vld [vmem:[%s3 + $0x310] sm:$0xff]
  %v257 = vld [vmem:[%s3 + $0x318] sm:$0xff]
  %v258 = vld [vmem:[%s3 + $0x320] sm:$0xff]
  %v259 = vld [vmem:[%s3 + $0x328] sm:$0xff]
  %v260 = vld [vmem:[%s3 + $0x330] sm:$0xff]
  %v261 = vld [vmem:[%s3 + $0x338] sm:$0xff]
  %v262 = vld [vmem:[%s3 + $0x340] sm:$0xff]
  %v263 = vld [vmem:[%s3 + $0x348] sm:$0xff]
  %v264 = vld [vmem:[%s3 + $0x350] sm:$0xff]
  %v265 = vld [vmem:[%s3 + $0x358] sm:$0xff]
  %v266 = vld [vmem:[%s3 + $0x360] sm:$0xff]
  %v267 = vld [vmem:[%s3 + $0x368] sm:$0xff]
  %v268 = vld [vmem:[%s3 + $0x370] sm:$0xff]
  %v269 = vld [vmem:[%s3 + $0x378] sm:$0xff]
  %v270 = vld [vmem:[%s3 + $0x380] sm:$0xff]
  %v271 = vld [vmem:[%s3 + $0x388] sm:$0xff]
  %v272 = vld [vmem:[%s3 + $0x390] sm:$0xff]
  %v273 = vld [vmem:[%s3 + $0x398] sm:$0xff]
  %v274 = vld [vmem:[%s3 + $0x3a0] sm:$0xff]
  %v275 = vld [vmem:[%s3 + $0x3a8] sm:$0xff]
  %v276 = vld [vmem:[%s3 + $0x3b0] sm:$0xff]
  %v277 = vld [vmem:[%s3 + $0x3b8] sm:$0xff]
  %v278 = vld [vmem:[%s3 + $0x3c0] sm:$0xff]
  %v279 = vld [vmem:[%s3 + $0x3c8] sm:$0xff]
  %v280 = vld [vmem:[%s3 + $0x3d0] sm:$0xff]
  %v281 = vld [vmem:[%s3 + $0x3d8] sm:$0xff]
  %v282 = vld [vmem:[%s3 + $0x3e0] sm:$0xff]
  %v283 = vld [vmem:[%s3 + $0x3e8] sm:$0xff]
  %v284 = vld [vmem:[%s3 + $0x3f0] sm:$0xff]
  %v285 = vld [vmem:[%s3 + $0x3f8] sm:$0xff]
  %v286 = vld [vmem:[%s3 + $0x400] sm:$0xff]
  %v287 = vld [vmem:[%s3 + $0x408] sm:$0xff]
  %v288 = vld [vmem:[%s3 + $0x410] sm:$0xff]
  %v289 = vld [vmem:[%s3 + $0x418] sm:$0xff]
  %v290 = vld [vmem:[%s3 + $0x420] sm:$0xff]
  %v291 = vld [vmem:[%s3 + $0x428] sm:$0xff]
  %v292 = vld [vmem:[%s3 + $0x430] sm:$0xff]
  %v293 = vld [vmem:[%s3 + $0x438] sm:$0xff]
  %v294 = vld [vmem:[%s3 + $0x440] sm:$0xff]
  %v295 = vld [vmem:[%s3 + $0x448] sm:$0xff]
  %v296 = vld [vmem:[%s3 + $0x450] sm:$0xff]
  %v297 = vld [vmem:[%s3 + $0x458] sm:$0xff]
  %v298 = vld [vmem:[%s3 + $0x460] sm:$0xff]
  %v299 = vld [vmem:[%s3 + $0x468] sm:$0xff]
  %v300 = vld [vmem:[%s3 + $0x470] sm:$0xff]
  %v301 = vld [vmem:[%s3 + $0x478] sm:$0xff]
  %v302 = vld [vmem:[%s3 + $0x480] sm:$0xff]
  %v303 = vld [vmem:[%s3 + $0x488] sm:$0xff]
  %v304 = vld [vmem:[%s3 + $0x490] sm:$0xff]
  %v305 = vld [vmem:[%s3 + $0x498] sm:$0xff]
  %v306 = vld [vmem:[%s3 + $0x4a0] sm:$0xff]
  %v307 = vld [vmem:[%s3 + $0x4a8] sm:$0xff]
  %v308 = vld [vmem:[%s3 + $0x4b0] sm:$0xff]
  %v309 = vld [vmem:[%s3 + $0x4b8] sm:$0xff]
  %v310 = vld [vmem:[%s3 + $0x4c0] sm:$0xff]
  %v311 = vld [vmem:[%s3 + $0x4c8] sm:$0xff]
  %v312 = vld [vmem:[%s3 + $0x4d0] sm:$0xff]
  %v313 = vld [vmem:[%s3 + $0x4d8] sm:$0xff]
  %v314 = vld [vmem:[%s3 + $0x4e0] sm:$0xff]
  %v315 = vld [vmem:[%s3 + $0x4e8] sm:$0xff]
  %v316 = vld [vmem:[%s3 + $0x4f0] sm:$0xff]
  %v317 = vld [vmem:[%s3 + $0x4f8] sm:$0xff]
  %v318 = vld [vmem:[%s3 + $0x500] sm:$0xff]
  %v319 = vld [vmem:[%s3 + $0x508] sm:$0xff]
  %v320 = vld [vmem:[%s3 + $0x510] sm:$0xff]
  %v321 = vld [vmem:[%s3 + $0x518] sm:$0xff]
  %v322 = vld [vmem:[%s3 + $0x520] sm:$0xff]
  %v323 = vld [vmem:[%s3 + $0x528] sm:$0xff]
  %v324 = vld [vmem:[%s3 + $0x530] sm:$0xff]
  %v325 = vld [vmem:[%s3 + $0x538] sm:$0xff]
  %v326 = vld [vmem:[%s3 + $0x540] sm:$0xff]
  %v327 = vld [vmem:[%s3 + $0x548] sm:$0xff]
  %v328 = vld [vmem:[%s3 + $0x550] sm:$0xff]
  %v329 = vld [vmem:[%s3 + $0x558] sm:$0xff]
  %v330 = vld [vmem:[%s3 + $0x560] sm:$0xff]
  %v331 = vld [vmem:[%s3 + $0x568] sm:$0xff]
  %v332 = vld [vmem:[%s3 + $0x570] sm:$0xff]
  %v333 = vld [vmem:[%s3 + $0x578] sm:$0xff]
  %v334 = vld [vmem:[%s3 + $0x580] sm:$0xff]
  %v335 = vld [vmem:[%s3 + $0x588] sm:$0xff]
  %v336 = vld [vmem:[%s3 + $0x590] sm:$0xff]
  %v337 = vld [vmem:[%s3 + $0x598] sm:$0xff]
  %v338 = vld [vmem:[%s3 + $0x5a0] sm:$0xff]
  %v339 = vld [vmem:[%s3 + $0x5a8] sm:$0xff]
  %v340 = vld [vmem:[%s3 + $0x5b0] sm:$0xff]
  %v341 = vld [vmem:[%s3 + $0x5b8] sm:$0xff]
  %v342 = vld [vmem:[%s3 + $0x5c0] sm:$0xff]
  %v343 = vld [vmem:[%s3 + $0x5c8] sm:$0xff]
  %v344 = vld [vmem:[%s3 + $0x5d0] sm:$0xff]
  %v345 = vld [vmem:[%s3 + $0x5d8] sm:$0xff]
  %v346 = vld [vmem:[%s3 + $0x5e0] sm:$0xff]
  %v347 = vld [vmem:[%s3 + $0x5e8] sm:$0xff]
  %v348 = vld [vmem:[%s3 + $0x5f0] sm:$0xff]
  %v349 = vld [vmem:[%s3 + $0x5f8] sm:$0xff]
  %v350 = vld [vmem:[%s3 + $0x600] sm:$0xff]
  %v351 = vld [vmem:[%s3 + $0x608] sm:$0xff]
  %v352 = vld [vmem:[%s3 + $0x610] sm:$0xff]
  %v353 = vld [vmem:[%s3 + $0x618] sm:$0xff]
  %v354 = vld [vmem:[%s3 + $0x620] sm:$0xff]
  %v355 = vld [vmem:[%s3 + $0x628] sm:$0xff]
  %v356 = vld [vmem:[%s3 + $0x630] sm:$0xff]
  %v357 = vld [vmem:[%s3 + $0x638] sm:$0xff]
  %v358 = vld [vmem:[%s3 + $0x640] sm:$0xff]
  %v359 = vld [vmem:[%s3 + $0x648] sm:$0xff]
  %v360 = vld [vmem:[%s3 + $0x650] sm:$0xff]
  %v361 = vld [vmem:[%s3 + $0x658] sm:$0xff]
  %v362 = vld [vmem:[%s3 + $0x660] sm:$0xff]
  %v363 = vld [vmem:[%s3 + $0x668] sm:$0xff]
  %v364 = vld [vmem:[%s3 + $0x670] sm:$0xff]
  %v365 = vld [vmem:[%s3 + $0x678] sm:$0xff]
  %v366 = vld [vmem:[%s3 + $0x680] sm:$0xff]
  %v367 = vld [vmem:[%s3 + $0x688] sm:$0xff]
  %v368 = vld [vmem:[%s3 + $0x690] sm:$0xff]
  %v369 = vld [vmem:[%s3 + $0x698] sm:$0xff]
  %v370 = vld [vmem:[%s3 + $0x6a0] sm:$0xff]
  %v371 = vld [vmem:[%s3 + $0x6a8] sm:$0xff]
  %v372 = vld [vmem:[%s3 + $0x6b0] sm:$0xff]
  %v373 = vld [vmem:[%s3 + $0x6b8] sm:$0xff]
  %v374 = vld [vmem:[%s3 + $0x6c0] sm:$0xff]
  %v375 = vld [vmem:[%s3 + $0x6c8] sm:$0xff]
  %v376 = vld [vmem:[%s3 + $0x6d0] sm:$0xff]
  %v377 = vld [vmem:[%s3 + $0x6d8] sm:$0xff]
  %v378 = vld [vmem:[%s3 + $0x6e0] sm:$0xff]
  %v379 = vld [vmem:[%s3 + $0x6e8] sm:$0xff]
  %v380 = vld [vmem:[%s3 + $0x6f0] sm:$0xff]
  %v381 = vld [vmem:[%s3 + $0x6f8] sm:$0xff]
  %v382 = vld [vmem:[%s3 + $0x700] sm:$0xff]
  %v383 = vld [vmem:[%s3 + $0x708] sm:$0xff]
  %v384 = vld [vmem:[%s3 + $0x710] sm:$0xff]
  %v385 = vld [vmem:[%s3 + $0x718] sm:$0xff]
  %v386 = vld [vmem:[%s3 + $0x720] sm:$0xff]
  %v387 = vld [vmem:[%s3 + $0x728] sm:$0xff]
  %v388 = vld [vmem:[%s3 + $0x730] sm:$0xff]
  %v389 = vld [vmem:[%s3 + $0x738] sm:$0xff]
  %v390 = vld [vmem:[%s3 + $0x740] sm:$0xff]
  %v391 = vld [vmem:[%s3 + $0x748] sm:$0xff]
  %v392 = vld [vmem:[%s3 + $0x750] sm:$0xff]
  %v393 = vld [vmem:[%s3 + $0x758] sm:$0xff]
  %v394 = vld [vmem:[%s3 + $0x760] sm:$0xff]
  %v395 = vld [vmem:[%s3 + $0x768] sm:$0xff]
  %v396 = vld [vmem:[%s3 + $0x770] sm:$0xff]
  %v397 = vld [vmem:[%s3 + $0x778] sm:$0xff]
  %v398 = vld [vmem:[%s3 + $0x780] sm:$0xff]
  %v399 = vld [vmem:[%s3 + $0x788] sm:$0xff]
  %v400 = vld [vmem:[%s3 + $0x790] sm:$0xff]
  %v401 = vld [vmem:[%s3 + $0x798] sm:$0xff]
  %v402 = vld [vmem:[%s3 + $0x7a0] sm:$0xff]
  %v403 = vld [vmem:[%s3 + $0x7a8] sm:$0xff]
  %v404 = vld [vmem:[%s3 + $0x7b0] sm:$0xff]
  %v405 = vld [vmem:[%s3 + $0x7b8] sm:$0xff]
  %v406 = vld [vmem:[%s3 + $0x7c0] sm:$0xff]
  %v407 = vld [vmem:[%s3 + $0x7c8] sm:$0xff]
  %v408 = vld [vmem:[%s3 + $0x7d0] sm:$0xff]
  %v409 = vld [vmem:[%s3 + $0x7d8] sm:$0xff]
  %v410 = vld [vmem:[%s3 + $0x7e0] sm:$0xff]
  %v411 = vld [vmem:[%s3 + $0x7e8] sm:$0xff]
  %v412 = vld [vmem:[%s3 + $0x7f0] sm:$0xff]
  %v413 = vld [vmem:[%s3 + $0x7f8] sm:$0xff]
  %v670 = vunpack.c.l.b16 %v158
  %v671 = vunpack.c.h.b16 %v158
  %v672 = vunpack.c.l.b16 %v159
  %v673 = vunpack.c.h.b16 %v159
  %v674 = vunpack.c.l.b16 %v160
  %v675 = vunpack.c.h.b16 %v160
  %v676 = vunpack.c.l.b16 %v161
  %v677 = vunpack.c.h.b16 %v161
  %v678 = vunpack.c.l.b16 %v162
  %v679 = vunpack.c.h.b16 %v162
  %v680 = vunpack.c.l.b16 %v163
  %v681 = vunpack.c.h.b16 %v163
  %v682 = vunpack.c.l.b16 %v164
  %v683 = vunpack.c.h.b16 %v164
  %v684 = vunpack.c.l.b16 %v165
  %v685 = vunpack.c.h.b16 %v165
  %v686 = vunpack.c.l.b16 %v166
  %v687 = vunpack.c.h.b16 %v166
  %v688 = vunpack.c.l.b16 %v167
  %v689 = vunpack.c.h.b16 %v167
  %v690 = vunpack.c.l.b16 %v168
  %v691 = vunpack.c.h.b16 %v168
  %v692 = vunpack.c.l.b16 %v169
  %v693 = vunpack.c.h.b16 %v169
  %v694 = vunpack.c.l.b16 %v170
  %v695 = vunpack.c.h.b16 %v170
  %v696 = vunpack.c.l.b16 %v171
  %v697 = vunpack.c.h.b16 %v171
  %v698 = vunpack.c.l.b16 %v172
  %v699 = vunpack.c.h.b16 %v172
  %v700 = vunpack.c.l.b16 %v173
  %v701 = vunpack.c.h.b16 %v173
  %v702 = vunpack.c.l.b16 %v174
  %v703 = vunpack.c.h.b16 %v174
  %v704 = vunpack.c.l.b16 %v175
  %v705 = vunpack.c.h.b16 %v175
  %v706 = vunpack.c.l.b16 %v176
  %v707 = vunpack.c.h.b16 %v176
  %v708 = vunpack.c.l.b16 %v177
  %v709 = vunpack.c.h.b16 %v177
  %v710 = vunpack.c.l.b16 %v178
  %v711 = vunpack.c.h.b16 %v178
  %v712 = vunpack.c.l.b16 %v179
  %v713 = vunpack.c.h.b16 %v179
  %v714 = vunpack.c.l.b16 %v180
  %v715 = vunpack.c.h.b16 %v180
  %v716 = vunpack.c.l.b16 %v181
  %v717 = vunpack.c.h.b16 %v181
  %v718 = vunpack.c.l.b16 %v182
  %v719 = vunpack.c.h.b16 %v182
  %v720 = vunpack.c.l.b16 %v183
  %v721 = vunpack.c.h.b16 %v183
  %v722 = vunpack.c.l.b16 %v184
  %v723 = vunpack.c.h.b16 %v184
  %v724 = vunpack.c.l.b16 %v185
  %v725 = vunpack.c.h.b16 %v185
  %v726 = vunpack.c.l.b16 %v186
  %v727 = vunpack.c.h.b16 %v186
  %v728 = vunpack.c.l.b16 %v187
  %v729 = vunpack.c.h.b16 %v187
  %v730 = vunpack.c.l.b16 %v188
  %v731 = vunpack.c.h.b16 %v188
  %v732 = vunpack.c.l.b16 %v189
  %v733 = vunpack.c.h.b16 %v189
  %v734 = vunpack.c.l.b16 %v190
  %v735 = vunpack.c.h.b16 %v190
  %v736 = vunpack.c.l.b16 %v191
  %v737 = vunpack.c.h.b16 %v191
  %v738 = vunpack.c.l.b16 %v192
  %v739 = vunpack.c.h.b16 %v192
  %v740 = vunpack.c.l.b16 %v193
  %v741 = vunpack.c.h.b16 %v193
  %v742 = vunpack.c.l.b16 %v194
  %v743 = vunpack.c.h.b16 %v194
  %v744 = vunpack.c.l.b16 %v195
  %v745 = vunpack.c.h.b16 %v195
  %v746 = vunpack.c.l.b16 %v196
  %v747 = vunpack.c.h.b16 %v196
  %v748 = vunpack.c.l.b16 %v197
  %v749 = vunpack.c.h.b16 %v197
  %v750 = vunpack.c.l.b16 %v198
  %v751 = vunpack.c.h.b16 %v198
  %v752 = vunpack.c.l.b16 %v199
  %v753 = vunpack.c.h.b16 %v199
  %v754 = vunpack.c.l.b16 %v200
  %v755 = vunpack.c.h.b16 %v200
  %v756 = vunpack.c.l.b16 %v201
  %v757 = vunpack.c.h.b16 %v201
  %v758 = vunpack.c.l.b16 %v202
  %v759 = vunpack.c.h.b16 %v202
  %v760 = vunpack.c.l.b16 %v203
  %v761 = vunpack.c.h.b16 %v203
  %v762 = vunpack.c.l.b16 %v204
  %v763 = vunpack.c.h.b16 %v204
  %v764 = vunpack.c.l.b16 %v205
  %v765 = vunpack.c.h.b16 %v205
  %v766 = vunpack.c.l.b16 %v206
  %v767 = vunpack.c.h.b16 %v206
  %v768 = vunpack.c.l.b16 %v207
  %v769 = vunpack.c.h.b16 %v207
  %v770 = vunpack.c.l.b16 %v208
  %v771 = vunpack.c.h.b16 %v208
  %v772 = vunpack.c.l.b16 %v209
  %v773 = vunpack.c.h.b16 %v209
  %v774 = vunpack.c.l.b16 %v210
  %v775 = vunpack.c.h.b16 %v210
  %v776 = vunpack.c.l.b16 %v211
  %v777 = vunpack.c.h.b16 %v211
  %v778 = vunpack.c.l.b16 %v212
  %v779 = vunpack.c.h.b16 %v212
  %v780 = vunpack.c.l.b16 %v213
  %v781 = vunpack.c.h.b16 %v213
  %v782 = vunpack.c.l.b16 %v214
  %v783 = vunpack.c.h.b16 %v214
  %v784 = vunpack.c.l.b16 %v215
  %v785 = vunpack.c.h.b16 %v215
  %v786 = vunpack.c.l.b16 %v216
  %v787 = vunpack.c.h.b16 %v216
  %v788 = vunpack.c.l.b16 %v217
  %v789 = vunpack.c.h.b16 %v217
  %v790 = vunpack.c.l.b16 %v218
  %v791 = vunpack.c.h.b16 %v218
  %v792 = vunpack.c.l.b16 %v219
  %v793 = vunpack.c.h.b16 %v219
  %v794 = vunpack.c.l.b16 %v220
  %v795 = vunpack.c.h.b16 %v220
  %v796 = vunpack.c.l.b16 %v221
  %v797 = vunpack.c.h.b16 %v221
  %v798 = vunpack.c.l.b16 %v222
  %v799 = vunpack.c.h.b16 %v222
  %v800 = vunpack.c.l.b16 %v223
  %v801 = vunpack.c.h.b16 %v223
  %v802 = vunpack.c.l.b16 %v224
  %v803 = vunpack.c.h.b16 %v224
  %v804 = vunpack.c.l.b16 %v225
  %v805 = vunpack.c.h.b16 %v225
  %v806 = vunpack.c.l.b16 %v226
  %v807 = vunpack.c.h.b16 %v226
  %v808 = vunpack.c.l.b16 %v227
  %v809 = vunpack.c.h.b16 %v227
  %v810 = vunpack.c.l.b16 %v228
  %v811 = vunpack.c.h.b16 %v228
  %v812 = vunpack.c.l.b16 %v229
  %v813 = vunpack.c.h.b16 %v229
  %v814 = vunpack.c.l.b16 %v230
  %v815 = vunpack.c.h.b16 %v230
  %v816 = vunpack.c.l.b16 %v231
  %v817 = vunpack.c.h.b16 %v231
  %v818 = vunpack.c.l.b16 %v232
  %v819 = vunpack.c.h.b16 %v232
  %v820 = vunpack.c.l.b16 %v233
  %v821 = vunpack.c.h.b16 %v233
  %v822 = vunpack.c.l.b16 %v234
  %v823 = vunpack.c.h.b16 %v234
  %v824 = vunpack.c.l.b16 %v235
  %v825 = vunpack.c.h.b16 %v235
  %v826 = vunpack.c.l.b16 %v236
  %v827 = vunpack.c.h.b16 %v236
  %v828 = vunpack.c.l.b16 %v237
  %v829 = vunpack.c.h.b16 %v237
  %v830 = vunpack.c.l.b16 %v238
  %v831 = vunpack.c.h.b16 %v238
  %v832 = vunpack.c.l.b16 %v239
  %v833 = vunpack.c.h.b16 %v239
  %v834 = vunpack.c.l.b16 %v240
  %v835 = vunpack.c.h.b16 %v240
  %v836 = vunpack.c.l.b16 %v241
  %v837 = vunpack.c.h.b16 %v241
  %v838 = vunpack.c.l.b16 %v242
  %v839 = vunpack.c.h.b16 %v242
  %v840 = vunpack.c.l.b16 %v243
  %v841 = vunpack.c.h.b16 %v243
  %v842 = vunpack.c.l.b16 %v244
  %v843 = vunpack.c.h.b16 %v244
  %v844 = vunpack.c.l.b16 %v245
  %v845 = vunpack.c.h.b16 %v245
  %v846 = vunpack.c.l.b16 %v246
  %v847 = vunpack.c.h.b16 %v246
  %v848 = vunpack.c.l.b16 %v247
  %v849 = vunpack.c.h.b16 %v247
  %v850 = vunpack.c.l.b16 %v248
  %v851 = vunpack.c.h.b16 %v248
  %v852 = vunpack.c.l.b16 %v249
  %v853 = vunpack.c.h.b16 %v249
  %v854 = vunpack.c.l.b16 %v250
  %v855 = vunpack.c.h.b16 %v250
  %v856 = vunpack.c.l.b16 %v251
  %v857 = vunpack.c.h.b16 %v251
  %v858 = vunpack.c.l.b16 %v252
  %v859 = vunpack.c.h.b16 %v252
  %v860 = vunpack.c.l.b16 %v253
  %v861 = vunpack.c.h.b16 %v253
  %v862 = vunpack.c.l.b16 %v254
  %v863 = vunpack.c.h.b16 %v254
  %v864 = vunpack.c.l.b16 %v255
  %v865 = vunpack.c.h.b16 %v255
  %v866 = vunpack.c.l.b16 %v256
  %v867 = vunpack.c.h.b16 %v256
  %v868 = vunpack.c.l.b16 %v257
  %v869 = vunpack.c.h.b16 %v257
  %v870 = vunpack.c.l.b16 %v258
  %v871 = vunpack.c.h.b16 %v258
  %v872 = vunpack.c.l.b16 %v259
  %v873 = vunpack.c.h.b16 %v259
  %v874 = vunpack.c.l.b16 %v260
  %v875 = vunpack.c.h.b16 %v260
  %v876 = vunpack.c.l.b16 %v261
  %v877 = vunpack.c.h.b16 %v261
  %v878 = vunpack.c.l.b16 %v262
  %v879 = vunpack.c.h.b16 %v262
  %v880 = vunpack.c.l.b16 %v263
  %v881 = vunpack.c.h.b16 %v263
  %v882 = vunpack.c.l.b16 %v264
  %v883 = vunpack.c.h.b16 %v264
  %v884 = vunpack.c.l.b16 %v265
  %v885 = vunpack.c.h.b16 %v265
  %v886 = vunpack.c.l.b16 %v266
  %v887 = vunpack.c.h.b16 %v266
  %v888 = vunpack.c.l.b16 %v267
  %v889 = vunpack.c.h.b16 %v267
  %v890 = vunpack.c.l.b16 %v268
  %v891 = vunpack.c.h.b16 %v268
  %v892 = vunpack.c.l.b16 %v269
  %v893 = vunpack.c.h.b16 %v269
  %v894 = vunpack.c.l.b16 %v270
  %v895 = vunpack.c.h.b16 %v270
  %v896 = vunpack.c.l.b16 %v271
  %v897 = vunpack.c.h.b16 %v271
  %v898 = vunpack.c.l.b16 %v272
  %v899 = vunpack.c.h.b16 %v272
  %v900 = vunpack.c.l.b16 %v273
  %v901 = vunpack.c.h.b16 %v273
  %v902 = vunpack.c.l.b16 %v274
  %v903 = vunpack.c.h.b16 %v274
  %v904 = vunpack.c.l.b16 %v275
  %v905 = vunpack.c.h.b16 %v275
  %v906 = vunpack.c.l.b16 %v276
  %v907 = vunpack.c.h.b16 %v276
  %v908 = vunpack.c.l.b16 %v277
  %v909 = vunpack.c.h.b16 %v277
  %v910 = vunpack.c.l.b16 %v278
  %v911 = vunpack.c.h.b16 %v278
  %v912 = vunpack.c.l.b16 %v279
  %v913 = vunpack.c.h.b16 %v279
  %v914 = vunpack.c.l.b16 %v280
  %v915 = vunpack.c.h.b16 %v280
  %v916 = vunpack.c.l.b16 %v281
  %v917 = vunpack.c.h.b16 %v281
  %v918 = vunpack.c.l.b16 %v282
  %v919 = vunpack.c.h.b16 %v282
  %v920 = vunpack.c.l.b16 %v283
  %v921 = vunpack.c.h.b16 %v283
  %v922 = vunpack.c.l.b16 %v284
  %v923 = vunpack.c.h.b16 %v284
  %v924 = vunpack.c.l.b16 %v285
  %v925 = vunpack.c.h.b16 %v285
  %v926 = vunpack.c.l.b16 %v286
  %v927 = vunpack.c.h.b16 %v286
  %v928 = vunpack.c.l.b16 %v287
  %v929 = vunpack.c.h.b16 %v287
  %v930 = vunpack.c.l.b16 %v288
  %v931 = vunpack.c.h.b16 %v288
  %v932 = vunpack.c.l.b16 %v289
  %v933 = vunpack.c.h.b16 %v289
  %v934 = vunpack.c.l.b16 %v290
  %v935 = vunpack.c.h.b16 %v290
  %v936 = vunpack.c.l.b16 %v291
  %v937 = vunpack.c.h.b16 %v291
  %v938 = vunpack.c.l.b16 %v292
  %v939 = vunpack.c.h.b16 %v292
  %v940 = vunpack.c.l.b16 %v293
  %v941 = vunpack.c.h.b16 %v293
  %v942 = vunpack.c.l.b16 %v294
  %v943 = vunpack.c.h.b16 %v294
  %v944 = vunpack.c.l.b16 %v295
  %v945 = vunpack.c.h.b16 %v295
  %v946 = vunpack.c.l.b16 %v296
  %v947 = vunpack.c.h.b16 %v296
  %v948 = vunpack.c.l.b16 %v297
  %v949 = vunpack.c.h.b16 %v297
  %v950 = vunpack.c.l.b16 %v298
  %v951 = vunpack.c.h.b16 %v298
  %v952 = vunpack.c.l.b16 %v299
  %v953 = vunpack.c.h.b16 %v299
  %v954 = vunpack.c.l.b16 %v300
  %v955 = vunpack.c.h.b16 %v300
  %v956 = vunpack.c.l.b16 %v301
  %v957 = vunpack.c.h.b16 %v301
  %v958 = vunpack.c.l.b16 %v302
  %v959 = vunpack.c.h.b16 %v302
  %v960 = vunpack.c.l.b16 %v303
  %v961 = vunpack.c.h.b16 %v303
  %v962 = vunpack.c.l.b16 %v304
  %v963 = vunpack.c.h.b16 %v304
  %v964 = vunpack.c.l.b16 %v305
  %v965 = vunpack.c.h.b16 %v305
  %v966 = vunpack.c.l.b16 %v306
  %v967 = vunpack.c.h.b16 %v306
  %v968 = vunpack.c.l.b16 %v307
  %v969 = vunpack.c.h.b16 %v307
  %v970 = vunpack.c.l.b16 %v308
  %v971 = vunpack.c.h.b16 %v308
  %v972 = vunpack.c.l.b16 %v309
  %v973 = vunpack.c.h.b16 %v309
  %v974 = vunpack.c.l.b16 %v310
  %v975 = vunpack.c.h.b16 %v310
  %v976 = vunpack.c.l.b16 %v311
  %v977 = vunpack.c.h.b16 %v311
  %v978 = vunpack.c.l.b16 %v312
  %v979 = vunpack.c.h.b16 %v312
  %v980 = vunpack.c.l.b16 %v313
  %v981 = vunpack.c.h.b16 %v313
  %v982 = vunpack.c.l.b16 %v314
  %v983 = vunpack.c.h.b16 %v314
  %v984 = vunpack.c.l.b16 %v315
  %v985 = vunpack.c.h.b16 %v315
  %v986 = vunpack.c.l.b16 %v316
  %v987 = vunpack.c.h.b16 %v316
  %v988 = vunpack.c.l.b16 %v317
  %v989 = vunpack.c.h.b16 %v317
  %v990 = vunpack.c.l.b16 %v318
  %v991 = vunpack.c.h.b16 %v318
  %v992 = vunpack.c.l.b16 %v319
  %v993 = vunpack.c.h.b16 %v319
  %v994 = vunpack.c.l.b16 %v320
  %v995 = vunpack.c.h.b16 %v320
  %v996 = vunpack.c.l.b16 %v321
  %v997 = vunpack.c.h.b16 %v321
  %v998 = vunpack.c.l.b16 %v322
  %v999 = vunpack.c.h.b16 %v322
  %v1000 = vunpack.c.l.b16 %v323
  %v1001 = vunpack.c.h.b16 %v323
  %v1002 = vunpack.c.l.b16 %v324
  %v1003 = vunpack.c.h.b16 %v324
  %v1004 = vunpack.c.l.b16 %v325
  %v1005 = vunpack.c.h.b16 %v325
  %v1006 = vunpack.c.l.b16 %v326
  %v1007 = vunpack.c.h.b16 %v326
  %v1008 = vunpack.c.l.b16 %v327
  %v1009 = vunpack.c.h.b16 %v327
  %v1010 = vunpack.c.l.b16 %v328
  %v1011 = vunpack.c.h.b16 %v328
  %v1012 = vunpack.c.l.b16 %v329
  %v1013 = vunpack.c.h.b16 %v329
  %v1014 = vunpack.c.l.b16 %v330
  %v1015 = vunpack.c.h.b16 %v330
  %v1016 = vunpack.c.l.b16 %v331
  %v1017 = vunpack.c.h.b16 %v331
  %v1018 = vunpack.c.l.b16 %v332
  %v1019 = vunpack.c.h.b16 %v332
  %v1020 = vunpack.c.l.b16 %v333
  %v1021 = vunpack.c.h.b16 %v333
  %v1022 = vunpack.c.l.b16 %v334
  %v1023 = vunpack.c.h.b16 %v334
  %v1024 = vunpack.c.l.b16 %v335
  %v1025 = vunpack.c.h.b16 %v335
  %v1026 = vunpack.c.l.b16 %v336
  %v1027 = vunpack.c.h.b16 %v336
  %v1028 = vunpack.c.l.b16 %v337
  %v1029 = vunpack.c.h.b16 %v337
  %v1030 = vunpack.c.l.b16 %v338
  %v1031 = vunpack.c.h.b16 %v338
  %v1032 = vunpack.c.l.b16 %v339
  %v1033 = vunpack.c.h.b16 %v339
  %v1034 = vunpack.c.l.b16 %v340
  %v1035 = vunpack.c.h.b16 %v340
  %v1036 = vunpack.c.l.b16 %v341
  %v1037 = vunpack.c.h.b16 %v341
  %v1038 = vunpack.c.l.b16 %v342
  %v1039 = vunpack.c.h.b16 %v342
  %v1040 = vunpack.c.l.b16 %v343
  %v1041 = vunpack.c.h.b16 %v343
  %v1042 = vunpack.c.l.b16 %v344
  %v1043 = vunpack.c.h.b16 %v344
  %v1044 = vunpack.c.l.b16 %v345
  %v1045 = vunpack.c.h.b16 %v345
  %v1046 = vunpack.c.l.b16 %v346
  %v1047 = vunpack.c.h.b16 %v346
  %v1048 = vunpack.c.l.b16 %v347
  %v1049 = vunpack.c.h.b16 %v347
  %v1050 = vunpack.c.l.b16 %v348
  %v1051 = vunpack.c.h.b16 %v348
  %v1052 = vunpack.c.l.b16 %v349
  %v1053 = vunpack.c.h.b16 %v349
  %v1054 = vunpack.c.l.b16 %v350
  %v1055 = vunpack.c.h.b16 %v350
  %v1056 = vunpack.c.l.b16 %v351
  %v1057 = vunpack.c.h.b16 %v351
  %v1058 = vunpack.c.l.b16 %v352
  %v1059 = vunpack.c.h.b16 %v352
  %v1060 = vunpack.c.l.b16 %v353
  %v1061 = vunpack.c.h.b16 %v353
  %v1062 = vunpack.c.l.b16 %v354
  %v1063 = vunpack.c.h.b16 %v354
  %v1064 = vunpack.c.l.b16 %v355
  %v1065 = vunpack.c.h.b16 %v355
  %v1066 = vunpack.c.l.b16 %v356
  %v1067 = vunpack.c.h.b16 %v356
  %v1068 = vunpack.c.l.b16 %v357
  %v1069 = vunpack.c.h.b16 %v357
  %v1070 = vunpack.c.l.b16 %v358
  %v1071 = vunpack.c.h.b16 %v358
  %v1072 = vunpack.c.l.b16 %v359
  %v1073 = vunpack.c.h.b16 %v359
  %v1074 = vunpack.c.l.b16 %v360
  %v1075 = vunpack.c.h.b16 %v360
  %v1076 = vunpack.c.l.b16 %v361
  %v1077 = vunpack.c.h.b16 %v361
  %v1078 = vunpack.c.l.b16 %v362
  %v1079 = vunpack.c.h.b16 %v362
  %v1080 = vunpack.c.l.b16 %v363
  %v1081 = vunpack.c.h.b16 %v363
  %v1082 = vunpack.c.l.b16 %v364
  %v1083 = vunpack.c.h.b16 %v364
  %v1084 = vunpack.c.l.b16 %v365
  %v1085 = vunpack.c.h.b16 %v365
  %v1086 = vunpack.c.l.b16 %v366
  %v1087 = vunpack.c.h.b16 %v366
  %v1088 = vunpack.c.l.b16 %v367
  %v1089 = vunpack.c.h.b16 %v367
  %v1090 = vunpack.c.l.b16 %v368
  %v1091 = vunpack.c.h.b16 %v368
  %v1092 = vunpack.c.l.b16 %v369
  %v1093 = vunpack.c.h.b16 %v369
  %v1094 = vunpack.c.l.b16 %v370
  %v1095 = vunpack.c.h.b16 %v370
  %v1096 = vunpack.c.l.b16 %v371
  %v1097 = vunpack.c.h.b16 %v371
  %v1098 = vunpack.c.l.b16 %v372
  %v1099 = vunpack.c.h.b16 %v372
  %v1100 = vunpack.c.l.b16 %v373
  %v1101 = vunpack.c.h.b16 %v373
  %v1102 = vunpack.c.l.b16 %v374
  %v1103 = vunpack.c.h.b16 %v374
  %v1104 = vunpack.c.l.b16 %v375
  %v1105 = vunpack.c.h.b16 %v375
  %v1106 = vunpack.c.l.b16 %v376
  %v1107 = vunpack.c.h.b16 %v376
  %v1108 = vunpack.c.l.b16 %v377
  %v1109 = vunpack.c.h.b16 %v377
  %v1110 = vunpack.c.l.b16 %v378
  %v1111 = vunpack.c.h.b16 %v378
  %v1112 = vunpack.c.l.b16 %v379
  %v1113 = vunpack.c.h.b16 %v379
  %v1114 = vunpack.c.l.b16 %v380
  %v1115 = vunpack.c.h.b16 %v380
  %v1116 = vunpack.c.l.b16 %v381
  %v1117 = vunpack.c.h.b16 %v381
  %v1118 = vunpack.c.l.b16 %v382
  %v1119 = vunpack.c.h.b16 %v382
  %v1120 = vunpack.c.l.b16 %v383
  %v1121 = vunpack.c.h.b16 %v383
  %v1122 = vunpack.c.l.b16 %v384
  %v1123 = vunpack.c.h.b16 %v384
  %v1124 = vunpack.c.l.b16 %v385
  %v1125 = vunpack.c.h.b16 %v385
  %v1126 = vunpack.c.l.b16 %v386
  %v1127 = vunpack.c.h.b16 %v386
  %v1128 = vunpack.c.l.b16 %v387
  %v1129 = vunpack.c.h.b16 %v387
  %v1130 = vunpack.c.l.b16 %v388
  %v1131 = vunpack.c.h.b16 %v388
  %v1132 = vunpack.c.l.b16 %v389
  %v1133 = vunpack.c.h.b16 %v389
  %v1134 = vunpack.c.l.b16 %v390
  %v1135 = vunpack.c.h.b16 %v390
  %v1136 = vunpack.c.l.b16 %v391
  %v1137 = vunpack.c.h.b16 %v391
  %v1138 = vunpack.c.l.b16 %v392
  %v1139 = vunpack.c.h.b16 %v392
  %v1140 = vunpack.c.l.b16 %v393
  %v1141 = vunpack.c.h.b16 %v393
  %v1142 = vunpack.c.l.b16 %v394
  %v1143 = vunpack.c.h.b16 %v394
  %v1144 = vunpack.c.l.b16 %v395
  %v1145 = vunpack.c.h.b16 %v395
  %v1146 = vunpack.c.l.b16 %v396
  %v1147 = vunpack.c.h.b16 %v396
  %v1148 = vunpack.c.l.b16 %v397
  %v1149 = vunpack.c.h.b16 %v397
  %v1150 = vunpack.c.l.b16 %v398
  %v1151 = vunpack.c.h.b16 %v398
  %v1152 = vunpack.c.l.b16 %v399
  %v1153 = vunpack.c.h.b16 %v399
  %v1154 = vunpack.c.l.b16 %v400
  %v1155 = vunpack.c.h.b16 %v400
  %v1156 = vunpack.c.l.b16 %v401
  %v1157 = vunpack.c.h.b16 %v401
  %v1158 = vunpack.c.l.b16 %v402
  %v1159 = vunpack.c.h.b16 %v402
  %v1160 = vunpack.c.l.b16 %v403
  %v1161 = vunpack.c.h.b16 %v403
  %v1162 = vunpack.c.l.b16 %v404
  %v1163 = vunpack.c.h.b16 %v404
  %v1164 = vunpack.c.l.b16 %v405
  %v1165 = vunpack.c.h.b16 %v405
  %v1166 = vunpack.c.l.b16 %v406
  %v1167 = vunpack.c.h.b16 %v406
  %v1168 = vunpack.c.l.b16 %v407
  %v1169 = vunpack.c.h.b16 %v407
  %v1170 = vunpack.c.l.b16 %v408
  %v1171 = vunpack.c.h.b16 %v408
  %v1172 = vunpack.c.l.b16 %v409
  %v1173 = vunpack.c.h.b16 %v409
  %v1174 = vunpack.c.l.b16 %v410
  %v1175 = vunpack.c.h.b16 %v410
  %v1176 = vunpack.c.l.b16 %v411
  %v1177 = vunpack.c.h.b16 %v411
  %v1178 = vunpack.c.l.b16 %v412
  %v1179 = vunpack.c.h.b16 %v412
  %v1180 = vunpack.c.l.b16 %v413
  %v1181 = vunpack.c.h.b16 %v413
  %v1182 = vpack.c.b16 %v674, %v670
  %v1183 = vpack.c.b16 %v675, %v671
  %v1184 = vpack.c.b16 %v676, %v672
  %v1185 = vpack.c.b16 %v677, %v673
  %v1186 = vpack.c.b16 %v682, %v678
  %v1187 = vpack.c.b16 %v683, %v679
  %v1188 = vpack.c.b16 %v684, %v680
  %v1189 = vpack.c.b16 %v685, %v681
  %v1190 = vpack.c.b16 %v690, %v686
  %v1191 = vpack.c.b16 %v691, %v687
  %v1192 = vpack.c.b16 %v692, %v688
  %v1193 = vpack.c.b16 %v693, %v689
  %v1194 = vpack.c.b16 %v698, %v694
  %v1195 = vpack.c.b16 %v699, %v695
  %v1196 = vpack.c.b16 %v700, %v696
  %v1197 = vpack.c.b16 %v701, %v697
  %v1198 = vpack.c.b16 %v706, %v702
  %v1199 = vpack.c.b16 %v707, %v703
  %v1200 = vpack.c.b16 %v708, %v704
  %v1201 = vpack.c.b16 %v709, %v705
  %v1202 = vpack.c.b16 %v714, %v710
  %v1203 = vpack.c.b16 %v715, %v711
  %v1204 = vpack.c.b16 %v716, %v712
  %v1205 = vpack.c.b16 %v717, %v713
  %v1206 = vpack.c.b16 %v722, %v718
  %v1207 = vpack.c.b16 %v723, %v719
  %v1208 = vpack.c.b16 %v724, %v720
  %v1209 = vpack.c.b16 %v725, %v721
  %v1210 = vpack.c.b16 %v730, %v726
  %v1211 = vpack.c.b16 %v731, %v727
  %v1212 = vpack.c.b16 %v732, %v728
  %v1213 = vpack.c.b16 %v733, %v729
  %v1214 = vpack.c.b16 %v738, %v734
  %v1215 = vpack.c.b16 %v739, %v735
  %v1216 = vpack.c.b16 %v740, %v736
  %v1217 = vpack.c.b16 %v741, %v737
  %v1218 = vpack.c.b16 %v746, %v742
  %v1219 = vpack.c.b16 %v747, %v743
  %v1220 = vpack.c.b16 %v748, %v744
  %v1221 = vpack.c.b16 %v749, %v745
  %v1222 = vpack.c.b16 %v754, %v750
  %v1223 = vpack.c.b16 %v755, %v751
  %v1224 = vpack.c.b16 %v756, %v752
  %v1225 = vpack.c.b16 %v757, %v753
  %v1226 = vpack.c.b16 %v762, %v758
  %v1227 = vpack.c.b16 %v763, %v759
  %v1228 = vpack.c.b16 %v764, %v760
  %v1229 = vpack.c.b16 %v765, %v761
  %v1230 = vpack.c.b16 %v770, %v766
  %v1231 = vpack.c.b16 %v771, %v767
  %v1232 = vpack.c.b16 %v772, %v768
  %v1233 = vpack.c.b16 %v773, %v769
  %v1234 = vpack.c.b16 %v778, %v774
  %v1235 = vpack.c.b16 %v779, %v775
  %v1236 = vpack.c.b16 %v780, %v776
  %v1237 = vpack.c.b16 %v781, %v777
  %v1238 = vpack.c.b16 %v786, %v782
  %v1239 = vpack.c.b16 %v787, %v783
  %v1240 = vpack.c.b16 %v788, %v784
  %v1241 = vpack.c.b16 %v789, %v785
  %v1242 = vpack.c.b16 %v794, %v790
  %v1243 = vpack.c.b16 %v795, %v791
  %v1244 = vpack.c.b16 %v796, %v792
  %v1245 = vpack.c.b16 %v797, %v793
  %v1246 = vpack.c.b16 %v802, %v798
  %v1247 = vpack.c.b16 %v803, %v799
  %v1248 = vpack.c.b16 %v804, %v800
  %v1249 = vpack.c.b16 %v805, %v801
  %v1250 = vpack.c.b16 %v810, %v806
  %v1251 = vpack.c.b16 %v811, %v807
  %v1252 = vpack.c.b16 %v812, %v808
  %v1253 = vpack.c.b16 %v813, %v809
  %v1254 = vpack.c.b16 %v818, %v814
  %v1255 = vpack.c.b16 %v819, %v815
  %v1256 = vpack.c.b16 %v820, %v816
  %v1257 = vpack.c.b16 %v821, %v817
  %v1258 = vpack.c.b16 %v826, %v822
  %v1259 = vpack.c.b16 %v827, %v823
  %v1260 = vpack.c.b16 %v828, %v824
  %v1261 = vpack.c.b16 %v829, %v825
  %v1262 = vpack.c.b16 %v834, %v830
  %v1263 = vpack.c.b16 %v835, %v831
  %v1264 = vpack.c.b16 %v836, %v832
  %v1265 = vpack.c.b16 %v837, %v833
  %v1266 = vpack.c.b16 %v842, %v838
  %v1267 = vpack.c.b16 %v843, %v839
  %v1268 = vpack.c.b16 %v844, %v840
  %v1269 = vpack.c.b16 %v845, %v841
  %v1270 = vpack.c.b16 %v850, %v846
  %v1271 = vpack.c.b16 %v851, %v847
  %v1272 = vpack.c.b16 %v852, %v848
  %v1273 = vpack.c.b16 %v853, %v849
  %v1274 = vpack.c.b16 %v858, %v854
  %v1275 = vpack.c.b16 %v859, %v855
  %v1276 = vpack.c.b16 %v860, %v856
  %v1277 = vpack.c.b16 %v861, %v857
  %v1278 = vpack.c.b16 %v866, %v862
  %v1279 = vpack.c.b16 %v867, %v863
  %v1280 = vpack.c.b16 %v868, %v864
  %v1281 = vpack.c.b16 %v869, %v865
  %v1282 = vpack.c.b16 %v874, %v870
  %v1283 = vpack.c.b16 %v875, %v871
  %v1284 = vpack.c.b16 %v876, %v872
  %v1285 = vpack.c.b16 %v877, %v873
  %v1286 = vpack.c.b16 %v882, %v878
  %v1287 = vpack.c.b16 %v883, %v879
  %v1288 = vpack.c.b16 %v884, %v880
  %v1289 = vpack.c.b16 %v885, %v881
  %v1290 = vpack.c.b16 %v890, %v886
  %v1291 = vpack.c.b16 %v891, %v887
  %v1292 = vpack.c.b16 %v892, %v888
  %v1293 = vpack.c.b16 %v893, %v889
  %v1294 = vpack.c.b16 %v898, %v894
  %v1295 = vpack.c.b16 %v899, %v895
  %v1296 = vpack.c.b16 %v900, %v896
  %v1297 = vpack.c.b16 %v901, %v897
  %v1298 = vpack.c.b16 %v906, %v902
  %v1299 = vpack.c.b16 %v907, %v903
  %v1300 = vpack.c.b16 %v908, %v904
  %v1301 = vpack.c.b16 %v909, %v905
  %v1302 = vpack.c.b16 %v914, %v910
  %v1303 = vpack.c.b16 %v915, %v911
  %v1304 = vpack.c.b16 %v916, %v912
  %v1305 = vpack.c.b16 %v917, %v913
  %v1306 = vpack.c.b16 %v922, %v918
  %v1307 = vpack.c.b16 %v923, %v919
  %v1308 = vpack.c.b16 %v924, %v920
  %v1309 = vpack.c.b16 %v925, %v921
  %v1310 = vpack.c.b16 %v930, %v926
  %v1311 = vpack.c.b16 %v931, %v927
  %v1312 = vpack.c.b16 %v932, %v928
  %v1313 = vpack.c.b16 %v933, %v929
  %v1314 = vpack.c.b16 %v938, %v934
  %v1315 = vpack.c.b16 %v939, %v935
  %v1316 = vpack.c.b16 %v940, %v936
  %v1317 = vpack.c.b16 %v941, %v937
  %v1318 = vpack.c.b16 %v946, %v942
  %v1319 = vpack.c.b16 %v947, %v943
  %v1320 = vpack.c.b16 %v948, %v944
  %v1321 = vpack.c.b16 %v949, %v945
  %v1322 = vpack.c.b16 %v954, %v950
  %v1323 = vpack.c.b16 %v955, %v951
  %v1324 = vpack.c.b16 %v956, %v952
  %v1325 = vpack.c.b16 %v957, %v953
  %v1326 = vpack.c.b16 %v962, %v958
  %v1327 = vpack.c.b16 %v963, %v959
  %v1328 = vpack.c.b16 %v964, %v960
  %v1329 = vpack.c.b16 %v965, %v961
  %v1330 = vpack.c.b16 %v970, %v966
  %v1331 = vpack.c.b16 %v971, %v967
  %v1332 = vpack.c.b16 %v972, %v968
  %v1333 = vpack.c.b16 %v973, %v969
  %v1334 = vpack.c.b16 %v978, %v974
  %v1335 = vpack.c.b16 %v979, %v975
  %v1336 = vpack.c.b16 %v980, %v976
  %v1337 = vpack.c.b16 %v981, %v977
  %v1338 = vpack.c.b16 %v986, %v982
  %v1339 = vpack.c.b16 %v987, %v983
  %v1340 = vpack.c.b16 %v988, %v984
  %v1341 = vpack.c.b16 %v989, %v985
  %v1342 = vpack.c.b16 %v994, %v990
  %v1343 = vpack.c.b16 %v995, %v991
  %v1344 = vpack.c.b16 %v996, %v992
  %v1345 = vpack.c.b16 %v997, %v993
  %v1346 = vpack.c.b16 %v1002, %v998
  %v1347 = vpack.c.b16 %v1003, %v999
  %v1348 = vpack.c.b16 %v1004, %v1000
  %v1349 = vpack.c.b16 %v1005, %v1001
  %v1350 = vpack.c.b16 %v1010, %v1006
  %v1351 = vpack.c.b16 %v1011, %v1007
  %v1352 = vpack.c.b16 %v1012, %v1008
  %v1353 = vpack.c.b16 %v1013, %v1009
  %v1354 = vpack.c.b16 %v1018, %v1014
  %v1355 = vpack.c.b16 %v1019, %v1015
  %v1356 = vpack.c.b16 %v1020, %v1016
  %v1357 = vpack.c.b16 %v1021, %v1017
  %v1358 = vpack.c.b16 %v1026, %v1022
  %v1359 = vpack.c.b16 %v1027, %v1023
  %v1360 = vpack.c.b16 %v1028, %v1024
  %v1361 = vpack.c.b16 %v1029, %v1025
  %v1362 = vpack.c.b16 %v1034, %v1030
  %v1363 = vpack.c.b16 %v1035, %v1031
  %v1364 = vpack.c.b16 %v1036, %v1032
  %v1365 = vpack.c.b16 %v1037, %v1033
  %v1366 = vpack.c.b16 %v1042, %v1038
  %v1367 = vpack.c.b16 %v1043, %v1039
  %v1368 = vpack.c.b16 %v1044, %v1040
  %v1369 = vpack.c.b16 %v1045, %v1041
  %v1370 = vpack.c.b16 %v1050, %v1046
  %v1371 = vpack.c.b16 %v1051, %v1047
  %v1372 = vpack.c.b16 %v1052, %v1048
  %v1373 = vpack.c.b16 %v1053, %v1049
  %v1374 = vpack.c.b16 %v1058, %v1054
  %v1375 = vpack.c.b16 %v1059, %v1055
  %v1376 = vpack.c.b16 %v1060, %v1056
  %v1377 = vpack.c.b16 %v1061, %v1057
  %v1378 = vpack.c.b16 %v1066, %v1062
  %v1379 = vpack.c.b16 %v1067, %v1063
  %v1380 = vpack.c.b16 %v1068, %v1064
  %v1381 = vpack.c.b16 %v1069, %v1065
  %v1382 = vpack.c.b16 %v1074, %v1070
  %v1383 = vpack.c.b16 %v1075, %v1071
  %v1384 = vpack.c.b16 %v1076, %v1072
  %v1385 = vpack.c.b16 %v1077, %v1073
  %v1386 = vpack.c.b16 %v1082, %v1078
  %v1387 = vpack.c.b16 %v1083, %v1079
  %v1388 = vpack.c.b16 %v1084, %v1080
  %v1389 = vpack.c.b16 %v1085, %v1081
  %v1390 = vpack.c.b16 %v1090, %v1086
  %v1391 = vpack.c.b16 %v1091, %v1087
  %v1392 = vpack.c.b16 %v1092, %v1088
  %v1393 = vpack.c.b16 %v1093, %v1089
  %v1394 = vpack.c.b16 %v1098, %v1094
  %v1395 = vpack.c.b16 %v1099, %v1095
  %v1396 = vpack.c.b16 %v1100, %v1096
  %v1397 = vpack.c.b16 %v1101, %v1097
  %v1398 = vpack.c.b16 %v1106, %v1102
  %v1399 = vpack.c.b16 %v1107, %v1103
  %v1400 = vpack.c.b16 %v1108, %v1104
  %v1401 = vpack.c.b16 %v1109, %v1105
  %v1402 = vpack.c.b16 %v1114, %v1110
  %v1403 = vpack.c.b16 %v1115, %v1111
  %v1404 = vpack.c.b16 %v1116, %v1112
  %v1405 = vpack.c.b16 %v1117, %v1113
  %v1406 = vpack.c.b16 %v1122, %v1118
  %v1407 = vpack.c.b16 %v1123, %v1119
  %v1408 = vpack.c.b16 %v1124, %v1120
  %v1409 = vpack.c.b16 %v1125, %v1121
  %v1410 = vpack.c.b16 %v1130, %v1126
  %v1411 = vpack.c.b16 %v1131, %v1127
  %v1412 = vpack.c.b16 %v1132, %v1128
  %v1413 = vpack.c.b16 %v1133, %v1129
  %v1414 = vpack.c.b16 %v1138, %v1134
  %v1415 = vpack.c.b16 %v1139, %v1135
  %v1416 = vpack.c.b16 %v1140, %v1136
  %v1417 = vpack.c.b16 %v1141, %v1137
  %v1418 = vpack.c.b16 %v1146, %v1142
  %v1419 = vpack.c.b16 %v1147, %v1143
  %v1420 = vpack.c.b16 %v1148, %v1144
  %v1421 = vpack.c.b16 %v1149, %v1145
  %v1422 = vpack.c.b16 %v1154, %v1150
  %v1423 = vpack.c.b16 %v1155, %v1151
  %v1424 = vpack.c.b16 %v1156, %v1152
  %v1425 = vpack.c.b16 %v1157, %v1153
  %v1426 = vpack.c.b16 %v1162, %v1158
  %v1427 = vpack.c.b16 %v1163, %v1159
  %v1428 = vpack.c.b16 %v1164, %v1160
  %v1429 = vpack.c.b16 %v1165, %v1161
  %v1430 = vpack.c.b16 %v1170, %v1166
  %v1431 = vpack.c.b16 %v1171, %v1167
  %v1432 = vpack.c.b16 %v1172, %v1168
  %v1433 = vpack.c.b16 %v1173, %v1169
  %v1434 = vpack.c.b16 %v1178, %v1174
  %v1435 = vpack.c.b16 %v1179, %v1175
  %v1436 = vpack.c.b16 %v1180, %v1176
  %v1437 = vpack.c.b16 %v1181, %v1177
  %1694 = vmatprep.subr.bf16.mxu0 %v1183
  %1695 = vmatpush1.bf16.msra.mxu0 %v1182
  %1696 = vmatprep.subr.bf16.mxu0 %v1187
  %1697 = vmatpush1.bf16.msra.mxu0 %v1186
  %1698 = vmatprep.subr.bf16.mxu0 %v1191
  %1699 = vmatpush1.bf16.msra.mxu0 %v1190
  %1700 = vmatprep.subr.bf16.mxu0 %v1195
  %1701 = vmatpush1.bf16.msra.mxu0 %v1194
  %1702 = vmatprep.subr.bf16.mxu0 %v1199
  %1703 = vmatpush1.bf16.msra.mxu0 %v1198
  %1704 = vmatprep.subr.bf16.mxu0 %v1203
  %1705 = vmatpush1.bf16.msra.mxu0 %v1202
  %1706 = vmatprep.subr.bf16.mxu0 %v1207
  %1707 = vmatpush1.bf16.msra.mxu0 %v1206
  %1708 = vmatprep.subr.bf16.mxu0 %v1211
  %1709 = vmatpush1.bf16.msra.mxu0 %v1210
  %1710 = vmatprep.subr.bf16.mxu0 %v1215
  %1711 = vmatpush1.bf16.msra.mxu0 %v1214
  %1712 = vmatprep.subr.bf16.mxu0 %v1219
  %1713 = vmatpush1.bf16.msra.mxu0 %v1218
  %1714 = vmatprep.subr.bf16.mxu0 %v1223
  %1715 = vmatpush1.bf16.msra.mxu0 %v1222
  %1716 = vmatprep.subr.bf16.mxu0 %v1227
  %1717 = vmatpush1.bf16.msra.mxu0 %v1226
  %1718 = vmatprep.subr.bf16.mxu0 %v1231
  %1719 = vmatpush1.bf16.msra.mxu0 %v1230
  %1720 = vmatprep.subr.bf16.mxu0 %v1235
  %1721 = vmatpush1.bf16.msra.mxu0 %v1234
  %1722 = vmatprep.subr.bf16.mxu0 %v1239
  %1723 = vmatpush1.bf16.msra.mxu0 %v1238
  %1724 = vmatprep.subr.bf16.mxu0 %v1243
  %1725 = vmatpush1.bf16.msra.mxu0 %v1242
  %1726 = vmatprep.mubr.bf16.mxu0 %v151
  %1727 = vmatmul.mubr.bf16.gmra.mrb[0].mxu0 %v150
  %v1728 = vpop.f32.mrb[0].mxu0
  %v1729 = vadd.f32 0.0, %v1728
  %v1730 = vpop.f32.mrb[0].mxu0
  %v1731 = vadd.f32 0.0, %v1730
  %v1732 = vpop.f32.mrb[0].mxu0
  %v1733 = vpop.f32.mrb[0].mxu0
  %1734 = vdwg.mxu0
  %1735 = vmatprep.subr.bf16.mxu0 %v1247
  %1736 = vmatpush1.bf16.msra.mxu0 %v1246
  %1737 = vmatprep.subr.bf16.mxu0 %v1251
  %1738 = vmatpush1.bf16.msra.mxu0 %v1250
  %1739 = vmatprep.subr.bf16.mxu0 %v1255
  %1740 = vmatpush1.bf16.msra.mxu0 %v1254
  %1741 = vmatprep.subr.bf16.mxu0 %v1259
  %1742 = vmatpush1.bf16.msra.mxu0 %v1258
  %1743 = vmatprep.subr.bf16.mxu0 %v1263
  %1744 = vmatpush1.bf16.msra.mxu0 %v1262
  %1745 = vmatprep.subr.bf16.mxu0 %v1267
  %1746 = vmatpush1.bf16.msra.mxu0 %v1266
  %1747 = vmatprep.subr.bf16.mxu0 %v1271
  %1748 = vmatpush1.bf16.msra.mxu0 %v1270
  %1749 = vmatprep.subr.bf16.mxu0 %v1275
  %1750 = vmatpush1.bf16.msra.mxu0 %v1274
  %1751 = vmatprep.subr.bf16.mxu0 %v1279
  %1752 = vmatpush1.bf16.msra.mxu0 %v1278
  %1753 = vmatprep.subr.bf16.mxu0 %v1283
  %1754 = vmatpush1.bf16.msra.mxu0 %v1282
  %1755 = vmatprep.subr.bf16.mxu0 %v1287
  %1756 = vmatpush1.bf16.msra.mxu0 %v1286
  %1757 = vmatprep.subr.bf16.mxu0 %v1291
  %1758 = vmatpush1.bf16.msra.mxu0 %v1290
  %1759 = vmatprep.subr.bf16.mxu0 %v1295
  %1760 = vmatpush1.bf16.msra.mxu0 %v1294
  %1761 = vmatprep.subr.bf16.mxu0 %v1299
  %1762 = vmatpush1.bf16.msra.mxu0 %v1298
  %1763 = vmatprep.subr.bf16.mxu0 %v1303
  %1764 = vmatpush1.bf16.msra.mxu0 %v1302
  %1765 = vmatprep.subr.bf16.mxu0 %v1307
  %1766 = vmatpush1.bf16.msra.mxu0 %v1306
  %1767 = vmatprep.mubr.bf16.mxu0 %v153
  %1768 = vmatmul.mubr.bf16.gmra.mrb[0].mxu0 %v152
  %v1769 = vpop.f32.mrb[0].mxu0
  %v1770 = vadd.f32 %v1729, %v1769
  %v1771 = vpop.f32.mrb[0].mxu0
  %v1772 = vadd.f32 %v1731, %v1771
  %v1773 = vpop.f32.mrb[0].mxu0
  %v1774 = vpop.f32.mrb[0].mxu0
  %1775 = vdwg.mxu0
  %1776 = vmatprep.subr.bf16.mxu0 %v1311
  %1777 = vmatpush1.bf16.msra.mxu0 %v1310
  %1778 = vmatprep.subr.bf16.mxu0 %v1315
  %1779 = vmatpush1.bf16.msra.mxu0 %v1314
  %1780 = vmatprep.subr.bf16.mxu0 %v1319
  %1781 = vmatpush1.bf16.msra.mxu0 %v1318
  %1782 = vmatprep.subr.bf16.mxu0 %v1323
  %1783 = vmatpush1.bf16.msra.mxu0 %v1322
  %1784 = vmatprep.subr.bf16.mxu0 %v1327
  %1785 = vmatpush1.bf16.msra.mxu0 %v1326
  %1786 = vmatprep.subr.bf16.mxu0 %v1331
  %1787 = vmatpush1.bf16.msra.mxu0 %v1330
  %1788 = vmatprep.subr.bf16.mxu0 %v1335
  %1789 = vmatpush1.bf16.msra.mxu0 %v1334
  %1790 = vmatprep.subr.bf16.mxu0 %v1339
  %1791 = vmatpush1.bf16.msra.mxu0 %v1338
  %1792 = vmatprep.subr.bf16.mxu0 %v1343
  %1793 = vmatpush1.bf16.msra.mxu0 %v1342
  %1794 = vmatprep.subr.bf16.mxu0 %v1347
  %1795 = vmatpush1.bf16.msra.mxu0 %v1346
  %1796 = vmatprep.subr.bf16.mxu0 %v1351
  %1797 = vmatpush1.bf16.msra.mxu0 %v1350
  %1798 = vmatprep.subr.bf16.mxu0 %v1355
  %1799 = vmatpush1.bf16.msra.mxu0 %v1354
  %1800 = vmatprep.subr.bf16.mxu0 %v1359
  %1801 = vmatpush1.bf16.msra.mxu0 %v1358
  %1802 = vmatprep.subr.bf16.mxu0 %v1363
  %1803 = vmatpush1.bf16.msra.mxu0 %v1362
  %1804 = vmatprep.subr.bf16.mxu0 %v1367
  %1805 = vmatpush1.bf16.msra.mxu0 %v1366
  %1806 = vmatprep.subr.bf16.mxu0 %v1371
  %1807 = vmatpush1.bf16.msra.mxu0 %v1370
  %1808 = vmatprep.mubr.bf16.mxu0 %v155
  %1809 = vmatmul.mubr.bf16.gmra.mrb[0].mxu0 %v154
  %v1810 = vpop.f32.mrb[0].mxu0
  %v1811 = vadd.f32 %v1770, %v1810
  %v1812 = vpop.f32.mrb[0].mxu0
  %v1813 = vadd.f32 %v1772, %v1812
  %v1814 = vpop.f32.mrb[0].mxu0
  %v1815 = vpop.f32.mrb[0].mxu0
  %1816 = vdwg.mxu0
  %1817 = vmatprep.subr.bf16.mxu0 %v1375
  %1818 = vmatpush1.bf16.msra.mxu0 %v1374
  %1819 = vmatprep.subr.bf16.mxu0 %v1379
  %1820 = vmatpush1.bf16.msra.mxu0 %v1378
  %1821 = vmatprep.subr.bf16.mxu0 %v1383
  %1822 = vmatpush1.bf16.msra.mxu0 %v1382
  %1823 = vmatprep.subr.bf16.mxu0 %v1387
  %1824 = vmatpush1.bf16.msra.mxu0 %v1386
  %1825 = vmatprep.subr.bf16.mxu0 %v1391
  %1826 = vmatpush1.bf16.msra.mxu0 %v1390
  %1827 = vmatprep.subr.bf16.mxu0 %v1395
  %1828 = vmatpush1.bf16.msra.mxu0 %v1394
  %1829 = vmatprep.subr.bf16.mxu0 %v1399
  %1830 = vmatpush1.bf16.msra.mxu0 %v1398
  %1831 = vmatprep.subr.bf16.mxu0 %v1403
  %1832 = vmatpush1.bf16.msra.mxu0 %v1402
  %1833 = vmatprep.subr.bf16.mxu0 %v1407
  %1834 = vmatpush1.bf16.msra.mxu0 %v1406
  %1835 = vmatprep.subr.bf16.mxu0 %v1411
  %1836 = vmatpush1.bf16.msra.mxu0 %v1410
  %1837 = vmatprep.subr.bf16.mxu0 %v1415
  %1838 = vmatpush1.bf16.msra.mxu0 %v1414
  %1839 = vmatprep.subr.bf16.mxu0 %v1419
  %1840 = vmatpush1.bf16.msra.mxu0 %v1418
  %1841 = vmatprep.subr.bf16.mxu0 %v1423
  %1842 = vmatpush1.bf16.msra.mxu0 %v1422
  %1843 = vmatprep.subr.bf16.mxu0 %v1427
  %1844 = vmatpush1.bf16.msra.mxu0 %v1426
  %1845 = vmatprep.subr.bf16.mxu0 %v1431
  %1846 = vmatpush1.bf16.msra.mxu0 %v1430
  %1847 = vmatprep.subr.bf16.mxu0 %v1435
  %1848 = vmatpush1.bf16.msra.mxu0 %v1434
  %1849 = vmatprep.mubr.bf16.mxu0 %v157
  %1850 = vmatmul.mubr.bf16.gmra.mrb[0].mxu0 %v156
  %v1851 = vpop.f32.mrb[0].mxu0
  %v1852 = vadd.f32 %v1811, %v1851
  %v1853 = vpop.f32.mrb[0].mxu0
  %v1854 = vadd.f32 %v1813, %v1853
  %v1855 = vpop.f32.mrb[0].mxu0
  %v1856 = vpop.f32.mrb[0].mxu0
  %1857 = vdwg.mxu0
  %1858 = vmatprep.subr.bf16.mxu0 %v1185
  %1859 = vmatpush1.bf16.msra.mxu0 %v1184
  %1860 = vmatprep.subr.bf16.mxu0 %v1189
  %1861 = vmatpush1.bf16.msra.mxu0 %v1188
  %1862 = vmatprep.subr.bf16.mxu0 %v1193
  %1863 = vmatpush1.bf16.msra.mxu0 %v1192
  %1864 = vmatprep.subr.bf16.mxu0 %v1197
  %1865 = vmatpush1.bf16.msra.mxu0 %v1196
  %1866 = vmatprep.subr.bf16.mxu0 %v1201
  %1867 = vmatpush1.bf16.msra.mxu0 %v1200
  %1868 = vmatprep.subr.bf16.mxu0 %v1205
  %1869 = vmatpush1.bf16.msra.mxu0 %v1204
  %1870 = vmatprep.subr.bf16.mxu0 %v1209
  %1871 = vmatpush1.bf16.msra.mxu0 %v1208
  %1872 = vmatprep.subr.bf16.mxu0 %v1213
  %1873 = vmatpush1.bf16.msra.mxu0 %v1212
  %1874 = vmatprep.subr.bf16.mxu0 %v1217
  %1875 = vmatpush1.bf16.msra.mxu0 %v1216
  %1876 = vmatprep.subr.bf16.mxu0 %v1221
  %1877 = vmatpush1.bf16.msra.mxu0 %v1220
  %1878 = vmatprep.subr.bf16.mxu0 %v1225
  %1879 = vmatpush1.bf16.msra.mxu0 %v1224
  %1880 = vmatprep.subr.bf16.mxu0 %v1229
  %1881 = vmatpush1.bf16.msra.mxu0 %v1228
  %1882 = vmatprep.subr.bf16.mxu0 %v1233
  %1883 = vmatpush1.bf16.msra.mxu0 %v1232
  %1884 = vmatprep.subr.bf16.mxu0 %v1237
  %1885 = vmatpush1.bf16.msra.mxu0 %v1236
  %1886 = vmatprep.subr.bf16.mxu0 %v1241
  %1887 = vmatpush1.bf16.msra.mxu0 %v1240
  %1888 = vmatprep.subr.bf16.mxu0 %v1245
  %1889 = vmatpush1.bf16.msra.mxu0 %v1244
  %1890 = vmatprep.mubr.bf16.mxu0 %v151
  %1891 = vmatmul.mubr.bf16.gmra.mrb[0].mxu0 %v150
  %v1892 = vpop.f32.mrb[0].mxu0
  %v1893 = vadd.f32 0.0, %v1892
  %v1894 = vpop.f32.mrb[0].mxu0
  %v1895 = vadd.f32 0.0, %v1894
  %v1896 = vpop.f32.mrb[0].mxu0
  %v1897 = vpop.f32.mrb[0].mxu0
  %1898 = vdwg.mxu0
  %1899 = vmatprep.subr.bf16.mxu0 %v1249
  %1900 = vmatpush1.bf16.msra.mxu0 %v1248
  %1901 = vmatprep.subr.bf16.mxu0 %v1253
  %1902 = vmatpush1.bf16.msra.mxu0 %v1252
  %1903 = vmatprep.subr.bf16.mxu0 %v1257
  %1904 = vmatpush1.bf16.msra.mxu0 %v1256
  %1905 = vmatprep.subr.bf16.mxu0 %v1261
  %1906 = vmatpush1.bf16.msra.mxu0 %v1260
  %1907 = vmatprep.subr.bf16.mxu0 %v1265
  %1908 = vmatpush1.bf16.msra.mxu0 %v1264
  %1909 = vmatprep.subr.bf16.mxu0 %v1269
  %1910 = vmatpush1.bf16.msra.mxu0 %v1268
  %1911 = vmatprep.subr.bf16.mxu0 %v1273
  %1912 = vmatpush1.bf16.msra.mxu0 %v1272
  %1913 = vmatprep.subr.bf16.mxu0 %v1277
  %1914 = vmatpush1.bf16.msra.mxu0 %v1276
  %1915 = vmatprep.subr.bf16.mxu0 %v1281
  %1916 = vmatpush1.bf16.msra.mxu0 %v1280
  %1917 = vmatprep.subr.bf16.mxu0 %v1285
  %1918 = vmatpush1.bf16.msra.mxu0 %v1284
  %1919 = vmatprep.subr.bf16.mxu0 %v1289
  %1920 = vmatpush1.bf16.msra.mxu0 %v1288
  %1921 = vmatprep.subr.bf16.mxu0 %v1293
  %1922 = vmatpush1.bf16.msra.mxu0 %v1292
  %1923 = vmatprep.subr.bf16.mxu0 %v1297
  %1924 = vmatpush1.bf16.msra.mxu0 %v1296
  %1925 = vmatprep.subr.bf16.mxu0 %v1301
  %1926 = vmatpush1.bf16.msra.mxu0 %v1300
  %1927 = vmatprep.subr.bf16.mxu0 %v1305
  %1928 = vmatpush1.bf16.msra.mxu0 %v1304
  %1929 = vmatprep.subr.bf16.mxu0 %v1309
  %1930 = vmatpush1.bf16.msra.mxu0 %v1308
  %1931 = vmatprep.mubr.bf16.mxu0 %v153
  %1932 = vmatmul.mubr.bf16.gmra.mrb[0].mxu0 %v152
  %v1933 = vpop.f32.mrb[0].mxu0
  %v1934 = vadd.f32 %v1893, %v1933
  %v1935 = vpop.f32.mrb[0].mxu0
  %v1936 = vadd.f32 %v1895, %v1935
  %v1937 = vpop.f32.mrb[0].mxu0
  %v1938 = vpop.f32.mrb[0].mxu0
  %1939 = vdwg.mxu0
  %1940 = vmatprep.subr.bf16.mxu0 %v1313
  %1941 = vmatpush1.bf16.msra.mxu0 %v1312
  %1942 = vmatprep.subr.bf16.mxu0 %v1317
  %1943 = vmatpush1.bf16.msra.mxu0 %v1316
  %1944 = vmatprep.subr.bf16.mxu0 %v1321
  %1945 = vmatpush1.bf16.msra.mxu0 %v1320
  %1946 = vmatprep.subr.bf16.mxu0 %v1325
  %1947 = vmatpush1.bf16.msra.mxu0 %v1324
  %1948 = vmatprep.subr.bf16.mxu0 %v1329
  %1949 = vmatpush1.bf16.msra.mxu0 %v1328
  %1950 = vmatprep.subr.bf16.mxu0 %v1333
  %1951 = vmatpush1.bf16.msra.mxu0 %v1332
  %1952 = vmatprep.subr.bf16.mxu0 %v1337
  %1953 = vmatpush1.bf16.msra.mxu0 %v1336
  %1954 = vmatprep.subr.bf16.mxu0 %v1341
  %1955 = vmatpush1.bf16.msra.mxu0 %v1340
  %1956 = vmatprep.subr.bf16.mxu0 %v1345
  %1957 = vmatpush1.bf16.msra.mxu0 %v1344
  %1958 = vmatprep.subr.bf16.mxu0 %v1349
  %1959 = vmatpush1.bf16.msra.mxu0 %v1348
  %1960 = vmatprep.subr.bf16.mxu0 %v1353
  %1961 = vmatpush1.bf16.msra.mxu0 %v1352
  %1962 = vmatprep.subr.bf16.mxu0 %v1357
  %1963 = vmatpush1.bf16.msra.mxu0 %v1356
  %1964 = vmatprep.subr.bf16.mxu0 %v1361
  %1965 = vmatpush1.bf16.msra.mxu0 %v1360
  %1966 = vmatprep.subr.bf16.mxu0 %v1365
  %1967 = vmatpush1.bf16.msra.mxu0 %v1364
  %1968 = vmatprep.subr.bf16.mxu0 %v1369
  %1969 = vmatpush1.bf16.msra.mxu0 %v1368
  %1970 = vmatprep.subr.bf16.mxu0 %v1373
  %1971 = vmatpush1.bf16.msra.mxu0 %v1372
  %1972 = vmatprep.mubr.bf16.mxu0 %v155
  %1973 = vmatmul.mubr.bf16.gmra.mrb[0].mxu0 %v154
  %v1974 = vpop.f32.mrb[0].mxu0
  %v1975 = vadd.f32 %v1934, %v1974
  %v1976 = vpop.f32.mrb[0].mxu0
  %v1977 = vadd.f32 %v1936, %v1976
  %v1978 = vpop.f32.mrb[0].mxu0
  %v1979 = vpop.f32.mrb[0].mxu0
  %1980 = vdwg.mxu0
  %1981 = vmatprep.subr.bf16.mxu0 %v1377
  %1982 = vmatpush1.bf16.msra.mxu0 %v1376
  %1983 = vmatprep.subr.bf16.mxu0 %v1381
  %1984 = vmatpush1.bf16.msra.mxu0 %v1380
  %1985 = vmatprep.subr.bf16.mxu0 %v1385
  %1986 = vmatpush1.bf16.msra.mxu0 %v1384
  %1987 = vmatprep.subr.bf16.mxu0 %v1389
  %1988 = vmatpush1.bf16.msra.mxu0 %v1388
  %1989 = vmatprep.subr.bf16.mxu0 %v1393
  %1990 = vmatpush1.bf16.msra.mxu0 %v1392
  %1991 = vmatprep.subr.bf16.mxu0 %v1397
  %1992 = vmatpush1.bf16.msra.mxu0 %v1396
  %1993 = vmatprep.subr.bf16.mxu0 %v1401
  %1994 = vmatpush1.bf16.msra.mxu0 %v1400
  %1995 = vmatprep.subr.bf16.mxu0 %v1405
  %1996 = vmatpush1.bf16.msra.mxu0 %v1404
  %1997 = vmatprep.subr.bf16.mxu0 %v1409
  %1998 = vmatpush1.bf16.msra.mxu0 %v1408
  %1999 = vmatprep.subr.bf16.mxu0 %v1413
  %2000 = vmatpush1.bf16.msra.mxu0 %v1412
  %2001 = vmatprep.subr.bf16.mxu0 %v1417
  %2002 = vmatpush1.bf16.msra.mxu0 %v1416
  %2003 = vmatprep.subr.bf16.mxu0 %v1421
  %2004 = vmatpush1.bf16.msra.mxu0 %v1420
  %2005 = vmatprep.subr.bf16.mxu0 %v1425
  %2006 = vmatpush1.bf16.msra.mxu0 %v1424
  %2007 = vmatprep.subr.bf16.mxu0 %v1429
  %2008 = vmatpush1.bf16.msra.mxu0 %v1428
  %2009 = vmatprep.subr.bf16.mxu0 %v1433
  %2010 = vmatpush1.bf16.msra.mxu0 %v1432
  %2011 = vmatprep.subr.bf16.mxu0 %v1437
  %2012 = vmatpush1.bf16.msra.mxu0 %v1436
  %2013 = vmatprep.mubr.bf16.mxu0 %v157
  %2014 = vmatmul.mubr.bf16.gmra.mrb[0].mxu0 %v156
  %v2015 = vpop.f32.mrb[0].mxu0
  %v2016 = vadd.f32 %v1975, %v2015
  %v2017 = vpop.f32.mrb[0].mxu0
  %v2018 = vadd.f32 %v1977, %v2017
  %v2019 = vpop.f32.mrb[0].mxu0
  %v2020 = vpop.f32.mrb[0].mxu0
  %2021 = vdwg.mxu0
  %v2022 = vld [vmem:[%s4] sm:$0xf]
  %v2023 = vld [vmem:[%s5] sm:$0xf]
  %vm2024 = vcmask 1043456
  %v2025 = vsel %vm2024, %v1852, 0.0
  %v2026 = vrot.slane %v2025, 4
  %v2027 = vadd.f32 %v2025, %v2026
  %v2028 = vrot.slane %v2027, 2
  %v2029 = vadd.f32 %v2027, %v2028
  %v2030 = vrot.slane %v2029, 1
  %v2031 = vadd.f32 %v2029, %v2030
  %v2032 = vsel %vm2024, %v1854, 0.0
  %v2033 = vrot.slane %v2032, 4
  %v2034 = vadd.f32 %v2032, %v2033
  %v2035 = vrot.slane %v2034, 2
  %v2036 = vadd.f32 %v2034, %v2035
  %v2037 = vrot.slane %v2036, 1
  %v2038 = vadd.f32 %v2036, %v2037
  %v2039 = vsel %vm2024, %v2016, 0.0
  %v2040 = vrot.slane %v2039, 4
  %v2041 = vadd.f32 %v2039, %v2040
  %v2042 = vrot.slane %v2041, 2
  %v2043 = vadd.f32 %v2041, %v2042
  %v2044 = vrot.slane %v2043, 1
  %v2045 = vadd.f32 %v2043, %v2044
  %v2046 = vsel %vm2024, %v2018, 0.0
  %v2047 = vrot.slane %v2046, 4
  %v2048 = vadd.f32 %v2046, %v2047
  %v2049 = vrot.slane %v2048, 2
  %v2050 = vadd.f32 %v2048, %v2049
  %v2051 = vrot.slane %v2050, 1
  %v2052 = vadd.f32 %v2050, %v2051
  %v2053 = vrcp.pop 4.0
  %v2054 = vmul.f32 %v2031, %v2053
  %v2055 = vmul.f32 %v2038, %v2053
  %v2056 = vmul.f32 %v2045, %v2053
  %v2057 = vmul.f32 %v2052, %v2053
  %v2058 = vsub.f32 %v1852, %v2054
  %v2059 = vsub.f32 %v1854, %v2055
  %v2060 = vsub.f32 %v2016, %v2056
  %v2061 = vsub.f32 %v2018, %v2057
  %v2062 = vmul.f32 %v2058, %v2058
  %v2063 = vmul.f32 %v2059, %v2059
  %v2064 = vmul.f32 %v2060, %v2060
  %v2065 = vmul.f32 %v2061, %v2061
  %v2066 = vsel %vm2024, %v2062, 0.0
  %v2067 = vrot.slane %v2066, 4
  %v2068 = vadd.f32 %v2066, %v2067
  %v2069 = vrot.slane %v2068, 2
  %v2070 = vadd.f32 %v2068, %v2069
  %v2071 = vrot.slane %v2070, 1
  %v2072 = vadd.f32 %v2070, %v2071
  %v2073 = vsel %vm2024, %v2063, 0.0
  %v2074 = vrot.slane %v2073, 4
  %v2075 = vadd.f32 %v2073, %v2074
  %v2076 = vrot.slane %v2075, 2
  %v2077 = vadd.f32 %v2075, %v2076
  %v2078 = vrot.slane %v2077, 1
  %v2079 = vadd.f32 %v2077, %v2078
  %v2080 = vsel %vm2024, %v2064, 0.0
  %v2081 = vrot.slane %v2080, 4
  %v2082 = vadd.f32 %v2080, %v2081
  %v2083 = vrot.slane %v2082, 2
  %v2084 = vadd.f32 %v2082, %v2083
  %v2085 = vrot.slane %v2084, 1
  %v2086 = vadd.f32 %v2084, %v2085
  %v2087 = vsel %vm2024, %v2065, 0.0
  %v2088 = vrot.slane %v2087, 4
  %v2089 = vadd.f32 %v2087, %v2088
  %v2090 = vrot.slane %v2089, 2
  %v2091 = vadd.f32 %v2089, %v2090
  %v2092 = vrot.slane %v2091, 1
  %v2093 = vadd.f32 %v2091, %v2092
  %v2094 = vmul.f32 %v2072, %v2053
  %v2095 = vmul.f32 %v2079, %v2053
  %v2096 = vmul.f32 %v2086, %v2053
  %v2097 = vmul.f32 %v2093, %v2053
  %v2098 = vadd.f32 %v2094, 1e-05
  %v2099 = vadd.f32 %v2095, 1e-05
  %v2100 = vadd.f32 %v2096, 1e-05
  %v2101 = vadd.f32 %v2097, 1e-05
  %v2102 = vrsqrt.pop %v2098
  %v2103 = vrsqrt.pop %v2099
  %v2104 = vrsqrt.pop %v2100
  %v2105 = vrsqrt.pop %v2101
  %v2110 = vcombine.low %v2102, %v2103
  %v2111 = vcombine.low %v2104, %v2105
  %v2113 = vunpack.c.l.s4 1966171168
  %v2114 = vunpack.c.0.s8 %v2113
  %v2115 = vlaneseq
  %v2116 = vshrl.u32 %v2115, 7
  %v2117 = vsub.s32 %v2114, %v2116
  %v2118 = vrot.slane %v2110, %v2117
  %v2120 = vunpack.c.l.s4 1966171168
  %v2121 = vunpack.c.0.s8 %v2120
  %v2122 = vlaneseq
  %v2123 = vshrl.u32 %v2122, 7
  %v2124 = vsub.s32 %v2121, %v2123
  %v2125 = vrot.slane %v2111, %v2124
  %v2126 = vcombine.low %v2118, %v2125
  %v2128 = vunpack.c.l.s4 1966171168
  %v2129 = vunpack.c.0.s8 %v2128
  %v2130 = vlaneseq
  %v2131 = vshrl.u32 %v2130, 7
  %v2132 = vsub.s32 %v2129, %v2131
  %v2133 = vrot.slane %v2126, %v2132
  %v2135 = vmul.f32 %v2022, %v2133
  %v2137 = vlaneseq
  %v2138 = vshrl.u32 %v2137, 7
  %v2139 = vsub.s32 0, %v2138
  %v2140 = vrot.slane %v2135, %v2139
  %v2141 = vlaneseq
  %v2142 = vshrl.u32 %v2141, 7
  %v2143 = vsub.s32 1, %v2142
  %v2144 = vrot.slane %v2135, %v2143
  %v2145 = vlaneseq
  %v2146 = vshrl.u32 %v2145, 7
  %v2147 = vsub.s32 2, %v2146
  %v2148 = vrot.slane %v2135, %v2147
  %v2149 = vlaneseq
  %v2150 = vshrl.u32 %v2149, 7
  %v2151 = vsub.s32 3, %v2150
  %v2152 = vrot.slane %v2135, %v2151
  %v2157 = vmul.f32 %v1852, %v2140
  %v2158 = vmul.f32 %v1854, %v2144
  %v2159 = vmul.f32 %v2016, %v2148
  %v2160 = vmul.f32 %v2018, %v2152
  %v2161 = vmul.f32 %v2054, %v2140
  %v2162 = vmul.f32 %v2055, %v2144
  %v2163 = vmul.f32 %v2056, %v2148
  %v2164 = vmul.f32 %v2057, %v2152
  %v2169 = vcombine.low %v2161, %v2162
  %v2170 = vcombine.low %v2163, %v2164
  %v2172 = vunpack.c.l.s4 1966171168
  %v2173 = vunpack.c.0.s8 %v2172
  %v2174 = vlaneseq
  %v2175 = vshrl.u32 %v2174, 7
  %v2176 = vsub.s32 %v2173, %v2175
  %v2177 = vrot.slane %v2169, %v2176
  %v2179 = vunpack.c.l.s4 1966171168
  %v2180 = vunpack.c.0.s8 %v2179
  %v2181 = vlaneseq
  %v2182 = vshrl.u32 %v2181, 7
  %v2183 = vsub.s32 %v2180, %v2182
  %v2184 = vrot.slane %v2170, %v2183
  %v2185 = vcombine.low %v2177, %v2184
  %v2187 = vunpack.c.l.s4 1966171168
  %v2188 = vunpack.c.0.s8 %v2187
  %v2189 = vlaneseq
  %v2190 = vshrl.u32 %v2189, 7
  %v2191 = vsub.s32 %v2188, %v2190
  %v2192 = vrot.slane %v2185, %v2191
  %v2194 = vsub.f32 %v2023, %v2192
  %v2196 = vlaneseq
  %v2197 = vshrl.u32 %v2196, 7
  %v2198 = vsub.s32 0, %v2197
  %v2199 = vrot.slane %v2194, %v2198
  %v2200 = vlaneseq
  %v2201 = vshrl.u32 %v2200, 7
  %v2202 = vsub.s32 1, %v2201
  %v2203 = vrot.slane %v2194, %v2202
  %v2204 = vlaneseq
  %v2205 = vshrl.u32 %v2204, 7
  %v2206 = vsub.s32 2, %v2205
  %v2207 = vrot.slane %v2194, %v2206
  %v2208 = vlaneseq
  %v2209 = vshrl.u32 %v2208, 7
  %v2210 = vsub.s32 3, %v2209
  %v2211 = vrot.slane %v2194, %v2210
  %v2216 = vadd.f32 %v2157, %v2199
  %v2217 = vadd.f32 %v2158, %v2203
  %v2218 = vadd.f32 %v2159, %v2207
  %v2219 = vadd.f32 %v2160, %v2211
  %v2220 = vmax.f32 %v2216, 0.0
  %v2221 = vmax.f32 %v2217, 0.0
  %v2222 = vmax.f32 %v2218, 0.0
  %v2223 = vmax.f32 %v2219, 0.0
  %v2224 = vpack.c.bf16 %v2220, %v2220
  %v2225 = vpack.c.bf16 %v2221, %v2221
  %v2226 = vpack.c.bf16 %v2222, %v2222
  %v2227 = vpack.c.bf16 %v2223, %v2223
  %v2228 = vld [vmem:[%s6] sm:$0xff]
  %v2229 = vld [vmem:[%s6 + $0x8] sm:$0xff]
  %v2230 = vld [vmem:[%s6 + $0x10] sm:$0xff]
  %v2231 = vld [vmem:[%s6 + $0x18] sm:$0xff]
  %v2232 = vld [vmem:[%s6 + $0x20] sm:$0xff]
  %v2233 = vld [vmem:[%s6 + $0x28] sm:$0xff]
  %v2234 = vld [vmem:[%s6 + $0x30] sm:$0xff]
  %v2235 = vld [vmem:[%s6 + $0x38] sm:$0xff]
  %v2236 = vld [vmem:[%s6 + $0x40] sm:$0xff]
  %v2237 = vld [vmem:[%s6 + $0x48] sm:$0xff]
  %v2238 = vld [vmem:[%s6 + $0x50] sm:$0xff]
  %v2239 = vld [vmem:[%s6 + $0x58] sm:$0xff]
  %v2240 = vld [vmem:[%s6 + $0x60] sm:$0xff]
  %v2241 = vld [vmem:[%s6 + $0x68] sm:$0xff]
  %v2242 = vld [vmem:[%s6 + $0x70] sm:$0xff]
  %v2243 = vld [vmem:[%s6 + $0x78] sm:$0xff]
  %v2244 = vld [vmem:[%s6 + $0x80] sm:$0xff]
  %v2245 = vld [vmem:[%s6 + $0x88] sm:$0xff]
  %v2246 = vld [vmem:[%s6 + $0x90] sm:$0xff]
  %v2247 = vld [vmem:[%s6 + $0x98] sm:$0xff]
  %v2248 = vld [vmem:[%s6 + $0xa0] sm:$0xff]
  %v2249 = vld [vmem:[%s6 + $0xa8] sm:$0xff]
  %v2250 = vld [vmem:[%s6 + $0xb0] sm:$0xff]
  %v2251 = vld [vmem:[%s6 + $0xb8] sm:$0xff]
  %v2252 = vld [vmem:[%s6 + $0xc0] sm:$0xff]
  %v2253 = vld [vmem:[%s6 + $0xc8] sm:$0xff]
  %v2254 = vld [vmem:[%s6 + $0xd0] sm:$0xff]
  %v2255 = vld [vmem:[%s6 + $0xd8] sm:$0xff]
  %v2256 = vld [vmem:[%s6 + $0xe0] sm:$0xff]
  %v2257 = vld [vmem:[%s6 + $0xe8] sm:$0xff]
  %v2258 = vld [vmem:[%s6 + $0xf0] sm:$0xff]
  %v2259 = vld [vmem:[%s6 + $0xf8] sm:$0xff]
  %v2260 = vld [vmem:[%s6 + $0x100] sm:$0xff]
  %v2261 = vld [vmem:[%s6 + $0x108] sm:$0xff]
  %v2262 = vld [vmem:[%s6 + $0x110] sm:$0xff]
  %v2263 = vld [vmem:[%s6 + $0x118] sm:$0xff]
  %v2264 = vld [vmem:[%s6 + $0x120] sm:$0xff]
  %v2265 = vld [vmem:[%s6 + $0x128] sm:$0xff]
  %v2266 = vld [vmem:[%s6 + $0x130] sm:$0xff]
  %v2267 = vld [vmem:[%s6 + $0x138] sm:$0xff]
  %v2268 = vld [vmem:[%s6 + $0x140] sm:$0xff]
  %v2269 = vld [vmem:[%s6 + $0x148] sm:$0xff]
  %v2270 = vld [vmem:[%s6 + $0x150] sm:$0xff]
  %v2271 = vld [vmem:[%s6 + $0x158] sm:$0xff]
  %v2272 = vld [vmem:[%s6 + $0x160] sm:$0xff]
  %v2273 = vld [vmem:[%s6 + $0x168] sm:$0xff]
  %v2274 = vld [vmem:[%s6 + $0x170] sm:$0xff]
  %v2275 = vld [vmem:[%s6 + $0x178] sm:$0xff]
  %v2276 = vld [vmem:[%s6 + $0x180] sm:$0xff]
  %v2277 = vld [vmem:[%s6 + $0x188] sm:$0xff]
  %v2278 = vld [vmem:[%s6 + $0x190] sm:$0xff]
  %v2279 = vld [vmem:[%s6 + $0x198] sm:$0xff]
  %v2280 = vld [vmem:[%s6 + $0x1a0] sm:$0xff]
  %v2281 = vld [vmem:[%s6 + $0x1a8] sm:$0xff]
  %v2282 = vld [vmem:[%s6 + $0x1b0] sm:$0xff]
  %v2283 = vld [vmem:[%s6 + $0x1b8] sm:$0xff]
  %v2284 = vld [vmem:[%s6 + $0x1c0] sm:$0xff]
  %v2285 = vld [vmem:[%s6 + $0x1c8] sm:$0xff]
  %v2286 = vld [vmem:[%s6 + $0x1d0] sm:$0xff]
  %v2287 = vld [vmem:[%s6 + $0x1d8] sm:$0xff]
  %v2288 = vld [vmem:[%s6 + $0x1e0] sm:$0xff]
  %v2289 = vld [vmem:[%s6 + $0x1e8] sm:$0xff]
  %v2290 = vld [vmem:[%s6 + $0x1f0] sm:$0xff]
  %v2291 = vld [vmem:[%s6 + $0x1f8] sm:$0xff]
  %v2356 = vunpack.c.l.b16 %v2228
  %v2357 = vunpack.c.h.b16 %v2228
  %v2358 = vunpack.c.l.b16 %v2229
  %v2359 = vunpack.c.h.b16 %v2229
  %v2360 = vunpack.c.l.b16 %v2230
  %v2361 = vunpack.c.h.b16 %v2230
  %v2362 = vunpack.c.l.b16 %v2231
  %v2363 = vunpack.c.h.b16 %v2231
  %v2364 = vunpack.c.l.b16 %v2232
  %v2365 = vunpack.c.h.b16 %v2232
  %v2366 = vunpack.c.l.b16 %v2233
  %v2367 = vunpack.c.h.b16 %v2233
  %v2368 = vunpack.c.l.b16 %v2234
  %v2369 = vunpack.c.h.b16 %v2234
  %v2370 = vunpack.c.l.b16 %v2235
  %v2371 = vunpack.c.h.b16 %v2235
  %v2372 = vunpack.c.l.b16 %v2236
  %v2373 = vunpack.c.h.b16 %v2236
  %v2374 = vunpack.c.l.b16 %v2237
  %v2375 = vunpack.c.h.b16 %v2237
  %v2376 = vunpack.c.l.b16 %v2238
  %v2377 = vunpack.c.h.b16 %v2238
  %v2378 = vunpack.c.l.b16 %v2239
  %v2379 = vunpack.c.h.b16 %v2239
  %v2380 = vunpack.c.l.b16 %v2240
  %v2381 = vunpack.c.h.b16 %v2240
  %v2382 = vunpack.c.l.b16 %v2241
  %v2383 = vunpack.c.h.b16 %v2241
  %v2384 = vunpack.c.l.b16 %v2242
  %v2385 = vunpack.c.h.b16 %v2242
  %v2386 = vunpack.c.l.b16 %v2243
  %v2387 = vunpack.c.h.b16 %v2243
  %v2388 = vunpack.c.l.b16 %v2244
  %v2389 = vunpack.c.h.b16 %v2244
  %v2390 = vunpack.c.l.b16 %v2245
  %v2391 = vunpack.c.h.b16 %v2245
  %v2392 = vunpack.c.l.b16 %v2246
  %v2393 = vunpack.c.h.b16 %v2246
  %v2394 = vunpack.c.l.b16 %v2247
  %v2395 = vunpack.c.h.b16 %v2247
  %v2396 = vunpack.c.l.b16 %v2248
  %v2397 = vunpack.c.h.b16 %v2248
  %v2398 = vunpack.c.l.b16 %v2249
  %v2399 = vunpack.c.h.b16 %v2249
  %v2400 = vunpack.c.l.b16 %v2250
  %v2401 = vunpack.c.h.b16 %v2250
  %v2402 = vunpack.c.l.b16 %v2251
  %v2403 = vunpack.c.h.b16 %v2251
  %v2404 = vunpack.c.l.b16 %v2252
  %v2405 = vunpack.c.h.b16 %v2252
  %v2406 = vunpack.c.l.b16 %v2253
  %v2407 = vunpack.c.h.b16 %v2253
  %v2408 = vunpack.c.l.b16 %v2254
  %v2409 = vunpack.c.h.b16 %v2254
  %v2410 = vunpack.c.l.b16 %v2255
  %v2411 = vunpack.c.h.b16 %v2255
  %v2412 = vunpack.c.l.b16 %v2256
  %v2413 = vunpack.c.h.b16 %v2256
  %v2414 = vunpack.c.l.b16 %v2257
  %v2415 = vunpack.c.h.b16 %v2257
  %v2416 = vunpack.c.l.b16 %v2258
  %v2417 = vunpack.c.h.b16 %v2258
  %v2418 = vunpack.c.l.b16 %v2259
  %v2419 = vunpack.c.h.b16 %v2259
  %v2420 = vunpack.c.l.b16 %v2260
  %v2421 = vunpack.c.h.b16 %v2260
  %v2422 = vunpack.c.l.b16 %v2261
  %v2423 = vunpack.c.h.b16 %v2261
  %v2424 = vunpack.c.l.b16 %v2262
  %v2425 = vunpack.c.h.b16 %v2262
  %v2426 = vunpack.c.l.b16 %v2263
  %v2427 = vunpack.c.h.b16 %v2263
  %v2428 = vunpack.c.l.b16 %v2264
  %v2429 = vunpack.c.h.b16 %v2264
  %v2430 = vunpack.c.l.b16 %v2265
  %v2431 = vunpack.c.h.b16 %v2265
  %v2432 = vunpack.c.l.b16 %v2266
  %v2433 = vunpack.c.h.b16 %v2266
  %v2434 = vunpack.c.l.b16 %v2267
  %v2435 = vunpack.c.h.b16 %v2267
  %v2436 = vunpack.c.l.b16 %v2268
  %v2437 = vunpack.c.h.b16 %v2268
  %v2438 = vunpack.c.l.b16 %v2269
  %v2439 = vunpack.c.h.b16 %v2269
  %v2440 = vunpack.c.l.b16 %v2270
  %v2441 = vunpack.c.h.b16 %v2270
  %v2442 = vunpack.c.l.b16 %v2271
  %v2443 = vunpack.c.h.b16 %v2271
  %v2444 = vunpack.c.l.b16 %v2272
  %v2445 = vunpack.c.h.b16 %v2272
  %v2446 = vunpack.c.l.b16 %v2273
  %v2447 = vunpack.c.h.b16 %v2273
  %v2448 = vunpack.c.l.b16 %v2274
  %v2449 = vunpack.c.h.b16 %v2274
  %v2450 = vunpack.c.l.b16 %v2275
  %v2451 = vunpack.c.h.b16 %v2275
  %v2452 = vunpack.c.l.b16 %v2276
  %v2453 = vunpack.c.h.b16 %v2276
  %v2454 = vunpack.c.l.b16 %v2277
  %v2455 = vunpack.c.h.b16 %v2277
  %v2456 = vunpack.c.l.b16 %v2278
  %v2457 = vunpack.c.h.b16 %v2278
  %v2458 = vunpack.c.l.b16 %v2279
  %v2459 = vunpack.c.h.b16 %v2279
  %v2460 = vunpack.c.l.b16 %v2280
  %v2461 = vunpack.c.h.b16 %v2280
  %v2462 = vunpack.c.l.b16 %v2281
  %v2463 = vunpack.c.h.b16 %v2281
  %v2464 = vunpack.c.l.b16 %v2282
  %v2465 = vunpack.c.h.b16 %v2282
  %v2466 = vunpack.c.l.b16 %v2283
  %v2467 = vunpack.c.h.b16 %v2283
  %v2468 = vunpack.c.l.b16 %v2284
  %v2469 = vunpack.c.h.b16 %v2284
  %v2470 = vunpack.c.l.b16 %v2285
  %v2471 = vunpack.c.h.b16 %v2285
  %v2472 = vunpack.c.l.b16 %v2286
  %v2473 = vunpack.c.h.b16 %v2286
  %v2474 = vunpack.c.l.b16 %v2287
  %v2475 = vunpack.c.h.b16 %v2287
  %v2476 = vunpack.c.l.b16 %v2288
  %v2477 = vunpack.c.h.b16 %v2288
  %v2478 = vunpack.c.l.b16 %v2289
  %v2479 = vunpack.c.h.b16 %v2289
  %v2480 = vunpack.c.l.b16 %v2290
  %v2481 = vunpack.c.h.b16 %v2290
  %v2482 = vunpack.c.l.b16 %v2291
  %v2483 = vunpack.c.h.b16 %v2291
  %v2484 = vpack.c.b16 %v2358, %v2356
  %v2485 = vpack.c.b16 %v2359, %v2357
  %v2486 = vpack.c.b16 %v2362, %v2360
  %v2487 = vpack.c.b16 %v2363, %v2361
  %v2488 = vpack.c.b16 %v2366, %v2364
  %v2489 = vpack.c.b16 %v2367, %v2365
  %v2490 = vpack.c.b16 %v2370, %v2368
  %v2491 = vpack.c.b16 %v2371, %v2369
  %v2492 = vpack.c.b16 %v2374, %v2372
  %v2493 = vpack.c.b16 %v2375, %v2373
  %v2494 = vpack.c.b16 %v2378, %v2376
  %v2495 = vpack.c.b16 %v2379, %v2377
  %v2496 = vpack.c.b16 %v2382, %v2380
  %v2497 = vpack.c.b16 %v2383, %v2381
  %v2498 = vpack.c.b16 %v2386, %v2384
  %v2499 = vpack.c.b16 %v2387, %v2385
  %v2500 = vpack.c.b16 %v2390, %v2388
  %v2501 = vpack.c.b16 %v2391, %v2389
  %v2502 = vpack.c.b16 %v2394, %v2392
  %v2503 = vpack.c.b16 %v2395, %v2393
  %v2504 = vpack.c.b16 %v2398, %v2396
  %v2505 = vpack.c.b16 %v2399, %v2397
  %v2506 = vpack.c.b16 %v2402, %v2400
  %v2507 = vpack.c.b16 %v2403, %v2401
  %v2508 = vpack.c.b16 %v2406, %v2404
  %v2509 = vpack.c.b16 %v2407, %v2405
  %v2510 = vpack.c.b16 %v2410, %v2408
  %v2511 = vpack.c.b16 %v2411, %v2409
  %v2512 = vpack.c.b16 %v2414, %v2412
  %v2513 = vpack.c.b16 %v2415, %v2413
  %v2514 = vpack.c.b16 %v2418, %v2416
  %v2515 = vpack.c.b16 %v2419, %v2417
  %v2516 = vpack.c.b16 %v2422, %v2420
  %v2517 = vpack.c.b16 %v2423, %v2421
  %v2518 = vpack.c.b16 %v2426, %v2424
  %v2519 = vpack.c.b16 %v2427, %v2425
  %v2520 = vpack.c.b16 %v2430, %v2428
  %v2521 = vpack.c.b16 %v2431, %v2429
  %v2522 = vpack.c.b16 %v2434, %v2432
  %v2523 = vpack.c.b16 %v2435, %v2433
  %v2524 = vpack.c.b16 %v2438, %v2436
  %v2525 = vpack.c.b16 %v2439, %v2437
  %v2526 = vpack.c.b16 %v2442, %v2440
  %v2527 = vpack.c.b16 %v2443, %v2441
  %v2528 = vpack.c.b16 %v2446, %v2444
  %v2529 = vpack.c.b16 %v2447, %v2445
  %v2530 = vpack.c.b16 %v2450, %v2448
  %v2531 = vpack.c.b16 %v2451, %v2449
  %v2532 = vpack.c.b16 %v2454, %v2452
  %v2533 = vpack.c.b16 %v2455, %v2453
  %v2534 = vpack.c.b16 %v2458, %v2456
  %v2535 = vpack.c.b16 %v2459, %v2457
  %v2536 = vpack.c.b16 %v2462, %v2460
  %v2537 = vpack.c.b16 %v2463, %v2461
  %v2538 = vpack.c.b16 %v2466, %v2464
  %v2539 = vpack.c.b16 %v2467, %v2465
  %v2540 = vpack.c.b16 %v2470, %v2468
  %v2541 = vpack.c.b16 %v2471, %v2469
  %v2542 = vpack.c.b16 %v2474, %v2472
  %v2543 = vpack.c.b16 %v2475, %v2473
  %v2544 = vpack.c.b16 %v2478, %v2476
  %v2545 = vpack.c.b16 %v2479, %v2477
  %v2546 = vpack.c.b16 %v2482, %v2480
  %v2547 = vpack.c.b16 %v2483, %v2481
  %2612 = vmatprep.subr.bf16.mxu0 %v2485
  %2613 = vmatpush1.bf16.msra.mxu0 %v2484
  %2614 = vmatprep.subr.bf16.mxu0 %v2487
  %2615 = vmatpush1.bf16.msra.mxu0 %v2486
  %2616 = vmatprep.subr.bf16.mxu0 %v2489
  %2617 = vmatpush1.bf16.msra.mxu0 %v2488
  %2618 = vmatprep.subr.bf16.mxu0 %v2491
  %2619 = vmatpush1.bf16.msra.mxu0 %v2490
  %2620 = vmatprep.subr.bf16.mxu0 %v2493
  %2621 = vmatpush1.bf16.msra.mxu0 %v2492
  %2622 = vmatprep.subr.bf16.mxu0 %v2495
  %2623 = vmatpush1.bf16.msra.mxu0 %v2494
  %2624 = vmatprep.subr.bf16.mxu0 %v2497
  %2625 = vmatpush1.bf16.msra.mxu0 %v2496
  %2626 = vmatprep.subr.bf16.mxu0 %v2499
  %2627 = vmatpush1.bf16.msra.mxu0 %v2498
  %2628 = vmatprep.subr.bf16.mxu0 %v2501
  %2629 = vmatpush1.bf16.msra.mxu0 %v2500
  %2630 = vmatprep.subr.bf16.mxu0 %v2503
  %2631 = vmatpush1.bf16.msra.mxu0 %v2502
  %2632 = vmatprep.subr.bf16.mxu0 %v2505
  %2633 = vmatpush1.bf16.msra.mxu0 %v2504
  %2634 = vmatprep.subr.bf16.mxu0 %v2507
  %2635 = vmatpush1.bf16.msra.mxu0 %v2506
  %2636 = vmatprep.subr.bf16.mxu0 %v2509
  %2637 = vmatpush1.bf16.msra.mxu0 %v2508
  %2638 = vmatprep.subr.bf16.mxu0 %v2511
  %2639 = vmatpush1.bf16.msra.mxu0 %v2510
  %2640 = vmatprep.subr.bf16.mxu0 %v2513
  %2641 = vmatpush1.bf16.msra.mxu0 %v2512
  %2642 = vmatprep.subr.bf16.mxu0 %v2515
  %2643 = vmatpush1.bf16.msra.mxu0 %v2514
  %2644 = vmatprep.mubr.bf16.mxu0 %v2225
  %2645 = vmatmul.mubr.bf16.gmra.mrb[0].mxu0 %v2224
  %v2646 = vpop.f32.mrb[0].mxu0
  %v2647 = vadd.f32 0.0, %v2646
  %v2648 = vpop.f32.mrb[0].mxu0
  %v2649 = vadd.f32 0.0, %v2648
  %v2650 = vpop.f32.mrb[0].mxu0
  %v2651 = vpop.f32.mrb[0].mxu0
  %2652 = vdwg.mxu0
  %2653 = vmatprep.subr.bf16.mxu0 %v2517
  %2654 = vmatpush1.bf16.msra.mxu0 %v2516
  %2655 = vmatprep.subr.bf16.mxu0 %v2519
  %2656 = vmatpush1.bf16.msra.mxu0 %v2518
  %2657 = vmatprep.subr.bf16.mxu0 %v2521
  %2658 = vmatpush1.bf16.msra.mxu0 %v2520
  %2659 = vmatprep.subr.bf16.mxu0 %v2523
  %2660 = vmatpush1.bf16.msra.mxu0 %v2522
  %2661 = vmatprep.subr.bf16.mxu0 %v2525
  %2662 = vmatpush1.bf16.msra.mxu0 %v2524
  %2663 = vmatprep.subr.bf16.mxu0 %v2527
  %2664 = vmatpush1.bf16.msra.mxu0 %v2526
  %2665 = vmatprep.subr.bf16.mxu0 %v2529
  %2666 = vmatpush1.bf16.msra.mxu0 %v2528
  %2667 = vmatprep.subr.bf16.mxu0 %v2531
  %2668 = vmatpush1.bf16.msra.mxu0 %v2530
  %2669 = vmatprep.subr.bf16.mxu0 %v2533
  %2670 = vmatpush1.bf16.msra.mxu0 %v2532
  %2671 = vmatprep.subr.bf16.mxu0 %v2535
  %2672 = vmatpush1.bf16.msra.mxu0 %v2534
  %2673 = vmatprep.subr.bf16.mxu0 %v2537
  %2674 = vmatpush1.bf16.msra.mxu0 %v2536
  %2675 = vmatprep.subr.bf16.mxu0 %v2539
  %2676 = vmatpush1.bf16.msra.mxu0 %v2538
  %2677 = vmatprep.subr.bf16.mxu0 %v2541
  %2678 = vmatpush1.bf16.msra.mxu0 %v2540
  %2679 = vmatprep.subr.bf16.mxu0 %v2543
  %2680 = vmatpush1.bf16.msra.mxu0 %v2542
  %2681 = vmatprep.subr.bf16.mxu0 %v2545
  %2682 = vmatpush1.bf16.msra.mxu0 %v2544
  %2683 = vmatprep.subr.bf16.mxu0 %v2547
  %2684 = vmatpush1.bf16.msra.mxu0 %v2546
  %2685 = vmatprep.mubr.bf16.mxu0 %v2227
  %2686 = vmatmul.mubr.bf16.gmra.mrb[0].mxu0 %v2226
  %v2687 = vpop.f32.mrb[0].mxu0
  %v2688 = vadd.f32 %v2647, %v2687
  %v2689 = vpop.f32.mrb[0].mxu0
  %v2690 = vadd.f32 %v2649, %v2689
  %v2691 = vpop.f32.mrb[0].mxu0
  %v2692 = vpop.f32.mrb[0].mxu0
  %2693 = vdwg.mxu0
  %v2694 = vld [vmem:[%s7] sm:$0x3]
  %v2695 = vld [vmem:[%s8] sm:$0x3]
  %v2696 = vsel %vm2024, %v2688, 0.0
  %v2697 = vrot.slane %v2696, 4
  %v2698 = vadd.f32 %v2696, %v2697
  %v2699 = vrot.slane %v2698, 2
  %v2700 = vadd.f32 %v2698, %v2699
  %v2701 = vrot.slane %v2700, 1
  %v2702 = vadd.f32 %v2700, %v2701
  %v2703 = vsel %vm2024, %v2690, 0.0
  %v2704 = vrot.slane %v2703, 4
  %v2705 = vadd.f32 %v2703, %v2704
  %v2706 = vrot.slane %v2705, 2
  %v2707 = vadd.f32 %v2705, %v2706
  %v2708 = vrot.slane %v2707, 1
  %v2709 = vadd.f32 %v2707, %v2708
  %v2710 = vmul.f32 %v2702, %v2053
  %v2711 = vmul.f32 %v2709, %v2053
  %v2712 = vsub.f32 %v2688, %v2710
  %v2713 = vsub.f32 %v2690, %v2711
  %v2714 = vmul.f32 %v2712, %v2712
  %v2715 = vmul.f32 %v2713, %v2713
  %v2716 = vsel %vm2024, %v2714, 0.0
  %v2717 = vrot.slane %v2716, 4
  %v2718 = vadd.f32 %v2716, %v2717
  %v2719 = vrot.slane %v2718, 2
  %v2720 = vadd.f32 %v2718, %v2719
  %v2721 = vrot.slane %v2720, 1
  %v2722 = vadd.f32 %v2720, %v2721
  %v2723 = vsel %vm2024, %v2715, 0.0
  %v2724 = vrot.slane %v2723, 4
  %v2725 = vadd.f32 %v2723, %v2724
  %v2726 = vrot.slane %v2725, 2
  %v2727 = vadd.f32 %v2725, %v2726
  %v2728 = vrot.slane %v2727, 1
  %v2729 = vadd.f32 %v2727, %v2728
  %v2730 = vmul.f32 %v2722, %v2053
  %v2731 = vmul.f32 %v2729, %v2053
  %v2732 = vadd.f32 %v2730, 1e-05
  %v2733 = vadd.f32 %v2731, 1e-05
  %v2734 = vrsqrt.pop %v2732
  %v2735 = vrsqrt.pop %v2733
  %v2738 = vcombine.low %v2734, %v2735
  %v2740 = vunpack.c.l.s4 1966171168
  %v2741 = vunpack.c.0.s8 %v2740
  %v2742 = vlaneseq
  %v2743 = vshrl.u32 %v2742, 7
  %v2744 = vsub.s32 %v2741, %v2743
  %v2745 = vrot.slane %v2738, %v2744
  %v2747 = vunpack.c.l.s4 1966171168
  %v2748 = vunpack.c.0.s8 %v2747
  %v2749 = vlaneseq
  %v2750 = vshrl.u32 %v2749, 7
  %v2751 = vsub.s32 %v2748, %v2750
  %v2752 = vrot.slane %v2745, %v2751
  %v2754 = vmul.f32 %v2694, %v2752
  %v2756 = vlaneseq
  %v2757 = vshrl.u32 %v2756, 7
  %v2758 = vsub.s32 0, %v2757
  %v2759 = vrot.slane %v2754, %v2758
  %v2760 = vlaneseq
  %v2761 = vshrl.u32 %v2760, 7
  %v2762 = vsub.s32 1, %v2761
  %v2763 = vrot.slane %v2754, %v2762
  %v2766 = vmul.f32 %v2688, %v2759
  %v2767 = vmul.f32 %v2690, %v2763
  %v2768 = vmul.f32 %v2710, %v2759
  %v2769 = vmul.f32 %v2711, %v2763
  %v2772 = vcombine.low %v2768, %v2769
  %v2774 = vunpack.c.l.s4 1966171168
  %v2775 = vunpack.c.0.s8 %v2774
  %v2776 = vlaneseq
  %v2777 = vshrl.u32 %v2776, 7
  %v2778 = vsub.s32 %v2775, %v2777
  %v2779 = vrot.slane %v2772, %v2778
  %v2781 = vunpack.c.l.s4 1966171168
  %v2782 = vunpack.c.0.s8 %v2781
  %v2783 = vlaneseq
  %v2784 = vshrl.u32 %v2783, 7
  %v2785 = vsub.s32 %v2782, %v2784
  %v2786 = vrot.slane %v2779, %v2785
  %v2788 = vsub.f32 %v2695, %v2786
  %v2790 = vlaneseq
  %v2791 = vshrl.u32 %v2790, 7
  %v2792 = vsub.s32 0, %v2791
  %v2793 = vrot.slane %v2788, %v2792
  %v2794 = vlaneseq
  %v2795 = vshrl.u32 %v2794, 7
  %v2796 = vsub.s32 1, %v2795
  %v2797 = vrot.slane %v2788, %v2796
  %v2800 = vadd.f32 %v2766, %v2793
  %v2801 = vadd.f32 %v2767, %v2797
  %v2802 = vmax.f32 %v2800, 0.0
  %v2803 = vmax.f32 %v2801, 0.0
  %v2804 = vpack.c.bf16 %v2802, %v2802
  %v2805 = vpack.c.bf16 %v2803, %v2803
  %v2806 = vld [vmem:[%s9] sm:$0xff]
  %v2807 = vld [vmem:[%s9 + $0x8] sm:$0xff]
  %v2808 = vld [vmem:[%s9 + $0x10] sm:$0xff]
  %v2809 = vld [vmem:[%s9 + $0x18] sm:$0xff]
  %v2810 = vld [vmem:[%s9 + $0x20] sm:$0xff]
  %v2811 = vld [vmem:[%s9 + $0x28] sm:$0xff]
  %v2812 = vld [vmem:[%s9 + $0x30] sm:$0xff]
  %v2813 = vld [vmem:[%s9 + $0x38] sm:$0xff]
  %v2814 = vld [vmem:[%s9 + $0x40] sm:$0xff]
  %v2815 = vld [vmem:[%s9 + $0x48] sm:$0xff]
  %v2816 = vld [vmem:[%s9 + $0x50] sm:$0xff]
  %v2817 = vld [vmem:[%s9 + $0x58] sm:$0xff]
  %v2818 = vld [vmem:[%s9 + $0x60] sm:$0xff]
  %v2819 = vld [vmem:[%s9 + $0x68] sm:$0xff]
  %v2820 = vld [vmem:[%s9 + $0x70] sm:$0xff]
  %v2821 = vld [vmem:[%s9 + $0x78] sm:$0xff]
  %v2822 = vld [vmem:[%s9 + $0x80] sm:$0xff]
  %v2823 = vld [vmem:[%s9 + $0x88] sm:$0xff]
  %v2824 = vld [vmem:[%s9 + $0x90] sm:$0xff]
  %v2825 = vld [vmem:[%s9 + $0x98] sm:$0xff]
  %v2826 = vld [vmem:[%s9 + $0xa0] sm:$0xff]
  %v2827 = vld [vmem:[%s9 + $0xa8] sm:$0xff]
  %v2828 = vld [vmem:[%s9 + $0xb0] sm:$0xff]
  %v2829 = vld [vmem:[%s9 + $0xb8] sm:$0xff]
  %v2830 = vld [vmem:[%s9 + $0xc0] sm:$0xff]
  %v2831 = vld [vmem:[%s9 + $0xc8] sm:$0xff]
  %v2832 = vld [vmem:[%s9 + $0xd0] sm:$0xff]
  %v2833 = vld [vmem:[%s9 + $0xd8] sm:$0xff]
  %v2834 = vld [vmem:[%s9 + $0xe0] sm:$0xff]
  %v2835 = vld [vmem:[%s9 + $0xe8] sm:$0xff]
  %v2836 = vld [vmem:[%s9 + $0xf0] sm:$0xff]
  %v2837 = vld [vmem:[%s9 + $0xf8] sm:$0xff]
  %v2838 = vld [vmem:[%s10] sm:$0x3]
  %v2840 = vlaneseq
  %v2841 = vshrl.u32 %v2840, 7
  %v2842 = vsub.s32 0, %v2841
  %v2843 = vrot.slane %v2838, %v2842
  %v2844 = vlaneseq
  %v2845 = vshrl.u32 %v2844, 7
  %v2846 = vsub.s32 1, %v2845
  %v2847 = vrot.slane %v2838, %v2846
  %v2882 = vunpack.c.l.b16 %v2806
  %v2883 = vunpack.c.h.b16 %v2806
  %v2884 = vunpack.c.l.b16 %v2807
  %v2885 = vunpack.c.h.b16 %v2807
  %v2886 = vunpack.c.l.b16 %v2808
  %v2887 = vunpack.c.h.b16 %v2808
  %v2888 = vunpack.c.l.b16 %v2809
  %v2889 = vunpack.c.h.b16 %v2809
  %v2890 = vunpack.c.l.b16 %v2810
  %v2891 = vunpack.c.h.b16 %v2810
  %v2892 = vunpack.c.l.b16 %v2811
  %v2893 = vunpack.c.h.b16 %v2811
  %v2894 = vunpack.c.l.b16 %v2812
  %v2895 = vunpack.c.h.b16 %v2812
  %v2896 = vunpack.c.l.b16 %v2813
  %v2897 = vunpack.c.h.b16 %v2813
  %v2898 = vunpack.c.l.b16 %v2814
  %v2899 = vunpack.c.h.b16 %v2814
  %v2900 = vunpack.c.l.b16 %v2815
  %v2901 = vunpack.c.h.b16 %v2815
  %v2902 = vunpack.c.l.b16 %v2816
  %v2903 = vunpack.c.h.b16 %v2816
  %v2904 = vunpack.c.l.b16 %v2817
  %v2905 = vunpack.c.h.b16 %v2817
  %v2906 = vunpack.c.l.b16 %v2818
  %v2907 = vunpack.c.h.b16 %v2818
  %v2908 = vunpack.c.l.b16 %v2819
  %v2909 = vunpack.c.h.b16 %v2819
  %v2910 = vunpack.c.l.b16 %v2820
  %v2911 = vunpack.c.h.b16 %v2820
  %v2912 = vunpack.c.l.b16 %v2821
  %v2913 = vunpack.c.h.b16 %v2821
  %v2914 = vunpack.c.l.b16 %v2822
  %v2915 = vunpack.c.h.b16 %v2822
  %v2916 = vunpack.c.l.b16 %v2823
  %v2917 = vunpack.c.h.b16 %v2823
  %v2918 = vunpack.c.l.b16 %v2824
  %v2919 = vunpack.c.h.b16 %v2824
  %v2920 = vunpack.c.l.b16 %v2825
  %v2921 = vunpack.c.h.b16 %v2825
  %v2922 = vunpack.c.l.b16 %v2826
  %v2923 = vunpack.c.h.b16 %v2826
  %v2924 = vunpack.c.l.b16 %v2827
  %v2925 = vunpack.c.h.b16 %v2827
  %v2926 = vunpack.c.l.b16 %v2828
  %v2927 = vunpack.c.h.b16 %v2828
  %v2928 = vunpack.c.l.b16 %v2829
  %v2929 = vunpack.c.h.b16 %v2829
  %v2930 = vunpack.c.l.b16 %v2830
  %v2931 = vunpack.c.h.b16 %v2830
  %v2932 = vunpack.c.l.b16 %v2831
  %v2933 = vunpack.c.h.b16 %v2831
  %v2934 = vunpack.c.l.b16 %v2832
  %v2935 = vunpack.c.h.b16 %v2832
  %v2936 = vunpack.c.l.b16 %v2833
  %v2937 = vunpack.c.h.b16 %v2833
  %v2938 = vunpack.c.l.b16 %v2834
  %v2939 = vunpack.c.h.b16 %v2834
  %v2940 = vunpack.c.l.b16 %v2835
  %v2941 = vunpack.c.h.b16 %v2835
  %v2942 = vunpack.c.l.b16 %v2836
  %v2943 = vunpack.c.h.b16 %v2836
  %v2944 = vunpack.c.l.b16 %v2837
  %v2945 = vunpack.c.h.b16 %v2837
  %v2946 = vpack.c.b16 %v2884, %v2882
  %v2947 = vpack.c.b16 %v2885, %v2883
  %v2948 = vpack.c.b16 %v2888, %v2886
  %v2949 = vpack.c.b16 %v2889, %v2887
  %v2950 = vpack.c.b16 %v2892, %v2890
  %v2951 = vpack.c.b16 %v2893, %v2891
  %v2952 = vpack.c.b16 %v2896, %v2894
  %v2953 = vpack.c.b16 %v2897, %v2895
  %v2954 = vpack.c.b16 %v2900, %v2898
  %v2955 = vpack.c.b16 %v2901, %v2899
  %v2956 = vpack.c.b16 %v2904, %v2902
  %v2957 = vpack.c.b16 %v2905, %v2903
  %v2958 = vpack.c.b16 %v2908, %v2906
  %v2959 = vpack.c.b16 %v2909, %v2907
  %v2960 = vpack.c.b16 %v2912, %v2910
  %v2961 = vpack.c.b16 %v2913, %v2911
  %v2962 = vpack.c.b16 %v2916, %v2914
  %v2963 = vpack.c.b16 %v2917, %v2915
  %v2964 = vpack.c.b16 %v2920, %v2918
  %v2965 = vpack.c.b16 %v2921, %v2919
  %v2966 = vpack.c.b16 %v2924, %v2922
  %v2967 = vpack.c.b16 %v2925, %v2923
  %v2968 = vpack.c.b16 %v2928, %v2926
  %v2969 = vpack.c.b16 %v2929, %v2927
  %v2970 = vpack.c.b16 %v2932, %v2930
  %v2971 = vpack.c.b16 %v2933, %v2931
  %v2972 = vpack.c.b16 %v2936, %v2934
  %v2973 = vpack.c.b16 %v2937, %v2935
  %v2974 = vpack.c.b16 %v2940, %v2938
  %v2975 = vpack.c.b16 %v2941, %v2939
  %v2976 = vpack.c.b16 %v2944, %v2942
  %v2977 = vpack.c.b16 %v2945, %v2943
  %3010 = vmatprep.subr.bf16.mxu0 %v2947
  %3011 = vmatpush1.bf16.msra.mxu0 %v2946
  %3012 = vmatprep.subr.bf16.mxu0 %v2949
  %3013 = vmatpush1.bf16.msra.mxu0 %v2948
  %3014 = vmatprep.subr.bf16.mxu0 %v2951
  %3015 = vmatpush1.bf16.msra.mxu0 %v2950
  %3016 = vmatprep.subr.bf16.mxu0 %v2953
  %3017 = vmatpush1.bf16.msra.mxu0 %v2952
  %3018 = vmatprep.subr.bf16.mxu0 %v2955
  %3019 = vmatpush1.bf16.msra.mxu0 %v2954
  %3020 = vmatprep.subr.bf16.mxu0 %v2957
  %3021 = vmatpush1.bf16.msra.mxu0 %v2956
  %3022 = vmatprep.subr.bf16.mxu0 %v2959
  %3023 = vmatpush1.bf16.msra.mxu0 %v2958
  %3024 = vmatprep.subr.bf16.mxu0 %v2961
  %3025 = vmatpush1.bf16.msra.mxu0 %v2960
  %3026 = vmatprep.subr.bf16.mxu0 %v2963
  %3027 = vmatpush1.bf16.msra.mxu0 %v2962
  %3028 = vmatprep.subr.bf16.mxu0 %v2965
  %3029 = vmatpush1.bf16.msra.mxu0 %v2964
  %3030 = vmatprep.subr.bf16.mxu0 %v2967
  %3031 = vmatpush1.bf16.msra.mxu0 %v2966
  %3032 = vmatprep.subr.bf16.mxu0 %v2969
  %3033 = vmatpush1.bf16.msra.mxu0 %v2968
  %3034 = vmatprep.subr.bf16.mxu0 %v2971
  %3035 = vmatpush1.bf16.msra.mxu0 %v2970
  %3036 = vmatprep.subr.bf16.mxu0 %v2973
  %3037 = vmatpush1.bf16.msra.mxu0 %v2972
  %3038 = vmatprep.subr.bf16.mxu0 %v2975
  %3039 = vmatpush1.bf16.msra.mxu0 %v2974
  %3040 = vmatprep.subr.bf16.mxu0 %v2977
  %3041 = vmatpush1.bf16.msra.mxu0 %v2976
  %3042 = vmatprep.mubr.bf16.mxu0 %v2805
  %3043 = vmatmul.mubr.bf16.gmra.mrb[0].mxu0 %v2804
  %v3044 = vpop.f32.mrb[0].mxu0
  %v3045 = vadd.f32 %v2843, %v3044
  %v3046 = vpop.f32.mrb[0].mxu0
  %v3047 = vadd.f32 %v2847, %v3046
  %v3048 = vpop.f32.mrb[0].mxu0
  %v3049 = vpop.f32.mrb[0].mxu0
  %3050 = vdwg.mxu0
  %v3053 = vcombine.low %v3045, %v3047
  %3055 = vst [vmem:[%s11] sm:$0xff] %v3053
  // Predicated region
  $region46: #{stnkd_forward.7} parent=0 // pred_check
    _
  $region47: #{stnkd_forward.7} parent=0 // pred_check_branch
    %3057 = sbr.rel (0) target = $region49
  $region48: #{stnkd_forward.7} parent=0 // pred_region
    _
  $region49: #{stnkd_forward.7} parent=0 // pred_fallthru
    _
  // Predicated region
  $region50: #{stnkd_forward.7} parent=0 // pred_check
    _
  $region51: #{stnkd_forward.7} parent=0 // pred_check_branch
    %3059 = sbr.rel (0) target = $region53
  $region52: #{stnkd_forward.7} parent=0 // pred_region
    _
  $region53: #{stnkd_forward.7} parent=0 // pred_fallthru
    _

</llo_original>
